<compile_context>
chip_gen: v5e
topology: v5e:2x2
jax: 0.10.0
libtpu: 0.0.40
codegen_flags: <defaults>
</compile_context>

<pallas_src>
import math

import jax
import jax.numpy as jnp
from jax.experimental import pallas as pl
from jax.experimental.pallas import tpu as pltpu


def _round_up(x, m):
    return ((x + m - 1) // m) * m


# ------------------------------ fused kernel ---------------------------------
def _make_fused_kernel(num_layers):
    """Builds the fused forward kernel (closure over num_layers for unpacking)."""

    def kernel(*refs):
        price_ref, time_ref = refs[0], refs[1]
        w = refs[2:-1]
        out_ref = refs[-1]
        assert len(w) == 6 * num_layers + 5

        B, T, Fp = price_ref.shape
        Ft = time_ref.shape[2]
        OM = out_ref.shape[1]

        idx = [0]

        def take(n):
            vals = w[idx[0]:idx[0] + n]
            idx[0] += n
            return vals

        def run_layer(gx, whh_ref):
            """One (fused or transform) LSTM layer's recurrence.

            gx: (B*T, 4*GS) f32 hoisted x @ W_ih + bias, batch-major rows
            (row = b*T + t).  whh_ref: (HW, 4*GS) bf16 recurrent weights with
            the real gate columns at the start of each 128-lane span.
            Returns the (B*T, HW) f32 hidden sequence.
            """
            whh = whh_ref[...]                       # load once, reused every t
            HW = whh.shape[0]
            GS = whh.shape[1] // 4
            gx3 = gx.reshape(B, T, 4 * GS)           # tile-aligned relabel (T==8)
            t_iota = jax.lax.broadcasted_iota(jnp.int32, (B, T, HW), 1)
            h = jnp.zeros((B, HW), jnp.float32)
            c = jnp.zeros((B, HW), jnp.float32)
            hseq = jnp.zeros((B, T, HW), jnp.float32)
            # T is small and static: Python loop == fully unrolled recurrence,
            # h/c/hseq live in vregs (no VMEM scratch round-trips).
            for t in range(T):
                g = gx3[:, t, :] + jnp.dot(h.astype(jnp.bfloat16), whh,
                                           preferred_element_type=jnp.float32)
                # Gate slices start at lane-span boundaries (k*GS), width = HW.
                i = jax.nn.sigmoid(g[:, 0 * GS:0 * GS + HW])
                f = jax.nn.sigmoid(g[:, 1 * GS:1 * GS + HW])
                gg = jnp.tanh(g[:, 2 * GS:2 * GS + HW])
                o = jax.nn.sigmoid(g[:, 3 * GS:3 * GS + HW])
                c = f * c + i * gg
                h = o * jnp.tanh(c)
                # Select-scatter h_t into the in-vreg sequence (elementwise ops
                # only -> robust lowering; off the serial h->h critical path).
                hseq = jnp.where(t_iota == t, h[:, None, :], hseq)
            return hseq.reshape(B * T, HW)

        def proj(x2d, wih_ref, b_ref):
            return (jnp.dot(x2d.astype(jnp.bfloat16), wih_ref[...],
                            preferred_element_type=jnp.float32) + b_ref[...])

        # ----- fused price+time LSTM stack (block-diagonal gate weights) -----
        wih_p0, wih_t0, whh0, b0 = take(4)
        xp = price_ref[...].reshape(B * T, Fp).astype(jnp.bfloat16)
        xt = time_ref[...].reshape(B * T, Ft).astype(jnp.bfloat16)
        gx0 = (jnp.dot(xp, wih_p0[...], preferred_element_type=jnp.float32)
               + jnp.dot(xt, wih_t0[...], preferred_element_type=jnp.float32)
               + b0[...])
        cur = run_layer(gx0, whh0)
        for _ in range(1, num_layers):
            wih, whh, b = take(3)
            cur = run_layer(proj(cur, wih, b), whh)

        # ----- transform stack: input == [h_price | h_time] == torch.cat -----
        for _ in range(num_layers):
            wih, whh, b = take(3)
            cur = run_layer(proj(cur, wih, b), whh)

        # ----- fc head: relu(fc1) -> fc2, lane-dense padded widths -----------
        fc1_w, fc1_b, fc2_w, fc2_b = take(4)
        h1 = jnp.maximum(proj(cur, fc1_w, fc1_b), 0.0)       # (B*T, F1P)
        y = proj(h1, fc2_w, fc2_b)                           # (B*T, OUTP)
        # Select the FIRST output_minutes timesteps (matches out[:, :OM, :]).
        out_ref[...] = y.reshape(B, T, y.shape[1])[:, :OM, :].astype(out_ref.dtype)

    return kernel


# ------------------------------ full forward ---------------------------------
def financial_predictor_forward(price_data, time_data, params, output_minutes):
    """price_data: (B, T, Fp), time_data: (B, T, Ft) — batch_first like PyTorch."""
    B, T, Fp = price_data.shape
    Ft = time_data.shape[2]
    H = params["hidden_dim"]
    L = params["num_layers"]
    HW = 2 * H
    cols = 4 * params["gate_span"]
    F1P = params["f1_pad"]
    OUTP = params["out_pad"]
    M = B * T

    # Advisory cost estimate for the XLA scheduler.
    flops = (2 * M * (Fp + Ft) * cols                  # layer-0 input projections
             + (2 * L - 1) * 2 * M * HW * cols         # hoisted projections, l>=1
             + 2 * L * T * 2 * B * HW * cols           # recurrent h @ W_hh dots
             + 2 * M * HW * F1P + 2 * M * F1P * OUTP)  # fc head
    transcendentals = 2 * L * T * 5 * B * HW
    weight_bytes = sum(int(a.size) * a.dtype.itemsize for a in params["flat"])
    bytes_accessed = (weight_bytes
                      + int(price_data.size + time_data.size) * 4
                      + B * output_minutes * OUTP * 4)

    kernel = _make_fused_kernel(L)
    out_full = pl.pallas_call(
        kernel,
        out_shape=jax.ShapeDtypeStruct((B, output_minutes, OUTP), jnp.float32),
        compiler_params=pltpu.CompilerParams(vmem_limit_bytes=32 * 1024 * 1024),
        cost_estimate=pl.CostEstimate(flops=int(flops),
                                      transcendentals=int(transcendentals),
                                      bytes_accessed=int(bytes_accessed)),
    )(price_data, time_data, *params["flat"])
    # Lane-dense kernel output; strip the out_dim padding here.
    return out_full[:, :, :params["out_dim"]]


# ------------------------ weight packing (lane-aligned) -----------------------
def _pack_gate_cols(w, H, GS, off, cols):
    """PyTorch (4H, In) weight -> (In, cols); gate g at [g*GS+off : g*GS+off+H]."""
    wt = w.T
    out = jnp.zeros((wt.shape[0], cols), jnp.float32)
    for g in range(4):
        out = out.at[:, g * GS + off:g * GS + off + H].set(wt[:, g * H:(g + 1) * H])
    return out


def _pack_gate_bias(b, H, GS, off, cols):
    out = jnp.zeros((cols,), jnp.float32)
    for g in range(4):
        out = out.at[g * GS + off:g * GS + off + H].set(b[g * H:(g + 1) * H])
    return out


# ------------------------------ parameter init --------------------------------
def _init_lstm_stack_raw(key, input_size, hidden, num_layers):
    bound = 1.0 / math.sqrt(hidden)
    layers = []
    for layer in range(num_layers):
        in_dim = input_size if layer == 0 else hidden
        key, k1, k2, k3, k4 = jax.random.split(key, 5)
        layers.append((
            jax.random.uniform(k1, (4 * hidden, in_dim), jnp.float32, -bound, bound),
            jax.random.uniform(k2, (4 * hidden, hidden), jnp.float32, -bound, bound),
            jax.random.uniform(k3, (4 * hidden,), jnp.float32, -bound, bound),
            jax.random.uniform(k4, (4 * hidden,), jnp.float32, -bound, bound),
        ))
    return key, layers


def init_params(key, price_feature_num, time_feature_num, hidden_dim,
                num_layers, output_dim):
    H = hidden_dim
    HW = 2 * H                        # fused / transform hidden width
    GS = _round_up(HW, 128)           # per-gate lane span (span-aligned slices)
    cols = 4 * GS
    F1P = _round_up(H, 128)           # fc1 lane-dense output width
    OUTP = _round_up(output_dim, 128)  # fc2 lane-dense output width

    key, price_raw = _init_lstm_stack_raw(key, price_feature_num, H, num_layers)
    key, time_raw = _init_lstm_stack_raw(key, time_feature_num, H, num_layers)
    key, trans_raw = _init_lstm_stack_raw(key, HW, HW, num_layers)

    flat = []
    # ---- fused price+time stack: block-diagonal gate layout ----------------
    for l in range(num_layers):
        wip, whp, bip, bhp = price_raw[l]
        wit, wht, bit_, bht = time_raw[l]
        if l == 0:
            flat.append(_pack_gate_cols(wip, H, GS, 0, cols).astype(jnp.bfloat16))
            flat.append(_pack_gate_cols(wit, H, GS, H, cols).astype(jnp.bfloat16))
        else:
            wih = jnp.concatenate([_pack_gate_cols(wip, H, GS, 0, cols),
                                   _pack_gate_cols(wit, H, GS, H, cols)], axis=0)
            flat.append(wih.astype(jnp.bfloat16))
        whh = jnp.concatenate([_pack_gate_cols(whp, H, GS, 0, cols),
                               _pack_gate_cols(wht, H, GS, H, cols)], axis=0)
        flat.append(whh.astype(jnp.bfloat16))
        bias = (_pack_gate_bias(bip + bhp, H, GS, 0, cols)
                + _pack_gate_bias(bit_ + bht, H, GS, H, cols)).reshape(1, cols)
        flat.append(bias)                                  # bias stays f32
    # ---- transform stack ----------------------------------------------------
    for l in range(num_layers):
        wi, wh, bi, bh = trans_raw[l]
        flat.append(_pack_gate_cols(wi, HW, GS, 0, cols).astype(jnp.bfloat16))
        flat.append(_pack_gate_cols(wh, HW, GS, 0, cols).astype(jnp.bfloat16))
        flat.append(_pack_gate_bias(bi + bh, HW, GS, 0, cols).reshape(1, cols))
    # ---- fc head (lane-dense padding; unused pad rows/cols are zero) --------
    b1 = 1.0 / math.sqrt(HW)
    b2 = 1.0 / math.sqrt(H)
    key, k1, k2, k3, k4 = jax.random.split(key, 5)
    fc1_w = jax.random.uniform(k1, (H, HW), jnp.float32, -b1, b1)
    fc1_b = jax.random.uniform(k2, (H,), jnp.float32, -b1, b1)
    fc2_w = jax.random.uniform(k3, (output_dim, H), jnp.float32, -b2, b2)
    fc2_b = jax.random.uniform(k4, (output_dim,), jnp.float32, -b2, b2)
    fc1_wp = jnp.zeros((HW, F1P), jnp.float32).at[:, :H].set(fc1_w.T)
    fc1_bp = jnp.zeros((1, F1P), jnp.float32).at[0, :H].set(fc1_b)
    fc2_wp = jnp.zeros((F1P, OUTP), jnp.float32).at[:H, :output_dim].set(fc2_w.T)
    fc2_bp = jnp.zeros((1, OUTP), jnp.float32).at[0, :output_dim].set(fc2_b)
    flat += [fc1_wp.astype(jnp.bfloat16), fc1_bp,
             fc2_wp.astype(jnp.bfloat16), fc2_bp]

    return {"flat": flat, "num_layers": num_layers, "hidden_dim": H,
            "out_dim": output_dim, "out_pad": OUTP, "f1_pad": F1P,
            "gate_span": GS}


# ----------------------------------- main -------------------------------------
if __name__ == "__main__":
    B, T = 2, 8
    price_feature_num, time_feature_num = 6, 4
    hidden_dim, num_layers = 32, 2
    output_dim, output_minutes = 3, 5

    root = jax.random.PRNGKey(0)
    k_params, k_price, k_time = jax.random.split(root, 3)

    params = init_params(k_params, price_feature_num, time_feature_num,
                         hidden_dim, num_layers, output_dim)
    price_data = jax.random.normal(k_price, (B, T, price_feature_num), jnp.float32)
    time_data = jax.random.normal(k_time, (B, T, time_feature_num), jnp.float32)

    out = financial_predictor_forward(price_data, time_data, params, output_minutes)
    out = jax.block_until_ready(out)
    assert out.shape == (B, output_minutes, output_dim), out.shape
    assert bool(jnp.all(jnp.isfinite(out)))
    print("KERNEL_OK")
</pallas_src>

<mosaic_0001>
module attributes {stable_mosaic.version = 11 : i64} {
  func.func @kernel(%arg0: memref<2x8x6xf32, #tpu.memory_space<vmem>>, %arg1: memref<2x8x4xf32, #tpu.memory_space<vmem>>, %arg2: memref<6x512xbf16, #tpu.memory_space<vmem>>, %arg3: memref<4x512xbf16, #tpu.memory_space<vmem>>, %arg4: memref<64x512xbf16, #tpu.memory_space<vmem>>, %arg5: memref<1x512xf32, #tpu.memory_space<vmem>>, %arg6: memref<64x512xbf16, #tpu.memory_space<vmem>>, %arg7: memref<64x512xbf16, #tpu.memory_space<vmem>>, %arg8: memref<1x512xf32, #tpu.memory_space<vmem>>, %arg9: memref<64x512xbf16, #tpu.memory_space<vmem>>, %arg10: memref<64x512xbf16, #tpu.memory_space<vmem>>, %arg11: memref<1x512xf32, #tpu.memory_space<vmem>>, %arg12: memref<64x512xbf16, #tpu.memory_space<vmem>>, %arg13: memref<64x512xbf16, #tpu.memory_space<vmem>>, %arg14: memref<1x512xf32, #tpu.memory_space<vmem>>, %arg15: memref<64x128xbf16, #tpu.memory_space<vmem>>, %arg16: memref<1x128xf32, #tpu.memory_space<vmem>>, %arg17: memref<128x128xbf16, #tpu.memory_space<vmem>>, %arg18: memref<1x128xf32, #tpu.memory_space<vmem>>, %arg19: memref<2x5x128xf32, #tpu.memory_space<vmem>>) attributes {dimension_semantics = [], scalar_prefetch = 0 : i64, scratch_operands = 0 : i64, tpu.core_type = #tpu.core_type<tc>} {
    %c0 = arith.constant 0 : index
    %c0_0 = arith.constant 0 : index
    %c0_1 = arith.constant 0 : index
    %0 = vector.load %arg0[%c0, %c0_0, %c0_1] : memref<2x8x6xf32, #tpu.memory_space<vmem>>, vector<2x8x6xf32>
    %1 = vector.shape_cast %0 : vector<2x8x6xf32> to vector<16x6xf32>
    %2 = arith.truncf %1 : vector<16x6xf32> to vector<16x6xbf16>
    %c0_2 = arith.constant 0 : index
    %c0_3 = arith.constant 0 : index
    %c0_4 = arith.constant 0 : index
    %3 = vector.load %arg1[%c0_2, %c0_3, %c0_4] : memref<2x8x4xf32, #tpu.memory_space<vmem>>, vector<2x8x4xf32>
    %4 = vector.shape_cast %3 : vector<2x8x4xf32> to vector<16x4xf32>
    %5 = arith.truncf %4 : vector<16x4xf32> to vector<16x4xbf16>
    %c0_5 = arith.constant 0 : index
    %c0_6 = arith.constant 0 : index
    %6 = vector.load %arg2[%c0_5, %c0_6] : memref<6x512xbf16, #tpu.memory_space<vmem>>, vector<6x512xbf16>
    %cst = arith.constant dense<0.000000e+00> : vector<16x512xf32>
    %7 = tpu.matmul %2, %6, %cst {dimension_numbers = #tpu.dot_dimension_numbers<[1], [0], [0], [1], [0, 0, 1, 1], [], []>} : vector<16x6xbf16>, vector<6x512xbf16>, vector<16x512xf32> -> vector<16x512xf32>
    %c0_7 = arith.constant 0 : index
    %c0_8 = arith.constant 0 : index
    %8 = vector.load %arg3[%c0_7, %c0_8] : memref<4x512xbf16, #tpu.memory_space<vmem>>, vector<4x512xbf16>
    %cst_9 = arith.constant dense<0.000000e+00> : vector<16x512xf32>
    %9 = tpu.matmul %5, %8, %cst_9 {dimension_numbers = #tpu.dot_dimension_numbers<[1], [0], [0], [1], [0, 0, 1, 1], [], []>} : vector<16x4xbf16>, vector<4x512xbf16>, vector<16x512xf32> -> vector<16x512xf32>
    %10 = arith.addf %7, %9 : vector<16x512xf32>
    %c0_10 = arith.constant 0 : index
    %c0_11 = arith.constant 0 : index
    %11 = vector.load %arg5[%c0_10, %c0_11] : memref<1x512xf32, #tpu.memory_space<vmem>>, vector<1x512xf32>
    %12 = vector.broadcast %11 : vector<1x512xf32> to vector<16x512xf32>
    %13 = arith.addf %10, %12 : vector<16x512xf32>
    %c0_12 = arith.constant 0 : index
    %c0_13 = arith.constant 0 : index
    %14 = vector.load %arg4[%c0_12, %c0_13] : memref<64x512xbf16, #tpu.memory_space<vmem>>, vector<64x512xbf16>
    %15 = vector.shape_cast %13 : vector<16x512xf32> to vector<2x8x512xf32>
    %16 = tpu.iota {dimensions = array<i32: 1>} : vector<2x8x64xi32>
    %cst_14 = arith.constant 0.000000e+00 : f32
    %17 = vector.broadcast %cst_14 : f32 to vector<2x64xf32>
    %cst_15 = arith.constant 0.000000e+00 : f32
    %18 = vector.broadcast %cst_15 : f32 to vector<2x64xf32>
    %cst_16 = arith.constant 0.000000e+00 : f32
    %19 = vector.broadcast %cst_16 : f32 to vector<2x8x64xf32>
    %20 = vector.extract_strided_slice %15 {offsets = [0, 0, 0], sizes = [2, 1, 512], strides = [1, 1, 1]} : vector<2x8x512xf32> to vector<2x1x512xf32>
    %21 = vector.shape_cast %20 : vector<2x1x512xf32> to vector<2x512xf32>
    %22 = arith.truncf %17 : vector<2x64xf32> to vector<2x64xbf16>
    %cst_17 = arith.constant dense<0.000000e+00> : vector<2x512xf32>
    %23 = tpu.matmul %22, %14, %cst_17 {dimension_numbers = #tpu.dot_dimension_numbers<[1], [0], [0], [1], [0, 0, 1, 1], [], []>} : vector<2x64xbf16>, vector<64x512xbf16>, vector<2x512xf32> -> vector<2x512xf32>
    %24 = arith.addf %21, %23 : vector<2x512xf32>
    %25 = vector.extract_strided_slice %24 {offsets = [0, 0], sizes = [2, 64], strides = [1, 1]} : vector<2x512xf32> to vector<2x64xf32>
    %26 = arith.negf %25 : vector<2x64xf32>
    %27 = math.exp %26 : vector<2x64xf32>
    %cst_18 = arith.constant 1.000000e+00 : f32
    %28 = vector.broadcast %cst_18 : f32 to vector<2x64xf32>
    %29 = arith.addf %28, %27 : vector<2x64xf32>
    %30 = arith.divf %28, %29 : vector<2x64xf32>
    %31 = vector.extract_strided_slice %24 {offsets = [0, 128], sizes = [2, 64], strides = [1, 1]} : vector<2x512xf32> to vector<2x64xf32>
    %32 = arith.negf %31 : vector<2x64xf32>
    %33 = math.exp %32 : vector<2x64xf32>
    %cst_19 = arith.constant 1.000000e+00 : f32
    %34 = vector.broadcast %cst_19 : f32 to vector<2x64xf32>
    %35 = arith.addf %34, %33 : vector<2x64xf32>
    %36 = arith.divf %34, %35 : vector<2x64xf32>
    %37 = vector.extract_strided_slice %24 {offsets = [0, 256], sizes = [2, 64], strides = [1, 1]} : vector<2x512xf32> to vector<2x64xf32>
    %38 = math.tanh %37 : vector<2x64xf32>
    %39 = vector.extract_strided_slice %24 {offsets = [0, 384], sizes = [2, 64], strides = [1, 1]} : vector<2x512xf32> to vector<2x64xf32>
    %40 = arith.negf %39 : vector<2x64xf32>
    %41 = math.exp %40 : vector<2x64xf32>
    %cst_20 = arith.constant 1.000000e+00 : f32
    %42 = vector.broadcast %cst_20 : f32 to vector<2x64xf32>
    %43 = arith.addf %42, %41 : vector<2x64xf32>
    %44 = arith.divf %42, %43 : vector<2x64xf32>
    %45 = arith.mulf %36, %18 : vector<2x64xf32>
    %46 = arith.mulf %30, %38 : vector<2x64xf32>
    %47 = arith.addf %45, %46 : vector<2x64xf32>
    %48 = math.tanh %47 : vector<2x64xf32>
    %49 = arith.mulf %44, %48 : vector<2x64xf32>
    %c0_i32 = arith.constant 0 : i32
    %50 = vector.broadcast %c0_i32 : i32 to vector<2x8x64xi32>
    %51 = arith.cmpi eq, %16, %50 : vector<2x8x64xi32>
    %52 = vector.shape_cast %49 : vector<2x64xf32> to vector<2x1x64xf32>
    %53 = vector.shape_cast %52 : vector<2x1x64xf32> to vector<2x1x64xf32>
    %54 = vector.broadcast %53 : vector<2x1x64xf32> to vector<2x8x64xf32>
    %55 = arith.select %51, %54, %19 : vector<2x8x64xi1>, vector<2x8x64xf32>
    %56 = vector.extract_strided_slice %15 {offsets = [0, 1, 0], sizes = [2, 1, 512], strides = [1, 1, 1]} : vector<2x8x512xf32> to vector<2x1x512xf32>
    %57 = vector.shape_cast %56 : vector<2x1x512xf32> to vector<2x512xf32>
    %58 = arith.truncf %49 : vector<2x64xf32> to vector<2x64xbf16>
    %cst_21 = arith.constant dense<0.000000e+00> : vector<2x512xf32>
    %59 = tpu.matmul %58, %14, %cst_21 {dimension_numbers = #tpu.dot_dimension_numbers<[1], [0], [0], [1], [0, 0, 1, 1], [], []>} : vector<2x64xbf16>, vector<64x512xbf16>, vector<2x512xf32> -> vector<2x512xf32>
    %60 = arith.addf %57, %59 : vector<2x512xf32>
    %61 = vector.extract_strided_slice %60 {offsets = [0, 0], sizes = [2, 64], strides = [1, 1]} : vector<2x512xf32> to vector<2x64xf32>
    %62 = arith.negf %61 : vector<2x64xf32>
    %63 = math.exp %62 : vector<2x64xf32>
    %cst_22 = arith.constant 1.000000e+00 : f32
    %64 = vector.broadcast %cst_22 : f32 to vector<2x64xf32>
    %65 = arith.addf %64, %63 : vector<2x64xf32>
    %66 = arith.divf %64, %65 : vector<2x64xf32>
    %67 = vector.extract_strided_slice %60 {offsets = [0, 128], sizes = [2, 64], strides = [1, 1]} : vector<2x512xf32> to vector<2x64xf32>
    %68 = arith.negf %67 : vector<2x64xf32>
    %69 = math.exp %68 : vector<2x64xf32>
    %cst_23 = arith.constant 1.000000e+00 : f32
    %70 = vector.broadcast %cst_23 : f32 to vector<2x64xf32>
    %71 = arith.addf %70, %69 : vector<2x64xf32>
    %72 = arith.divf %70, %71 : vector<2x64xf32>
    %73 = vector.extract_strided_slice %60 {offsets = [0, 256], sizes = [2, 64], strides = [1, 1]} : vector<2x512xf32> to vector<2x64xf32>
    %74 = math.tanh %73 : vector<2x64xf32>
    %75 = vector.extract_strided_slice %60 {offsets = [0, 384], sizes = [2, 64], strides = [1, 1]} : vector<2x512xf32> to vector<2x64xf32>
    %76 = arith.negf %75 : vector<2x64xf32>
    %77 = math.exp %76 : vector<2x64xf32>
    %cst_24 = arith.constant 1.000000e+00 : f32
    %78 = vector.broadcast %cst_24 : f32 to vector<2x64xf32>
    %79 = arith.addf %78, %77 : vector<2x64xf32>
    %80 = arith.divf %78, %79 : vector<2x64xf32>
    %81 = arith.mulf %72, %47 : vector<2x64xf32>
    %82 = arith.mulf %66, %74 : vector<2x64xf32>
    %83 = arith.addf %81, %82 : vector<2x64xf32>
    %84 = math.tanh %83 : vector<2x64xf32>
    %85 = arith.mulf %80, %84 : vector<2x64xf32>
    %c1_i32 = arith.constant 1 : i32
    %86 = vector.broadcast %c1_i32 : i32 to vector<2x8x64xi32>
    %87 = arith.cmpi eq, %16, %86 : vector<2x8x64xi32>
    %88 = vector.shape_cast %85 : vector<2x64xf32> to vector<2x1x64xf32>
    %89 = vector.shape_cast %88 : vector<2x1x64xf32> to vector<2x1x64xf32>
    %90 = vector.broadcast %89 : vector<2x1x64xf32> to vector<2x8x64xf32>
    %91 = arith.select %87, %90, %55 : vector<2x8x64xi1>, vector<2x8x64xf32>
    %92 = vector.extract_strided_slice %15 {offsets = [0, 2, 0], sizes = [2, 1, 512], strides = [1, 1, 1]} : vector<2x8x512xf32> to vector<2x1x512xf32>
    %93 = vector.shape_cast %92 : vector<2x1x512xf32> to vector<2x512xf32>
    %94 = arith.truncf %85 : vector<2x64xf32> to vector<2x64xbf16>
    %cst_25 = arith.constant dense<0.000000e+00> : vector<2x512xf32>
    %95 = tpu.matmul %94, %14, %cst_25 {dimension_numbers = #tpu.dot_dimension_numbers<[1], [0], [0], [1], [0, 0, 1, 1], [], []>} : vector<2x64xbf16>, vector<64x512xbf16>, vector<2x512xf32> -> vector<2x512xf32>
    %96 = arith.addf %93, %95 : vector<2x512xf32>
    %97 = vector.extract_strided_slice %96 {offsets = [0, 0], sizes = [2, 64], strides = [1, 1]} : vector<2x512xf32> to vector<2x64xf32>
    %98 = arith.negf %97 : vector<2x64xf32>
    %99 = math.exp %98 : vector<2x64xf32>
    %cst_26 = arith.constant 1.000000e+00 : f32
    %100 = vector.broadcast %cst_26 : f32 to vector<2x64xf32>
    %101 = arith.addf %100, %99 : vector<2x64xf32>
    %102 = arith.divf %100, %101 : vector<2x64xf32>
    %103 = vector.extract_strided_slice %96 {offsets = [0, 128], sizes = [2, 64], strides = [1, 1]} : vector<2x512xf32> to vector<2x64xf32>
    %104 = arith.negf %103 : vector<2x64xf32>
    %105 = math.exp %104 : vector<2x64xf32>
    %cst_27 = arith.constant 1.000000e+00 : f32
    %106 = vector.broadcast %cst_27 : f32 to vector<2x64xf32>
    %107 = arith.addf %106, %105 : vector<2x64xf32>
    %108 = arith.divf %106, %107 : vector<2x64xf32>
    %109 = vector.extract_strided_slice %96 {offsets = [0, 256], sizes = [2, 64], strides = [1, 1]} : vector<2x512xf32> to vector<2x64xf32>
    %110 = math.tanh %109 : vector<2x64xf32>
    %111 = vector.extract_strided_slice %96 {offsets = [0, 384], sizes = [2, 64], strides = [1, 1]} : vector<2x512xf32> to vector<2x64xf32>
    %112 = arith.negf %111 : vector<2x64xf32>
    %113 = math.exp %112 : vector<2x64xf32>
    %cst_28 = arith.constant 1.000000e+00 : f32
    %114 = vector.broadcast %cst_28 : f32 to vector<2x64xf32>
    %115 = arith.addf %114, %113 : vector<2x64xf32>
    %116 = arith.divf %114, %115 : vector<2x64xf32>
    %117 = arith.mulf %108, %83 : vector<2x64xf32>
    %118 = arith.mulf %102, %110 : vector<2x64xf32>
    %119 = arith.addf %117, %118 : vector<2x64xf32>
    %120 = math.tanh %119 : vector<2x64xf32>
    %121 = arith.mulf %116, %120 : vector<2x64xf32>
    %c2_i32 = arith.constant 2 : i32
    %122 = vector.broadcast %c2_i32 : i32 to vector<2x8x64xi32>
    %123 = arith.cmpi eq, %16, %122 : vector<2x8x64xi32>
    %124 = vector.shape_cast %121 : vector<2x64xf32> to vector<2x1x64xf32>
    %125 = vector.shape_cast %124 : vector<2x1x64xf32> to vector<2x1x64xf32>
    %126 = vector.broadcast %125 : vector<2x1x64xf32> to vector<2x8x64xf32>
    %127 = arith.select %123, %126, %91 : vector<2x8x64xi1>, vector<2x8x64xf32>
    %128 = vector.extract_strided_slice %15 {offsets = [0, 3, 0], sizes = [2, 1, 512], strides = [1, 1, 1]} : vector<2x8x512xf32> to vector<2x1x512xf32>
    %129 = vector.shape_cast %128 : vector<2x1x512xf32> to vector<2x512xf32>
    %130 = arith.truncf %121 : vector<2x64xf32> to vector<2x64xbf16>
    %cst_29 = arith.constant dense<0.000000e+00> : vector<2x512xf32>
    %131 = tpu.matmul %130, %14, %cst_29 {dimension_numbers = #tpu.dot_dimension_numbers<[1], [0], [0], [1], [0, 0, 1, 1], [], []>} : vector<2x64xbf16>, vector<64x512xbf16>, vector<2x512xf32> -> vector<2x512xf32>
    %132 = arith.addf %129, %131 : vector<2x512xf32>
    %133 = vector.extract_strided_slice %132 {offsets = [0, 0], sizes = [2, 64], strides = [1, 1]} : vector<2x512xf32> to vector<2x64xf32>
    %134 = arith.negf %133 : vector<2x64xf32>
    %135 = math.exp %134 : vector<2x64xf32>
    %cst_30 = arith.constant 1.000000e+00 : f32
    %136 = vector.broadcast %cst_30 : f32 to vector<2x64xf32>
    %137 = arith.addf %136, %135 : vector<2x64xf32>
    %138 = arith.divf %136, %137 : vector<2x64xf32>
    %139 = vector.extract_strided_slice %132 {offsets = [0, 128], sizes = [2, 64], strides = [1, 1]} : vector<2x512xf32> to vector<2x64xf32>
    %140 = arith.negf %139 : vector<2x64xf32>
    %141 = math.exp %140 : vector<2x64xf32>
    %cst_31 = arith.constant 1.000000e+00 : f32
    %142 = vector.broadcast %cst_31 : f32 to vector<2x64xf32>
    %143 = arith.addf %142, %141 : vector<2x64xf32>
    %144 = arith.divf %142, %143 : vector<2x64xf32>
    %145 = vector.extract_strided_slice %132 {offsets = [0, 256], sizes = [2, 64], strides = [1, 1]} : vector<2x512xf32> to vector<2x64xf32>
    %146 = math.tanh %145 : vector<2x64xf32>
    %147 = vector.extract_strided_slice %132 {offsets = [0, 384], sizes = [2, 64], strides = [1, 1]} : vector<2x512xf32> to vector<2x64xf32>
    %148 = arith.negf %147 : vector<2x64xf32>
    %149 = math.exp %148 : vector<2x64xf32>
    %cst_32 = arith.constant 1.000000e+00 : f32
    %150 = vector.broadcast %cst_32 : f32 to vector<2x64xf32>
    %151 = arith.addf %150, %149 : vector<2x64xf32>
    %152 = arith.divf %150, %151 : vector<2x64xf32>
    %153 = arith.mulf %144, %119 : vector<2x64xf32>
    %154 = arith.mulf %138, %146 : vector<2x64xf32>
    %155 = arith.addf %153, %154 : vector<2x64xf32>
    %156 = math.tanh %155 : vector<2x64xf32>
    %157 = arith.mulf %152, %156 : vector<2x64xf32>
    %c3_i32 = arith.constant 3 : i32
    %158 = vector.broadcast %c3_i32 : i32 to vector<2x8x64xi32>
    %159 = arith.cmpi eq, %16, %158 : vector<2x8x64xi32>
    %160 = vector.shape_cast %157 : vector<2x64xf32> to vector<2x1x64xf32>
    %161 = vector.shape_cast %160 : vector<2x1x64xf32> to vector<2x1x64xf32>
    %162 = vector.broadcast %161 : vector<2x1x64xf32> to vector<2x8x64xf32>
    %163 = arith.select %159, %162, %127 : vector<2x8x64xi1>, vector<2x8x64xf32>
    %164 = vector.extract_strided_slice %15 {offsets = [0, 4, 0], sizes = [2, 1, 512], strides = [1, 1, 1]} : vector<2x8x512xf32> to vector<2x1x512xf32>
    %165 = vector.shape_cast %164 : vector<2x1x512xf32> to vector<2x512xf32>
    %166 = arith.truncf %157 : vector<2x64xf32> to vector<2x64xbf16>
    %cst_33 = arith.constant dense<0.000000e+00> : vector<2x512xf32>
    %167 = tpu.matmul %166, %14, %cst_33 {dimension_numbers = #tpu.dot_dimension_numbers<[1], [0], [0], [1], [0, 0, 1, 1], [], []>} : vector<2x64xbf16>, vector<64x512xbf16>, vector<2x512xf32> -> vector<2x512xf32>
    %168 = arith.addf %165, %167 : vector<2x512xf32>
    %169 = vector.extract_strided_slice %168 {offsets = [0, 0], sizes = [2, 64], strides = [1, 1]} : vector<2x512xf32> to vector<2x64xf32>
    %170 = arith.negf %169 : vector<2x64xf32>
    %171 = math.exp %170 : vector<2x64xf32>
    %cst_34 = arith.constant 1.000000e+00 : f32
    %172 = vector.broadcast %cst_34 : f32 to vector<2x64xf32>
    %173 = arith.addf %172, %171 : vector<2x64xf32>
    %174 = arith.divf %172, %173 : vector<2x64xf32>
    %175 = vector.extract_strided_slice %168 {offsets = [0, 128], sizes = [2, 64], strides = [1, 1]} : vector<2x512xf32> to vector<2x64xf32>
    %176 = arith.negf %175 : vector<2x64xf32>
    %177 = math.exp %176 : vector<2x64xf32>
    %cst_35 = arith.constant 1.000000e+00 : f32
    %178 = vector.broadcast %cst_35 : f32 to vector<2x64xf32>
    %179 = arith.addf %178, %177 : vector<2x64xf32>
    %180 = arith.divf %178, %179 : vector<2x64xf32>
    %181 = vector.extract_strided_slice %168 {offsets = [0, 256], sizes = [2, 64], strides = [1, 1]} : vector<2x512xf32> to vector<2x64xf32>
    %182 = math.tanh %181 : vector<2x64xf32>
    %183 = vector.extract_strided_slice %168 {offsets = [0, 384], sizes = [2, 64], strides = [1, 1]} : vector<2x512xf32> to vector<2x64xf32>
    %184 = arith.negf %183 : vector<2x64xf32>
    %185 = math.exp %184 : vector<2x64xf32>
    %cst_36 = arith.constant 1.000000e+00 : f32
    %186 = vector.broadcast %cst_36 : f32 to vector<2x64xf32>
    %187 = arith.addf %186, %185 : vector<2x64xf32>
    %188 = arith.divf %186, %187 : vector<2x64xf32>
    %189 = arith.mulf %180, %155 : vector<2x64xf32>
    %190 = arith.mulf %174, %182 : vector<2x64xf32>
    %191 = arith.addf %189, %190 : vector<2x64xf32>
    %192 = math.tanh %191 : vector<2x64xf32>
    %193 = arith.mulf %188, %192 : vector<2x64xf32>
    %c4_i32 = arith.constant 4 : i32
    %194 = vector.broadcast %c4_i32 : i32 to vector<2x8x64xi32>
    %195 = arith.cmpi eq, %16, %194 : vector<2x8x64xi32>
    %196 = vector.shape_cast %193 : vector<2x64xf32> to vector<2x1x64xf32>
    %197 = vector.shape_cast %196 : vector<2x1x64xf32> to vector<2x1x64xf32>
    %198 = vector.broadcast %197 : vector<2x1x64xf32> to vector<2x8x64xf32>
    %199 = arith.select %195, %198, %163 : vector<2x8x64xi1>, vector<2x8x64xf32>
    %200 = vector.extract_strided_slice %15 {offsets = [0, 5, 0], sizes = [2, 1, 512], strides = [1, 1, 1]} : vector<2x8x512xf32> to vector<2x1x512xf32>
    %201 = vector.shape_cast %200 : vector<2x1x512xf32> to vector<2x512xf32>
    %202 = arith.truncf %193 : vector<2x64xf32> to vector<2x64xbf16>
    %cst_37 = arith.constant dense<0.000000e+00> : vector<2x512xf32>
    %203 = tpu.matmul %202, %14, %cst_37 {dimension_numbers = #tpu.dot_dimension_numbers<[1], [0], [0], [1], [0, 0, 1, 1], [], []>} : vector<2x64xbf16>, vector<64x512xbf16>, vector<2x512xf32> -> vector<2x512xf32>
    %204 = arith.addf %201, %203 : vector<2x512xf32>
    %205 = vector.extract_strided_slice %204 {offsets = [0, 0], sizes = [2, 64], strides = [1, 1]} : vector<2x512xf32> to vector<2x64xf32>
    %206 = arith.negf %205 : vector<2x64xf32>
    %207 = math.exp %206 : vector<2x64xf32>
    %cst_38 = arith.constant 1.000000e+00 : f32
    %208 = vector.broadcast %cst_38 : f32 to vector<2x64xf32>
    %209 = arith.addf %208, %207 : vector<2x64xf32>
    %210 = arith.divf %208, %209 : vector<2x64xf32>
    %211 = vector.extract_strided_slice %204 {offsets = [0, 128], sizes = [2, 64], strides = [1, 1]} : vector<2x512xf32> to vector<2x64xf32>
    %212 = arith.negf %211 : vector<2x64xf32>
    %213 = math.exp %212 : vector<2x64xf32>
    %cst_39 = arith.constant 1.000000e+00 : f32
    %214 = vector.broadcast %cst_39 : f32 to vector<2x64xf32>
    %215 = arith.addf %214, %213 : vector<2x64xf32>
    %216 = arith.divf %214, %215 : vector<2x64xf32>
    %217 = vector.extract_strided_slice %204 {offsets = [0, 256], sizes = [2, 64], strides = [1, 1]} : vector<2x512xf32> to vector<2x64xf32>
    %218 = math.tanh %217 : vector<2x64xf32>
    %219 = vector.extract_strided_slice %204 {offsets = [0, 384], sizes = [2, 64], strides = [1, 1]} : vector<2x512xf32> to vector<2x64xf32>
    %220 = arith.negf %219 : vector<2x64xf32>
    %221 = math.exp %220 : vector<2x64xf32>
    %cst_40 = arith.constant 1.000000e+00 : f32
    %222 = vector.broadcast %cst_40 : f32 to vector<2x64xf32>
    %223 = arith.addf %222, %221 : vector<2x64xf32>
    %224 = arith.divf %222, %223 : vector<2x64xf32>
    %225 = arith.mulf %216, %191 : vector<2x64xf32>
    %226 = arith.mulf %210, %218 : vector<2x64xf32>
    %227 = arith.addf %225, %226 : vector<2x64xf32>
    %228 = math.tanh %227 : vector<2x64xf32>
    %229 = arith.mulf %224, %228 : vector<2x64xf32>
    %c5_i32 = arith.constant 5 : i32
    %230 = vector.broadcast %c5_i32 : i32 to vector<2x8x64xi32>
    %231 = arith.cmpi eq, %16, %230 : vector<2x8x64xi32>
    %232 = vector.shape_cast %229 : vector<2x64xf32> to vector<2x1x64xf32>
    %233 = vector.shape_cast %232 : vector<2x1x64xf32> to vector<2x1x64xf32>
    %234 = vector.broadcast %233 : vector<2x1x64xf32> to vector<2x8x64xf32>
    %235 = arith.select %231, %234, %199 : vector<2x8x64xi1>, vector<2x8x64xf32>
    %236 = vector.extract_strided_slice %15 {offsets = [0, 6, 0], sizes = [2, 1, 512], strides = [1, 1, 1]} : vector<2x8x512xf32> to vector<2x1x512xf32>
    %237 = vector.shape_cast %236 : vector<2x1x512xf32> to vector<2x512xf32>
    %238 = arith.truncf %229 : vector<2x64xf32> to vector<2x64xbf16>
    %cst_41 = arith.constant dense<0.000000e+00> : vector<2x512xf32>
    %239 = tpu.matmul %238, %14, %cst_41 {dimension_numbers = #tpu.dot_dimension_numbers<[1], [0], [0], [1], [0, 0, 1, 1], [], []>} : vector<2x64xbf16>, vector<64x512xbf16>, vector<2x512xf32> -> vector<2x512xf32>
    %240 = arith.addf %237, %239 : vector<2x512xf32>
    %241 = vector.extract_strided_slice %240 {offsets = [0, 0], sizes = [2, 64], strides = [1, 1]} : vector<2x512xf32> to vector<2x64xf32>
    %242 = arith.negf %241 : vector<2x64xf32>
    %243 = math.exp %242 : vector<2x64xf32>
    %cst_42 = arith.constant 1.000000e+00 : f32
    %244 = vector.broadcast %cst_42 : f32 to vector<2x64xf32>
    %245 = arith.addf %244, %243 : vector<2x64xf32>
    %246 = arith.divf %244, %245 : vector<2x64xf32>
    %247 = vector.extract_strided_slice %240 {offsets = [0, 128], sizes = [2, 64], strides = [1, 1]} : vector<2x512xf32> to vector<2x64xf32>
    %248 = arith.negf %247 : vector<2x64xf32>
    %249 = math.exp %248 : vector<2x64xf32>
    %cst_43 = arith.constant 1.000000e+00 : f32
    %250 = vector.broadcast %cst_43 : f32 to vector<2x64xf32>
    %251 = arith.addf %250, %249 : vector<2x64xf32>
    %252 = arith.divf %250, %251 : vector<2x64xf32>
    %253 = vector.extract_strided_slice %240 {offsets = [0, 256], sizes = [2, 64], strides = [1, 1]} : vector<2x512xf32> to vector<2x64xf32>
    %254 = math.tanh %253 : vector<2x64xf32>
    %255 = vector.extract_strided_slice %240 {offsets = [0, 384], sizes = [2, 64], strides = [1, 1]} : vector<2x512xf32> to vector<2x64xf32>
    %256 = arith.negf %255 : vector<2x64xf32>
    %257 = math.exp %256 : vector<2x64xf32>
    %cst_44 = arith.constant 1.000000e+00 : f32
    %258 = vector.broadcast %cst_44 : f32 to vector<2x64xf32>
    %259 = arith.addf %258, %257 : vector<2x64xf32>
    %260 = arith.divf %258, %259 : vector<2x64xf32>
    %261 = arith.mulf %252, %227 : vector<2x64xf32>
    %262 = arith.mulf %246, %254 : vector<2x64xf32>
    %263 = arith.addf %261, %262 : vector<2x64xf32>
    %264 = math.tanh %263 : vector<2x64xf32>
    %265 = arith.mulf %260, %264 : vector<2x64xf32>
    %c6_i32 = arith.constant 6 : i32
    %266 = vector.broadcast %c6_i32 : i32 to vector<2x8x64xi32>
    %267 = arith.cmpi eq, %16, %266 : vector<2x8x64xi32>
    %268 = vector.shape_cast %265 : vector<2x64xf32> to vector<2x1x64xf32>
    %269 = vector.shape_cast %268 : vector<2x1x64xf32> to vector<2x1x64xf32>
    %270 = vector.broadcast %269 : vector<2x1x64xf32> to vector<2x8x64xf32>
    %271 = arith.select %267, %270, %235 : vector<2x8x64xi1>, vector<2x8x64xf32>
    %272 = vector.extract_strided_slice %15 {offsets = [0, 7, 0], sizes = [2, 1, 512], strides = [1, 1, 1]} : vector<2x8x512xf32> to vector<2x1x512xf32>
    %273 = vector.shape_cast %272 : vector<2x1x512xf32> to vector<2x512xf32>
    %274 = arith.truncf %265 : vector<2x64xf32> to vector<2x64xbf16>
    %cst_45 = arith.constant dense<0.000000e+00> : vector<2x512xf32>
    %275 = tpu.matmul %274, %14, %cst_45 {dimension_numbers = #tpu.dot_dimension_numbers<[1], [0], [0], [1], [0, 0, 1, 1], [], []>} : vector<2x64xbf16>, vector<64x512xbf16>, vector<2x512xf32> -> vector<2x512xf32>
    %276 = arith.addf %273, %275 : vector<2x512xf32>
    %277 = vector.extract_strided_slice %276 {offsets = [0, 0], sizes = [2, 64], strides = [1, 1]} : vector<2x512xf32> to vector<2x64xf32>
    %278 = arith.negf %277 : vector<2x64xf32>
    %279 = math.exp %278 : vector<2x64xf32>
    %cst_46 = arith.constant 1.000000e+00 : f32
    %280 = vector.broadcast %cst_46 : f32 to vector<2x64xf32>
    %281 = arith.addf %280, %279 : vector<2x64xf32>
    %282 = arith.divf %280, %281 : vector<2x64xf32>
    %283 = vector.extract_strided_slice %276 {offsets = [0, 128], sizes = [2, 64], strides = [1, 1]} : vector<2x512xf32> to vector<2x64xf32>
    %284 = arith.negf %283 : vector<2x64xf32>
    %285 = math.exp %284 : vector<2x64xf32>
    %cst_47 = arith.constant 1.000000e+00 : f32
    %286 = vector.broadcast %cst_47 : f32 to vector<2x64xf32>
    %287 = arith.addf %286, %285 : vector<2x64xf32>
    %288 = arith.divf %286, %287 : vector<2x64xf32>
    %289 = vector.extract_strided_slice %276 {offsets = [0, 256], sizes = [2, 64], strides = [1, 1]} : vector<2x512xf32> to vector<2x64xf32>
    %290 = math.tanh %289 : vector<2x64xf32>
    %291 = vector.extract_strided_slice %276 {offsets = [0, 384], sizes = [2, 64], strides = [1, 1]} : vector<2x512xf32> to vector<2x64xf32>
    %292 = arith.negf %291 : vector<2x64xf32>
    %293 = math.exp %292 : vector<2x64xf32>
    %cst_48 = arith.constant 1.000000e+00 : f32
    %294 = vector.broadcast %cst_48 : f32 to vector<2x64xf32>
    %295 = arith.addf %294, %293 : vector<2x64xf32>
    %296 = arith.divf %294, %295 : vector<2x64xf32>
    %297 = arith.mulf %288, %263 : vector<2x64xf32>
    %298 = arith.mulf %282, %290 : vector<2x64xf32>
    %299 = arith.addf %297, %298 : vector<2x64xf32>
    %300 = math.tanh %299 : vector<2x64xf32>
    %301 = arith.mulf %296, %300 : vector<2x64xf32>
    %c7_i32 = arith.constant 7 : i32
    %302 = vector.broadcast %c7_i32 : i32 to vector<2x8x64xi32>
    %303 = arith.cmpi eq, %16, %302 : vector<2x8x64xi32>
    %304 = vector.shape_cast %301 : vector<2x64xf32> to vector<2x1x64xf32>
    %305 = vector.shape_cast %304 : vector<2x1x64xf32> to vector<2x1x64xf32>
    %306 = vector.broadcast %305 : vector<2x1x64xf32> to vector<2x8x64xf32>
    %307 = arith.select %303, %306, %271 : vector<2x8x64xi1>, vector<2x8x64xf32>
    %308 = vector.shape_cast %307 : vector<2x8x64xf32> to vector<16x64xf32>
    %309 = arith.truncf %308 : vector<16x64xf32> to vector<16x64xbf16>
    %c0_49 = arith.constant 0 : index
    %c0_50 = arith.constant 0 : index
    %310 = vector.load %arg6[%c0_49, %c0_50] : memref<64x512xbf16, #tpu.memory_space<vmem>>, vector<64x512xbf16>
    %cst_51 = arith.constant dense<0.000000e+00> : vector<16x512xf32>
    %311 = tpu.matmul %309, %310, %cst_51 {dimension_numbers = #tpu.dot_dimension_numbers<[1], [0], [0], [1], [0, 0, 1, 1], [], []>} : vector<16x64xbf16>, vector<64x512xbf16>, vector<16x512xf32> -> vector<16x512xf32>
    %c0_52 = arith.constant 0 : index
    %c0_53 = arith.constant 0 : index
    %312 = vector.load %arg8[%c0_52, %c0_53] : memref<1x512xf32, #tpu.memory_space<vmem>>, vector<1x512xf32>
    %313 = vector.broadcast %312 : vector<1x512xf32> to vector<16x512xf32>
    %314 = arith.addf %311, %313 : vector<16x512xf32>
    %c0_54 = arith.constant 0 : index
    %c0_55 = arith.constant 0 : index
    %315 = vector.load %arg7[%c0_54, %c0_55] : memref<64x512xbf16, #tpu.memory_space<vmem>>, vector<64x512xbf16>
    %316 = vector.shape_cast %314 : vector<16x512xf32> to vector<2x8x512xf32>
    %317 = tpu.iota {dimensions = array<i32: 1>} : vector<2x8x64xi32>
    %cst_56 = arith.constant 0.000000e+00 : f32
    %318 = vector.broadcast %cst_56 : f32 to vector<2x64xf32>
    %cst_57 = arith.constant 0.000000e+00 : f32
    %319 = vector.broadcast %cst_57 : f32 to vector<2x64xf32>
    %cst_58 = arith.constant 0.000000e+00 : f32
    %320 = vector.broadcast %cst_58 : f32 to vector<2x8x64xf32>
    %321 = vector.extract_strided_slice %316 {offsets = [0, 0, 0], sizes = [2, 1, 512], strides = [1, 1, 1]} : vector<2x8x512xf32> to vector<2x1x512xf32>
    %322 = vector.shape_cast %321 : vector<2x1x512xf32> to vector<2x512xf32>
    %323 = arith.truncf %318 : vector<2x64xf32> to vector<2x64xbf16>
    %cst_59 = arith.constant dense<0.000000e+00> : vector<2x512xf32>
    %324 = tpu.matmul %323, %315, %cst_59 {dimension_numbers = #tpu.dot_dimension_numbers<[1], [0], [0], [1], [0, 0, 1, 1], [], []>} : vector<2x64xbf16>, vector<64x512xbf16>, vector<2x512xf32> -> vector<2x512xf32>
    %325 = arith.addf %322, %324 : vector<2x512xf32>
    %326 = vector.extract_strided_slice %325 {offsets = [0, 0], sizes = [2, 64], strides = [1, 1]} : vector<2x512xf32> to vector<2x64xf32>
    %327 = arith.negf %326 : vector<2x64xf32>
    %328 = math.exp %327 : vector<2x64xf32>
    %cst_60 = arith.constant 1.000000e+00 : f32
    %329 = vector.broadcast %cst_60 : f32 to vector<2x64xf32>
    %330 = arith.addf %329, %328 : vector<2x64xf32>
    %331 = arith.divf %329, %330 : vector<2x64xf32>
    %332 = vector.extract_strided_slice %325 {offsets = [0, 128], sizes = [2, 64], strides = [1, 1]} : vector<2x512xf32> to vector<2x64xf32>
    %333 = arith.negf %332 : vector<2x64xf32>
    %334 = math.exp %333 : vector<2x64xf32>
    %cst_61 = arith.constant 1.000000e+00 : f32
    %335 = vector.broadcast %cst_61 : f32 to vector<2x64xf32>
    %336 = arith.addf %335, %334 : vector<2x64xf32>
    %337 = arith.divf %335, %336 : vector<2x64xf32>
    %338 = vector.extract_strided_slice %325 {offsets = [0, 256], sizes = [2, 64], strides = [1, 1]} : vector<2x512xf32> to vector<2x64xf32>
    %339 = math.tanh %338 : vector<2x64xf32>
    %340 = vector.extract_strided_slice %325 {offsets = [0, 384], sizes = [2, 64], strides = [1, 1]} : vector<2x512xf32> to vector<2x64xf32>
    %341 = arith.negf %340 : vector<2x64xf32>
    %342 = math.exp %341 : vector<2x64xf32>
    %cst_62 = arith.constant 1.000000e+00 : f32
    %343 = vector.broadcast %cst_62 : f32 to vector<2x64xf32>
    %344 = arith.addf %343, %342 : vector<2x64xf32>
    %345 = arith.divf %343, %344 : vector<2x64xf32>
    %346 = arith.mulf %337, %319 : vector<2x64xf32>
    %347 = arith.mulf %331, %339 : vector<2x64xf32>
    %348 = arith.addf %346, %347 : vector<2x64xf32>
    %349 = math.tanh %348 : vector<2x64xf32>
    %350 = arith.mulf %345, %349 : vector<2x64xf32>
    %c0_i32_63 = arith.constant 0 : i32
    %351 = vector.broadcast %c0_i32_63 : i32 to vector<2x8x64xi32>
    %352 = arith.cmpi eq, %317, %351 : vector<2x8x64xi32>
    %353 = vector.shape_cast %350 : vector<2x64xf32> to vector<2x1x64xf32>
    %354 = vector.shape_cast %353 : vector<2x1x64xf32> to vector<2x1x64xf32>
    %355 = vector.broadcast %354 : vector<2x1x64xf32> to vector<2x8x64xf32>
    %356 = arith.select %352, %355, %320 : vector<2x8x64xi1>, vector<2x8x64xf32>
    %357 = vector.extract_strided_slice %316 {offsets = [0, 1, 0], sizes = [2, 1, 512], strides = [1, 1, 1]} : vector<2x8x512xf32> to vector<2x1x512xf32>
    %358 = vector.shape_cast %357 : vector<2x1x512xf32> to vector<2x512xf32>
    %359 = arith.truncf %350 : vector<2x64xf32> to vector<2x64xbf16>
    %cst_64 = arith.constant dense<0.000000e+00> : vector<2x512xf32>
    %360 = tpu.matmul %359, %315, %cst_64 {dimension_numbers = #tpu.dot_dimension_numbers<[1], [0], [0], [1], [0, 0, 1, 1], [], []>} : vector<2x64xbf16>, vector<64x512xbf16>, vector<2x512xf32> -> vector<2x512xf32>
    %361 = arith.addf %358, %360 : vector<2x512xf32>
    %362 = vector.extract_strided_slice %361 {offsets = [0, 0], sizes = [2, 64], strides = [1, 1]} : vector<2x512xf32> to vector<2x64xf32>
    %363 = arith.negf %362 : vector<2x64xf32>
    %364 = math.exp %363 : vector<2x64xf32>
    %cst_65 = arith.constant 1.000000e+00 : f32
    %365 = vector.broadcast %cst_65 : f32 to vector<2x64xf32>
    %366 = arith.addf %365, %364 : vector<2x64xf32>
    %367 = arith.divf %365, %366 : vector<2x64xf32>
    %368 = vector.extract_strided_slice %361 {offsets = [0, 128], sizes = [2, 64], strides = [1, 1]} : vector<2x512xf32> to vector<2x64xf32>
    %369 = arith.negf %368 : vector<2x64xf32>
    %370 = math.exp %369 : vector<2x64xf32>
    %cst_66 = arith.constant 1.000000e+00 : f32
    %371 = vector.broadcast %cst_66 : f32 to vector<2x64xf32>
    %372 = arith.addf %371, %370 : vector<2x64xf32>
    %373 = arith.divf %371, %372 : vector<2x64xf32>
    %374 = vector.extract_strided_slice %361 {offsets = [0, 256], sizes = [2, 64], strides = [1, 1]} : vector<2x512xf32> to vector<2x64xf32>
    %375 = math.tanh %374 : vector<2x64xf32>
    %376 = vector.extract_strided_slice %361 {offsets = [0, 384], sizes = [2, 64], strides = [1, 1]} : vector<2x512xf32> to vector<2x64xf32>
    %377 = arith.negf %376 : vector<2x64xf32>
    %378 = math.exp %377 : vector<2x64xf32>
    %cst_67 = arith.constant 1.000000e+00 : f32
    %379 = vector.broadcast %cst_67 : f32 to vector<2x64xf32>
    %380 = arith.addf %379, %378 : vector<2x64xf32>
    %381 = arith.divf %379, %380 : vector<2x64xf32>
    %382 = arith.mulf %373, %348 : vector<2x64xf32>
    %383 = arith.mulf %367, %375 : vector<2x64xf32>
    %384 = arith.addf %382, %383 : vector<2x64xf32>
    %385 = math.tanh %384 : vector<2x64xf32>
    %386 = arith.mulf %381, %385 : vector<2x64xf32>
    %c1_i32_68 = arith.constant 1 : i32
    %387 = vector.broadcast %c1_i32_68 : i32 to vector<2x8x64xi32>
    %388 = arith.cmpi eq, %317, %387 : vector<2x8x64xi32>
    %389 = vector.shape_cast %386 : vector<2x64xf32> to vector<2x1x64xf32>
    %390 = vector.shape_cast %389 : vector<2x1x64xf32> to vector<2x1x64xf32>
    %391 = vector.broadcast %390 : vector<2x1x64xf32> to vector<2x8x64xf32>
    %392 = arith.select %388, %391, %356 : vector<2x8x64xi1>, vector<2x8x64xf32>
    %393 = vector.extract_strided_slice %316 {offsets = [0, 2, 0], sizes = [2, 1, 512], strides = [1, 1, 1]} : vector<2x8x512xf32> to vector<2x1x512xf32>
    %394 = vector.shape_cast %393 : vector<2x1x512xf32> to vector<2x512xf32>
    %395 = arith.truncf %386 : vector<2x64xf32> to vector<2x64xbf16>
    %cst_69 = arith.constant dense<0.000000e+00> : vector<2x512xf32>
    %396 = tpu.matmul %395, %315, %cst_69 {dimension_numbers = #tpu.dot_dimension_numbers<[1], [0], [0], [1], [0, 0, 1, 1], [], []>} : vector<2x64xbf16>, vector<64x512xbf16>, vector<2x512xf32> -> vector<2x512xf32>
    %397 = arith.addf %394, %396 : vector<2x512xf32>
    %398 = vector.extract_strided_slice %397 {offsets = [0, 0], sizes = [2, 64], strides = [1, 1]} : vector<2x512xf32> to vector<2x64xf32>
    %399 = arith.negf %398 : vector<2x64xf32>
    %400 = math.exp %399 : vector<2x64xf32>
    %cst_70 = arith.constant 1.000000e+00 : f32
    %401 = vector.broadcast %cst_70 : f32 to vector<2x64xf32>
    %402 = arith.addf %401, %400 : vector<2x64xf32>
    %403 = arith.divf %401, %402 : vector<2x64xf32>
    %404 = vector.extract_strided_slice %397 {offsets = [0, 128], sizes = [2, 64], strides = [1, 1]} : vector<2x512xf32> to vector<2x64xf32>
    %405 = arith.negf %404 : vector<2x64xf32>
    %406 = math.exp %405 : vector<2x64xf32>
    %cst_71 = arith.constant 1.000000e+00 : f32
    %407 = vector.broadcast %cst_71 : f32 to vector<2x64xf32>
    %408 = arith.addf %407, %406 : vector<2x64xf32>
    %409 = arith.divf %407, %408 : vector<2x64xf32>
    %410 = vector.extract_strided_slice %397 {offsets = [0, 256], sizes = [2, 64], strides = [1, 1]} : vector<2x512xf32> to vector<2x64xf32>
    %411 = math.tanh %410 : vector<2x64xf32>
    %412 = vector.extract_strided_slice %397 {offsets = [0, 384], sizes = [2, 64], strides = [1, 1]} : vector<2x512xf32> to vector<2x64xf32>
    %413 = arith.negf %412 : vector<2x64xf32>
    %414 = math.exp %413 : vector<2x64xf32>
    %cst_72 = arith.constant 1.000000e+00 : f32
    %415 = vector.broadcast %cst_72 : f32 to vector<2x64xf32>
    %416 = arith.addf %415, %414 : vector<2x64xf32>
    %417 = arith.divf %415, %416 : vector<2x64xf32>
    %418 = arith.mulf %409, %384 : vector<2x64xf32>
    %419 = arith.mulf %403, %411 : vector<2x64xf32>
    %420 = arith.addf %418, %419 : vector<2x64xf32>
    %421 = math.tanh %420 : vector<2x64xf32>
    %422 = arith.mulf %417, %421 : vector<2x64xf32>
    %c2_i32_73 = arith.constant 2 : i32
    %423 = vector.broadcast %c2_i32_73 : i32 to vector<2x8x64xi32>
    %424 = arith.cmpi eq, %317, %423 : vector<2x8x64xi32>
    %425 = vector.shape_cast %422 : vector<2x64xf32> to vector<2x1x64xf32>
    %426 = vector.shape_cast %425 : vector<2x1x64xf32> to vector<2x1x64xf32>
    %427 = vector.broadcast %426 : vector<2x1x64xf32> to vector<2x8x64xf32>
    %428 = arith.select %424, %427, %392 : vector<2x8x64xi1>, vector<2x8x64xf32>
    %429 = vector.extract_strided_slice %316 {offsets = [0, 3, 0], sizes = [2, 1, 512], strides = [1, 1, 1]} : vector<2x8x512xf32> to vector<2x1x512xf32>
    %430 = vector.shape_cast %429 : vector<2x1x512xf32> to vector<2x512xf32>
    %431 = arith.truncf %422 : vector<2x64xf32> to vector<2x64xbf16>
    %cst_74 = arith.constant dense<0.000000e+00> : vector<2x512xf32>
    %432 = tpu.matmul %431, %315, %cst_74 {dimension_numbers = #tpu.dot_dimension_numbers<[1], [0], [0], [1], [0, 0, 1, 1], [], []>} : vector<2x64xbf16>, vector<64x512xbf16>, vector<2x512xf32> -> vector<2x512xf32>
    %433 = arith.addf %430, %432 : vector<2x512xf32>
    %434 = vector.extract_strided_slice %433 {offsets = [0, 0], sizes = [2, 64], strides = [1, 1]} : vector<2x512xf32> to vector<2x64xf32>
    %435 = arith.negf %434 : vector<2x64xf32>
    %436 = math.exp %435 : vector<2x64xf32>
    %cst_75 = arith.constant 1.000000e+00 : f32
    %437 = vector.broadcast %cst_75 : f32 to vector<2x64xf32>
    %438 = arith.addf %437, %436 : vector<2x64xf32>
    %439 = arith.divf %437, %438 : vector<2x64xf32>
    %440 = vector.extract_strided_slice %433 {offsets = [0, 128], sizes = [2, 64], strides = [1, 1]} : vector<2x512xf32> to vector<2x64xf32>
    %441 = arith.negf %440 : vector<2x64xf32>
    %442 = math.exp %441 : vector<2x64xf32>
    %cst_76 = arith.constant 1.000000e+00 : f32
    %443 = vector.broadcast %cst_76 : f32 to vector<2x64xf32>
    %444 = arith.addf %443, %442 : vector<2x64xf32>
    %445 = arith.divf %443, %444 : vector<2x64xf32>
    %446 = vector.extract_strided_slice %433 {offsets = [0, 256], sizes = [2, 64], strides = [1, 1]} : vector<2x512xf32> to vector<2x64xf32>
    %447 = math.tanh %446 : vector<2x64xf32>
    %448 = vector.extract_strided_slice %433 {offsets = [0, 384], sizes = [2, 64], strides = [1, 1]} : vector<2x512xf32> to vector<2x64xf32>
    %449 = arith.negf %448 : vector<2x64xf32>
    %450 = math.exp %449 : vector<2x64xf32>
    %cst_77 = arith.constant 1.000000e+00 : f32
    %451 = vector.broadcast %cst_77 : f32 to vector<2x64xf32>
    %452 = arith.addf %451, %450 : vector<2x64xf32>
    %453 = arith.divf %451, %452 : vector<2x64xf32>
    %454 = arith.mulf %445, %420 : vector<2x64xf32>
    %455 = arith.mulf %439, %447 : vector<2x64xf32>
    %456 = arith.addf %454, %455 : vector<2x64xf32>
    %457 = math.tanh %456 : vector<2x64xf32>
    %458 = arith.mulf %453, %457 : vector<2x64xf32>
    %c3_i32_78 = arith.constant 3 : i32
    %459 = vector.broadcast %c3_i32_78 : i32 to vector<2x8x64xi32>
    %460 = arith.cmpi eq, %317, %459 : vector<2x8x64xi32>
    %461 = vector.shape_cast %458 : vector<2x64xf32> to vector<2x1x64xf32>
    %462 = vector.shape_cast %461 : vector<2x1x64xf32> to vector<2x1x64xf32>
    %463 = vector.broadcast %462 : vector<2x1x64xf32> to vector<2x8x64xf32>
    %464 = arith.select %460, %463, %428 : vector<2x8x64xi1>, vector<2x8x64xf32>
    %465 = vector.extract_strided_slice %316 {offsets = [0, 4, 0], sizes = [2, 1, 512], strides = [1, 1, 1]} : vector<2x8x512xf32> to vector<2x1x512xf32>
    %466 = vector.shape_cast %465 : vector<2x1x512xf32> to vector<2x512xf32>
    %467 = arith.truncf %458 : vector<2x64xf32> to vector<2x64xbf16>
    %cst_79 = arith.constant dense<0.000000e+00> : vector<2x512xf32>
    %468 = tpu.matmul %467, %315, %cst_79 {dimension_numbers = #tpu.dot_dimension_numbers<[1], [0], [0], [1], [0, 0, 1, 1], [], []>} : vector<2x64xbf16>, vector<64x512xbf16>, vector<2x512xf32> -> vector<2x512xf32>
    %469 = arith.addf %466, %468 : vector<2x512xf32>
    %470 = vector.extract_strided_slice %469 {offsets = [0, 0], sizes = [2, 64], strides = [1, 1]} : vector<2x512xf32> to vector<2x64xf32>
    %471 = arith.negf %470 : vector<2x64xf32>
    %472 = math.exp %471 : vector<2x64xf32>
    %cst_80 = arith.constant 1.000000e+00 : f32
    %473 = vector.broadcast %cst_80 : f32 to vector<2x64xf32>
    %474 = arith.addf %473, %472 : vector<2x64xf32>
    %475 = arith.divf %473, %474 : vector<2x64xf32>
    %476 = vector.extract_strided_slice %469 {offsets = [0, 128], sizes = [2, 64], strides = [1, 1]} : vector<2x512xf32> to vector<2x64xf32>
    %477 = arith.negf %476 : vector<2x64xf32>
    %478 = math.exp %477 : vector<2x64xf32>
    %cst_81 = arith.constant 1.000000e+00 : f32
    %479 = vector.broadcast %cst_81 : f32 to vector<2x64xf32>
    %480 = arith.addf %479, %478 : vector<2x64xf32>
    %481 = arith.divf %479, %480 : vector<2x64xf32>
    %482 = vector.extract_strided_slice %469 {offsets = [0, 256], sizes = [2, 64], strides = [1, 1]} : vector<2x512xf32> to vector<2x64xf32>
    %483 = math.tanh %482 : vector<2x64xf32>
    %484 = vector.extract_strided_slice %469 {offsets = [0, 384], sizes = [2, 64], strides = [1, 1]} : vector<2x512xf32> to vector<2x64xf32>
    %485 = arith.negf %484 : vector<2x64xf32>
    %486 = math.exp %485 : vector<2x64xf32>
    %cst_82 = arith.constant 1.000000e+00 : f32
    %487 = vector.broadcast %cst_82 : f32 to vector<2x64xf32>
    %488 = arith.addf %487, %486 : vector<2x64xf32>
    %489 = arith.divf %487, %488 : vector<2x64xf32>
    %490 = arith.mulf %481, %456 : vector<2x64xf32>
    %491 = arith.mulf %475, %483 : vector<2x64xf32>
    %492 = arith.addf %490, %491 : vector<2x64xf32>
    %493 = math.tanh %492 : vector<2x64xf32>
    %494 = arith.mulf %489, %493 : vector<2x64xf32>
    %c4_i32_83 = arith.constant 4 : i32
    %495 = vector.broadcast %c4_i32_83 : i32 to vector<2x8x64xi32>
    %496 = arith.cmpi eq, %317, %495 : vector<2x8x64xi32>
    %497 = vector.shape_cast %494 : vector<2x64xf32> to vector<2x1x64xf32>
    %498 = vector.shape_cast %497 : vector<2x1x64xf32> to vector<2x1x64xf32>
    %499 = vector.broadcast %498 : vector<2x1x64xf32> to vector<2x8x64xf32>
    %500 = arith.select %496, %499, %464 : vector<2x8x64xi1>, vector<2x8x64xf32>
    %501 = vector.extract_strided_slice %316 {offsets = [0, 5, 0], sizes = [2, 1, 512], strides = [1, 1, 1]} : vector<2x8x512xf32> to vector<2x1x512xf32>
    %502 = vector.shape_cast %501 : vector<2x1x512xf32> to vector<2x512xf32>
    %503 = arith.truncf %494 : vector<2x64xf32> to vector<2x64xbf16>
    %cst_84 = arith.constant dense<0.000000e+00> : vector<2x512xf32>
    %504 = tpu.matmul %503, %315, %cst_84 {dimension_numbers = #tpu.dot_dimension_numbers<[1], [0], [0], [1], [0, 0, 1, 1], [], []>} : vector<2x64xbf16>, vector<64x512xbf16>, vector<2x512xf32> -> vector<2x512xf32>
    %505 = arith.addf %502, %504 : vector<2x512xf32>
    %506 = vector.extract_strided_slice %505 {offsets = [0, 0], sizes = [2, 64], strides = [1, 1]} : vector<2x512xf32> to vector<2x64xf32>
    %507 = arith.negf %506 : vector<2x64xf32>
    %508 = math.exp %507 : vector<2x64xf32>
    %cst_85 = arith.constant 1.000000e+00 : f32
    %509 = vector.broadcast %cst_85 : f32 to vector<2x64xf32>
    %510 = arith.addf %509, %508 : vector<2x64xf32>
    %511 = arith.divf %509, %510 : vector<2x64xf32>
    %512 = vector.extract_strided_slice %505 {offsets = [0, 128], sizes = [2, 64], strides = [1, 1]} : vector<2x512xf32> to vector<2x64xf32>
    %513 = arith.negf %512 : vector<2x64xf32>
    %514 = math.exp %513 : vector<2x64xf32>
    %cst_86 = arith.constant 1.000000e+00 : f32
    %515 = vector.broadcast %cst_86 : f32 to vector<2x64xf32>
    %516 = arith.addf %515, %514 : vector<2x64xf32>
    %517 = arith.divf %515, %516 : vector<2x64xf32>
    %518 = vector.extract_strided_slice %505 {offsets = [0, 256], sizes = [2, 64], strides = [1, 1]} : vector<2x512xf32> to vector<2x64xf32>
    %519 = math.tanh %518 : vector<2x64xf32>
    %520 = vector.extract_strided_slice %505 {offsets = [0, 384], sizes = [2, 64], strides = [1, 1]} : vector<2x512xf32> to vector<2x64xf32>
    %521 = arith.negf %520 : vector<2x64xf32>
    %522 = math.exp %521 : vector<2x64xf32>
    %cst_87 = arith.constant 1.000000e+00 : f32
    %523 = vector.broadcast %cst_87 : f32 to vector<2x64xf32>
    %524 = arith.addf %523, %522 : vector<2x64xf32>
    %525 = arith.divf %523, %524 : vector<2x64xf32>
    %526 = arith.mulf %517, %492 : vector<2x64xf32>
    %527 = arith.mulf %511, %519 : vector<2x64xf32>
    %528 = arith.addf %526, %527 : vector<2x64xf32>
    %529 = math.tanh %528 : vector<2x64xf32>
    %530 = arith.mulf %525, %529 : vector<2x64xf32>
    %c5_i32_88 = arith.constant 5 : i32
    %531 = vector.broadcast %c5_i32_88 : i32 to vector<2x8x64xi32>
    %532 = arith.cmpi eq, %317, %531 : vector<2x8x64xi32>
    %533 = vector.shape_cast %530 : vector<2x64xf32> to vector<2x1x64xf32>
    %534 = vector.shape_cast %533 : vector<2x1x64xf32> to vector<2x1x64xf32>
    %535 = vector.broadcast %534 : vector<2x1x64xf32> to vector<2x8x64xf32>
    %536 = arith.select %532, %535, %500 : vector<2x8x64xi1>, vector<2x8x64xf32>
    %537 = vector.extract_strided_slice %316 {offsets = [0, 6, 0], sizes = [2, 1, 512], strides = [1, 1, 1]} : vector<2x8x512xf32> to vector<2x1x512xf32>
    %538 = vector.shape_cast %537 : vector<2x1x512xf32> to vector<2x512xf32>
    %539 = arith.truncf %530 : vector<2x64xf32> to vector<2x64xbf16>
    %cst_89 = arith.constant dense<0.000000e+00> : vector<2x512xf32>
    %540 = tpu.matmul %539, %315, %cst_89 {dimension_numbers = #tpu.dot_dimension_numbers<[1], [0], [0], [1], [0, 0, 1, 1], [], []>} : vector<2x64xbf16>, vector<64x512xbf16>, vector<2x512xf32> -> vector<2x512xf32>
    %541 = arith.addf %538, %540 : vector<2x512xf32>
    %542 = vector.extract_strided_slice %541 {offsets = [0, 0], sizes = [2, 64], strides = [1, 1]} : vector<2x512xf32> to vector<2x64xf32>
    %543 = arith.negf %542 : vector<2x64xf32>
    %544 = math.exp %543 : vector<2x64xf32>
    %cst_90 = arith.constant 1.000000e+00 : f32
    %545 = vector.broadcast %cst_90 : f32 to vector<2x64xf32>
    %546 = arith.addf %545, %544 : vector<2x64xf32>
    %547 = arith.divf %545, %546 : vector<2x64xf32>
    %548 = vector.extract_strided_slice %541 {offsets = [0, 128], sizes = [2, 64], strides = [1, 1]} : vector<2x512xf32> to vector<2x64xf32>
    %549 = arith.negf %548 : vector<2x64xf32>
    %550 = math.exp %549 : vector<2x64xf32>
    %cst_91 = arith.constant 1.000000e+00 : f32
    %551 = vector.broadcast %cst_91 : f32 to vector<2x64xf32>
    %552 = arith.addf %551, %550 : vector<2x64xf32>
    %553 = arith.divf %551, %552 : vector<2x64xf32>
    %554 = vector.extract_strided_slice %541 {offsets = [0, 256], sizes = [2, 64], strides = [1, 1]} : vector<2x512xf32> to vector<2x64xf32>
    %555 = math.tanh %554 : vector<2x64xf32>
    %556 = vector.extract_strided_slice %541 {offsets = [0, 384], sizes = [2, 64], strides = [1, 1]} : vector<2x512xf32> to vector<2x64xf32>
    %557 = arith.negf %556 : vector<2x64xf32>
    %558 = math.exp %557 : vector<2x64xf32>
    %cst_92 = arith.constant 1.000000e+00 : f32
    %559 = vector.broadcast %cst_92 : f32 to vector<2x64xf32>
    %560 = arith.addf %559, %558 : vector<2x64xf32>
    %561 = arith.divf %559, %560 : vector<2x64xf32>
    %562 = arith.mulf %553, %528 : vector<2x64xf32>
    %563 = arith.mulf %547, %555 : vector<2x64xf32>
    %564 = arith.addf %562, %563 : vector<2x64xf32>
    %565 = math.tanh %564 : vector<2x64xf32>
    %566 = arith.mulf %561, %565 : vector<2x64xf32>
    %c6_i32_93 = arith.constant 6 : i32
    %567 = vector.broadcast %c6_i32_93 : i32 to vector<2x8x64xi32>
    %568 = arith.cmpi eq, %317, %567 : vector<2x8x64xi32>
    %569 = vector.shape_cast %566 : vector<2x64xf32> to vector<2x1x64xf32>
    %570 = vector.shape_cast %569 : vector<2x1x64xf32> to vector<2x1x64xf32>
    %571 = vector.broadcast %570 : vector<2x1x64xf32> to vector<2x8x64xf32>
    %572 = arith.select %568, %571, %536 : vector<2x8x64xi1>, vector<2x8x64xf32>
    %573 = vector.extract_strided_slice %316 {offsets = [0, 7, 0], sizes = [2, 1, 512], strides = [1, 1, 1]} : vector<2x8x512xf32> to vector<2x1x512xf32>
    %574 = vector.shape_cast %573 : vector<2x1x512xf32> to vector<2x512xf32>
    %575 = arith.truncf %566 : vector<2x64xf32> to vector<2x64xbf16>
    %cst_94 = arith.constant dense<0.000000e+00> : vector<2x512xf32>
    %576 = tpu.matmul %575, %315, %cst_94 {dimension_numbers = #tpu.dot_dimension_numbers<[1], [0], [0], [1], [0, 0, 1, 1], [], []>} : vector<2x64xbf16>, vector<64x512xbf16>, vector<2x512xf32> -> vector<2x512xf32>
    %577 = arith.addf %574, %576 : vector<2x512xf32>
    %578 = vector.extract_strided_slice %577 {offsets = [0, 0], sizes = [2, 64], strides = [1, 1]} : vector<2x512xf32> to vector<2x64xf32>
    %579 = arith.negf %578 : vector<2x64xf32>
    %580 = math.exp %579 : vector<2x64xf32>
    %cst_95 = arith.constant 1.000000e+00 : f32
    %581 = vector.broadcast %cst_95 : f32 to vector<2x64xf32>
    %582 = arith.addf %581, %580 : vector<2x64xf32>
    %583 = arith.divf %581, %582 : vector<2x64xf32>
    %584 = vector.extract_strided_slice %577 {offsets = [0, 128], sizes = [2, 64], strides = [1, 1]} : vector<2x512xf32> to vector<2x64xf32>
    %585 = arith.negf %584 : vector<2x64xf32>
    %586 = math.exp %585 : vector<2x64xf32>
    %cst_96 = arith.constant 1.000000e+00 : f32
    %587 = vector.broadcast %cst_96 : f32 to vector<2x64xf32>
    %588 = arith.addf %587, %586 : vector<2x64xf32>
    %589 = arith.divf %587, %588 : vector<2x64xf32>
    %590 = vector.extract_strided_slice %577 {offsets = [0, 256], sizes = [2, 64], strides = [1, 1]} : vector<2x512xf32> to vector<2x64xf32>
    %591 = math.tanh %590 : vector<2x64xf32>
    %592 = vector.extract_strided_slice %577 {offsets = [0, 384], sizes = [2, 64], strides = [1, 1]} : vector<2x512xf32> to vector<2x64xf32>
    %593 = arith.negf %592 : vector<2x64xf32>
    %594 = math.exp %593 : vector<2x64xf32>
    %cst_97 = arith.constant 1.000000e+00 : f32
    %595 = vector.broadcast %cst_97 : f32 to vector<2x64xf32>
    %596 = arith.addf %595, %594 : vector<2x64xf32>
    %597 = arith.divf %595, %596 : vector<2x64xf32>
    %598 = arith.mulf %589, %564 : vector<2x64xf32>
    %599 = arith.mulf %583, %591 : vector<2x64xf32>
    %600 = arith.addf %598, %599 : vector<2x64xf32>
    %601 = math.tanh %600 : vector<2x64xf32>
    %602 = arith.mulf %597, %601 : vector<2x64xf32>
    %c7_i32_98 = arith.constant 7 : i32
    %603 = vector.broadcast %c7_i32_98 : i32 to vector<2x8x64xi32>
    %604 = arith.cmpi eq, %317, %603 : vector<2x8x64xi32>
    %605 = vector.shape_cast %602 : vector<2x64xf32> to vector<2x1x64xf32>
    %606 = vector.shape_cast %605 : vector<2x1x64xf32> to vector<2x1x64xf32>
    %607 = vector.broadcast %606 : vector<2x1x64xf32> to vector<2x8x64xf32>
    %608 = arith.select %604, %607, %572 : vector<2x8x64xi1>, vector<2x8x64xf32>
    %609 = vector.shape_cast %608 : vector<2x8x64xf32> to vector<16x64xf32>
    %610 = arith.truncf %609 : vector<16x64xf32> to vector<16x64xbf16>
    %c0_99 = arith.constant 0 : index
    %c0_100 = arith.constant 0 : index
    %611 = vector.load %arg9[%c0_99, %c0_100] : memref<64x512xbf16, #tpu.memory_space<vmem>>, vector<64x512xbf16>
    %cst_101 = arith.constant dense<0.000000e+00> : vector<16x512xf32>
    %612 = tpu.matmul %610, %611, %cst_101 {dimension_numbers = #tpu.dot_dimension_numbers<[1], [0], [0], [1], [0, 0, 1, 1], [], []>} : vector<16x64xbf16>, vector<64x512xbf16>, vector<16x512xf32> -> vector<16x512xf32>
    %c0_102 = arith.constant 0 : index
    %c0_103 = arith.constant 0 : index
    %613 = vector.load %arg11[%c0_102, %c0_103] : memref<1x512xf32, #tpu.memory_space<vmem>>, vector<1x512xf32>
    %614 = vector.broadcast %613 : vector<1x512xf32> to vector<16x512xf32>
    %615 = arith.addf %612, %614 : vector<16x512xf32>
    %c0_104 = arith.constant 0 : index
    %c0_105 = arith.constant 0 : index
    %616 = vector.load %arg10[%c0_104, %c0_105] : memref<64x512xbf16, #tpu.memory_space<vmem>>, vector<64x512xbf16>
    %617 = vector.shape_cast %615 : vector<16x512xf32> to vector<2x8x512xf32>
    %618 = tpu.iota {dimensions = array<i32: 1>} : vector<2x8x64xi32>
    %cst_106 = arith.constant 0.000000e+00 : f32
    %619 = vector.broadcast %cst_106 : f32 to vector<2x64xf32>
    %cst_107 = arith.constant 0.000000e+00 : f32
    %620 = vector.broadcast %cst_107 : f32 to vector<2x64xf32>
    %cst_108 = arith.constant 0.000000e+00 : f32
    %621 = vector.broadcast %cst_108 : f32 to vector<2x8x64xf32>
    %622 = vector.extract_strided_slice %617 {offsets = [0, 0, 0], sizes = [2, 1, 512], strides = [1, 1, 1]} : vector<2x8x512xf32> to vector<2x1x512xf32>
    %623 = vector.shape_cast %622 : vector<2x1x512xf32> to vector<2x512xf32>
    %624 = arith.truncf %619 : vector<2x64xf32> to vector<2x64xbf16>
    %cst_109 = arith.constant dense<0.000000e+00> : vector<2x512xf32>
    %625 = tpu.matmul %624, %616, %cst_109 {dimension_numbers = #tpu.dot_dimension_numbers<[1], [0], [0], [1], [0, 0, 1, 1], [], []>} : vector<2x64xbf16>, vector<64x512xbf16>, vector<2x512xf32> -> vector<2x512xf32>
    %626 = arith.addf %623, %625 : vector<2x512xf32>
    %627 = vector.extract_strided_slice %626 {offsets = [0, 0], sizes = [2, 64], strides = [1, 1]} : vector<2x512xf32> to vector<2x64xf32>
    %628 = arith.negf %627 : vector<2x64xf32>
    %629 = math.exp %628 : vector<2x64xf32>
    %cst_110 = arith.constant 1.000000e+00 : f32
    %630 = vector.broadcast %cst_110 : f32 to vector<2x64xf32>
    %631 = arith.addf %630, %629 : vector<2x64xf32>
    %632 = arith.divf %630, %631 : vector<2x64xf32>
    %633 = vector.extract_strided_slice %626 {offsets = [0, 128], sizes = [2, 64], strides = [1, 1]} : vector<2x512xf32> to vector<2x64xf32>
    %634 = arith.negf %633 : vector<2x64xf32>
    %635 = math.exp %634 : vector<2x64xf32>
    %cst_111 = arith.constant 1.000000e+00 : f32
    %636 = vector.broadcast %cst_111 : f32 to vector<2x64xf32>
    %637 = arith.addf %636, %635 : vector<2x64xf32>
    %638 = arith.divf %636, %637 : vector<2x64xf32>
    %639 = vector.extract_strided_slice %626 {offsets = [0, 256], sizes = [2, 64], strides = [1, 1]} : vector<2x512xf32> to vector<2x64xf32>
    %640 = math.tanh %639 : vector<2x64xf32>
    %641 = vector.extract_strided_slice %626 {offsets = [0, 384], sizes = [2, 64], strides = [1, 1]} : vector<2x512xf32> to vector<2x64xf32>
    %642 = arith.negf %641 : vector<2x64xf32>
    %643 = math.exp %642 : vector<2x64xf32>
    %cst_112 = arith.constant 1.000000e+00 : f32
    %644 = vector.broadcast %cst_112 : f32 to vector<2x64xf32>
    %645 = arith.addf %644, %643 : vector<2x64xf32>
    %646 = arith.divf %644, %645 : vector<2x64xf32>
    %647 = arith.mulf %638, %620 : vector<2x64xf32>
    %648 = arith.mulf %632, %640 : vector<2x64xf32>
    %649 = arith.addf %647, %648 : vector<2x64xf32>
    %650 = math.tanh %649 : vector<2x64xf32>
    %651 = arith.mulf %646, %650 : vector<2x64xf32>
    %c0_i32_113 = arith.constant 0 : i32
    %652 = vector.broadcast %c0_i32_113 : i32 to vector<2x8x64xi32>
    %653 = arith.cmpi eq, %618, %652 : vector<2x8x64xi32>
    %654 = vector.shape_cast %651 : vector<2x64xf32> to vector<2x1x64xf32>
    %655 = vector.shape_cast %654 : vector<2x1x64xf32> to vector<2x1x64xf32>
    %656 = vector.broadcast %655 : vector<2x1x64xf32> to vector<2x8x64xf32>
    %657 = arith.select %653, %656, %621 : vector<2x8x64xi1>, vector<2x8x64xf32>
    %658 = vector.extract_strided_slice %617 {offsets = [0, 1, 0], sizes = [2, 1, 512], strides = [1, 1, 1]} : vector<2x8x512xf32> to vector<2x1x512xf32>
    %659 = vector.shape_cast %658 : vector<2x1x512xf32> to vector<2x512xf32>
    %660 = arith.truncf %651 : vector<2x64xf32> to vector<2x64xbf16>
    %cst_114 = arith.constant dense<0.000000e+00> : vector<2x512xf32>
    %661 = tpu.matmul %660, %616, %cst_114 {dimension_numbers = #tpu.dot_dimension_numbers<[1], [0], [0], [1], [0, 0, 1, 1], [], []>} : vector<2x64xbf16>, vector<64x512xbf16>, vector<2x512xf32> -> vector<2x512xf32>
    %662 = arith.addf %659, %661 : vector<2x512xf32>
    %663 = vector.extract_strided_slice %662 {offsets = [0, 0], sizes = [2, 64], strides = [1, 1]} : vector<2x512xf32> to vector<2x64xf32>
    %664 = arith.negf %663 : vector<2x64xf32>
    %665 = math.exp %664 : vector<2x64xf32>
    %cst_115 = arith.constant 1.000000e+00 : f32
    %666 = vector.broadcast %cst_115 : f32 to vector<2x64xf32>
    %667 = arith.addf %666, %665 : vector<2x64xf32>
    %668 = arith.divf %666, %667 : vector<2x64xf32>
    %669 = vector.extract_strided_slice %662 {offsets = [0, 128], sizes = [2, 64], strides = [1, 1]} : vector<2x512xf32> to vector<2x64xf32>
    %670 = arith.negf %669 : vector<2x64xf32>
    %671 = math.exp %670 : vector<2x64xf32>
    %cst_116 = arith.constant 1.000000e+00 : f32
    %672 = vector.broadcast %cst_116 : f32 to vector<2x64xf32>
    %673 = arith.addf %672, %671 : vector<2x64xf32>
    %674 = arith.divf %672, %673 : vector<2x64xf32>
    %675 = vector.extract_strided_slice %662 {offsets = [0, 256], sizes = [2, 64], strides = [1, 1]} : vector<2x512xf32> to vector<2x64xf32>
    %676 = math.tanh %675 : vector<2x64xf32>
    %677 = vector.extract_strided_slice %662 {offsets = [0, 384], sizes = [2, 64], strides = [1, 1]} : vector<2x512xf32> to vector<2x64xf32>
    %678 = arith.negf %677 : vector<2x64xf32>
    %679 = math.exp %678 : vector<2x64xf32>
    %cst_117 = arith.constant 1.000000e+00 : f32
    %680 = vector.broadcast %cst_117 : f32 to vector<2x64xf32>
    %681 = arith.addf %680, %679 : vector<2x64xf32>
    %682 = arith.divf %680, %681 : vector<2x64xf32>
    %683 = arith.mulf %674, %649 : vector<2x64xf32>
    %684 = arith.mulf %668, %676 : vector<2x64xf32>
    %685 = arith.addf %683, %684 : vector<2x64xf32>
    %686 = math.tanh %685 : vector<2x64xf32>
    %687 = arith.mulf %682, %686 : vector<2x64xf32>
    %c1_i32_118 = arith.constant 1 : i32
    %688 = vector.broadcast %c1_i32_118 : i32 to vector<2x8x64xi32>
    %689 = arith.cmpi eq, %618, %688 : vector<2x8x64xi32>
    %690 = vector.shape_cast %687 : vector<2x64xf32> to vector<2x1x64xf32>
    %691 = vector.shape_cast %690 : vector<2x1x64xf32> to vector<2x1x64xf32>
    %692 = vector.broadcast %691 : vector<2x1x64xf32> to vector<2x8x64xf32>
    %693 = arith.select %689, %692, %657 : vector<2x8x64xi1>, vector<2x8x64xf32>
    %694 = vector.extract_strided_slice %617 {offsets = [0, 2, 0], sizes = [2, 1, 512], strides = [1, 1, 1]} : vector<2x8x512xf32> to vector<2x1x512xf32>
    %695 = vector.shape_cast %694 : vector<2x1x512xf32> to vector<2x512xf32>
    %696 = arith.truncf %687 : vector<2x64xf32> to vector<2x64xbf16>
    %cst_119 = arith.constant dense<0.000000e+00> : vector<2x512xf32>
    %697 = tpu.matmul %696, %616, %cst_119 {dimension_numbers = #tpu.dot_dimension_numbers<[1], [0], [0], [1], [0, 0, 1, 1], [], []>} : vector<2x64xbf16>, vector<64x512xbf16>, vector<2x512xf32> -> vector<2x512xf32>
    %698 = arith.addf %695, %697 : vector<2x512xf32>
    %699 = vector.extract_strided_slice %698 {offsets = [0, 0], sizes = [2, 64], strides = [1, 1]} : vector<2x512xf32> to vector<2x64xf32>
    %700 = arith.negf %699 : vector<2x64xf32>
    %701 = math.exp %700 : vector<2x64xf32>
    %cst_120 = arith.constant 1.000000e+00 : f32
    %702 = vector.broadcast %cst_120 : f32 to vector<2x64xf32>
    %703 = arith.addf %702, %701 : vector<2x64xf32>
    %704 = arith.divf %702, %703 : vector<2x64xf32>
    %705 = vector.extract_strided_slice %698 {offsets = [0, 128], sizes = [2, 64], strides = [1, 1]} : vector<2x512xf32> to vector<2x64xf32>
    %706 = arith.negf %705 : vector<2x64xf32>
    %707 = math.exp %706 : vector<2x64xf32>
    %cst_121 = arith.constant 1.000000e+00 : f32
    %708 = vector.broadcast %cst_121 : f32 to vector<2x64xf32>
    %709 = arith.addf %708, %707 : vector<2x64xf32>
    %710 = arith.divf %708, %709 : vector<2x64xf32>
    %711 = vector.extract_strided_slice %698 {offsets = [0, 256], sizes = [2, 64], strides = [1, 1]} : vector<2x512xf32> to vector<2x64xf32>
    %712 = math.tanh %711 : vector<2x64xf32>
    %713 = vector.extract_strided_slice %698 {offsets = [0, 384], sizes = [2, 64], strides = [1, 1]} : vector<2x512xf32> to vector<2x64xf32>
    %714 = arith.negf %713 : vector<2x64xf32>
    %715 = math.exp %714 : vector<2x64xf32>
    %cst_122 = arith.constant 1.000000e+00 : f32
    %716 = vector.broadcast %cst_122 : f32 to vector<2x64xf32>
    %717 = arith.addf %716, %715 : vector<2x64xf32>
    %718 = arith.divf %716, %717 : vector<2x64xf32>
    %719 = arith.mulf %710, %685 : vector<2x64xf32>
    %720 = arith.mulf %704, %712 : vector<2x64xf32>
    %721 = arith.addf %719, %720 : vector<2x64xf32>
    %722 = math.tanh %721 : vector<2x64xf32>
    %723 = arith.mulf %718, %722 : vector<2x64xf32>
    %c2_i32_123 = arith.constant 2 : i32
    %724 = vector.broadcast %c2_i32_123 : i32 to vector<2x8x64xi32>
    %725 = arith.cmpi eq, %618, %724 : vector<2x8x64xi32>
    %726 = vector.shape_cast %723 : vector<2x64xf32> to vector<2x1x64xf32>
    %727 = vector.shape_cast %726 : vector<2x1x64xf32> to vector<2x1x64xf32>
    %728 = vector.broadcast %727 : vector<2x1x64xf32> to vector<2x8x64xf32>
    %729 = arith.select %725, %728, %693 : vector<2x8x64xi1>, vector<2x8x64xf32>
    %730 = vector.extract_strided_slice %617 {offsets = [0, 3, 0], sizes = [2, 1, 512], strides = [1, 1, 1]} : vector<2x8x512xf32> to vector<2x1x512xf32>
    %731 = vector.shape_cast %730 : vector<2x1x512xf32> to vector<2x512xf32>
    %732 = arith.truncf %723 : vector<2x64xf32> to vector<2x64xbf16>
    %cst_124 = arith.constant dense<0.000000e+00> : vector<2x512xf32>
    %733 = tpu.matmul %732, %616, %cst_124 {dimension_numbers = #tpu.dot_dimension_numbers<[1], [0], [0], [1], [0, 0, 1, 1], [], []>} : vector<2x64xbf16>, vector<64x512xbf16>, vector<2x512xf32> -> vector<2x512xf32>
    %734 = arith.addf %731, %733 : vector<2x512xf32>
    %735 = vector.extract_strided_slice %734 {offsets = [0, 0], sizes = [2, 64], strides = [1, 1]} : vector<2x512xf32> to vector<2x64xf32>
    %736 = arith.negf %735 : vector<2x64xf32>
    %737 = math.exp %736 : vector<2x64xf32>
    %cst_125 = arith.constant 1.000000e+00 : f32
    %738 = vector.broadcast %cst_125 : f32 to vector<2x64xf32>
    %739 = arith.addf %738, %737 : vector<2x64xf32>
    %740 = arith.divf %738, %739 : vector<2x64xf32>
    %741 = vector.extract_strided_slice %734 {offsets = [0, 128], sizes = [2, 64], strides = [1, 1]} : vector<2x512xf32> to vector<2x64xf32>
    %742 = arith.negf %741 : vector<2x64xf32>
    %743 = math.exp %742 : vector<2x64xf32>
    %cst_126 = arith.constant 1.000000e+00 : f32
    %744 = vector.broadcast %cst_126 : f32 to vector<2x64xf32>
    %745 = arith.addf %744, %743 : vector<2x64xf32>
    %746 = arith.divf %744, %745 : vector<2x64xf32>
    %747 = vector.extract_strided_slice %734 {offsets = [0, 256], sizes = [2, 64], strides = [1, 1]} : vector<2x512xf32> to vector<2x64xf32>
    %748 = math.tanh %747 : vector<2x64xf32>
    %749 = vector.extract_strided_slice %734 {offsets = [0, 384], sizes = [2, 64], strides = [1, 1]} : vector<2x512xf32> to vector<2x64xf32>
    %750 = arith.negf %749 : vector<2x64xf32>
    %751 = math.exp %750 : vector<2x64xf32>
    %cst_127 = arith.constant 1.000000e+00 : f32
    %752 = vector.broadcast %cst_127 : f32 to vector<2x64xf32>
    %753 = arith.addf %752, %751 : vector<2x64xf32>
    %754 = arith.divf %752, %753 : vector<2x64xf32>
    %755 = arith.mulf %746, %721 : vector<2x64xf32>
    %756 = arith.mulf %740, %748 : vector<2x64xf32>
    %757 = arith.addf %755, %756 : vector<2x64xf32>
    %758 = math.tanh %757 : vector<2x64xf32>
    %759 = arith.mulf %754, %758 : vector<2x64xf32>
    %c3_i32_128 = arith.constant 3 : i32
    %760 = vector.broadcast %c3_i32_128 : i32 to vector<2x8x64xi32>
    %761 = arith.cmpi eq, %618, %760 : vector<2x8x64xi32>
    %762 = vector.shape_cast %759 : vector<2x64xf32> to vector<2x1x64xf32>
    %763 = vector.shape_cast %762 : vector<2x1x64xf32> to vector<2x1x64xf32>
    %764 = vector.broadcast %763 : vector<2x1x64xf32> to vector<2x8x64xf32>
    %765 = arith.select %761, %764, %729 : vector<2x8x64xi1>, vector<2x8x64xf32>
    %766 = vector.extract_strided_slice %617 {offsets = [0, 4, 0], sizes = [2, 1, 512], strides = [1, 1, 1]} : vector<2x8x512xf32> to vector<2x1x512xf32>
    %767 = vector.shape_cast %766 : vector<2x1x512xf32> to vector<2x512xf32>
    %768 = arith.truncf %759 : vector<2x64xf32> to vector<2x64xbf16>
    %cst_129 = arith.constant dense<0.000000e+00> : vector<2x512xf32>
    %769 = tpu.matmul %768, %616, %cst_129 {dimension_numbers = #tpu.dot_dimension_numbers<[1], [0], [0], [1], [0, 0, 1, 1], [], []>} : vector<2x64xbf16>, vector<64x512xbf16>, vector<2x512xf32> -> vector<2x512xf32>
    %770 = arith.addf %767, %769 : vector<2x512xf32>
    %771 = vector.extract_strided_slice %770 {offsets = [0, 0], sizes = [2, 64], strides = [1, 1]} : vector<2x512xf32> to vector<2x64xf32>
    %772 = arith.negf %771 : vector<2x64xf32>
    %773 = math.exp %772 : vector<2x64xf32>
    %cst_130 = arith.constant 1.000000e+00 : f32
    %774 = vector.broadcast %cst_130 : f32 to vector<2x64xf32>
    %775 = arith.addf %774, %773 : vector<2x64xf32>
    %776 = arith.divf %774, %775 : vector<2x64xf32>
    %777 = vector.extract_strided_slice %770 {offsets = [0, 128], sizes = [2, 64], strides = [1, 1]} : vector<2x512xf32> to vector<2x64xf32>
    %778 = arith.negf %777 : vector<2x64xf32>
    %779 = math.exp %778 : vector<2x64xf32>
    %cst_131 = arith.constant 1.000000e+00 : f32
    %780 = vector.broadcast %cst_131 : f32 to vector<2x64xf32>
    %781 = arith.addf %780, %779 : vector<2x64xf32>
    %782 = arith.divf %780, %781 : vector<2x64xf32>
    %783 = vector.extract_strided_slice %770 {offsets = [0, 256], sizes = [2, 64], strides = [1, 1]} : vector<2x512xf32> to vector<2x64xf32>
    %784 = math.tanh %783 : vector<2x64xf32>
    %785 = vector.extract_strided_slice %770 {offsets = [0, 384], sizes = [2, 64], strides = [1, 1]} : vector<2x512xf32> to vector<2x64xf32>
    %786 = arith.negf %785 : vector<2x64xf32>
    %787 = math.exp %786 : vector<2x64xf32>
    %cst_132 = arith.constant 1.000000e+00 : f32
    %788 = vector.broadcast %cst_132 : f32 to vector<2x64xf32>
    %789 = arith.addf %788, %787 : vector<2x64xf32>
    %790 = arith.divf %788, %789 : vector<2x64xf32>
    %791 = arith.mulf %782, %757 : vector<2x64xf32>
    %792 = arith.mulf %776, %784 : vector<2x64xf32>
    %793 = arith.addf %791, %792 : vector<2x64xf32>
    %794 = math.tanh %793 : vector<2x64xf32>
    %795 = arith.mulf %790, %794 : vector<2x64xf32>
    %c4_i32_133 = arith.constant 4 : i32
    %796 = vector.broadcast %c4_i32_133 : i32 to vector<2x8x64xi32>
    %797 = arith.cmpi eq, %618, %796 : vector<2x8x64xi32>
    %798 = vector.shape_cast %795 : vector<2x64xf32> to vector<2x1x64xf32>
    %799 = vector.shape_cast %798 : vector<2x1x64xf32> to vector<2x1x64xf32>
    %800 = vector.broadcast %799 : vector<2x1x64xf32> to vector<2x8x64xf32>
    %801 = arith.select %797, %800, %765 : vector<2x8x64xi1>, vector<2x8x64xf32>
    %802 = vector.extract_strided_slice %617 {offsets = [0, 5, 0], sizes = [2, 1, 512], strides = [1, 1, 1]} : vector<2x8x512xf32> to vector<2x1x512xf32>
    %803 = vector.shape_cast %802 : vector<2x1x512xf32> to vector<2x512xf32>
    %804 = arith.truncf %795 : vector<2x64xf32> to vector<2x64xbf16>
    %cst_134 = arith.constant dense<0.000000e+00> : vector<2x512xf32>
    %805 = tpu.matmul %804, %616, %cst_134 {dimension_numbers = #tpu.dot_dimension_numbers<[1], [0], [0], [1], [0, 0, 1, 1], [], []>} : vector<2x64xbf16>, vector<64x512xbf16>, vector<2x512xf32> -> vector<2x512xf32>
    %806 = arith.addf %803, %805 : vector<2x512xf32>
    %807 = vector.extract_strided_slice %806 {offsets = [0, 0], sizes = [2, 64], strides = [1, 1]} : vector<2x512xf32> to vector<2x64xf32>
    %808 = arith.negf %807 : vector<2x64xf32>
    %809 = math.exp %808 : vector<2x64xf32>
    %cst_135 = arith.constant 1.000000e+00 : f32
    %810 = vector.broadcast %cst_135 : f32 to vector<2x64xf32>
    %811 = arith.addf %810, %809 : vector<2x64xf32>
    %812 = arith.divf %810, %811 : vector<2x64xf32>
    %813 = vector.extract_strided_slice %806 {offsets = [0, 128], sizes = [2, 64], strides = [1, 1]} : vector<2x512xf32> to vector<2x64xf32>
    %814 = arith.negf %813 : vector<2x64xf32>
    %815 = math.exp %814 : vector<2x64xf32>
    %cst_136 = arith.constant 1.000000e+00 : f32
    %816 = vector.broadcast %cst_136 : f32 to vector<2x64xf32>
    %817 = arith.addf %816, %815 : vector<2x64xf32>
    %818 = arith.divf %816, %817 : vector<2x64xf32>
    %819 = vector.extract_strided_slice %806 {offsets = [0, 256], sizes = [2, 64], strides = [1, 1]} : vector<2x512xf32> to vector<2x64xf32>
    %820 = math.tanh %819 : vector<2x64xf32>
    %821 = vector.extract_strided_slice %806 {offsets = [0, 384], sizes = [2, 64], strides = [1, 1]} : vector<2x512xf32> to vector<2x64xf32>
    %822 = arith.negf %821 : vector<2x64xf32>
    %823 = math.exp %822 : vector<2x64xf32>
    %cst_137 = arith.constant 1.000000e+00 : f32
    %824 = vector.broadcast %cst_137 : f32 to vector<2x64xf32>
    %825 = arith.addf %824, %823 : vector<2x64xf32>
    %826 = arith.divf %824, %825 : vector<2x64xf32>
    %827 = arith.mulf %818, %793 : vector<2x64xf32>
    %828 = arith.mulf %812, %820 : vector<2x64xf32>
    %829 = arith.addf %827, %828 : vector<2x64xf32>
    %830 = math.tanh %829 : vector<2x64xf32>
    %831 = arith.mulf %826, %830 : vector<2x64xf32>
    %c5_i32_138 = arith.constant 5 : i32
    %832 = vector.broadcast %c5_i32_138 : i32 to vector<2x8x64xi32>
    %833 = arith.cmpi eq, %618, %832 : vector<2x8x64xi32>
    %834 = vector.shape_cast %831 : vector<2x64xf32> to vector<2x1x64xf32>
    %835 = vector.shape_cast %834 : vector<2x1x64xf32> to vector<2x1x64xf32>
    %836 = vector.broadcast %835 : vector<2x1x64xf32> to vector<2x8x64xf32>
    %837 = arith.select %833, %836, %801 : vector<2x8x64xi1>, vector<2x8x64xf32>
    %838 = vector.extract_strided_slice %617 {offsets = [0, 6, 0], sizes = [2, 1, 512], strides = [1, 1, 1]} : vector<2x8x512xf32> to vector<2x1x512xf32>
    %839 = vector.shape_cast %838 : vector<2x1x512xf32> to vector<2x512xf32>
    %840 = arith.truncf %831 : vector<2x64xf32> to vector<2x64xbf16>
    %cst_139 = arith.constant dense<0.000000e+00> : vector<2x512xf32>
    %841 = tpu.matmul %840, %616, %cst_139 {dimension_numbers = #tpu.dot_dimension_numbers<[1], [0], [0], [1], [0, 0, 1, 1], [], []>} : vector<2x64xbf16>, vector<64x512xbf16>, vector<2x512xf32> -> vector<2x512xf32>
    %842 = arith.addf %839, %841 : vector<2x512xf32>
    %843 = vector.extract_strided_slice %842 {offsets = [0, 0], sizes = [2, 64], strides = [1, 1]} : vector<2x512xf32> to vector<2x64xf32>
    %844 = arith.negf %843 : vector<2x64xf32>
    %845 = math.exp %844 : vector<2x64xf32>
    %cst_140 = arith.constant 1.000000e+00 : f32
    %846 = vector.broadcast %cst_140 : f32 to vector<2x64xf32>
    %847 = arith.addf %846, %845 : vector<2x64xf32>
    %848 = arith.divf %846, %847 : vector<2x64xf32>
    %849 = vector.extract_strided_slice %842 {offsets = [0, 128], sizes = [2, 64], strides = [1, 1]} : vector<2x512xf32> to vector<2x64xf32>
    %850 = arith.negf %849 : vector<2x64xf32>
    %851 = math.exp %850 : vector<2x64xf32>
    %cst_141 = arith.constant 1.000000e+00 : f32
    %852 = vector.broadcast %cst_141 : f32 to vector<2x64xf32>
    %853 = arith.addf %852, %851 : vector<2x64xf32>
    %854 = arith.divf %852, %853 : vector<2x64xf32>
    %855 = vector.extract_strided_slice %842 {offsets = [0, 256], sizes = [2, 64], strides = [1, 1]} : vector<2x512xf32> to vector<2x64xf32>
    %856 = math.tanh %855 : vector<2x64xf32>
    %857 = vector.extract_strided_slice %842 {offsets = [0, 384], sizes = [2, 64], strides = [1, 1]} : vector<2x512xf32> to vector<2x64xf32>
    %858 = arith.negf %857 : vector<2x64xf32>
    %859 = math.exp %858 : vector<2x64xf32>
    %cst_142 = arith.constant 1.000000e+00 : f32
    %860 = vector.broadcast %cst_142 : f32 to vector<2x64xf32>
    %861 = arith.addf %860, %859 : vector<2x64xf32>
    %862 = arith.divf %860, %861 : vector<2x64xf32>
    %863 = arith.mulf %854, %829 : vector<2x64xf32>
    %864 = arith.mulf %848, %856 : vector<2x64xf32>
    %865 = arith.addf %863, %864 : vector<2x64xf32>
    %866 = math.tanh %865 : vector<2x64xf32>
    %867 = arith.mulf %862, %866 : vector<2x64xf32>
    %c6_i32_143 = arith.constant 6 : i32
    %868 = vector.broadcast %c6_i32_143 : i32 to vector<2x8x64xi32>
    %869 = arith.cmpi eq, %618, %868 : vector<2x8x64xi32>
    %870 = vector.shape_cast %867 : vector<2x64xf32> to vector<2x1x64xf32>
    %871 = vector.shape_cast %870 : vector<2x1x64xf32> to vector<2x1x64xf32>
    %872 = vector.broadcast %871 : vector<2x1x64xf32> to vector<2x8x64xf32>
    %873 = arith.select %869, %872, %837 : vector<2x8x64xi1>, vector<2x8x64xf32>
    %874 = vector.extract_strided_slice %617 {offsets = [0, 7, 0], sizes = [2, 1, 512], strides = [1, 1, 1]} : vector<2x8x512xf32> to vector<2x1x512xf32>
    %875 = vector.shape_cast %874 : vector<2x1x512xf32> to vector<2x512xf32>
    %876 = arith.truncf %867 : vector<2x64xf32> to vector<2x64xbf16>
    %cst_144 = arith.constant dense<0.000000e+00> : vector<2x512xf32>
    %877 = tpu.matmul %876, %616, %cst_144 {dimension_numbers = #tpu.dot_dimension_numbers<[1], [0], [0], [1], [0, 0, 1, 1], [], []>} : vector<2x64xbf16>, vector<64x512xbf16>, vector<2x512xf32> -> vector<2x512xf32>
    %878 = arith.addf %875, %877 : vector<2x512xf32>
    %879 = vector.extract_strided_slice %878 {offsets = [0, 0], sizes = [2, 64], strides = [1, 1]} : vector<2x512xf32> to vector<2x64xf32>
    %880 = arith.negf %879 : vector<2x64xf32>
    %881 = math.exp %880 : vector<2x64xf32>
    %cst_145 = arith.constant 1.000000e+00 : f32
    %882 = vector.broadcast %cst_145 : f32 to vector<2x64xf32>
    %883 = arith.addf %882, %881 : vector<2x64xf32>
    %884 = arith.divf %882, %883 : vector<2x64xf32>
    %885 = vector.extract_strided_slice %878 {offsets = [0, 128], sizes = [2, 64], strides = [1, 1]} : vector<2x512xf32> to vector<2x64xf32>
    %886 = arith.negf %885 : vector<2x64xf32>
    %887 = math.exp %886 : vector<2x64xf32>
    %cst_146 = arith.constant 1.000000e+00 : f32
    %888 = vector.broadcast %cst_146 : f32 to vector<2x64xf32>
    %889 = arith.addf %888, %887 : vector<2x64xf32>
    %890 = arith.divf %888, %889 : vector<2x64xf32>
    %891 = vector.extract_strided_slice %878 {offsets = [0, 256], sizes = [2, 64], strides = [1, 1]} : vector<2x512xf32> to vector<2x64xf32>
    %892 = math.tanh %891 : vector<2x64xf32>
    %893 = vector.extract_strided_slice %878 {offsets = [0, 384], sizes = [2, 64], strides = [1, 1]} : vector<2x512xf32> to vector<2x64xf32>
    %894 = arith.negf %893 : vector<2x64xf32>
    %895 = math.exp %894 : vector<2x64xf32>
    %cst_147 = arith.constant 1.000000e+00 : f32
    %896 = vector.broadcast %cst_147 : f32 to vector<2x64xf32>
    %897 = arith.addf %896, %895 : vector<2x64xf32>
    %898 = arith.divf %896, %897 : vector<2x64xf32>
    %899 = arith.mulf %890, %865 : vector<2x64xf32>
    %900 = arith.mulf %884, %892 : vector<2x64xf32>
    %901 = arith.addf %899, %900 : vector<2x64xf32>
    %902 = math.tanh %901 : vector<2x64xf32>
    %903 = arith.mulf %898, %902 : vector<2x64xf32>
    %c7_i32_148 = arith.constant 7 : i32
    %904 = vector.broadcast %c7_i32_148 : i32 to vector<2x8x64xi32>
    %905 = arith.cmpi eq, %618, %904 : vector<2x8x64xi32>
    %906 = vector.shape_cast %903 : vector<2x64xf32> to vector<2x1x64xf32>
    %907 = vector.shape_cast %906 : vector<2x1x64xf32> to vector<2x1x64xf32>
    %908 = vector.broadcast %907 : vector<2x1x64xf32> to vector<2x8x64xf32>
    %909 = arith.select %905, %908, %873 : vector<2x8x64xi1>, vector<2x8x64xf32>
    %910 = vector.shape_cast %909 : vector<2x8x64xf32> to vector<16x64xf32>
    %911 = arith.truncf %910 : vector<16x64xf32> to vector<16x64xbf16>
    %c0_149 = arith.constant 0 : index
    %c0_150 = arith.constant 0 : index
    %912 = vector.load %arg12[%c0_149, %c0_150] : memref<64x512xbf16, #tpu.memory_space<vmem>>, vector<64x512xbf16>
    %cst_151 = arith.constant dense<0.000000e+00> : vector<16x512xf32>
    %913 = tpu.matmul %911, %912, %cst_151 {dimension_numbers = #tpu.dot_dimension_numbers<[1], [0], [0], [1], [0, 0, 1, 1], [], []>} : vector<16x64xbf16>, vector<64x512xbf16>, vector<16x512xf32> -> vector<16x512xf32>
    %c0_152 = arith.constant 0 : index
    %c0_153 = arith.constant 0 : index
    %914 = vector.load %arg14[%c0_152, %c0_153] : memref<1x512xf32, #tpu.memory_space<vmem>>, vector<1x512xf32>
    %915 = vector.broadcast %914 : vector<1x512xf32> to vector<16x512xf32>
    %916 = arith.addf %913, %915 : vector<16x512xf32>
    %c0_154 = arith.constant 0 : index
    %c0_155 = arith.constant 0 : index
    %917 = vector.load %arg13[%c0_154, %c0_155] : memref<64x512xbf16, #tpu.memory_space<vmem>>, vector<64x512xbf16>
    %918 = vector.shape_cast %916 : vector<16x512xf32> to vector<2x8x512xf32>
    %919 = tpu.iota {dimensions = array<i32: 1>} : vector<2x8x64xi32>
    %cst_156 = arith.constant 0.000000e+00 : f32
    %920 = vector.broadcast %cst_156 : f32 to vector<2x64xf32>
    %cst_157 = arith.constant 0.000000e+00 : f32
    %921 = vector.broadcast %cst_157 : f32 to vector<2x64xf32>
    %cst_158 = arith.constant 0.000000e+00 : f32
    %922 = vector.broadcast %cst_158 : f32 to vector<2x8x64xf32>
    %923 = vector.extract_strided_slice %918 {offsets = [0, 0, 0], sizes = [2, 1, 512], strides = [1, 1, 1]} : vector<2x8x512xf32> to vector<2x1x512xf32>
    %924 = vector.shape_cast %923 : vector<2x1x512xf32> to vector<2x512xf32>
    %925 = arith.truncf %920 : vector<2x64xf32> to vector<2x64xbf16>
    %cst_159 = arith.constant dense<0.000000e+00> : vector<2x512xf32>
    %926 = tpu.matmul %925, %917, %cst_159 {dimension_numbers = #tpu.dot_dimension_numbers<[1], [0], [0], [1], [0, 0, 1, 1], [], []>} : vector<2x64xbf16>, vector<64x512xbf16>, vector<2x512xf32> -> vector<2x512xf32>
    %927 = arith.addf %924, %926 : vector<2x512xf32>
    %928 = vector.extract_strided_slice %927 {offsets = [0, 0], sizes = [2, 64], strides = [1, 1]} : vector<2x512xf32> to vector<2x64xf32>
    %929 = arith.negf %928 : vector<2x64xf32>
    %930 = math.exp %929 : vector<2x64xf32>
    %cst_160 = arith.constant 1.000000e+00 : f32
    %931 = vector.broadcast %cst_160 : f32 to vector<2x64xf32>
    %932 = arith.addf %931, %930 : vector<2x64xf32>
    %933 = arith.divf %931, %932 : vector<2x64xf32>
    %934 = vector.extract_strided_slice %927 {offsets = [0, 128], sizes = [2, 64], strides = [1, 1]} : vector<2x512xf32> to vector<2x64xf32>
    %935 = arith.negf %934 : vector<2x64xf32>
    %936 = math.exp %935 : vector<2x64xf32>
    %cst_161 = arith.constant 1.000000e+00 : f32
    %937 = vector.broadcast %cst_161 : f32 to vector<2x64xf32>
    %938 = arith.addf %937, %936 : vector<2x64xf32>
    %939 = arith.divf %937, %938 : vector<2x64xf32>
    %940 = vector.extract_strided_slice %927 {offsets = [0, 256], sizes = [2, 64], strides = [1, 1]} : vector<2x512xf32> to vector<2x64xf32>
    %941 = math.tanh %940 : vector<2x64xf32>
    %942 = vector.extract_strided_slice %927 {offsets = [0, 384], sizes = [2, 64], strides = [1, 1]} : vector<2x512xf32> to vector<2x64xf32>
    %943 = arith.negf %942 : vector<2x64xf32>
    %944 = math.exp %943 : vector<2x64xf32>
    %cst_162 = arith.constant 1.000000e+00 : f32
    %945 = vector.broadcast %cst_162 : f32 to vector<2x64xf32>
    %946 = arith.addf %945, %944 : vector<2x64xf32>
    %947 = arith.divf %945, %946 : vector<2x64xf32>
    %948 = arith.mulf %939, %921 : vector<2x64xf32>
    %949 = arith.mulf %933, %941 : vector<2x64xf32>
    %950 = arith.addf %948, %949 : vector<2x64xf32>
    %951 = math.tanh %950 : vector<2x64xf32>
    %952 = arith.mulf %947, %951 : vector<2x64xf32>
    %c0_i32_163 = arith.constant 0 : i32
    %953 = vector.broadcast %c0_i32_163 : i32 to vector<2x8x64xi32>
    %954 = arith.cmpi eq, %919, %953 : vector<2x8x64xi32>
    %955 = vector.shape_cast %952 : vector<2x64xf32> to vector<2x1x64xf32>
    %956 = vector.shape_cast %955 : vector<2x1x64xf32> to vector<2x1x64xf32>
    %957 = vector.broadcast %956 : vector<2x1x64xf32> to vector<2x8x64xf32>
    %958 = arith.select %954, %957, %922 : vector<2x8x64xi1>, vector<2x8x64xf32>
    %959 = vector.extract_strided_slice %918 {offsets = [0, 1, 0], sizes = [2, 1, 512], strides = [1, 1, 1]} : vector<2x8x512xf32> to vector<2x1x512xf32>
    %960 = vector.shape_cast %959 : vector<2x1x512xf32> to vector<2x512xf32>
    %961 = arith.truncf %952 : vector<2x64xf32> to vector<2x64xbf16>
    %cst_164 = arith.constant dense<0.000000e+00> : vector<2x512xf32>
    %962 = tpu.matmul %961, %917, %cst_164 {dimension_numbers = #tpu.dot_dimension_numbers<[1], [0], [0], [1], [0, 0, 1, 1], [], []>} : vector<2x64xbf16>, vector<64x512xbf16>, vector<2x512xf32> -> vector<2x512xf32>
    %963 = arith.addf %960, %962 : vector<2x512xf32>
    %964 = vector.extract_strided_slice %963 {offsets = [0, 0], sizes = [2, 64], strides = [1, 1]} : vector<2x512xf32> to vector<2x64xf32>
    %965 = arith.negf %964 : vector<2x64xf32>
    %966 = math.exp %965 : vector<2x64xf32>
    %cst_165 = arith.constant 1.000000e+00 : f32
    %967 = vector.broadcast %cst_165 : f32 to vector<2x64xf32>
    %968 = arith.addf %967, %966 : vector<2x64xf32>
    %969 = arith.divf %967, %968 : vector<2x64xf32>
    %970 = vector.extract_strided_slice %963 {offsets = [0, 128], sizes = [2, 64], strides = [1, 1]} : vector<2x512xf32> to vector<2x64xf32>
    %971 = arith.negf %970 : vector<2x64xf32>
    %972 = math.exp %971 : vector<2x64xf32>
    %cst_166 = arith.constant 1.000000e+00 : f32
    %973 = vector.broadcast %cst_166 : f32 to vector<2x64xf32>
    %974 = arith.addf %973, %972 : vector<2x64xf32>
    %975 = arith.divf %973, %974 : vector<2x64xf32>
    %976 = vector.extract_strided_slice %963 {offsets = [0, 256], sizes = [2, 64], strides = [1, 1]} : vector<2x512xf32> to vector<2x64xf32>
    %977 = math.tanh %976 : vector<2x64xf32>
    %978 = vector.extract_strided_slice %963 {offsets = [0, 384], sizes = [2, 64], strides = [1, 1]} : vector<2x512xf32> to vector<2x64xf32>
    %979 = arith.negf %978 : vector<2x64xf32>
    %980 = math.exp %979 : vector<2x64xf32>
    %cst_167 = arith.constant 1.000000e+00 : f32
    %981 = vector.broadcast %cst_167 : f32 to vector<2x64xf32>
    %982 = arith.addf %981, %980 : vector<2x64xf32>
    %983 = arith.divf %981, %982 : vector<2x64xf32>
    %984 = arith.mulf %975, %950 : vector<2x64xf32>
    %985 = arith.mulf %969, %977 : vector<2x64xf32>
    %986 = arith.addf %984, %985 : vector<2x64xf32>
    %987 = math.tanh %986 : vector<2x64xf32>
    %988 = arith.mulf %983, %987 : vector<2x64xf32>
    %c1_i32_168 = arith.constant 1 : i32
    %989 = vector.broadcast %c1_i32_168 : i32 to vector<2x8x64xi32>
    %990 = arith.cmpi eq, %919, %989 : vector<2x8x64xi32>
    %991 = vector.shape_cast %988 : vector<2x64xf32> to vector<2x1x64xf32>
    %992 = vector.shape_cast %991 : vector<2x1x64xf32> to vector<2x1x64xf32>
    %993 = vector.broadcast %992 : vector<2x1x64xf32> to vector<2x8x64xf32>
    %994 = arith.select %990, %993, %958 : vector<2x8x64xi1>, vector<2x8x64xf32>
    %995 = vector.extract_strided_slice %918 {offsets = [0, 2, 0], sizes = [2, 1, 512], strides = [1, 1, 1]} : vector<2x8x512xf32> to vector<2x1x512xf32>
    %996 = vector.shape_cast %995 : vector<2x1x512xf32> to vector<2x512xf32>
    %997 = arith.truncf %988 : vector<2x64xf32> to vector<2x64xbf16>
    %cst_169 = arith.constant dense<0.000000e+00> : vector<2x512xf32>
    %998 = tpu.matmul %997, %917, %cst_169 {dimension_numbers = #tpu.dot_dimension_numbers<[1], [0], [0], [1], [0, 0, 1, 1], [], []>} : vector<2x64xbf16>, vector<64x512xbf16>, vector<2x512xf32> -> vector<2x512xf32>
    %999 = arith.addf %996, %998 : vector<2x512xf32>
    %1000 = vector.extract_strided_slice %999 {offsets = [0, 0], sizes = [2, 64], strides = [1, 1]} : vector<2x512xf32> to vector<2x64xf32>
    %1001 = arith.negf %1000 : vector<2x64xf32>
    %1002 = math.exp %1001 : vector<2x64xf32>
    %cst_170 = arith.constant 1.000000e+00 : f32
    %1003 = vector.broadcast %cst_170 : f32 to vector<2x64xf32>
    %1004 = arith.addf %1003, %1002 : vector<2x64xf32>
    %1005 = arith.divf %1003, %1004 : vector<2x64xf32>
    %1006 = vector.extract_strided_slice %999 {offsets = [0, 128], sizes = [2, 64], strides = [1, 1]} : vector<2x512xf32> to vector<2x64xf32>
    %1007 = arith.negf %1006 : vector<2x64xf32>
    %1008 = math.exp %1007 : vector<2x64xf32>
    %cst_171 = arith.constant 1.000000e+00 : f32
    %1009 = vector.broadcast %cst_171 : f32 to vector<2x64xf32>
    %1010 = arith.addf %1009, %1008 : vector<2x64xf32>
    %1011 = arith.divf %1009, %1010 : vector<2x64xf32>
    %1012 = vector.extract_strided_slice %999 {offsets = [0, 256], sizes = [2, 64], strides = [1, 1]} : vector<2x512xf32> to vector<2x64xf32>
    %1013 = math.tanh %1012 : vector<2x64xf32>
    %1014 = vector.extract_strided_slice %999 {offsets = [0, 384], sizes = [2, 64], strides = [1, 1]} : vector<2x512xf32> to vector<2x64xf32>
    %1015 = arith.negf %1014 : vector<2x64xf32>
    %1016 = math.exp %1015 : vector<2x64xf32>
    %cst_172 = arith.constant 1.000000e+00 : f32
    %1017 = vector.broadcast %cst_172 : f32 to vector<2x64xf32>
    %1018 = arith.addf %1017, %1016 : vector<2x64xf32>
    %1019 = arith.divf %1017, %1018 : vector<2x64xf32>
    %1020 = arith.mulf %1011, %986 : vector<2x64xf32>
    %1021 = arith.mulf %1005, %1013 : vector<2x64xf32>
    %1022 = arith.addf %1020, %1021 : vector<2x64xf32>
    %1023 = math.tanh %1022 : vector<2x64xf32>
    %1024 = arith.mulf %1019, %1023 : vector<2x64xf32>
    %c2_i32_173 = arith.constant 2 : i32
    %1025 = vector.broadcast %c2_i32_173 : i32 to vector<2x8x64xi32>
    %1026 = arith.cmpi eq, %919, %1025 : vector<2x8x64xi32>
    %1027 = vector.shape_cast %1024 : vector<2x64xf32> to vector<2x1x64xf32>
    %1028 = vector.shape_cast %1027 : vector<2x1x64xf32> to vector<2x1x64xf32>
    %1029 = vector.broadcast %1028 : vector<2x1x64xf32> to vector<2x8x64xf32>
    %1030 = arith.select %1026, %1029, %994 : vector<2x8x64xi1>, vector<2x8x64xf32>
    %1031 = vector.extract_strided_slice %918 {offsets = [0, 3, 0], sizes = [2, 1, 512], strides = [1, 1, 1]} : vector<2x8x512xf32> to vector<2x1x512xf32>
    %1032 = vector.shape_cast %1031 : vector<2x1x512xf32> to vector<2x512xf32>
    %1033 = arith.truncf %1024 : vector<2x64xf32> to vector<2x64xbf16>
    %cst_174 = arith.constant dense<0.000000e+00> : vector<2x512xf32>
    %1034 = tpu.matmul %1033, %917, %cst_174 {dimension_numbers = #tpu.dot_dimension_numbers<[1], [0], [0], [1], [0, 0, 1, 1], [], []>} : vector<2x64xbf16>, vector<64x512xbf16>, vector<2x512xf32> -> vector<2x512xf32>
    %1035 = arith.addf %1032, %1034 : vector<2x512xf32>
    %1036 = vector.extract_strided_slice %1035 {offsets = [0, 0], sizes = [2, 64], strides = [1, 1]} : vector<2x512xf32> to vector<2x64xf32>
    %1037 = arith.negf %1036 : vector<2x64xf32>
    %1038 = math.exp %1037 : vector<2x64xf32>
    %cst_175 = arith.constant 1.000000e+00 : f32
    %1039 = vector.broadcast %cst_175 : f32 to vector<2x64xf32>
    %1040 = arith.addf %1039, %1038 : vector<2x64xf32>
    %1041 = arith.divf %1039, %1040 : vector<2x64xf32>
    %1042 = vector.extract_strided_slice %1035 {offsets = [0, 128], sizes = [2, 64], strides = [1, 1]} : vector<2x512xf32> to vector<2x64xf32>
    %1043 = arith.negf %1042 : vector<2x64xf32>
    %1044 = math.exp %1043 : vector<2x64xf32>
    %cst_176 = arith.constant 1.000000e+00 : f32
    %1045 = vector.broadcast %cst_176 : f32 to vector<2x64xf32>
    %1046 = arith.addf %1045, %1044 : vector<2x64xf32>
    %1047 = arith.divf %1045, %1046 : vector<2x64xf32>
    %1048 = vector.extract_strided_slice %1035 {offsets = [0, 256], sizes = [2, 64], strides = [1, 1]} : vector<2x512xf32> to vector<2x64xf32>
    %1049 = math.tanh %1048 : vector<2x64xf32>
    %1050 = vector.extract_strided_slice %1035 {offsets = [0, 384], sizes = [2, 64], strides = [1, 1]} : vector<2x512xf32> to vector<2x64xf32>
    %1051 = arith.negf %1050 : vector<2x64xf32>
    %1052 = math.exp %1051 : vector<2x64xf32>
    %cst_177 = arith.constant 1.000000e+00 : f32
    %1053 = vector.broadcast %cst_177 : f32 to vector<2x64xf32>
    %1054 = arith.addf %1053, %1052 : vector<2x64xf32>
    %1055 = arith.divf %1053, %1054 : vector<2x64xf32>
    %1056 = arith.mulf %1047, %1022 : vector<2x64xf32>
    %1057 = arith.mulf %1041, %1049 : vector<2x64xf32>
    %1058 = arith.addf %1056, %1057 : vector<2x64xf32>
    %1059 = math.tanh %1058 : vector<2x64xf32>
    %1060 = arith.mulf %1055, %1059 : vector<2x64xf32>
    %c3_i32_178 = arith.constant 3 : i32
    %1061 = vector.broadcast %c3_i32_178 : i32 to vector<2x8x64xi32>
    %1062 = arith.cmpi eq, %919, %1061 : vector<2x8x64xi32>
    %1063 = vector.shape_cast %1060 : vector<2x64xf32> to vector<2x1x64xf32>
    %1064 = vector.shape_cast %1063 : vector<2x1x64xf32> to vector<2x1x64xf32>
    %1065 = vector.broadcast %1064 : vector<2x1x64xf32> to vector<2x8x64xf32>
    %1066 = arith.select %1062, %1065, %1030 : vector<2x8x64xi1>, vector<2x8x64xf32>
    %1067 = vector.extract_strided_slice %918 {offsets = [0, 4, 0], sizes = [2, 1, 512], strides = [1, 1, 1]} : vector<2x8x512xf32> to vector<2x1x512xf32>
    %1068 = vector.shape_cast %1067 : vector<2x1x512xf32> to vector<2x512xf32>
    %1069 = arith.truncf %1060 : vector<2x64xf32> to vector<2x64xbf16>
    %cst_179 = arith.constant dense<0.000000e+00> : vector<2x512xf32>
    %1070 = tpu.matmul %1069, %917, %cst_179 {dimension_numbers = #tpu.dot_dimension_numbers<[1], [0], [0], [1], [0, 0, 1, 1], [], []>} : vector<2x64xbf16>, vector<64x512xbf16>, vector<2x512xf32> -> vector<2x512xf32>
    %1071 = arith.addf %1068, %1070 : vector<2x512xf32>
    %1072 = vector.extract_strided_slice %1071 {offsets = [0, 0], sizes = [2, 64], strides = [1, 1]} : vector<2x512xf32> to vector<2x64xf32>
    %1073 = arith.negf %1072 : vector<2x64xf32>
    %1074 = math.exp %1073 : vector<2x64xf32>
    %cst_180 = arith.constant 1.000000e+00 : f32
    %1075 = vector.broadcast %cst_180 : f32 to vector<2x64xf32>
    %1076 = arith.addf %1075, %1074 : vector<2x64xf32>
    %1077 = arith.divf %1075, %1076 : vector<2x64xf32>
    %1078 = vector.extract_strided_slice %1071 {offsets = [0, 128], sizes = [2, 64], strides = [1, 1]} : vector<2x512xf32> to vector<2x64xf32>
    %1079 = arith.negf %1078 : vector<2x64xf32>
    %1080 = math.exp %1079 : vector<2x64xf32>
    %cst_181 = arith.constant 1.000000e+00 : f32
    %1081 = vector.broadcast %cst_181 : f32 to vector<2x64xf32>
    %1082 = arith.addf %1081, %1080 : vector<2x64xf32>
    %1083 = arith.divf %1081, %1082 : vector<2x64xf32>
    %1084 = vector.extract_strided_slice %1071 {offsets = [0, 256], sizes = [2, 64], strides = [1, 1]} : vector<2x512xf32> to vector<2x64xf32>
    %1085 = math.tanh %1084 : vector<2x64xf32>
    %1086 = vector.extract_strided_slice %1071 {offsets = [0, 384], sizes = [2, 64], strides = [1, 1]} : vector<2x512xf32> to vector<2x64xf32>
    %1087 = arith.negf %1086 : vector<2x64xf32>
    %1088 = math.exp %1087 : vector<2x64xf32>
    %cst_182 = arith.constant 1.000000e+00 : f32
    %1089 = vector.broadcast %cst_182 : f32 to vector<2x64xf32>
    %1090 = arith.addf %1089, %1088 : vector<2x64xf32>
    %1091 = arith.divf %1089, %1090 : vector<2x64xf32>
    %1092 = arith.mulf %1083, %1058 : vector<2x64xf32>
    %1093 = arith.mulf %1077, %1085 : vector<2x64xf32>
    %1094 = arith.addf %1092, %1093 : vector<2x64xf32>
    %1095 = math.tanh %1094 : vector<2x64xf32>
    %1096 = arith.mulf %1091, %1095 : vector<2x64xf32>
    %c4_i32_183 = arith.constant 4 : i32
    %1097 = vector.broadcast %c4_i32_183 : i32 to vector<2x8x64xi32>
    %1098 = arith.cmpi eq, %919, %1097 : vector<2x8x64xi32>
    %1099 = vector.shape_cast %1096 : vector<2x64xf32> to vector<2x1x64xf32>
    %1100 = vector.shape_cast %1099 : vector<2x1x64xf32> to vector<2x1x64xf32>
    %1101 = vector.broadcast %1100 : vector<2x1x64xf32> to vector<2x8x64xf32>
    %1102 = arith.select %1098, %1101, %1066 : vector<2x8x64xi1>, vector<2x8x64xf32>
    %1103 = vector.extract_strided_slice %918 {offsets = [0, 5, 0], sizes = [2, 1, 512], strides = [1, 1, 1]} : vector<2x8x512xf32> to vector<2x1x512xf32>
    %1104 = vector.shape_cast %1103 : vector<2x1x512xf32> to vector<2x512xf32>
    %1105 = arith.truncf %1096 : vector<2x64xf32> to vector<2x64xbf16>
    %cst_184 = arith.constant dense<0.000000e+00> : vector<2x512xf32>
    %1106 = tpu.matmul %1105, %917, %cst_184 {dimension_numbers = #tpu.dot_dimension_numbers<[1], [0], [0], [1], [0, 0, 1, 1], [], []>} : vector<2x64xbf16>, vector<64x512xbf16>, vector<2x512xf32> -> vector<2x512xf32>
    %1107 = arith.addf %1104, %1106 : vector<2x512xf32>
    %1108 = vector.extract_strided_slice %1107 {offsets = [0, 0], sizes = [2, 64], strides = [1, 1]} : vector<2x512xf32> to vector<2x64xf32>
    %1109 = arith.negf %1108 : vector<2x64xf32>
    %1110 = math.exp %1109 : vector<2x64xf32>
    %cst_185 = arith.constant 1.000000e+00 : f32
    %1111 = vector.broadcast %cst_185 : f32 to vector<2x64xf32>
    %1112 = arith.addf %1111, %1110 : vector<2x64xf32>
    %1113 = arith.divf %1111, %1112 : vector<2x64xf32>
    %1114 = vector.extract_strided_slice %1107 {offsets = [0, 128], sizes = [2, 64], strides = [1, 1]} : vector<2x512xf32> to vector<2x64xf32>
    %1115 = arith.negf %1114 : vector<2x64xf32>
    %1116 = math.exp %1115 : vector<2x64xf32>
    %cst_186 = arith.constant 1.000000e+00 : f32
    %1117 = vector.broadcast %cst_186 : f32 to vector<2x64xf32>
    %1118 = arith.addf %1117, %1116 : vector<2x64xf32>
    %1119 = arith.divf %1117, %1118 : vector<2x64xf32>
    %1120 = vector.extract_strided_slice %1107 {offsets = [0, 256], sizes = [2, 64], strides = [1, 1]} : vector<2x512xf32> to vector<2x64xf32>
    %1121 = math.tanh %1120 : vector<2x64xf32>
    %1122 = vector.extract_strided_slice %1107 {offsets = [0, 384], sizes = [2, 64], strides = [1, 1]} : vector<2x512xf32> to vector<2x64xf32>
    %1123 = arith.negf %1122 : vector<2x64xf32>
    %1124 = math.exp %1123 : vector<2x64xf32>
    %cst_187 = arith.constant 1.000000e+00 : f32
    %1125 = vector.broadcast %cst_187 : f32 to vector<2x64xf32>
    %1126 = arith.addf %1125, %1124 : vector<2x64xf32>
    %1127 = arith.divf %1125, %1126 : vector<2x64xf32>
    %1128 = arith.mulf %1119, %1094 : vector<2x64xf32>
    %1129 = arith.mulf %1113, %1121 : vector<2x64xf32>
    %1130 = arith.addf %1128, %1129 : vector<2x64xf32>
    %1131 = math.tanh %1130 : vector<2x64xf32>
    %1132 = arith.mulf %1127, %1131 : vector<2x64xf32>
    %c5_i32_188 = arith.constant 5 : i32
    %1133 = vector.broadcast %c5_i32_188 : i32 to vector<2x8x64xi32>
    %1134 = arith.cmpi eq, %919, %1133 : vector<2x8x64xi32>
    %1135 = vector.shape_cast %1132 : vector<2x64xf32> to vector<2x1x64xf32>
    %1136 = vector.shape_cast %1135 : vector<2x1x64xf32> to vector<2x1x64xf32>
    %1137 = vector.broadcast %1136 : vector<2x1x64xf32> to vector<2x8x64xf32>
    %1138 = arith.select %1134, %1137, %1102 : vector<2x8x64xi1>, vector<2x8x64xf32>
    %1139 = vector.extract_strided_slice %918 {offsets = [0, 6, 0], sizes = [2, 1, 512], strides = [1, 1, 1]} : vector<2x8x512xf32> to vector<2x1x512xf32>
    %1140 = vector.shape_cast %1139 : vector<2x1x512xf32> to vector<2x512xf32>
    %1141 = arith.truncf %1132 : vector<2x64xf32> to vector<2x64xbf16>
    %cst_189 = arith.constant dense<0.000000e+00> : vector<2x512xf32>
    %1142 = tpu.matmul %1141, %917, %cst_189 {dimension_numbers = #tpu.dot_dimension_numbers<[1], [0], [0], [1], [0, 0, 1, 1], [], []>} : vector<2x64xbf16>, vector<64x512xbf16>, vector<2x512xf32> -> vector<2x512xf32>
    %1143 = arith.addf %1140, %1142 : vector<2x512xf32>
    %1144 = vector.extract_strided_slice %1143 {offsets = [0, 0], sizes = [2, 64], strides = [1, 1]} : vector<2x512xf32> to vector<2x64xf32>
    %1145 = arith.negf %1144 : vector<2x64xf32>
    %1146 = math.exp %1145 : vector<2x64xf32>
    %cst_190 = arith.constant 1.000000e+00 : f32
    %1147 = vector.broadcast %cst_190 : f32 to vector<2x64xf32>
    %1148 = arith.addf %1147, %1146 : vector<2x64xf32>
    %1149 = arith.divf %1147, %1148 : vector<2x64xf32>
    %1150 = vector.extract_strided_slice %1143 {offsets = [0, 128], sizes = [2, 64], strides = [1, 1]} : vector<2x512xf32> to vector<2x64xf32>
    %1151 = arith.negf %1150 : vector<2x64xf32>
    %1152 = math.exp %1151 : vector<2x64xf32>
    %cst_191 = arith.constant 1.000000e+00 : f32
    %1153 = vector.broadcast %cst_191 : f32 to vector<2x64xf32>
    %1154 = arith.addf %1153, %1152 : vector<2x64xf32>
    %1155 = arith.divf %1153, %1154 : vector<2x64xf32>
    %1156 = vector.extract_strided_slice %1143 {offsets = [0, 256], sizes = [2, 64], strides = [1, 1]} : vector<2x512xf32> to vector<2x64xf32>
    %1157 = math.tanh %1156 : vector<2x64xf32>
    %1158 = vector.extract_strided_slice %1143 {offsets = [0, 384], sizes = [2, 64], strides = [1, 1]} : vector<2x512xf32> to vector<2x64xf32>
    %1159 = arith.negf %1158 : vector<2x64xf32>
    %1160 = math.exp %1159 : vector<2x64xf32>
    %cst_192 = arith.constant 1.000000e+00 : f32
    %1161 = vector.broadcast %cst_192 : f32 to vector<2x64xf32>
    %1162 = arith.addf %1161, %1160 : vector<2x64xf32>
    %1163 = arith.divf %1161, %1162 : vector<2x64xf32>
    %1164 = arith.mulf %1155, %1130 : vector<2x64xf32>
    %1165 = arith.mulf %1149, %1157 : vector<2x64xf32>
    %1166 = arith.addf %1164, %1165 : vector<2x64xf32>
    %1167 = math.tanh %1166 : vector<2x64xf32>
    %1168 = arith.mulf %1163, %1167 : vector<2x64xf32>
    %c6_i32_193 = arith.constant 6 : i32
    %1169 = vector.broadcast %c6_i32_193 : i32 to vector<2x8x64xi32>
    %1170 = arith.cmpi eq, %919, %1169 : vector<2x8x64xi32>
    %1171 = vector.shape_cast %1168 : vector<2x64xf32> to vector<2x1x64xf32>
    %1172 = vector.shape_cast %1171 : vector<2x1x64xf32> to vector<2x1x64xf32>
    %1173 = vector.broadcast %1172 : vector<2x1x64xf32> to vector<2x8x64xf32>
    %1174 = arith.select %1170, %1173, %1138 : vector<2x8x64xi1>, vector<2x8x64xf32>
    %1175 = vector.extract_strided_slice %918 {offsets = [0, 7, 0], sizes = [2, 1, 512], strides = [1, 1, 1]} : vector<2x8x512xf32> to vector<2x1x512xf32>
    %1176 = vector.shape_cast %1175 : vector<2x1x512xf32> to vector<2x512xf32>
    %1177 = arith.truncf %1168 : vector<2x64xf32> to vector<2x64xbf16>
    %cst_194 = arith.constant dense<0.000000e+00> : vector<2x512xf32>
    %1178 = tpu.matmul %1177, %917, %cst_194 {dimension_numbers = #tpu.dot_dimension_numbers<[1], [0], [0], [1], [0, 0, 1, 1], [], []>} : vector<2x64xbf16>, vector<64x512xbf16>, vector<2x512xf32> -> vector<2x512xf32>
    %1179 = arith.addf %1176, %1178 : vector<2x512xf32>
    %1180 = vector.extract_strided_slice %1179 {offsets = [0, 0], sizes = [2, 64], strides = [1, 1]} : vector<2x512xf32> to vector<2x64xf32>
    %1181 = arith.negf %1180 : vector<2x64xf32>
    %1182 = math.exp %1181 : vector<2x64xf32>
    %cst_195 = arith.constant 1.000000e+00 : f32
    %1183 = vector.broadcast %cst_195 : f32 to vector<2x64xf32>
    %1184 = arith.addf %1183, %1182 : vector<2x64xf32>
    %1185 = arith.divf %1183, %1184 : vector<2x64xf32>
    %1186 = vector.extract_strided_slice %1179 {offsets = [0, 128], sizes = [2, 64], strides = [1, 1]} : vector<2x512xf32> to vector<2x64xf32>
    %1187 = arith.negf %1186 : vector<2x64xf32>
    %1188 = math.exp %1187 : vector<2x64xf32>
    %cst_196 = arith.constant 1.000000e+00 : f32
    %1189 = vector.broadcast %cst_196 : f32 to vector<2x64xf32>
    %1190 = arith.addf %1189, %1188 : vector<2x64xf32>
    %1191 = arith.divf %1189, %1190 : vector<2x64xf32>
    %1192 = vector.extract_strided_slice %1179 {offsets = [0, 256], sizes = [2, 64], strides = [1, 1]} : vector<2x512xf32> to vector<2x64xf32>
    %1193 = math.tanh %1192 : vector<2x64xf32>
    %1194 = vector.extract_strided_slice %1179 {offsets = [0, 384], sizes = [2, 64], strides = [1, 1]} : vector<2x512xf32> to vector<2x64xf32>
    %1195 = arith.negf %1194 : vector<2x64xf32>
    %1196 = math.exp %1195 : vector<2x64xf32>
    %cst_197 = arith.constant 1.000000e+00 : f32
    %1197 = vector.broadcast %cst_197 : f32 to vector<2x64xf32>
    %1198 = arith.addf %1197, %1196 : vector<2x64xf32>
    %1199 = arith.divf %1197, %1198 : vector<2x64xf32>
    %1200 = arith.mulf %1191, %1166 : vector<2x64xf32>
    %1201 = arith.mulf %1185, %1193 : vector<2x64xf32>
    %1202 = arith.addf %1200, %1201 : vector<2x64xf32>
    %1203 = math.tanh %1202 : vector<2x64xf32>
    %1204 = arith.mulf %1199, %1203 : vector<2x64xf32>
    %c7_i32_198 = arith.constant 7 : i32
    %1205 = vector.broadcast %c7_i32_198 : i32 to vector<2x8x64xi32>
    %1206 = arith.cmpi eq, %919, %1205 : vector<2x8x64xi32>
    %1207 = vector.shape_cast %1204 : vector<2x64xf32> to vector<2x1x64xf32>
    %1208 = vector.shape_cast %1207 : vector<2x1x64xf32> to vector<2x1x64xf32>
    %1209 = vector.broadcast %1208 : vector<2x1x64xf32> to vector<2x8x64xf32>
    %1210 = arith.select %1206, %1209, %1174 : vector<2x8x64xi1>, vector<2x8x64xf32>
    %1211 = vector.shape_cast %1210 : vector<2x8x64xf32> to vector<16x64xf32>
    %1212 = arith.truncf %1211 : vector<16x64xf32> to vector<16x64xbf16>
    %c0_199 = arith.constant 0 : index
    %c0_200 = arith.constant 0 : index
    %1213 = vector.load %arg15[%c0_199, %c0_200] : memref<64x128xbf16, #tpu.memory_space<vmem>>, vector<64x128xbf16>
    %cst_201 = arith.constant dense<0.000000e+00> : vector<16x128xf32>
    %1214 = tpu.matmul %1212, %1213, %cst_201 {dimension_numbers = #tpu.dot_dimension_numbers<[1], [0], [0], [1], [0, 0, 1, 1], [], []>} : vector<16x64xbf16>, vector<64x128xbf16>, vector<16x128xf32> -> vector<16x128xf32>
    %c0_202 = arith.constant 0 : index
    %c0_203 = arith.constant 0 : index
    %1215 = vector.load %arg16[%c0_202, %c0_203] : memref<1x128xf32, #tpu.memory_space<vmem>>, vector<1x128xf32>
    %1216 = vector.broadcast %1215 : vector<1x128xf32> to vector<16x128xf32>
    %1217 = arith.addf %1214, %1216 : vector<16x128xf32>
    %cst_204 = arith.constant 0.000000e+00 : f32
    %1218 = vector.broadcast %cst_204 : f32 to vector<16x128xf32>
    %1219 = arith.maximumf %1217, %1218 : vector<16x128xf32>
    %1220 = arith.truncf %1219 : vector<16x128xf32> to vector<16x128xbf16>
    %c0_205 = arith.constant 0 : index
    %c0_206 = arith.constant 0 : index
    %1221 = vector.load %arg17[%c0_205, %c0_206] : memref<128x128xbf16, #tpu.memory_space<vmem>>, vector<128x128xbf16>
    %cst_207 = arith.constant dense<0.000000e+00> : vector<16x128xf32>
    %1222 = tpu.matmul %1220, %1221, %cst_207 {dimension_numbers = #tpu.dot_dimension_numbers<[1], [0], [0], [1], [0, 0, 1, 1], [], []>} : vector<16x128xbf16>, vector<128x128xbf16>, vector<16x128xf32> -> vector<16x128xf32>
    %c0_208 = arith.constant 0 : index
    %c0_209 = arith.constant 0 : index
    %1223 = vector.load %arg18[%c0_208, %c0_209] : memref<1x128xf32, #tpu.memory_space<vmem>>, vector<1x128xf32>
    %1224 = vector.broadcast %1223 : vector<1x128xf32> to vector<16x128xf32>
    %1225 = arith.addf %1222, %1224 : vector<16x128xf32>
    %1226 = vector.shape_cast %1225 : vector<16x128xf32> to vector<2x8x128xf32>
    %1227 = vector.extract_strided_slice %1226 {offsets = [0, 0, 0], sizes = [2, 5, 128], strides = [1, 1, 1]} : vector<2x8x128xf32> to vector<2x5x128xf32>
    %c0_210 = arith.constant 0 : index
    %c0_211 = arith.constant 0 : index
    %c0_212 = arith.constant 0 : index
    %1228 = vector.load %arg19[%c0_210, %c0_211, %c0_212] : memref<2x5x128xf32, #tpu.memory_space<vmem>>, vector<2x5x128xf32>
    tpu.vector_store %arg19[%c0_210, %c0_211, %c0_212], %1227 {strides = array<i32>} : memref<2x5x128xf32, #tpu.memory_space<vmem>>, vector<2x5x128xf32>,
    return
  }
}

</mosaic_0001>

<llo_original>
// kernel: tpu_custom_call.1
$region0: #{tpu_custom_call.1}
  #allocation0 [shape = 'u32[]', space=smem, size = 0x4, offset = 0x4, fixed_abs, tag = 'smem constant byte address 0x4 - core index']
  #allocation1 [shape = 'u32[72,128]{1,0:T(1,128)}', space=vmem, size = 0x9000, scoped, tag = 'internal scratch']
  %s0 = inlined_call_operand.vmem [shape: f32[2,8,6], index: 0, kind: input, shape index: {}]
  %s1 = inlined_call_operand.vmem [shape: f32[2,8,4], index: 1, kind: input, shape index: {}]
  %s2 = inlined_call_operand.hbm [shape: bf16[6,512], index: 2, kind: input, shape index: {}]
  %s3 = inlined_call_operand.hbm [shape: bf16[4,512], index: 3, kind: input, shape index: {}]
  %s4 = inlined_call_operand.hbm [shape: bf16[64,512], index: 4, kind: input, shape index: {}]
  %s5 = inlined_call_operand.vmem [shape: f32[1,512], index: 5, kind: input, shape index: {}]
  %s6 = inlined_call_operand.hbm [shape: bf16[64,512], index: 6, kind: input, shape index: {}]
  %s7 = inlined_call_operand.hbm [shape: bf16[64,512], index: 7, kind: input, shape index: {}]
  %s8 = inlined_call_operand.hbm [shape: f32[1,512], index: 8, kind: input, shape index: {}]
  %s9 = inlined_call_operand.hbm [shape: bf16[64,512], index: 9, kind: input, shape index: {}]
  %s10 = inlined_call_operand.hbm [shape: bf16[64,512], index: 10, kind: input, shape index: {}]
  %s11 = inlined_call_operand.hbm [shape: f32[1,512], index: 11, kind: input, shape index: {}]
  %s12 = inlined_call_operand.hbm [shape: bf16[64,512], index: 12, kind: input, shape index: {}]
  %s13 = inlined_call_operand.hbm [shape: bf16[64,512], index: 13, kind: input, shape index: {}]
  %s14 = inlined_call_operand.hbm [shape: f32[1,512], index: 14, kind: input, shape index: {}]
  %s15 = inlined_call_operand.hbm [shape: bf16[64,128], index: 15, kind: input, shape index: {}]
  %s16 = inlined_call_operand.hbm [shape: f32[1,128], index: 16, kind: input, shape index: {}]
  %s17 = inlined_call_operand.vmem [shape: bf16[128,128], index: 17, kind: input, shape index: {}]
  %s18 = inlined_call_operand.vmem [shape: f32[1,128], index: 18, kind: input, shape index: {}]
  %s19 = inlined_call_operand.vmem [shape: f32[2,5,128], index: 19, kind: output, shape index: {}]
  %s20 = sld [smem:[#allocation0]]
  $region142: #{tpu_custom_call.1} parent=0
    _
  %s22 = ssub.s32 1, %s20
  %s23 = scalar_select 0, %s22, %s20
  $region1: #{tpu_custom_call.1} parent=0
    #allocation2 [shape = 'u8[8192]{0}', space=vmem, size = 0x2000, scoped, tag = 'input window, operand 2, single buffered']
    #allocation3 [shape = 's32[1]{0}', space=sflag, size = 0x4, scoped, tag = 'scoped memory for tpu_custom_call.1']
    #allocation4 [shape = 'u8[4096]{0}', space=vmem, size = 0x1000, scoped, tag = 'input window, operand 3, single buffered']
    #allocation5 [shape = 's32[1]{0}', space=sflag, size = 0x4, scoped, tag = 'scoped memory for tpu_custom_call.1']
    #allocation6 [shape = 'u8[65536]{0}', space=vmem, size = 0x10000, scoped, tag = 'input window, operand 4, single buffered']
    #allocation7 [shape = 'u8[65536]{0}', space=vmem, size = 0x10000, scoped, tag = 'input window, operand 6, single buffered']
    #allocation8 [shape = 's32[1]{0}', space=sflag, size = 0x4, scoped, tag = 'scoped memory for tpu_custom_call.1']
    #allocation9 [shape = 'u8[65536]{0}', space=vmem, size = 0x10000, scoped, tag = 'input window, operand 7, single buffered']
    #allocation10 [shape = 'u8[2048]{0}', space=vmem, size = 0x800, scoped, tag = 'input window, operand 8, single buffered']
    #allocation11 [shape = 's32[1]{0}', space=sflag, size = 0x4, scoped, tag = 'scoped memory for tpu_custom_call.1']
    #allocation12 [shape = 'u8[65536]{0}', space=vmem, size = 0x10000, scoped, tag = 'input window, operand 9, single buffered']
    #allocation13 [shape = 'u8[65536]{0}', space=vmem, size = 0x10000, scoped, tag = 'input window, operand 10, single buffered']
    #allocation14 [shape = 's32[1]{0}', space=sflag, size = 0x4, scoped, tag = 'scoped memory for tpu_custom_call.1']
    #allocation15 [shape = 'u8[2048]{0}', space=vmem, size = 0x800, scoped, tag = 'input window, operand 11, single buffered']
    #allocation16 [shape = 'u8[65536]{0}', space=vmem, size = 0x10000, scoped, tag = 'input window, operand 12, single buffered']
    #allocation17 [shape = 's32[1]{0}', space=sflag, size = 0x4, scoped, tag = 'scoped memory for tpu_custom_call.1']
    #allocation18 [shape = 'u8[65536]{0}', space=vmem, size = 0x10000, scoped, tag = 'input window, operand 13, single buffered']
    #allocation19 [shape = 'u8[2048]{0}', space=vmem, size = 0x800, scoped, tag = 'input window, operand 14, single buffered']
    #allocation20 [shape = 's32[1]{0}', space=sflag, size = 0x4, scoped, tag = 'scoped memory for tpu_custom_call.1']
    #allocation21 [shape = 'u8[16384]{0}', space=vmem, size = 0x4000, scoped, tag = 'input window, operand 15, single buffered']
    #allocation22 [shape = 'u8[512]{0}', space=vmem, size = 0x400, scoped, tag = 'input window, operand 16, single buffered']
    #allocation23 [shape = 's32[1]{0}', space=sflag, size = 0x4, scoped, tag = 'scoped memory for tpu_custom_call.1']
    %24 = vsyncpa [#allocation3], 0
    %25 = vsyncpa [#allocation5], 0
    %26 = vsyncpa [#allocation8], 0
    %27 = vsyncpa [#allocation11], 0
    %28 = vsyncpa [#allocation14], 0
    %29 = vsyncpa [#allocation17], 0
    %30 = vsyncpa [#allocation20], 0
    %31 = vsyncpa [#allocation23], 0
    // Predicated region
    $region2: #{tpu_custom_call.1} parent=1 // pred_check
      _
    $region3: #{tpu_custom_call.1} parent=1 // pred_check_branch
      %33 = sbr.rel (0) target = $region5
    $region4: #{tpu_custom_call.1} parent=1 // pred_region
      _
    $region5: #{tpu_custom_call.1} parent=1 // pred_fallthru
      _
    // Predicated region
    $region6: #{tpu_custom_call.1} parent=1 // pred_check
      _
    $region7: #{tpu_custom_call.1} parent=1 // pred_check_branch
      %35 = sbr.rel (0) target = $region9
    $region8: #{tpu_custom_call.1} parent=1 // pred_region
      _
    $region9: #{tpu_custom_call.1} parent=1 // pred_fallthru
      _
    // Predicated region
    $region10: #{tpu_custom_call.1} parent=1 // pred_check
      _
    $region11: #{tpu_custom_call.1} parent=1 // pred_check_branch
      %37 = sbr.rel (0) target = $region13
    $region12: #{tpu_custom_call.1} parent=1 // pred_region
      %39 = vsyncadd [#allocation3], 0
      %s41 = sshll.u32 %s2, 4
      %s42 = int_to_ptr.hbm [resolvable:$true] %s41
      %s43 = sshll.u32 [#allocation2], 4
      %s44 = int_to_ptr.vmem [resolvable:$true] %s43
      %46 = dma.hbm_to_vmem [thread:$0]  %s42, 256, %s44, [#allocation3]
    $region13: #{tpu_custom_call.1} parent=1 // pred_fallthru
      _
    // Predicated region
    $region14: #{tpu_custom_call.1} parent=1 // pred_check
      _
    $region15: #{tpu_custom_call.1} parent=1 // pred_check_branch
      %48 = sbr.rel (0) target = $region17
    $region16: #{tpu_custom_call.1} parent=1 // pred_region
      %50 = vsyncadd [#allocation5], 0
      %s52 = sshll.u32 %s3, 4
      %s53 = int_to_ptr.hbm [resolvable:$true] %s52
      %s54 = sshll.u32 [#allocation4], 4
      %s55 = int_to_ptr.vmem [resolvable:$true] %s54
      %57 = dma.hbm_to_vmem [thread:$0]  %s53, 128, %s55, [#allocation5]
    $region17: #{tpu_custom_call.1} parent=1 // pred_fallthru
      _
    // Predicated region
    $region18: #{tpu_custom_call.1} parent=1 // pred_check
      _
    $region19: #{tpu_custom_call.1} parent=1 // pred_check_branch
      %59 = sbr.rel (0) target = $region21
    $region20: #{tpu_custom_call.1} parent=1 // pred_region
      %61 = vsyncadd [#allocation5], 0
      %s62 = sshll.u32 %s4, 4
      %s63 = int_to_ptr.hbm [resolvable:$true] %s62
      %s64 = sshll.u32 [#allocation6], 4
      %s65 = int_to_ptr.vmem [resolvable:$true] %s64
      %70 = dma.hbm_to_vmem [thread:$0]  %s63, 2048, %s65, [#allocation5], 256, 256, 16
    $region21: #{tpu_custom_call.1} parent=1 // pred_fallthru
      _
    // Predicated region
    $region22: #{tpu_custom_call.1} parent=1 // pred_check
      _
    $region23: #{tpu_custom_call.1} parent=1 // pred_check_branch
      %72 = sbr.rel (0) target = $region25
    $region24: #{tpu_custom_call.1} parent=1 // pred_region
      _
    $region25: #{tpu_custom_call.1} parent=1 // pred_fallthru
      _
    // Predicated region
    $region26: #{tpu_custom_call.1} parent=1 // pred_check
      _
    $region27: #{tpu_custom_call.1} parent=1 // pred_check_branch
      %74 = sbr.rel (0) target = $region29
    $region28: #{tpu_custom_call.1} parent=1 // pred_region
      %76 = vsyncadd [#allocation8], 0
      %s77 = sshll.u32 %s6, 4
      %s78 = int_to_ptr.hbm [resolvable:$true] %s77
      %s79 = sshll.u32 [#allocation7], 4
      %s80 = int_to_ptr.vmem [resolvable:$true] %s79
      %85 = dma.hbm_to_vmem [thread:$0]  %s78, 2048, %s80, [#allocation8], 256, 256, 16
    $region29: #{tpu_custom_call.1} parent=1 // pred_fallthru
      _
    // Predicated region
    $region30: #{tpu_custom_call.1} parent=1 // pred_check
      _
    $region31: #{tpu_custom_call.1} parent=1 // pred_check_branch
      %87 = sbr.rel (0) target = $region33
    $region32: #{tpu_custom_call.1} parent=1 // pred_region
      %89 = vsyncadd [#allocation8], 0
      %s90 = sshll.u32 %s7, 4
      %s91 = int_to_ptr.hbm [resolvable:$true] %s90
      %s92 = sshll.u32 [#allocation9], 4
      %s93 = int_to_ptr.vmem [resolvable:$true] %s92
      %98 = dma.hbm_to_vmem [thread:$0]  %s91, 2048, %s93, [#allocation8], 256, 256, 16
    $region33: #{tpu_custom_call.1} parent=1 // pred_fallthru
      _
    // Predicated region
    $region34: #{tpu_custom_call.1} parent=1 // pred_check
      _
    $region35: #{tpu_custom_call.1} parent=1 // pred_check_branch
      %100 = sbr.rel (0) target = $region37
    $region36: #{tpu_custom_call.1} parent=1 // pred_region
      %102 = vsyncadd [#allocation11], 0
      %s104 = sshll.u32 %s8, 4
      %s105 = int_to_ptr.hbm [resolvable:$true] %s104
      %s106 = sshll.u32 [#allocation10], 4
      %s107 = int_to_ptr.vmem [resolvable:$true] %s106
      %109 = dma.hbm_to_vmem [thread:$0]  %s105, 64, %s107, [#allocation11]
    $region37: #{tpu_custom_call.1} parent=1 // pred_fallthru
      _
    // Predicated region
    $region38: #{tpu_custom_call.1} parent=1 // pred_check
      _
    $region39: #{tpu_custom_call.1} parent=1 // pred_check_branch
      %111 = sbr.rel (0) target = $region41
    $region40: #{tpu_custom_call.1} parent=1 // pred_region
      %113 = vsyncadd [#allocation11], 0
      %s114 = sshll.u32 %s9, 4
      %s115 = int_to_ptr.hbm [resolvable:$true] %s114
      %s116 = sshll.u32 [#allocation12], 4
      %s117 = int_to_ptr.vmem [resolvable:$true] %s116
      %122 = dma.hbm_to_vmem [thread:$0]  %s115, 2048, %s117, [#allocation11], 256, 256, 16
    $region41: #{tpu_custom_call.1} parent=1 // pred_fallthru
      _
    // Predicated region
    $region42: #{tpu_custom_call.1} parent=1 // pred_check
      _
    $region43: #{tpu_custom_call.1} parent=1 // pred_check_branch
      %124 = sbr.rel (0) target = $region45
    $region44: #{tpu_custom_call.1} parent=1 // pred_region
      %126 = vsyncadd [#allocation14], 0
      %s127 = sshll.u32 %s10, 4
      %s128 = int_to_ptr.hbm [resolvable:$true] %s127
      %s129 = sshll.u32 [#allocation13], 4
      %s130 = int_to_ptr.vmem [resolvable:$true] %s129
      %135 = dma.hbm_to_vmem [thread:$0]  %s128, 2048, %s130, [#allocation14], 256, 256, 16
    $region45: #{tpu_custom_call.1} parent=1 // pred_fallthru
      _
    // Predicated region
    $region46: #{tpu_custom_call.1} parent=1 // pred_check
      _
    $region47: #{tpu_custom_call.1} parent=1 // pred_check_branch
      %137 = sbr.rel (0) target = $region49
    $region48: #{tpu_custom_call.1} parent=1 // pred_region
      %139 = vsyncadd [#allocation14], 0
      %s141 = sshll.u32 %s11, 4
      %s142 = int_to_ptr.hbm [resolvable:$true] %s141
      %s143 = sshll.u32 [#allocation15], 4
      %s144 = int_to_ptr.vmem [resolvable:$true] %s143
      %146 = dma.hbm_to_vmem [thread:$0]  %s142, 64, %s144, [#allocation14]
    $region49: #{tpu_custom_call.1} parent=1 // pred_fallthru
      _
    // Predicated region
    $region50: #{tpu_custom_call.1} parent=1 // pred_check
      _
    $region51: #{tpu_custom_call.1} parent=1 // pred_check_branch
      %148 = sbr.rel (0) target = $region53
    $region52: #{tpu_custom_call.1} parent=1 // pred_region
      %150 = vsyncadd [#allocation17], 0
      %s151 = sshll.u32 %s12, 4
      %s152 = int_to_ptr.hbm [resolvable:$true] %s151
      %s153 = sshll.u32 [#allocation16], 4
      %s154 = int_to_ptr.vmem [resolvable:$true] %s153
      %159 = dma.hbm_to_vmem [thread:$0]  %s152, 2048, %s154, [#allocation17], 256, 256, 16
    $region53: #{tpu_custom_call.1} parent=1 // pred_fallthru
      _
    // Predicated region
    $region54: #{tpu_custom_call.1} parent=1 // pred_check
      _
    $region55: #{tpu_custom_call.1} parent=1 // pred_check_branch
      %161 = sbr.rel (0) target = $region57
    $region56: #{tpu_custom_call.1} parent=1 // pred_region
      %163 = vsyncadd [#allocation17], 0
      %s164 = sshll.u32 %s13, 4
      %s165 = int_to_ptr.hbm [resolvable:$true] %s164
      %s166 = sshll.u32 [#allocation18], 4
      %s167 = int_to_ptr.vmem [resolvable:$true] %s166
      %172 = dma.hbm_to_vmem [thread:$0]  %s165, 2048, %s167, [#allocation17], 256, 256, 16
    $region57: #{tpu_custom_call.1} parent=1 // pred_fallthru
      _
    // Predicated region
    $region58: #{tpu_custom_call.1} parent=1 // pred_check
      _
    $region59: #{tpu_custom_call.1} parent=1 // pred_check_branch
      %174 = sbr.rel (0) target = $region61
    $region60: #{tpu_custom_call.1} parent=1 // pred_region
      %176 = vsyncadd [#allocation20], 0
      %s178 = sshll.u32 %s14, 4
      %s179 = int_to_ptr.hbm [resolvable:$true] %s178
      %s180 = sshll.u32 [#allocation19], 4
      %s181 = int_to_ptr.vmem [resolvable:$true] %s180
      %183 = dma.hbm_to_vmem [thread:$0]  %s179, 64, %s181, [#allocation20]
    $region61: #{tpu_custom_call.1} parent=1 // pred_fallthru
      _
    // Predicated region
    $region62: #{tpu_custom_call.1} parent=1 // pred_check
      _
    $region63: #{tpu_custom_call.1} parent=1 // pred_check_branch
      %185 = sbr.rel (0) target = $region65
    $region64: #{tpu_custom_call.1} parent=1 // pred_region
      %187 = vsyncadd [#allocation20], 0
      %s188 = sshll.u32 %s15, 4
      %s189 = int_to_ptr.hbm [resolvable:$true] %s188
      %s190 = sshll.u32 [#allocation21], 4
      %s191 = int_to_ptr.vmem [resolvable:$true] %s190
      %196 = dma.hbm_to_vmem [thread:$0]  %s189, 512, %s191, [#allocation20], 64, 64, 4
    $region65: #{tpu_custom_call.1} parent=1 // pred_fallthru
      _
    // Predicated region
    $region66: #{tpu_custom_call.1} parent=1 // pred_check
      _
    $region67: #{tpu_custom_call.1} parent=1 // pred_check_branch
      %198 = sbr.rel (0) target = $region69
    $region68: #{tpu_custom_call.1} parent=1 // pred_region
      %200 = vsyncadd [#allocation23], 0
      %s202 = sshll.u32 %s16, 4
      %s203 = int_to_ptr.hbm [resolvable:$true] %s202
      %s204 = sshll.u32 [#allocation22], 4
      %s205 = int_to_ptr.vmem [resolvable:$true] %s204
      %207 = dma.hbm_to_vmem [thread:$0]  %s203, 16, %s205, [#allocation23]
    $region69: #{tpu_custom_call.1} parent=1 // pred_fallthru
      _
    // Predicated region
    $region70: #{tpu_custom_call.1} parent=1 // pred_check
      _
    $region71: #{tpu_custom_call.1} parent=1 // pred_check_branch
      %209 = sbr.rel (0) target = $region73
    $region72: #{tpu_custom_call.1} parent=1 // pred_region
      _
    $region73: #{tpu_custom_call.1} parent=1 // pred_fallthru
      _
    // Predicated region
    $region74: #{tpu_custom_call.1} parent=1 // pred_check
      _
    $region75: #{tpu_custom_call.1} parent=1 // pred_check_branch
      %211 = sbr.rel (0) target = $region77
    $region76: #{tpu_custom_call.1} parent=1 // pred_region
      _
    $region77: #{tpu_custom_call.1} parent=1 // pred_fallthru
      _
    // Predicated region
    $region78: #{tpu_custom_call.1} parent=1 // pred_check
      _
    $region79: #{tpu_custom_call.1} parent=1 // pred_check_branch
      %213 = sbr.rel (0) target = $region81
    $region80: #{tpu_custom_call.1} parent=1 // pred_region
      %215 = dma.done [#allocation3], 256
    $region81: #{tpu_custom_call.1} parent=1 // pred_fallthru
      _
    // Predicated region
    $region82: #{tpu_custom_call.1} parent=1 // pred_check
      _
    $region83: #{tpu_custom_call.1} parent=1 // pred_check_branch
      %217 = sbr.rel (0) target = $region85
    $region84: #{tpu_custom_call.1} parent=1 // pred_region
      %219 = dma.done [#allocation5], 128
    $region85: #{tpu_custom_call.1} parent=1 // pred_fallthru
      _
    // Predicated region
    $region86: #{tpu_custom_call.1} parent=1 // pred_check
      _
    $region87: #{tpu_custom_call.1} parent=1 // pred_check_branch
      %221 = sbr.rel (0) target = $region89
    $region88: #{tpu_custom_call.1} parent=1 // pred_region
      %223 = dma.done [#allocation5], 2048
    $region89: #{tpu_custom_call.1} parent=1 // pred_fallthru
      _
    // Predicated region
    $region90: #{tpu_custom_call.1} parent=1 // pred_check
      _
    $region91: #{tpu_custom_call.1} parent=1 // pred_check_branch
      %225 = sbr.rel (0) target = $region93
    $region92: #{tpu_custom_call.1} parent=1 // pred_region
      %227 = dma.done [#allocation8], 2048
    $region93: #{tpu_custom_call.1} parent=1 // pred_fallthru
      _
    // Predicated region
    $region94: #{tpu_custom_call.1} parent=1 // pred_check
      _
    $region95: #{tpu_custom_call.1} parent=1 // pred_check_branch
      %229 = sbr.rel (0) target = $region97
    $region96: #{tpu_custom_call.1} parent=1 // pred_region
      %231 = dma.done [#allocation8], 2048
    $region97: #{tpu_custom_call.1} parent=1 // pred_fallthru
      _
    // Predicated region
    $region98: #{tpu_custom_call.1} parent=1 // pred_check
      _
    $region99: #{tpu_custom_call.1} parent=1 // pred_check_branch
      %233 = sbr.rel (0) target = $region101
    $region100: #{tpu_custom_call.1} parent=1 // pred_region
      %235 = dma.done [#allocation11], 64
    $region101: #{tpu_custom_call.1} parent=1 // pred_fallthru
      _
    // Predicated region
    $region102: #{tpu_custom_call.1} parent=1 // pred_check
      _
    $region103: #{tpu_custom_call.1} parent=1 // pred_check_branch
      %237 = sbr.rel (0) target = $region105
    $region104: #{tpu_custom_call.1} parent=1 // pred_region
      %239 = dma.done [#allocation11], 2048
    $region105: #{tpu_custom_call.1} parent=1 // pred_fallthru
      _
    // Predicated region
    $region106: #{tpu_custom_call.1} parent=1 // pred_check
      _
    $region107: #{tpu_custom_call.1} parent=1 // pred_check_branch
      %241 = sbr.rel (0) target = $region109
    $region108: #{tpu_custom_call.1} parent=1 // pred_region
      %243 = dma.done [#allocation14], 2048
    $region109: #{tpu_custom_call.1} parent=1 // pred_fallthru
      _
    // Predicated region
    $region110: #{tpu_custom_call.1} parent=1 // pred_check
      _
    $region111: #{tpu_custom_call.1} parent=1 // pred_check_branch
      %245 = sbr.rel (0) target = $region113
    $region112: #{tpu_custom_call.1} parent=1 // pred_region
      %247 = dma.done [#allocation14], 64
    $region113: #{tpu_custom_call.1} parent=1 // pred_fallthru
      _
    // Predicated region
    $region114: #{tpu_custom_call.1} parent=1 // pred_check
      _
    $region115: #{tpu_custom_call.1} parent=1 // pred_check_branch
      %249 = sbr.rel (0) target = $region117
    $region116: #{tpu_custom_call.1} parent=1 // pred_region
      %251 = dma.done [#allocation17], 2048
    $region117: #{tpu_custom_call.1} parent=1 // pred_fallthru
      _
    // Predicated region
    $region118: #{tpu_custom_call.1} parent=1 // pred_check
      _
    $region119: #{tpu_custom_call.1} parent=1 // pred_check_branch
      %253 = sbr.rel (0) target = $region121
    $region120: #{tpu_custom_call.1} parent=1 // pred_region
      %255 = dma.done [#allocation17], 2048
    $region121: #{tpu_custom_call.1} parent=1 // pred_fallthru
      _
    // Predicated region
    $region122: #{tpu_custom_call.1} parent=1 // pred_check
      _
    $region123: #{tpu_custom_call.1} parent=1 // pred_check_branch
      %257 = sbr.rel (0) target = $region125
    $region124: #{tpu_custom_call.1} parent=1 // pred_region
      %259 = dma.done [#allocation20], 64
    $region125: #{tpu_custom_call.1} parent=1 // pred_fallthru
      _
    // Predicated region
    $region126: #{tpu_custom_call.1} parent=1 // pred_check
      _
    $region127: #{tpu_custom_call.1} parent=1 // pred_check_branch
      %261 = sbr.rel (0) target = $region129
    $region128: #{tpu_custom_call.1} parent=1 // pred_region
      %263 = dma.done [#allocation20], 512
    $region129: #{tpu_custom_call.1} parent=1 // pred_fallthru
      _
    // Predicated region
    $region130: #{tpu_custom_call.1} parent=1 // pred_check
      _
    $region131: #{tpu_custom_call.1} parent=1 // pred_check_branch
      %265 = sbr.rel (0) target = $region133
    $region132: #{tpu_custom_call.1} parent=1 // pred_region
      %267 = dma.done [#allocation23], 16
    $region133: #{tpu_custom_call.1} parent=1 // pred_fallthru
      _
    %v269 = vld [vmem:[%s0] sm:$0xff]
    %v270 = vld [vmem:[%s0 + $0x8] sm:$0xff]
    %v271 = vpack.c.bf16 %v270, %v269
    %v272 = vld [vmem:[%s1] sm:$0xff]
    %v273 = vld [vmem:[%s1 + $0x8] sm:$0xff]
    %v274 = vpack.c.bf16 %v273, %v272
    %v275 = vld [vmem:[#allocation2] sm:$0x77]
    %v276 = vld [vmem:[#allocation2 + $0x8] sm:$0x77]
    %v277 = vld [vmem:[#allocation4] sm:$0xff]
    %279 = vst [vmem:[#allocation1] ss:$4 sm:$0xff] %v277
    %v280 = vld.sshfl [vmem:[#allocation1] sm:$0xff pattern:$0x73625140]
    %v281 = vld.sshfl [vmem:[#allocation1 + $0x8] sm:$0xff pattern:$0x73625140]
    %v282 = vld.sshfl [vmem:[#allocation1 + $0x10] sm:$0xff pattern:$0x73625140]
    %v283 = vld.sshfl [vmem:[#allocation1 + $0x18] sm:$0xff pattern:$0x73625140]
    %vm284 = vcmask 31744
    %v286 = vsel %vm284, %v274, 0
    %vm288 = vcmask 1041408
    %v289 = vsel %vm288, %v280, 0
    %v291 = vsel %vm288, %v281, 0
    %v293 = vsel %vm288, %v282, 0
    %v295 = vsel %vm288, %v283, 0
    %297 = vmatpush.bf16.msra.mxu0 0
    %298 = vmatpush.bf16.msra.mxu0 0
    %299 = vmatpush.bf16.msra.mxu0 0
    %300 = vmatpush.bf16.msra.mxu0 0
    %301 = vmatpush.bf16.msra.mxu0 0
    %302 = vmatpush.bf16.msra.mxu0 0
    %303 = vmatpush.bf16.msra.mxu0 0
    %304 = vmatpush.bf16.msra.mxu0 %v289
    %305 = vmatmul.bf16.gmra.mxu0 %v286
    %v306 = vpop.f32.mrf.mxu0
    %v307 = vadd.f32 0.0, %v306
    %v308 = vpop.f32.mrf.mxu0
    %v309 = vadd.f32 0.0, %v308
    %310 = vdwg.mxu0
    %311 = vmatpush.bf16.msra.mxu0 0
    %312 = vmatpush.bf16.msra.mxu0 0
    %313 = vmatpush.bf16.msra.mxu0 0
    %314 = vmatpush.bf16.msra.mxu0 0
    %315 = vmatpush.bf16.msra.mxu0 0
    %316 = vmatpush.bf16.msra.mxu0 0
    %317 = vmatpush.bf16.msra.mxu0 0
    %318 = vmatpush.bf16.msra.mxu0 %v291
    %319 = vmatmul.bf16.gmra.mxu0 %v286
    %v320 = vpop.f32.mrf.mxu0
    %v321 = vadd.f32 0.0, %v320
    %v322 = vpop.f32.mrf.mxu0
    %v323 = vadd.f32 0.0, %v322
    %324 = vdwg.mxu0
    %325 = vmatpush.bf16.msra.mxu0 0
    %326 = vmatpush.bf16.msra.mxu0 0
    %327 = vmatpush.bf16.msra.mxu0 0
    %328 = vmatpush.bf16.msra.mxu0 0
    %329 = vmatpush.bf16.msra.mxu0 0
    %330 = vmatpush.bf16.msra.mxu0 0
    %331 = vmatpush.bf16.msra.mxu0 0
    %332 = vmatpush.bf16.msra.mxu0 %v293
    %333 = vmatmul.bf16.gmra.mxu0 %v286
    %v334 = vpop.f32.mrf.mxu0
    %v335 = vadd.f32 0.0, %v334
    %v336 = vpop.f32.mrf.mxu0
    %v337 = vadd.f32 0.0, %v336
    %338 = vdwg.mxu0
    %339 = vmatpush.bf16.msra.mxu0 0
    %340 = vmatpush.bf16.msra.mxu0 0
    %341 = vmatpush.bf16.msra.mxu0 0
    %342 = vmatpush.bf16.msra.mxu0 0
    %343 = vmatpush.bf16.msra.mxu0 0
    %344 = vmatpush.bf16.msra.mxu0 0
    %345 = vmatpush.bf16.msra.mxu0 0
    %346 = vmatpush.bf16.msra.mxu0 %v295
    %347 = vmatmul.bf16.gmra.mxu0 %v286
    %v348 = vpop.f32.mrf.mxu0
    %v349 = vadd.f32 0.0, %v348
    %v350 = vpop.f32.mrf.mxu0
    %v351 = vadd.f32 0.0, %v350
    %352 = vdwg.mxu0
    %v355 = vunpack.c.l.b16 %v275
    %v356 = vunpack.c.h.b16 %v275
    %v357 = vunpack.c.l.b16 %v276
    %v358 = vunpack.c.h.b16 %v276
    %v359 = vpack.c.b16 %v355, %v355
    %v360 = vpack.c.b16 %v356, %v356
    %v361 = vpack.c.b16 %v357, %v357
    %v362 = vpack.c.b16 %v358, %v358
    %vm363 = vcmask 48128
    %v365 = vsel %vm363, %v271, 0
    %vm367 = vcmask 1042432
    %v369 = vsel %vm367, %v359, 0
    %v372 = vsel %vm367, %v360, 0
    %v375 = vsel %vm367, %v361, 0
    %v378 = vsel %vm367, %v362, 0
    %380 = vmatpush.bf16.msra.mxu0 0
    %381 = vmatpush.bf16.msra.mxu0 0
    %382 = vmatpush.bf16.msra.mxu0 0
    %383 = vmatpush.bf16.msra.mxu0 0
    %384 = vmatpush.bf16.msra.mxu0 0
    %385 = vmatpush.bf16.msra.mxu0 0
    %386 = vmatpush.bf16.msra.mxu0 0
    %387 = vmatpush.bf16.msra.mxu0 %v369
    %388 = vmatmul.bf16.gmra.mxu0 %v365
    %v389 = vpop.f32.mrf.mxu0
    %v390 = vadd.f32 %v307, %v389
    %v391 = vpop.f32.mrf.mxu0
    %v392 = vadd.f32 %v309, %v391
    %393 = vdwg.mxu0
    %394 = vmatpush.bf16.msra.mxu0 0
    %395 = vmatpush.bf16.msra.mxu0 0
    %396 = vmatpush.bf16.msra.mxu0 0
    %397 = vmatpush.bf16.msra.mxu0 0
    %398 = vmatpush.bf16.msra.mxu0 0
    %399 = vmatpush.bf16.msra.mxu0 0
    %400 = vmatpush.bf16.msra.mxu0 0
    %401 = vmatpush.bf16.msra.mxu0 %v372
    %402 = vmatmul.bf16.gmra.mxu0 %v365
    %v403 = vpop.f32.mrf.mxu0
    %v404 = vadd.f32 %v321, %v403
    %v405 = vpop.f32.mrf.mxu0
    %v406 = vadd.f32 %v323, %v405
    %407 = vdwg.mxu0
    %408 = vmatpush.bf16.msra.mxu0 0
    %409 = vmatpush.bf16.msra.mxu0 0
    %410 = vmatpush.bf16.msra.mxu0 0
    %411 = vmatpush.bf16.msra.mxu0 0
    %412 = vmatpush.bf16.msra.mxu0 0
    %413 = vmatpush.bf16.msra.mxu0 0
    %414 = vmatpush.bf16.msra.mxu0 0
    %415 = vmatpush.bf16.msra.mxu0 %v375
    %416 = vmatmul.bf16.gmra.mxu0 %v365
    %v417 = vpop.f32.mrf.mxu0
    %v418 = vadd.f32 %v335, %v417
    %v419 = vpop.f32.mrf.mxu0
    %v420 = vadd.f32 %v337, %v419
    %421 = vdwg.mxu0
    %422 = vmatpush.bf16.msra.mxu0 0
    %423 = vmatpush.bf16.msra.mxu0 0
    %424 = vmatpush.bf16.msra.mxu0 0
    %425 = vmatpush.bf16.msra.mxu0 0
    %426 = vmatpush.bf16.msra.mxu0 0
    %427 = vmatpush.bf16.msra.mxu0 0
    %428 = vmatpush.bf16.msra.mxu0 0
    %429 = vmatpush.bf16.msra.mxu0 %v378
    %430 = vmatmul.bf16.gmra.mxu0 %v365
    %v431 = vpop.f32.mrf.mxu0
    %v432 = vadd.f32 %v349, %v431
    %v433 = vpop.f32.mrf.mxu0
    %v434 = vadd.f32 %v351, %v433
    %435 = vdwg.mxu0
    %v436 = vld [vmem:[%s5] sm:$0xf]
    %v438 = vperm.slane %v436, 0
    %v439 = vperm.slane %v436, 1
    %v440 = vperm.slane %v436, 2
    %v441 = vperm.slane %v436, 3
    %v446 = vadd.f32 %v390, %v438
    %v447 = vadd.f32 %v404, %v439
    %v448 = vadd.f32 %v418, %v440
    %v449 = vadd.f32 %v432, %v441
    %v450 = vadd.f32 %v392, %v438
    %v451 = vadd.f32 %v406, %v439
    %v452 = vadd.f32 %v420, %v440
    %v453 = vadd.f32 %v434, %v441
    %v454 = vld [vmem:[#allocation6] sm:$0xff]
    %v455 = vld [vmem:[#allocation6 + $0x8] sm:$0xff]
    %v456 = vld [vmem:[#allocation6 + $0x10] sm:$0xff]
    %v457 = vld [vmem:[#allocation6 + $0x18] sm:$0xff]
    %v458 = vld [vmem:[#allocation6 + $0x20] sm:$0xff]
    %v459 = vld [vmem:[#allocation6 + $0x28] sm:$0xff]
    %v460 = vld [vmem:[#allocation6 + $0x30] sm:$0xff]
    %v461 = vld [vmem:[#allocation6 + $0x38] sm:$0xff]
    %v462 = vld [vmem:[#allocation6 + $0x40] sm:$0xff]
    %v463 = vld [vmem:[#allocation6 + $0x48] sm:$0xff]
    %v464 = vld [vmem:[#allocation6 + $0x50] sm:$0xff]
    %v465 = vld [vmem:[#allocation6 + $0x58] sm:$0xff]
    %v466 = vld [vmem:[#allocation6 + $0x60] sm:$0xff]
    %v467 = vld [vmem:[#allocation6 + $0x68] sm:$0xff]
    %v468 = vld [vmem:[#allocation6 + $0x70] sm:$0xff]
    %v469 = vld [vmem:[#allocation6 + $0x78] sm:$0xff]
    %v470 = vlaneseq
    %v471 = vshrl.u32 %v470, 7
    %v488 = vunpack.c.l.b16 %v454
    %v489 = vunpack.c.h.b16 %v454
    %v490 = vunpack.c.l.b16 %v455
    %v491 = vunpack.c.h.b16 %v455
    %v492 = vunpack.c.l.b16 %v456
    %v493 = vunpack.c.h.b16 %v456
    %v494 = vunpack.c.l.b16 %v457
    %v495 = vunpack.c.h.b16 %v457
    %v496 = vunpack.c.l.b16 %v458
    %v497 = vunpack.c.h.b16 %v458
    %v498 = vunpack.c.l.b16 %v459
    %v499 = vunpack.c.h.b16 %v459
    %v500 = vunpack.c.l.b16 %v460
    %v501 = vunpack.c.h.b16 %v460
    %v502 = vunpack.c.l.b16 %v461
    %v503 = vunpack.c.h.b16 %v461
    %v504 = vunpack.c.l.b16 %v462
    %v505 = vunpack.c.h.b16 %v462
    %v506 = vunpack.c.l.b16 %v463
    %v507 = vunpack.c.h.b16 %v463
    %v508 = vunpack.c.l.b16 %v464
    %v509 = vunpack.c.h.b16 %v464
    %v510 = vunpack.c.l.b16 %v465
    %v511 = vunpack.c.h.b16 %v465
    %v512 = vunpack.c.l.b16 %v466
    %v513 = vunpack.c.h.b16 %v466
    %v514 = vunpack.c.l.b16 %v467
    %v515 = vunpack.c.h.b16 %v467
    %v516 = vunpack.c.l.b16 %v468
    %v517 = vunpack.c.h.b16 %v468
    %v518 = vunpack.c.l.b16 %v469
    %v519 = vunpack.c.h.b16 %v469
    %v520 = vpack.c.b16 %v492, %v488
    %v521 = vpack.c.b16 %v493, %v489
    %v522 = vpack.c.b16 %v494, %v490
    %v523 = vpack.c.b16 %v495, %v491
    %v524 = vpack.c.b16 %v500, %v496
    %v525 = vpack.c.b16 %v501, %v497
    %v526 = vpack.c.b16 %v502, %v498
    %v527 = vpack.c.b16 %v503, %v499
    %v528 = vpack.c.b16 %v508, %v504
    %v529 = vpack.c.b16 %v509, %v505
    %v530 = vpack.c.b16 %v510, %v506
    %v531 = vpack.c.b16 %v511, %v507
    %v532 = vpack.c.b16 %v516, %v512
    %v533 = vpack.c.b16 %v517, %v513
    %v534 = vpack.c.b16 %v518, %v514
    %v535 = vpack.c.b16 %v519, %v515
    %vm552 = vcmask 523264
    %v554 = vsel %vm552, 0, 0
    %556 = vmatpush.bf16.msra.mxu0 0
    %557 = vmatpush.bf16.msra.mxu0 0
    %558 = vmatpush.bf16.msra.mxu0 0
    %559 = vmatpush.bf16.msra.mxu0 0
    %560 = vmatpush.bf16.msra.mxu0 %v532
    %561 = vmatpush.bf16.msra.mxu0 %v528
    %562 = vmatpush.bf16.msra.mxu0 %v524
    %563 = vmatpush.bf16.msra.mxu0 %v520
    %564 = vmatmul.bf16.gmra.mxu0 %v554
    %v565 = vpop.f32.mrf.mxu0
    %v566 = vadd.f32 0.0, %v565
    %v567 = vpop.f32.mrf.mxu0
    %568 = vdwg.mxu0
    %569 = vmatpush.bf16.msra.mxu0 0
    %570 = vmatpush.bf16.msra.mxu0 0
    %571 = vmatpush.bf16.msra.mxu0 0
    %572 = vmatpush.bf16.msra.mxu0 0
    %573 = vmatpush.bf16.msra.mxu0 %v533
    %574 = vmatpush.bf16.msra.mxu0 %v529
    %575 = vmatpush.bf16.msra.mxu0 %v525
    %576 = vmatpush.bf16.msra.mxu0 %v521
    %577 = vmatmul.bf16.gmra.mxu0 %v554
    %v578 = vpop.f32.mrf.mxu0
    %v579 = vadd.f32 0.0, %v578
    %v580 = vpop.f32.mrf.mxu0
    %581 = vdwg.mxu0
    %582 = vmatpush.bf16.msra.mxu0 0
    %583 = vmatpush.bf16.msra.mxu0 0
    %584 = vmatpush.bf16.msra.mxu0 0
    %585 = vmatpush.bf16.msra.mxu0 0
    %586 = vmatpush.bf16.msra.mxu0 %v534
    %587 = vmatpush.bf16.msra.mxu0 %v530
    %588 = vmatpush.bf16.msra.mxu0 %v526
    %589 = vmatpush.bf16.msra.mxu0 %v522
    %590 = vmatmul.bf16.gmra.mxu0 %v554
    %v591 = vpop.f32.mrf.mxu0
    %v592 = vadd.f32 0.0, %v591
    %v593 = vpop.f32.mrf.mxu0
    %594 = vdwg.mxu0
    %595 = vmatpush.bf16.msra.mxu0 0
    %596 = vmatpush.bf16.msra.mxu0 0
    %597 = vmatpush.bf16.msra.mxu0 0
    %598 = vmatpush.bf16.msra.mxu0 0
    %599 = vmatpush.bf16.msra.mxu0 %v535
    %600 = vmatpush.bf16.msra.mxu0 %v531
    %601 = vmatpush.bf16.msra.mxu0 %v527
    %602 = vmatpush.bf16.msra.mxu0 %v523
    %603 = vmatmul.bf16.gmra.mxu0 %v554
    %v604 = vpop.f32.mrf.mxu0
    %v605 = vadd.f32 0.0, %v604
    %v606 = vpop.f32.mrf.mxu0
    %607 = vdwg.mxu0
    %v612 = vrot.slane %v566, 1
    %v613 = vrot.slane %v579, 1
    %v614 = vrot.slane %v592, 1
    %v615 = vrot.slane %v605, 1
    %v624 = vadd.f32 %v446, %v566
    %v625 = vadd.f32 %v447, %v579
    %v626 = vadd.f32 %v448, %v592
    %v627 = vadd.f32 %v449, %v605
    %v628 = vadd.f32 %v450, %v612
    %v629 = vadd.f32 %v451, %v613
    %v630 = vadd.f32 %v452, %v614
    %v631 = vadd.f32 %v453, %v615
    %v632 = vxor.u32 %v624, 2147483648
    %v633 = vxor.u32 %v628, 2147483648
    %v634 = vmul.f32 %v632, 1.442695
    %v635 = vpow.pop %v634
    %v636 = vmul.f32 %v633, 1.442695
    %v637 = vpow.pop %v636
    %v638 = vadd.f32 %v635, 1.0
    %v639 = vadd.f32 %v637, 1.0
    %v640 = vrcp.pop %v638
    %v641 = vmul.f32 %v638, %v640
    %v642 = vsub.f32 1.0, %v641
    %v643 = vmul.f32 %v640, %v642
    %v644 = vadd.f32 %v640, %v643
    %vm645 = vweird.f32 %v638
    %vm646 = vweird.f32 %v640
    %vm647 = vmor %vm645, %vm646
    %v648 = vsel %vm647, %v640, %v644
    %v649 = vand.u32 2147483647, %v638
    %vm650 = vcmp.eq.f32.partialorder %v649, 8.507059e+37
    %v651 = vand.u32 %v638, 2147483648
    %v652 = vor.u32 1.1754944e-38, %v651
    %v653 = vsel %vm650, %v652, %v648
    %v654 = vmul.f32 1.0, %v653
    %v655 = vrcp.pop %v639
    %v656 = vmul.f32 %v639, %v655
    %v657 = vsub.f32 1.0, %v656
    %v658 = vmul.f32 %v655, %v657
    %v659 = vadd.f32 %v655, %v658
    %vm660 = vweird.f32 %v639
    %vm661 = vweird.f32 %v655
    %vm662 = vmor %vm660, %vm661
    %v663 = vsel %vm662, %v655, %v659
    %v664 = vand.u32 2147483647, %v639
    %vm665 = vcmp.eq.f32.partialorder %v664, 8.507059e+37
    %v666 = vand.u32 %v639, 2147483648
    %v667 = vor.u32 1.1754944e-38, %v666
    %v668 = vsel %vm665, %v667, %v663
    %v669 = vmul.f32 1.0, %v668
    %v670 = vxor.u32 %v625, 2147483648
    %v671 = vxor.u32 %v629, 2147483648
    %v672 = vmul.f32 %v670, 1.442695
    %v673 = vpow.pop %v672
    %v674 = vmul.f32 %v671, 1.442695
    %v675 = vpow.pop %v674
    %v676 = vadd.f32 %v673, 1.0
    %v677 = vadd.f32 %v675, 1.0
    %v678 = vrcp.pop %v676
    %v679 = vmul.f32 %v676, %v678
    %v680 = vsub.f32 1.0, %v679
    %v681 = vmul.f32 %v678, %v680
    %v682 = vadd.f32 %v678, %v681
    %vm683 = vweird.f32 %v676
    %vm684 = vweird.f32 %v678
    %vm685 = vmor %vm683, %vm684
    %v686 = vsel %vm685, %v678, %v682
    %v687 = vand.u32 2147483647, %v676
    %vm688 = vcmp.eq.f32.partialorder %v687, 8.507059e+37
    %v689 = vand.u32 %v676, 2147483648
    %v690 = vor.u32 1.1754944e-38, %v689
    %v691 = vsel %vm688, %v690, %v686
    %v692 = vmul.f32 1.0, %v691
    %v693 = vrcp.pop %v677
    %v694 = vmul.f32 %v677, %v693
    %v695 = vsub.f32 1.0, %v694
    %v696 = vmul.f32 %v693, %v695
    %v697 = vadd.f32 %v693, %v696
    %vm698 = vweird.f32 %v677
    %vm699 = vweird.f32 %v693
    %vm700 = vmor %vm698, %vm699
    %v701 = vsel %vm700, %v693, %v697
    %v702 = vand.u32 2147483647, %v677
    %vm703 = vcmp.eq.f32.partialorder %v702, 8.507059e+37
    %v704 = vand.u32 %v677, 2147483648
    %v705 = vor.u32 1.1754944e-38, %v704
    %v706 = vsel %vm703, %v705, %v701
    %v707 = vmul.f32 1.0, %v706
    %v708 = vtanh.pop %v626
    %v709 = vtanh.pop %v630
    %v710 = vxor.u32 %v627, 2147483648
    %v711 = vxor.u32 %v631, 2147483648
    %v712 = vmul.f32 %v710, 1.442695
    %v713 = vpow.pop %v712
    %v714 = vmul.f32 %v711, 1.442695
    %v715 = vpow.pop %v714
    %v716 = vadd.f32 %v713, 1.0
    %v717 = vadd.f32 %v715, 1.0
    %v718 = vrcp.pop %v716
    %v719 = vmul.f32 %v716, %v718
    %v720 = vsub.f32 1.0, %v719
    %v721 = vmul.f32 %v718, %v720
    %v722 = vadd.f32 %v718, %v721
    %vm723 = vweird.f32 %v716
    %vm724 = vweird.f32 %v718
    %vm725 = vmor %vm723, %vm724
    %v726 = vsel %vm725, %v718, %v722
    %v727 = vand.u32 2147483647, %v716
    %vm728 = vcmp.eq.f32.partialorder %v727, 8.507059e+37
    %v729 = vand.u32 %v716, 2147483648
    %v730 = vor.u32 1.1754944e-38, %v729
    %v731 = vsel %vm728, %v730, %v726
    %v732 = vmul.f32 1.0, %v731
    %v733 = vrcp.pop %v717
    %v734 = vmul.f32 %v717, %v733
    %v735 = vsub.f32 1.0, %v734
    %v736 = vmul.f32 %v733, %v735
    %v737 = vadd.f32 %v733, %v736
    %vm738 = vweird.f32 %v717
    %vm739 = vweird.f32 %v733
    %vm740 = vmor %vm738, %vm739
    %v741 = vsel %vm740, %v733, %v737
    %v742 = vand.u32 2147483647, %v717
    %vm743 = vcmp.eq.f32.partialorder %v742, 8.507059e+37
    %v744 = vand.u32 %v717, 2147483648
    %v745 = vor.u32 1.1754944e-38, %v744
    %v746 = vsel %vm743, %v745, %v741
    %v747 = vmul.f32 1.0, %v746
    %v748 = vmul.f32 %v692, 0.0
    %v749 = vmul.f32 %v707, 0.0
    %v750 = vmul.f32 %v654, %v708
    %v751 = vmul.f32 %v669, %v709
    %v752 = vadd.f32 %v748, %v750
    %v753 = vadd.f32 %v749, %v751
    %v754 = vtanh.pop %v752
    %v755 = vtanh.pop %v753
    %v756 = vmul.f32 %v732, %v754
    %v757 = vmul.f32 %v747, %v755
    %vm758 = vcmp.eq.s32.totalorder %v471, 0
    %v759 = vperm.slane %v756, 0
    %v760 = vperm.slane %v757, 0
    %v761 = vsel %vm758, %v759, 0.0
    %v762 = vsel %vm758, %v760, 0.0
    %v763 = vpack.c.bf16 %v756, %v756
    %v764 = vpack.c.bf16 %v757, %v757
    %v767 = vunpack.c.l.b16 %v763
    %v768 = vunpack.c.l.b16 %v764
    %v769 = vrot.slane %v768, 7
    %vm770 = vcmask 1041409
    %v771 = vsel %vm770, %v769, %v767
    %v772 = vpack.c.b16 %v771, %v771
    %v774 = vsel %vm552, %v772, 0
    %776 = vmatpush.bf16.msra.mxu0 0
    %777 = vmatpush.bf16.msra.mxu0 0
    %778 = vmatpush.bf16.msra.mxu0 0
    %779 = vmatpush.bf16.msra.mxu0 0
    %780 = vmatpush.bf16.msra.mxu0 %v532
    %781 = vmatpush.bf16.msra.mxu0 %v528
    %782 = vmatpush.bf16.msra.mxu0 %v524
    %783 = vmatpush.bf16.msra.mxu0 %v520
    %784 = vmatmul.bf16.gmra.mxu0 %v774
    %v785 = vpop.f32.mrf.mxu0
    %v786 = vadd.f32 0.0, %v785
    %v787 = vpop.f32.mrf.mxu0
    %788 = vdwg.mxu0
    %789 = vmatpush.bf16.msra.mxu0 0
    %790 = vmatpush.bf16.msra.mxu0 0
    %791 = vmatpush.bf16.msra.mxu0 0
    %792 = vmatpush.bf16.msra.mxu0 0
    %793 = vmatpush.bf16.msra.mxu0 %v533
    %794 = vmatpush.bf16.msra.mxu0 %v529
    %795 = vmatpush.bf16.msra.mxu0 %v525
    %796 = vmatpush.bf16.msra.mxu0 %v521
    %797 = vmatmul.bf16.gmra.mxu0 %v774
    %v798 = vpop.f32.mrf.mxu0
    %v799 = vadd.f32 0.0, %v798
    %v800 = vpop.f32.mrf.mxu0
    %801 = vdwg.mxu0
    %802 = vmatpush.bf16.msra.mxu0 0
    %803 = vmatpush.bf16.msra.mxu0 0
    %804 = vmatpush.bf16.msra.mxu0 0
    %805 = vmatpush.bf16.msra.mxu0 0
    %806 = vmatpush.bf16.msra.mxu0 %v534
    %807 = vmatpush.bf16.msra.mxu0 %v530
    %808 = vmatpush.bf16.msra.mxu0 %v526
    %809 = vmatpush.bf16.msra.mxu0 %v522
    %810 = vmatmul.bf16.gmra.mxu0 %v774
    %v811 = vpop.f32.mrf.mxu0
    %v812 = vadd.f32 0.0, %v811
    %v813 = vpop.f32.mrf.mxu0
    %814 = vdwg.mxu0
    %815 = vmatpush.bf16.msra.mxu0 0
    %816 = vmatpush.bf16.msra.mxu0 0
    %817 = vmatpush.bf16.msra.mxu0 0
    %818 = vmatpush.bf16.msra.mxu0 0
    %819 = vmatpush.bf16.msra.mxu0 %v535
    %820 = vmatpush.bf16.msra.mxu0 %v531
    %821 = vmatpush.bf16.msra.mxu0 %v527
    %822 = vmatpush.bf16.msra.mxu0 %v523
    %823 = vmatmul.bf16.gmra.mxu0 %v774
    %v824 = vpop.f32.mrf.mxu0
    %v825 = vadd.f32 0.0, %v824
    %v826 = vpop.f32.mrf.mxu0
    %827 = vdwg.mxu0
    %v832 = vrot.slane %v786, 7
    %v833 = vrot.slane %v799, 7
    %v834 = vrot.slane %v812, 7
    %v835 = vrot.slane %v825, 7
    %v844 = vadd.f32 %v446, %v832
    %v845 = vadd.f32 %v447, %v833
    %v846 = vadd.f32 %v448, %v834
    %v847 = vadd.f32 %v449, %v835
    %v848 = vadd.f32 %v450, %v786
    %v849 = vadd.f32 %v451, %v799
    %v850 = vadd.f32 %v452, %v812
    %v851 = vadd.f32 %v453, %v825
    %v852 = vxor.u32 %v844, 2147483648
    %v853 = vxor.u32 %v848, 2147483648
    %v854 = vmul.f32 %v852, 1.442695
    %v855 = vpow.pop %v854
    %v856 = vmul.f32 %v853, 1.442695
    %v857 = vpow.pop %v856
    %v858 = vadd.f32 %v855, 1.0
    %v859 = vadd.f32 %v857, 1.0
    %v860 = vrcp.pop %v858
    %v861 = vmul.f32 %v858, %v860
    %v862 = vsub.f32 1.0, %v861
    %v863 = vmul.f32 %v860, %v862
    %v864 = vadd.f32 %v860, %v863
    %vm865 = vweird.f32 %v858
    %vm866 = vweird.f32 %v860
    %vm867 = vmor %vm865, %vm866
    %v868 = vsel %vm867, %v860, %v864
    %v869 = vand.u32 2147483647, %v858
    %vm870 = vcmp.eq.f32.partialorder %v869, 8.507059e+37
    %v871 = vand.u32 %v858, 2147483648
    %v872 = vor.u32 1.1754944e-38, %v871
    %v873 = vsel %vm870, %v872, %v868
    %v874 = vmul.f32 1.0, %v873
    %v875 = vrcp.pop %v859
    %v876 = vmul.f32 %v859, %v875
    %v877 = vsub.f32 1.0, %v876
    %v878 = vmul.f32 %v875, %v877
    %v879 = vadd.f32 %v875, %v878
    %vm880 = vweird.f32 %v859
    %vm881 = vweird.f32 %v875
    %vm882 = vmor %vm880, %vm881
    %v883 = vsel %vm882, %v875, %v879
    %v884 = vand.u32 2147483647, %v859
    %vm885 = vcmp.eq.f32.partialorder %v884, 8.507059e+37
    %v886 = vand.u32 %v859, 2147483648
    %v887 = vor.u32 1.1754944e-38, %v886
    %v888 = vsel %vm885, %v887, %v883
    %v889 = vmul.f32 1.0, %v888
    %v890 = vxor.u32 %v845, 2147483648
    %v891 = vxor.u32 %v849, 2147483648
    %v892 = vmul.f32 %v890, 1.442695
    %v893 = vpow.pop %v892
    %v894 = vmul.f32 %v891, 1.442695
    %v895 = vpow.pop %v894
    %v896 = vadd.f32 %v893, 1.0
    %v897 = vadd.f32 %v895, 1.0
    %v898 = vrcp.pop %v896
    %v899 = vmul.f32 %v896, %v898
    %v900 = vsub.f32 1.0, %v899
    %v901 = vmul.f32 %v898, %v900
    %v902 = vadd.f32 %v898, %v901
    %vm903 = vweird.f32 %v896
    %vm904 = vweird.f32 %v898
    %vm905 = vmor %vm903, %vm904
    %v906 = vsel %vm905, %v898, %v902
    %v907 = vand.u32 2147483647, %v896
    %vm908 = vcmp.eq.f32.partialorder %v907, 8.507059e+37
    %v909 = vand.u32 %v896, 2147483648
    %v910 = vor.u32 1.1754944e-38, %v909
    %v911 = vsel %vm908, %v910, %v906
    %v912 = vmul.f32 1.0, %v911
    %v913 = vrcp.pop %v897
    %v914 = vmul.f32 %v897, %v913
    %v915 = vsub.f32 1.0, %v914
    %v916 = vmul.f32 %v913, %v915
    %v917 = vadd.f32 %v913, %v916
    %vm918 = vweird.f32 %v897
    %vm919 = vweird.f32 %v913
    %vm920 = vmor %vm918, %vm919
    %v921 = vsel %vm920, %v913, %v917
    %v922 = vand.u32 2147483647, %v897
    %vm923 = vcmp.eq.f32.partialorder %v922, 8.507059e+37
    %v924 = vand.u32 %v897, 2147483648
    %v925 = vor.u32 1.1754944e-38, %v924
    %v926 = vsel %vm923, %v925, %v921
    %v927 = vmul.f32 1.0, %v926
    %v928 = vtanh.pop %v846
    %v929 = vtanh.pop %v850
    %v930 = vxor.u32 %v847, 2147483648
    %v931 = vxor.u32 %v851, 2147483648
    %v932 = vmul.f32 %v930, 1.442695
    %v933 = vpow.pop %v932
    %v934 = vmul.f32 %v931, 1.442695
    %v935 = vpow.pop %v934
    %v936 = vadd.f32 %v933, 1.0
    %v937 = vadd.f32 %v935, 1.0
    %v938 = vrcp.pop %v936
    %v939 = vmul.f32 %v936, %v938
    %v940 = vsub.f32 1.0, %v939
    %v941 = vmul.f32 %v938, %v940
    %v942 = vadd.f32 %v938, %v941
    %vm943 = vweird.f32 %v936
    %vm944 = vweird.f32 %v938
    %vm945 = vmor %vm943, %vm944
    %v946 = vsel %vm945, %v938, %v942
    %v947 = vand.u32 2147483647, %v936
    %vm948 = vcmp.eq.f32.partialorder %v947, 8.507059e+37
    %v949 = vand.u32 %v936, 2147483648
    %v950 = vor.u32 1.1754944e-38, %v949
    %v951 = vsel %vm948, %v950, %v946
    %v952 = vmul.f32 1.0, %v951
    %v953 = vrcp.pop %v937
    %v954 = vmul.f32 %v937, %v953
    %v955 = vsub.f32 1.0, %v954
    %v956 = vmul.f32 %v953, %v955
    %v957 = vadd.f32 %v953, %v956
    %vm958 = vweird.f32 %v937
    %vm959 = vweird.f32 %v953
    %vm960 = vmor %vm958, %vm959
    %v961 = vsel %vm960, %v953, %v957
    %v962 = vand.u32 2147483647, %v937
    %vm963 = vcmp.eq.f32.partialorder %v962, 8.507059e+37
    %v964 = vand.u32 %v937, 2147483648
    %v965 = vor.u32 1.1754944e-38, %v964
    %v966 = vsel %vm963, %v965, %v961
    %v967 = vmul.f32 1.0, %v966
    %v970 = vrot.slane %v752, 7
    %v971 = vrot.slane %v753, 7
    %v974 = vmul.f32 %v912, %v970
    %v975 = vmul.f32 %v927, %v971
    %v976 = vmul.f32 %v874, %v928
    %v977 = vmul.f32 %v889, %v929
    %v978 = vadd.f32 %v974, %v976
    %v979 = vadd.f32 %v975, %v977
    %v980 = vtanh.pop %v978
    %v981 = vtanh.pop %v979
    %v982 = vmul.f32 %v952, %v980
    %v983 = vmul.f32 %v967, %v981
    %vm984 = vcmp.eq.s32.totalorder %v471, 1
    %v985 = vperm.slane %v982, 1
    %v986 = vperm.slane %v983, 1
    %v987 = vsel %vm984, %v985, %v761
    %v988 = vsel %vm984, %v986, %v762
    %v989 = vpack.c.bf16 %v982, %v982
    %v990 = vpack.c.bf16 %v983, %v983
    %v993 = vunpack.c.l.b16 %v989
    %v994 = vunpack.c.l.b16 %v990
    %v995 = vrot.slane %v993, 1
    %v996 = vsel %vm770, %v994, %v995
    %v997 = vpack.c.b16 %v996, %v996
    %v999 = vsel %vm552, %v997, 0
    %1001 = vmatpush.bf16.msra.mxu0 0
    %1002 = vmatpush.bf16.msra.mxu0 0
    %1003 = vmatpush.bf16.msra.mxu0 0
    %1004 = vmatpush.bf16.msra.mxu0 0
    %1005 = vmatpush.bf16.msra.mxu0 %v532
    %1006 = vmatpush.bf16.msra.mxu0 %v528
    %1007 = vmatpush.bf16.msra.mxu0 %v524
    %1008 = vmatpush.bf16.msra.mxu0 %v520
    %1009 = vmatmul.bf16.gmra.mxu0 %v999
    %v1010 = vpop.f32.mrf.mxu0
    %v1011 = vadd.f32 0.0, %v1010
    %v1012 = vpop.f32.mrf.mxu0
    %1013 = vdwg.mxu0
    %1014 = vmatpush.bf16.msra.mxu0 0
    %1015 = vmatpush.bf16.msra.mxu0 0
    %1016 = vmatpush.bf16.msra.mxu0 0
    %1017 = vmatpush.bf16.msra.mxu0 0
    %1018 = vmatpush.bf16.msra.mxu0 %v533
    %1019 = vmatpush.bf16.msra.mxu0 %v529
    %1020 = vmatpush.bf16.msra.mxu0 %v525
    %1021 = vmatpush.bf16.msra.mxu0 %v521
    %1022 = vmatmul.bf16.gmra.mxu0 %v999
    %v1023 = vpop.f32.mrf.mxu0
    %v1024 = vadd.f32 0.0, %v1023
    %v1025 = vpop.f32.mrf.mxu0
    %1026 = vdwg.mxu0
    %1027 = vmatpush.bf16.msra.mxu0 0
    %1028 = vmatpush.bf16.msra.mxu0 0
    %1029 = vmatpush.bf16.msra.mxu0 0
    %1030 = vmatpush.bf16.msra.mxu0 0
    %1031 = vmatpush.bf16.msra.mxu0 %v534
    %1032 = vmatpush.bf16.msra.mxu0 %v530
    %1033 = vmatpush.bf16.msra.mxu0 %v526
    %1034 = vmatpush.bf16.msra.mxu0 %v522
    %1035 = vmatmul.bf16.gmra.mxu0 %v999
    %v1036 = vpop.f32.mrf.mxu0
    %v1037 = vadd.f32 0.0, %v1036
    %v1038 = vpop.f32.mrf.mxu0
    %1039 = vdwg.mxu0
    %1040 = vmatpush.bf16.msra.mxu0 0
    %1041 = vmatpush.bf16.msra.mxu0 0
    %1042 = vmatpush.bf16.msra.mxu0 0
    %1043 = vmatpush.bf16.msra.mxu0 0
    %1044 = vmatpush.bf16.msra.mxu0 %v535
    %1045 = vmatpush.bf16.msra.mxu0 %v531
    %1046 = vmatpush.bf16.msra.mxu0 %v527
    %1047 = vmatpush.bf16.msra.mxu0 %v523
    %1048 = vmatmul.bf16.gmra.mxu0 %v999
    %v1049 = vpop.f32.mrf.mxu0
    %v1050 = vadd.f32 0.0, %v1049
    %v1051 = vpop.f32.mrf.mxu0
    %1052 = vdwg.mxu0
    %v1057 = vrot.slane %v1011, 6
    %v1058 = vrot.slane %v1024, 6
    %v1059 = vrot.slane %v1037, 6
    %v1060 = vrot.slane %v1050, 6
    %v1061 = vrot.slane %v1011, 7
    %v1062 = vrot.slane %v1024, 7
    %v1063 = vrot.slane %v1037, 7
    %v1064 = vrot.slane %v1050, 7
    %v1073 = vadd.f32 %v446, %v1057
    %v1074 = vadd.f32 %v447, %v1058
    %v1075 = vadd.f32 %v448, %v1059
    %v1076 = vadd.f32 %v449, %v1060
    %v1077 = vadd.f32 %v450, %v1061
    %v1078 = vadd.f32 %v451, %v1062
    %v1079 = vadd.f32 %v452, %v1063
    %v1080 = vadd.f32 %v453, %v1064
    %v1081 = vxor.u32 %v1073, 2147483648
    %v1082 = vxor.u32 %v1077, 2147483648
    %v1083 = vmul.f32 %v1081, 1.442695
    %v1084 = vpow.pop %v1083
    %v1085 = vmul.f32 %v1082, 1.442695
    %v1086 = vpow.pop %v1085
    %v1087 = vadd.f32 %v1084, 1.0
    %v1088 = vadd.f32 %v1086, 1.0
    %v1089 = vrcp.pop %v1087
    %v1090 = vmul.f32 %v1087, %v1089
    %v1091 = vsub.f32 1.0, %v1090
    %v1092 = vmul.f32 %v1089, %v1091
    %v1093 = vadd.f32 %v1089, %v1092
    %vm1094 = vweird.f32 %v1087
    %vm1095 = vweird.f32 %v1089
    %vm1096 = vmor %vm1094, %vm1095
    %v1097 = vsel %vm1096, %v1089, %v1093
    %v1098 = vand.u32 2147483647, %v1087
    %vm1099 = vcmp.eq.f32.partialorder %v1098, 8.507059e+37
    %v1100 = vand.u32 %v1087, 2147483648
    %v1101 = vor.u32 1.1754944e-38, %v1100
    %v1102 = vsel %vm1099, %v1101, %v1097
    %v1103 = vmul.f32 1.0, %v1102
    %v1104 = vrcp.pop %v1088
    %v1105 = vmul.f32 %v1088, %v1104
    %v1106 = vsub.f32 1.0, %v1105
    %v1107 = vmul.f32 %v1104, %v1106
    %v1108 = vadd.f32 %v1104, %v1107
    %vm1109 = vweird.f32 %v1088
    %vm1110 = vweird.f32 %v1104
    %vm1111 = vmor %vm1109, %vm1110
    %v1112 = vsel %vm1111, %v1104, %v1108
    %v1113 = vand.u32 2147483647, %v1088
    %vm1114 = vcmp.eq.f32.partialorder %v1113, 8.507059e+37
    %v1115 = vand.u32 %v1088, 2147483648
    %v1116 = vor.u32 1.1754944e-38, %v1115
    %v1117 = vsel %vm1114, %v1116, %v1112
    %v1118 = vmul.f32 1.0, %v1117
    %v1119 = vxor.u32 %v1074, 2147483648
    %v1120 = vxor.u32 %v1078, 2147483648
    %v1121 = vmul.f32 %v1119, 1.442695
    %v1122 = vpow.pop %v1121
    %v1123 = vmul.f32 %v1120, 1.442695
    %v1124 = vpow.pop %v1123
    %v1125 = vadd.f32 %v1122, 1.0
    %v1126 = vadd.f32 %v1124, 1.0
    %v1127 = vrcp.pop %v1125
    %v1128 = vmul.f32 %v1125, %v1127
    %v1129 = vsub.f32 1.0, %v1128
    %v1130 = vmul.f32 %v1127, %v1129
    %v1131 = vadd.f32 %v1127, %v1130
    %vm1132 = vweird.f32 %v1125
    %vm1133 = vweird.f32 %v1127
    %vm1134 = vmor %vm1132, %vm1133
    %v1135 = vsel %vm1134, %v1127, %v1131
    %v1136 = vand.u32 2147483647, %v1125
    %vm1137 = vcmp.eq.f32.partialorder %v1136, 8.507059e+37
    %v1138 = vand.u32 %v1125, 2147483648
    %v1139 = vor.u32 1.1754944e-38, %v1138
    %v1140 = vsel %vm1137, %v1139, %v1135
    %v1141 = vmul.f32 1.0, %v1140
    %v1142 = vrcp.pop %v1126
    %v1143 = vmul.f32 %v1126, %v1142
    %v1144 = vsub.f32 1.0, %v1143
    %v1145 = vmul.f32 %v1142, %v1144
    %v1146 = vadd.f32 %v1142, %v1145
    %vm1147 = vweird.f32 %v1126
    %vm1148 = vweird.f32 %v1142
    %vm1149 = vmor %vm1147, %vm1148
    %v1150 = vsel %vm1149, %v1142, %v1146
    %v1151 = vand.u32 2147483647, %v1126
    %vm1152 = vcmp.eq.f32.partialorder %v1151, 8.507059e+37
    %v1153 = vand.u32 %v1126, 2147483648
    %v1154 = vor.u32 1.1754944e-38, %v1153
    %v1155 = vsel %vm1152, %v1154, %v1150
    %v1156 = vmul.f32 1.0, %v1155
    %v1157 = vtanh.pop %v1075
    %v1158 = vtanh.pop %v1079
    %v1159 = vxor.u32 %v1076, 2147483648
    %v1160 = vxor.u32 %v1080, 2147483648
    %v1161 = vmul.f32 %v1159, 1.442695
    %v1162 = vpow.pop %v1161
    %v1163 = vmul.f32 %v1160, 1.442695
    %v1164 = vpow.pop %v1163
    %v1165 = vadd.f32 %v1162, 1.0
    %v1166 = vadd.f32 %v1164, 1.0
    %v1167 = vrcp.pop %v1165
    %v1168 = vmul.f32 %v1165, %v1167
    %v1169 = vsub.f32 1.0, %v1168
    %v1170 = vmul.f32 %v1167, %v1169
    %v1171 = vadd.f32 %v1167, %v1170
    %vm1172 = vweird.f32 %v1165
    %vm1173 = vweird.f32 %v1167
    %vm1174 = vmor %vm1172, %vm1173
    %v1175 = vsel %vm1174, %v1167, %v1171
    %v1176 = vand.u32 2147483647, %v1165
    %vm1177 = vcmp.eq.f32.partialorder %v1176, 8.507059e+37
    %v1178 = vand.u32 %v1165, 2147483648
    %v1179 = vor.u32 1.1754944e-38, %v1178
    %v1180 = vsel %vm1177, %v1179, %v1175
    %v1181 = vmul.f32 1.0, %v1180
    %v1182 = vrcp.pop %v1166
    %v1183 = vmul.f32 %v1166, %v1182
    %v1184 = vsub.f32 1.0, %v1183
    %v1185 = vmul.f32 %v1182, %v1184
    %v1186 = vadd.f32 %v1182, %v1185
    %vm1187 = vweird.f32 %v1166
    %vm1188 = vweird.f32 %v1182
    %vm1189 = vmor %vm1187, %vm1188
    %v1190 = vsel %vm1189, %v1182, %v1186
    %v1191 = vand.u32 2147483647, %v1166
    %vm1192 = vcmp.eq.f32.partialorder %v1191, 8.507059e+37
    %v1193 = vand.u32 %v1166, 2147483648
    %v1194 = vor.u32 1.1754944e-38, %v1193
    %v1195 = vsel %vm1192, %v1194, %v1190
    %v1196 = vmul.f32 1.0, %v1195
    %v1199 = vrot.slane %v978, 7
    %v1200 = vrot.slane %v979, 7
    %v1203 = vmul.f32 %v1141, %v1199
    %v1204 = vmul.f32 %v1156, %v1200
    %v1205 = vmul.f32 %v1103, %v1157
    %v1206 = vmul.f32 %v1118, %v1158
    %v1207 = vadd.f32 %v1203, %v1205
    %v1208 = vadd.f32 %v1204, %v1206
    %v1209 = vtanh.pop %v1207
    %v1210 = vtanh.pop %v1208
    %v1211 = vmul.f32 %v1181, %v1209
    %v1212 = vmul.f32 %v1196, %v1210
    %vm1213 = vcmp.eq.s32.totalorder %v471, 2
    %v1214 = vperm.slane %v1211, 2
    %v1215 = vperm.slane %v1212, 2
    %v1216 = vsel %vm1213, %v1214, %v987
    %v1217 = vsel %vm1213, %v1215, %v988
    %v1218 = vpack.c.bf16 %v1211, %v1211
    %v1219 = vpack.c.bf16 %v1212, %v1212
    %v1222 = vunpack.c.l.b16 %v1218
    %v1223 = vunpack.c.l.b16 %v1219
    %v1224 = vrot.slane %v1222, 2
    %v1225 = vrot.slane %v1223, 1
    %v1226 = vsel %vm770, %v1225, %v1224
    %v1227 = vpack.c.b16 %v1226, %v1226
    %v1229 = vsel %vm552, %v1227, 0
    %1231 = vmatpush.bf16.msra.mxu0 0
    %1232 = vmatpush.bf16.msra.mxu0 0
    %1233 = vmatpush.bf16.msra.mxu0 0
    %1234 = vmatpush.bf16.msra.mxu0 0
    %1235 = vmatpush.bf16.msra.mxu0 %v532
    %1236 = vmatpush.bf16.msra.mxu0 %v528
    %1237 = vmatpush.bf16.msra.mxu0 %v524
    %1238 = vmatpush.bf16.msra.mxu0 %v520
    %1239 = vmatmul.bf16.gmra.mxu0 %v1229
    %v1240 = vpop.f32.mrf.mxu0
    %v1241 = vadd.f32 0.0, %v1240
    %v1242 = vpop.f32.mrf.mxu0
    %1243 = vdwg.mxu0
    %1244 = vmatpush.bf16.msra.mxu0 0
    %1245 = vmatpush.bf16.msra.mxu0 0
    %1246 = vmatpush.bf16.msra.mxu0 0
    %1247 = vmatpush.bf16.msra.mxu0 0
    %1248 = vmatpush.bf16.msra.mxu0 %v533
    %1249 = vmatpush.bf16.msra.mxu0 %v529
    %1250 = vmatpush.bf16.msra.mxu0 %v525
    %1251 = vmatpush.bf16.msra.mxu0 %v521
    %1252 = vmatmul.bf16.gmra.mxu0 %v1229
    %v1253 = vpop.f32.mrf.mxu0
    %v1254 = vadd.f32 0.0, %v1253
    %v1255 = vpop.f32.mrf.mxu0
    %1256 = vdwg.mxu0
    %1257 = vmatpush.bf16.msra.mxu0 0
    %1258 = vmatpush.bf16.msra.mxu0 0
    %1259 = vmatpush.bf16.msra.mxu0 0
    %1260 = vmatpush.bf16.msra.mxu0 0
    %1261 = vmatpush.bf16.msra.mxu0 %v534
    %1262 = vmatpush.bf16.msra.mxu0 %v530
    %1263 = vmatpush.bf16.msra.mxu0 %v526
    %1264 = vmatpush.bf16.msra.mxu0 %v522
    %1265 = vmatmul.bf16.gmra.mxu0 %v1229
    %v1266 = vpop.f32.mrf.mxu0
    %v1267 = vadd.f32 0.0, %v1266
    %v1268 = vpop.f32.mrf.mxu0
    %1269 = vdwg.mxu0
    %1270 = vmatpush.bf16.msra.mxu0 0
    %1271 = vmatpush.bf16.msra.mxu0 0
    %1272 = vmatpush.bf16.msra.mxu0 0
    %1273 = vmatpush.bf16.msra.mxu0 0
    %1274 = vmatpush.bf16.msra.mxu0 %v535
    %1275 = vmatpush.bf16.msra.mxu0 %v531
    %1276 = vmatpush.bf16.msra.mxu0 %v527
    %1277 = vmatpush.bf16.msra.mxu0 %v523
    %1278 = vmatmul.bf16.gmra.mxu0 %v1229
    %v1279 = vpop.f32.mrf.mxu0
    %v1280 = vadd.f32 0.0, %v1279
    %v1281 = vpop.f32.mrf.mxu0
    %1282 = vdwg.mxu0
    %v1287 = vrot.slane %v1241, 5
    %v1288 = vrot.slane %v1254, 5
    %v1289 = vrot.slane %v1267, 5
    %v1290 = vrot.slane %v1280, 5
    %v1291 = vrot.slane %v1241, 6
    %v1292 = vrot.slane %v1254, 6
    %v1293 = vrot.slane %v1267, 6
    %v1294 = vrot.slane %v1280, 6
    %v1303 = vadd.f32 %v446, %v1287
    %v1304 = vadd.f32 %v447, %v1288
    %v1305 = vadd.f32 %v448, %v1289
    %v1306 = vadd.f32 %v449, %v1290
    %v1307 = vadd.f32 %v450, %v1291
    %v1308 = vadd.f32 %v451, %v1292
    %v1309 = vadd.f32 %v452, %v1293
    %v1310 = vadd.f32 %v453, %v1294
    %v1311 = vxor.u32 %v1303, 2147483648
    %v1312 = vxor.u32 %v1307, 2147483648
    %v1313 = vmul.f32 %v1311, 1.442695
    %v1314 = vpow.pop %v1313
    %v1315 = vmul.f32 %v1312, 1.442695
    %v1316 = vpow.pop %v1315
    %v1317 = vadd.f32 %v1314, 1.0
    %v1318 = vadd.f32 %v1316, 1.0
    %v1319 = vrcp.pop %v1317
    %v1320 = vmul.f32 %v1317, %v1319
    %v1321 = vsub.f32 1.0, %v1320
    %v1322 = vmul.f32 %v1319, %v1321
    %v1323 = vadd.f32 %v1319, %v1322
    %vm1324 = vweird.f32 %v1317
    %vm1325 = vweird.f32 %v1319
    %vm1326 = vmor %vm1324, %vm1325
    %v1327 = vsel %vm1326, %v1319, %v1323
    %v1328 = vand.u32 2147483647, %v1317
    %vm1329 = vcmp.eq.f32.partialorder %v1328, 8.507059e+37
    %v1330 = vand.u32 %v1317, 2147483648
    %v1331 = vor.u32 1.1754944e-38, %v1330
    %v1332 = vsel %vm1329, %v1331, %v1327
    %v1333 = vmul.f32 1.0, %v1332
    %v1334 = vrcp.pop %v1318
    %v1335 = vmul.f32 %v1318, %v1334
    %v1336 = vsub.f32 1.0, %v1335
    %v1337 = vmul.f32 %v1334, %v1336
    %v1338 = vadd.f32 %v1334, %v1337
    %vm1339 = vweird.f32 %v1318
    %vm1340 = vweird.f32 %v1334
    %vm1341 = vmor %vm1339, %vm1340
    %v1342 = vsel %vm1341, %v1334, %v1338
    %v1343 = vand.u32 2147483647, %v1318
    %vm1344 = vcmp.eq.f32.partialorder %v1343, 8.507059e+37
    %v1345 = vand.u32 %v1318, 2147483648
    %v1346 = vor.u32 1.1754944e-38, %v1345
    %v1347 = vsel %vm1344, %v1346, %v1342
    %v1348 = vmul.f32 1.0, %v1347
    %v1349 = vxor.u32 %v1304, 2147483648
    %v1350 = vxor.u32 %v1308, 2147483648
    %v1351 = vmul.f32 %v1349, 1.442695
    %v1352 = vpow.pop %v1351
    %v1353 = vmul.f32 %v1350, 1.442695
    %v1354 = vpow.pop %v1353
    %v1355 = vadd.f32 %v1352, 1.0
    %v1356 = vadd.f32 %v1354, 1.0
    %v1357 = vrcp.pop %v1355
    %v1358 = vmul.f32 %v1355, %v1357
    %v1359 = vsub.f32 1.0, %v1358
    %v1360 = vmul.f32 %v1357, %v1359
    %v1361 = vadd.f32 %v1357, %v1360
    %vm1362 = vweird.f32 %v1355
    %vm1363 = vweird.f32 %v1357
    %vm1364 = vmor %vm1362, %vm1363
    %v1365 = vsel %vm1364, %v1357, %v1361
    %v1366 = vand.u32 2147483647, %v1355
    %vm1367 = vcmp.eq.f32.partialorder %v1366, 8.507059e+37
    %v1368 = vand.u32 %v1355, 2147483648
    %v1369 = vor.u32 1.1754944e-38, %v1368
    %v1370 = vsel %vm1367, %v1369, %v1365
    %v1371 = vmul.f32 1.0, %v1370
    %v1372 = vrcp.pop %v1356
    %v1373 = vmul.f32 %v1356, %v1372
    %v1374 = vsub.f32 1.0, %v1373
    %v1375 = vmul.f32 %v1372, %v1374
    %v1376 = vadd.f32 %v1372, %v1375
    %vm1377 = vweird.f32 %v1356
    %vm1378 = vweird.f32 %v1372
    %vm1379 = vmor %vm1377, %vm1378
    %v1380 = vsel %vm1379, %v1372, %v1376
    %v1381 = vand.u32 2147483647, %v1356
    %vm1382 = vcmp.eq.f32.partialorder %v1381, 8.507059e+37
    %v1383 = vand.u32 %v1356, 2147483648
    %v1384 = vor.u32 1.1754944e-38, %v1383
    %v1385 = vsel %vm1382, %v1384, %v1380
    %v1386 = vmul.f32 1.0, %v1385
    %v1387 = vtanh.pop %v1305
    %v1388 = vtanh.pop %v1309
    %v1389 = vxor.u32 %v1306, 2147483648
    %v1390 = vxor.u32 %v1310, 2147483648
    %v1391 = vmul.f32 %v1389, 1.442695
    %v1392 = vpow.pop %v1391
    %v1393 = vmul.f32 %v1390, 1.442695
    %v1394 = vpow.pop %v1393
    %v1395 = vadd.f32 %v1392, 1.0
    %v1396 = vadd.f32 %v1394, 1.0
    %v1397 = vrcp.pop %v1395
    %v1398 = vmul.f32 %v1395, %v1397
    %v1399 = vsub.f32 1.0, %v1398
    %v1400 = vmul.f32 %v1397, %v1399
    %v1401 = vadd.f32 %v1397, %v1400
    %vm1402 = vweird.f32 %v1395
    %vm1403 = vweird.f32 %v1397
    %vm1404 = vmor %vm1402, %vm1403
    %v1405 = vsel %vm1404, %v1397, %v1401
    %v1406 = vand.u32 2147483647, %v1395
    %vm1407 = vcmp.eq.f32.partialorder %v1406, 8.507059e+37
    %v1408 = vand.u32 %v1395, 2147483648
    %v1409 = vor.u32 1.1754944e-38, %v1408
    %v1410 = vsel %vm1407, %v1409, %v1405
    %v1411 = vmul.f32 1.0, %v1410
    %v1412 = vrcp.pop %v1396
    %v1413 = vmul.f32 %v1396, %v1412
    %v1414 = vsub.f32 1.0, %v1413
    %v1415 = vmul.f32 %v1412, %v1414
    %v1416 = vadd.f32 %v1412, %v1415
    %vm1417 = vweird.f32 %v1396
    %vm1418 = vweird.f32 %v1412
    %vm1419 = vmor %vm1417, %vm1418
    %v1420 = vsel %vm1419, %v1412, %v1416
    %v1421 = vand.u32 2147483647, %v1396
    %vm1422 = vcmp.eq.f32.partialorder %v1421, 8.507059e+37
    %v1423 = vand.u32 %v1396, 2147483648
    %v1424 = vor.u32 1.1754944e-38, %v1423
    %v1425 = vsel %vm1422, %v1424, %v1420
    %v1426 = vmul.f32 1.0, %v1425
    %v1429 = vrot.slane %v1207, 7
    %v1430 = vrot.slane %v1208, 7
    %v1433 = vmul.f32 %v1371, %v1429
    %v1434 = vmul.f32 %v1386, %v1430
    %v1435 = vmul.f32 %v1333, %v1387
    %v1436 = vmul.f32 %v1348, %v1388
    %v1437 = vadd.f32 %v1433, %v1435
    %v1438 = vadd.f32 %v1434, %v1436
    %v1439 = vtanh.pop %v1437
    %v1440 = vtanh.pop %v1438
    %v1441 = vmul.f32 %v1411, %v1439
    %v1442 = vmul.f32 %v1426, %v1440
    %vm1443 = vcmp.eq.s32.totalorder %v471, 3
    %v1444 = vperm.slane %v1441, 3
    %v1445 = vperm.slane %v1442, 3
    %v1446 = vsel %vm1443, %v1444, %v1216
    %v1447 = vsel %vm1443, %v1445, %v1217
    %v1448 = vpack.c.bf16 %v1441, %v1441
    %v1449 = vpack.c.bf16 %v1442, %v1442
    %v1452 = vunpack.c.l.b16 %v1448
    %v1453 = vunpack.c.l.b16 %v1449
    %v1454 = vrot.slane %v1452, 3
    %v1455 = vrot.slane %v1453, 2
    %v1456 = vsel %vm770, %v1455, %v1454
    %v1457 = vpack.c.b16 %v1456, %v1456
    %v1459 = vsel %vm552, %v1457, 0
    %1461 = vmatpush.bf16.msra.mxu0 0
    %1462 = vmatpush.bf16.msra.mxu0 0
    %1463 = vmatpush.bf16.msra.mxu0 0
    %1464 = vmatpush.bf16.msra.mxu0 0
    %1465 = vmatpush.bf16.msra.mxu0 %v532
    %1466 = vmatpush.bf16.msra.mxu0 %v528
    %1467 = vmatpush.bf16.msra.mxu0 %v524
    %1468 = vmatpush.bf16.msra.mxu0 %v520
    %1469 = vmatmul.bf16.gmra.mxu0 %v1459
    %v1470 = vpop.f32.mrf.mxu0
    %v1471 = vadd.f32 0.0, %v1470
    %v1472 = vpop.f32.mrf.mxu0
    %1473 = vdwg.mxu0
    %1474 = vmatpush.bf16.msra.mxu0 0
    %1475 = vmatpush.bf16.msra.mxu0 0
    %1476 = vmatpush.bf16.msra.mxu0 0
    %1477 = vmatpush.bf16.msra.mxu0 0
    %1478 = vmatpush.bf16.msra.mxu0 %v533
    %1479 = vmatpush.bf16.msra.mxu0 %v529
    %1480 = vmatpush.bf16.msra.mxu0 %v525
    %1481 = vmatpush.bf16.msra.mxu0 %v521
    %1482 = vmatmul.bf16.gmra.mxu0 %v1459
    %v1483 = vpop.f32.mrf.mxu0
    %v1484 = vadd.f32 0.0, %v1483
    %v1485 = vpop.f32.mrf.mxu0
    %1486 = vdwg.mxu0
    %1487 = vmatpush.bf16.msra.mxu0 0
    %1488 = vmatpush.bf16.msra.mxu0 0
    %1489 = vmatpush.bf16.msra.mxu0 0
    %1490 = vmatpush.bf16.msra.mxu0 0
    %1491 = vmatpush.bf16.msra.mxu0 %v534
    %1492 = vmatpush.bf16.msra.mxu0 %v530
    %1493 = vmatpush.bf16.msra.mxu0 %v526
    %1494 = vmatpush.bf16.msra.mxu0 %v522
    %1495 = vmatmul.bf16.gmra.mxu0 %v1459
    %v1496 = vpop.f32.mrf.mxu0
    %v1497 = vadd.f32 0.0, %v1496
    %v1498 = vpop.f32.mrf.mxu0
    %1499 = vdwg.mxu0
    %1500 = vmatpush.bf16.msra.mxu0 0
    %1501 = vmatpush.bf16.msra.mxu0 0
    %1502 = vmatpush.bf16.msra.mxu0 0
    %1503 = vmatpush.bf16.msra.mxu0 0
    %1504 = vmatpush.bf16.msra.mxu0 %v535
    %1505 = vmatpush.bf16.msra.mxu0 %v531
    %1506 = vmatpush.bf16.msra.mxu0 %v527
    %1507 = vmatpush.bf16.msra.mxu0 %v523
    %1508 = vmatmul.bf16.gmra.mxu0 %v1459
    %v1509 = vpop.f32.mrf.mxu0
    %v1510 = vadd.f32 0.0, %v1509
    %v1511 = vpop.f32.mrf.mxu0
    %1512 = vdwg.mxu0
    %v1517 = vrot.slane %v1471, 4
    %v1518 = vrot.slane %v1484, 4
    %v1519 = vrot.slane %v1497, 4
    %v1520 = vrot.slane %v1510, 4
    %v1521 = vrot.slane %v1471, 5
    %v1522 = vrot.slane %v1484, 5
    %v1523 = vrot.slane %v1497, 5
    %v1524 = vrot.slane %v1510, 5
    %v1533 = vadd.f32 %v446, %v1517
    %v1534 = vadd.f32 %v447, %v1518
    %v1535 = vadd.f32 %v448, %v1519
    %v1536 = vadd.f32 %v449, %v1520
    %v1537 = vadd.f32 %v450, %v1521
    %v1538 = vadd.f32 %v451, %v1522
    %v1539 = vadd.f32 %v452, %v1523
    %v1540 = vadd.f32 %v453, %v1524
    %v1541 = vxor.u32 %v1533, 2147483648
    %v1542 = vxor.u32 %v1537, 2147483648
    %v1543 = vmul.f32 %v1541, 1.442695
    %v1544 = vpow.pop %v1543
    %v1545 = vmul.f32 %v1542, 1.442695
    %v1546 = vpow.pop %v1545
    %v1547 = vadd.f32 %v1544, 1.0
    %v1548 = vadd.f32 %v1546, 1.0
    %v1549 = vrcp.pop %v1547
    %v1550 = vmul.f32 %v1547, %v1549
    %v1551 = vsub.f32 1.0, %v1550
    %v1552 = vmul.f32 %v1549, %v1551
    %v1553 = vadd.f32 %v1549, %v1552
    %vm1554 = vweird.f32 %v1547
    %vm1555 = vweird.f32 %v1549
    %vm1556 = vmor %vm1554, %vm1555
    %v1557 = vsel %vm1556, %v1549, %v1553
    %v1558 = vand.u32 2147483647, %v1547
    %vm1559 = vcmp.eq.f32.partialorder %v1558, 8.507059e+37
    %v1560 = vand.u32 %v1547, 2147483648
    %v1561 = vor.u32 1.1754944e-38, %v1560
    %v1562 = vsel %vm1559, %v1561, %v1557
    %v1563 = vmul.f32 1.0, %v1562
    %v1564 = vrcp.pop %v1548
    %v1565 = vmul.f32 %v1548, %v1564
    %v1566 = vsub.f32 1.0, %v1565
    %v1567 = vmul.f32 %v1564, %v1566
    %v1568 = vadd.f32 %v1564, %v1567
    %vm1569 = vweird.f32 %v1548
    %vm1570 = vweird.f32 %v1564
    %vm1571 = vmor %vm1569, %vm1570
    %v1572 = vsel %vm1571, %v1564, %v1568
    %v1573 = vand.u32 2147483647, %v1548
    %vm1574 = vcmp.eq.f32.partialorder %v1573, 8.507059e+37
    %v1575 = vand.u32 %v1548, 2147483648
    %v1576 = vor.u32 1.1754944e-38, %v1575
    %v1577 = vsel %vm1574, %v1576, %v1572
    %v1578 = vmul.f32 1.0, %v1577
    %v1579 = vxor.u32 %v1534, 2147483648
    %v1580 = vxor.u32 %v1538, 2147483648
    %v1581 = vmul.f32 %v1579, 1.442695
    %v1582 = vpow.pop %v1581
    %v1583 = vmul.f32 %v1580, 1.442695
    %v1584 = vpow.pop %v1583
    %v1585 = vadd.f32 %v1582, 1.0
    %v1586 = vadd.f32 %v1584, 1.0
    %v1587 = vrcp.pop %v1585
    %v1588 = vmul.f32 %v1585, %v1587
    %v1589 = vsub.f32 1.0, %v1588
    %v1590 = vmul.f32 %v1587, %v1589
    %v1591 = vadd.f32 %v1587, %v1590
    %vm1592 = vweird.f32 %v1585
    %vm1593 = vweird.f32 %v1587
    %vm1594 = vmor %vm1592, %vm1593
    %v1595 = vsel %vm1594, %v1587, %v1591
    %v1596 = vand.u32 2147483647, %v1585
    %vm1597 = vcmp.eq.f32.partialorder %v1596, 8.507059e+37
    %v1598 = vand.u32 %v1585, 2147483648
    %v1599 = vor.u32 1.1754944e-38, %v1598
    %v1600 = vsel %vm1597, %v1599, %v1595
    %v1601 = vmul.f32 1.0, %v1600
    %v1602 = vrcp.pop %v1586
    %v1603 = vmul.f32 %v1586, %v1602
    %v1604 = vsub.f32 1.0, %v1603
    %v1605 = vmul.f32 %v1602, %v1604
    %v1606 = vadd.f32 %v1602, %v1605
    %vm1607 = vweird.f32 %v1586
    %vm1608 = vweird.f32 %v1602
    %vm1609 = vmor %vm1607, %vm1608
    %v1610 = vsel %vm1609, %v1602, %v1606
    %v1611 = vand.u32 2147483647, %v1586
    %vm1612 = vcmp.eq.f32.partialorder %v1611, 8.507059e+37
    %v1613 = vand.u32 %v1586, 2147483648
    %v1614 = vor.u32 1.1754944e-38, %v1613
    %v1615 = vsel %vm1612, %v1614, %v1610
    %v1616 = vmul.f32 1.0, %v1615
    %v1617 = vtanh.pop %v1535
    %v1618 = vtanh.pop %v1539
    %v1619 = vxor.u32 %v1536, 2147483648
    %v1620 = vxor.u32 %v1540, 2147483648
    %v1621 = vmul.f32 %v1619, 1.442695
    %v1622 = vpow.pop %v1621
    %v1623 = vmul.f32 %v1620, 1.442695
    %v1624 = vpow.pop %v1623
    %v1625 = vadd.f32 %v1622, 1.0
    %v1626 = vadd.f32 %v1624, 1.0
    %v1627 = vrcp.pop %v1625
    %v1628 = vmul.f32 %v1625, %v1627
    %v1629 = vsub.f32 1.0, %v1628
    %v1630 = vmul.f32 %v1627, %v1629
    %v1631 = vadd.f32 %v1627, %v1630
    %vm1632 = vweird.f32 %v1625
    %vm1633 = vweird.f32 %v1627
    %vm1634 = vmor %vm1632, %vm1633
    %v1635 = vsel %vm1634, %v1627, %v1631
    %v1636 = vand.u32 2147483647, %v1625
    %vm1637 = vcmp.eq.f32.partialorder %v1636, 8.507059e+37
    %v1638 = vand.u32 %v1625, 2147483648
    %v1639 = vor.u32 1.1754944e-38, %v1638
    %v1640 = vsel %vm1637, %v1639, %v1635
    %v1641 = vmul.f32 1.0, %v1640
    %v1642 = vrcp.pop %v1626
    %v1643 = vmul.f32 %v1626, %v1642
    %v1644 = vsub.f32 1.0, %v1643
    %v1645 = vmul.f32 %v1642, %v1644
    %v1646 = vadd.f32 %v1642, %v1645
    %vm1647 = vweird.f32 %v1626
    %vm1648 = vweird.f32 %v1642
    %vm1649 = vmor %vm1647, %vm1648
    %v1650 = vsel %vm1649, %v1642, %v1646
    %v1651 = vand.u32 2147483647, %v1626
    %vm1652 = vcmp.eq.f32.partialorder %v1651, 8.507059e+37
    %v1653 = vand.u32 %v1626, 2147483648
    %v1654 = vor.u32 1.1754944e-38, %v1653
    %v1655 = vsel %vm1652, %v1654, %v1650
    %v1656 = vmul.f32 1.0, %v1655
    %v1659 = vrot.slane %v1437, 7
    %v1660 = vrot.slane %v1438, 7
    %v1663 = vmul.f32 %v1601, %v1659
    %v1664 = vmul.f32 %v1616, %v1660
    %v1665 = vmul.f32 %v1563, %v1617
    %v1666 = vmul.f32 %v1578, %v1618
    %v1667 = vadd.f32 %v1663, %v1665
    %v1668 = vadd.f32 %v1664, %v1666
    %v1669 = vtanh.pop %v1667
    %v1670 = vtanh.pop %v1668
    %v1671 = vmul.f32 %v1641, %v1669
    %v1672 = vmul.f32 %v1656, %v1670
    %vm1673 = vcmp.eq.s32.totalorder %v471, 4
    %v1674 = vperm.slane %v1671, 4
    %v1675 = vperm.slane %v1672, 4
    %v1676 = vsel %vm1673, %v1674, %v1446
    %v1677 = vsel %vm1673, %v1675, %v1447
    %v1678 = vpack.c.bf16 %v1671, %v1671
    %v1679 = vpack.c.bf16 %v1672, %v1672
    %v1682 = vunpack.c.l.b16 %v1678
    %v1683 = vunpack.c.l.b16 %v1679
    %v1684 = vrot.slane %v1682, 4
    %v1685 = vrot.slane %v1683, 3
    %v1686 = vsel %vm770, %v1685, %v1684
    %v1687 = vpack.c.b16 %v1686, %v1686
    %v1689 = vsel %vm552, %v1687, 0
    %1691 = vmatpush.bf16.msra.mxu0 0
    %1692 = vmatpush.bf16.msra.mxu0 0
    %1693 = vmatpush.bf16.msra.mxu0 0
    %1694 = vmatpush.bf16.msra.mxu0 0
    %1695 = vmatpush.bf16.msra.mxu0 %v532
    %1696 = vmatpush.bf16.msra.mxu0 %v528
    %1697 = vmatpush.bf16.msra.mxu0 %v524
    %1698 = vmatpush.bf16.msra.mxu0 %v520
    %1699 = vmatmul.bf16.gmra.mxu0 %v1689
    %v1700 = vpop.f32.mrf.mxu0
    %v1701 = vadd.f32 0.0, %v1700
    %v1702 = vpop.f32.mrf.mxu0
    %1703 = vdwg.mxu0
    %1704 = vmatpush.bf16.msra.mxu0 0
    %1705 = vmatpush.bf16.msra.mxu0 0
    %1706 = vmatpush.bf16.msra.mxu0 0
    %1707 = vmatpush.bf16.msra.mxu0 0
    %1708 = vmatpush.bf16.msra.mxu0 %v533
    %1709 = vmatpush.bf16.msra.mxu0 %v529
    %1710 = vmatpush.bf16.msra.mxu0 %v525
    %1711 = vmatpush.bf16.msra.mxu0 %v521
    %1712 = vmatmul.bf16.gmra.mxu0 %v1689
    %v1713 = vpop.f32.mrf.mxu0
    %v1714 = vadd.f32 0.0, %v1713
    %v1715 = vpop.f32.mrf.mxu0
    %1716 = vdwg.mxu0
    %1717 = vmatpush.bf16.msra.mxu0 0
    %1718 = vmatpush.bf16.msra.mxu0 0
    %1719 = vmatpush.bf16.msra.mxu0 0
    %1720 = vmatpush.bf16.msra.mxu0 0
    %1721 = vmatpush.bf16.msra.mxu0 %v534
    %1722 = vmatpush.bf16.msra.mxu0 %v530
    %1723 = vmatpush.bf16.msra.mxu0 %v526
    %1724 = vmatpush.bf16.msra.mxu0 %v522
    %1725 = vmatmul.bf16.gmra.mxu0 %v1689
    %v1726 = vpop.f32.mrf.mxu0
    %v1727 = vadd.f32 0.0, %v1726
    %v1728 = vpop.f32.mrf.mxu0
    %1729 = vdwg.mxu0
    %1730 = vmatpush.bf16.msra.mxu0 0
    %1731 = vmatpush.bf16.msra.mxu0 0
    %1732 = vmatpush.bf16.msra.mxu0 0
    %1733 = vmatpush.bf16.msra.mxu0 0
    %1734 = vmatpush.bf16.msra.mxu0 %v535
    %1735 = vmatpush.bf16.msra.mxu0 %v531
    %1736 = vmatpush.bf16.msra.mxu0 %v527
    %1737 = vmatpush.bf16.msra.mxu0 %v523
    %1738 = vmatmul.bf16.gmra.mxu0 %v1689
    %v1739 = vpop.f32.mrf.mxu0
    %v1740 = vadd.f32 0.0, %v1739
    %v1741 = vpop.f32.mrf.mxu0
    %1742 = vdwg.mxu0
    %v1747 = vrot.slane %v1701, 3
    %v1748 = vrot.slane %v1714, 3
    %v1749 = vrot.slane %v1727, 3
    %v1750 = vrot.slane %v1740, 3
    %v1751 = vrot.slane %v1701, 4
    %v1752 = vrot.slane %v1714, 4
    %v1753 = vrot.slane %v1727, 4
    %v1754 = vrot.slane %v1740, 4
    %v1763 = vadd.f32 %v446, %v1747
    %v1764 = vadd.f32 %v447, %v1748
    %v1765 = vadd.f32 %v448, %v1749
    %v1766 = vadd.f32 %v449, %v1750
    %v1767 = vadd.f32 %v450, %v1751
    %v1768 = vadd.f32 %v451, %v1752
    %v1769 = vadd.f32 %v452, %v1753
    %v1770 = vadd.f32 %v453, %v1754
    %v1771 = vxor.u32 %v1763, 2147483648
    %v1772 = vxor.u32 %v1767, 2147483648
    %v1773 = vmul.f32 %v1771, 1.442695
    %v1774 = vpow.pop %v1773
    %v1775 = vmul.f32 %v1772, 1.442695
    %v1776 = vpow.pop %v1775
    %v1777 = vadd.f32 %v1774, 1.0
    %v1778 = vadd.f32 %v1776, 1.0
    %v1779 = vrcp.pop %v1777
    %v1780 = vmul.f32 %v1777, %v1779
    %v1781 = vsub.f32 1.0, %v1780
    %v1782 = vmul.f32 %v1779, %v1781
    %v1783 = vadd.f32 %v1779, %v1782
    %vm1784 = vweird.f32 %v1777
    %vm1785 = vweird.f32 %v1779
    %vm1786 = vmor %vm1784, %vm1785
    %v1787 = vsel %vm1786, %v1779, %v1783
    %v1788 = vand.u32 2147483647, %v1777
    %vm1789 = vcmp.eq.f32.partialorder %v1788, 8.507059e+37
    %v1790 = vand.u32 %v1777, 2147483648
    %v1791 = vor.u32 1.1754944e-38, %v1790
    %v1792 = vsel %vm1789, %v1791, %v1787
    %v1793 = vmul.f32 1.0, %v1792
    %v1794 = vrcp.pop %v1778
    %v1795 = vmul.f32 %v1778, %v1794
    %v1796 = vsub.f32 1.0, %v1795
    %v1797 = vmul.f32 %v1794, %v1796
    %v1798 = vadd.f32 %v1794, %v1797
    %vm1799 = vweird.f32 %v1778
    %vm1800 = vweird.f32 %v1794
    %vm1801 = vmor %vm1799, %vm1800
    %v1802 = vsel %vm1801, %v1794, %v1798
    %v1803 = vand.u32 2147483647, %v1778
    %vm1804 = vcmp.eq.f32.partialorder %v1803, 8.507059e+37
    %v1805 = vand.u32 %v1778, 2147483648
    %v1806 = vor.u32 1.1754944e-38, %v1805
    %v1807 = vsel %vm1804, %v1806, %v1802
    %v1808 = vmul.f32 1.0, %v1807
    %v1809 = vxor.u32 %v1764, 2147483648
    %v1810 = vxor.u32 %v1768, 2147483648
    %v1811 = vmul.f32 %v1809, 1.442695
    %v1812 = vpow.pop %v1811
    %v1813 = vmul.f32 %v1810, 1.442695
    %v1814 = vpow.pop %v1813
    %v1815 = vadd.f32 %v1812, 1.0
    %v1816 = vadd.f32 %v1814, 1.0
    %v1817 = vrcp.pop %v1815
    %v1818 = vmul.f32 %v1815, %v1817
    %v1819 = vsub.f32 1.0, %v1818
    %v1820 = vmul.f32 %v1817, %v1819
    %v1821 = vadd.f32 %v1817, %v1820
    %vm1822 = vweird.f32 %v1815
    %vm1823 = vweird.f32 %v1817
    %vm1824 = vmor %vm1822, %vm1823
    %v1825 = vsel %vm1824, %v1817, %v1821
    %v1826 = vand.u32 2147483647, %v1815
    %vm1827 = vcmp.eq.f32.partialorder %v1826, 8.507059e+37
    %v1828 = vand.u32 %v1815, 2147483648
    %v1829 = vor.u32 1.1754944e-38, %v1828
    %v1830 = vsel %vm1827, %v1829, %v1825
    %v1831 = vmul.f32 1.0, %v1830
    %v1832 = vrcp.pop %v1816
    %v1833 = vmul.f32 %v1816, %v1832
    %v1834 = vsub.f32 1.0, %v1833
    %v1835 = vmul.f32 %v1832, %v1834
    %v1836 = vadd.f32 %v1832, %v1835
    %vm1837 = vweird.f32 %v1816
    %vm1838 = vweird.f32 %v1832
    %vm1839 = vmor %vm1837, %vm1838
    %v1840 = vsel %vm1839, %v1832, %v1836
    %v1841 = vand.u32 2147483647, %v1816
    %vm1842 = vcmp.eq.f32.partialorder %v1841, 8.507059e+37
    %v1843 = vand.u32 %v1816, 2147483648
    %v1844 = vor.u32 1.1754944e-38, %v1843
    %v1845 = vsel %vm1842, %v1844, %v1840
    %v1846 = vmul.f32 1.0, %v1845
    %v1847 = vtanh.pop %v1765
    %v1848 = vtanh.pop %v1769
    %v1849 = vxor.u32 %v1766, 2147483648
    %v1850 = vxor.u32 %v1770, 2147483648
    %v1851 = vmul.f32 %v1849, 1.442695
    %v1852 = vpow.pop %v1851
    %v1853 = vmul.f32 %v1850, 1.442695
    %v1854 = vpow.pop %v1853
    %v1855 = vadd.f32 %v1852, 1.0
    %v1856 = vadd.f32 %v1854, 1.0
    %v1857 = vrcp.pop %v1855
    %v1858 = vmul.f32 %v1855, %v1857
    %v1859 = vsub.f32 1.0, %v1858
    %v1860 = vmul.f32 %v1857, %v1859
    %v1861 = vadd.f32 %v1857, %v1860
    %vm1862 = vweird.f32 %v1855
    %vm1863 = vweird.f32 %v1857
    %vm1864 = vmor %vm1862, %vm1863
    %v1865 = vsel %vm1864, %v1857, %v1861
    %v1866 = vand.u32 2147483647, %v1855
    %vm1867 = vcmp.eq.f32.partialorder %v1866, 8.507059e+37
    %v1868 = vand.u32 %v1855, 2147483648
    %v1869 = vor.u32 1.1754944e-38, %v1868
    %v1870 = vsel %vm1867, %v1869, %v1865
    %v1871 = vmul.f32 1.0, %v1870
    %v1872 = vrcp.pop %v1856
    %v1873 = vmul.f32 %v1856, %v1872
    %v1874 = vsub.f32 1.0, %v1873
    %v1875 = vmul.f32 %v1872, %v1874
    %v1876 = vadd.f32 %v1872, %v1875
    %vm1877 = vweird.f32 %v1856
    %vm1878 = vweird.f32 %v1872
    %vm1879 = vmor %vm1877, %vm1878
    %v1880 = vsel %vm1879, %v1872, %v1876
    %v1881 = vand.u32 2147483647, %v1856
    %vm1882 = vcmp.eq.f32.partialorder %v1881, 8.507059e+37
    %v1883 = vand.u32 %v1856, 2147483648
    %v1884 = vor.u32 1.1754944e-38, %v1883
    %v1885 = vsel %vm1882, %v1884, %v1880
    %v1886 = vmul.f32 1.0, %v1885
    %v1889 = vrot.slane %v1667, 7
    %v1890 = vrot.slane %v1668, 7
    %v1893 = vmul.f32 %v1831, %v1889
    %v1894 = vmul.f32 %v1846, %v1890
    %v1895 = vmul.f32 %v1793, %v1847
    %v1896 = vmul.f32 %v1808, %v1848
    %v1897 = vadd.f32 %v1893, %v1895
    %v1898 = vadd.f32 %v1894, %v1896
    %v1899 = vtanh.pop %v1897
    %v1900 = vtanh.pop %v1898
    %v1901 = vmul.f32 %v1871, %v1899
    %v1902 = vmul.f32 %v1886, %v1900
    %vm1903 = vcmp.eq.s32.totalorder %v471, 5
    %v1904 = vperm.slane %v1901, 5
    %v1905 = vperm.slane %v1902, 5
    %v1906 = vsel %vm1903, %v1904, %v1676
    %v1907 = vsel %vm1903, %v1905, %v1677
    %v1908 = vpack.c.bf16 %v1901, %v1901
    %v1909 = vpack.c.bf16 %v1902, %v1902
    %v1912 = vunpack.c.l.b16 %v1908
    %v1913 = vunpack.c.l.b16 %v1909
    %v1914 = vrot.slane %v1912, 5
    %v1915 = vrot.slane %v1913, 4
    %v1916 = vsel %vm770, %v1915, %v1914
    %v1917 = vpack.c.b16 %v1916, %v1916
    %v1919 = vsel %vm552, %v1917, 0
    %1921 = vmatpush.bf16.msra.mxu0 0
    %1922 = vmatpush.bf16.msra.mxu0 0
    %1923 = vmatpush.bf16.msra.mxu0 0
    %1924 = vmatpush.bf16.msra.mxu0 0
    %1925 = vmatpush.bf16.msra.mxu0 %v532
    %1926 = vmatpush.bf16.msra.mxu0 %v528
    %1927 = vmatpush.bf16.msra.mxu0 %v524
    %1928 = vmatpush.bf16.msra.mxu0 %v520
    %1929 = vmatmul.bf16.gmra.mxu0 %v1919
    %v1930 = vpop.f32.mrf.mxu0
    %v1931 = vadd.f32 0.0, %v1930
    %v1932 = vpop.f32.mrf.mxu0
    %1933 = vdwg.mxu0
    %1934 = vmatpush.bf16.msra.mxu0 0
    %1935 = vmatpush.bf16.msra.mxu0 0
    %1936 = vmatpush.bf16.msra.mxu0 0
    %1937 = vmatpush.bf16.msra.mxu0 0
    %1938 = vmatpush.bf16.msra.mxu0 %v533
    %1939 = vmatpush.bf16.msra.mxu0 %v529
    %1940 = vmatpush.bf16.msra.mxu0 %v525
    %1941 = vmatpush.bf16.msra.mxu0 %v521
    %1942 = vmatmul.bf16.gmra.mxu0 %v1919
    %v1943 = vpop.f32.mrf.mxu0
    %v1944 = vadd.f32 0.0, %v1943
    %v1945 = vpop.f32.mrf.mxu0
    %1946 = vdwg.mxu0
    %1947 = vmatpush.bf16.msra.mxu0 0
    %1948 = vmatpush.bf16.msra.mxu0 0
    %1949 = vmatpush.bf16.msra.mxu0 0
    %1950 = vmatpush.bf16.msra.mxu0 0
    %1951 = vmatpush.bf16.msra.mxu0 %v534
    %1952 = vmatpush.bf16.msra.mxu0 %v530
    %1953 = vmatpush.bf16.msra.mxu0 %v526
    %1954 = vmatpush.bf16.msra.mxu0 %v522
    %1955 = vmatmul.bf16.gmra.mxu0 %v1919
    %v1956 = vpop.f32.mrf.mxu0
    %v1957 = vadd.f32 0.0, %v1956
    %v1958 = vpop.f32.mrf.mxu0
    %1959 = vdwg.mxu0
    %1960 = vmatpush.bf16.msra.mxu0 0
    %1961 = vmatpush.bf16.msra.mxu0 0
    %1962 = vmatpush.bf16.msra.mxu0 0
    %1963 = vmatpush.bf16.msra.mxu0 0
    %1964 = vmatpush.bf16.msra.mxu0 %v535
    %1965 = vmatpush.bf16.msra.mxu0 %v531
    %1966 = vmatpush.bf16.msra.mxu0 %v527
    %1967 = vmatpush.bf16.msra.mxu0 %v523
    %1968 = vmatmul.bf16.gmra.mxu0 %v1919
    %v1969 = vpop.f32.mrf.mxu0
    %v1970 = vadd.f32 0.0, %v1969
    %v1971 = vpop.f32.mrf.mxu0
    %1972 = vdwg.mxu0
    %v1977 = vrot.slane %v1931, 2
    %v1978 = vrot.slane %v1944, 2
    %v1979 = vrot.slane %v1957, 2
    %v1980 = vrot.slane %v1970, 2
    %v1981 = vrot.slane %v1931, 3
    %v1982 = vrot.slane %v1944, 3
    %v1983 = vrot.slane %v1957, 3
    %v1984 = vrot.slane %v1970, 3
    %v1993 = vadd.f32 %v446, %v1977
    %v1994 = vadd.f32 %v447, %v1978
    %v1995 = vadd.f32 %v448, %v1979
    %v1996 = vadd.f32 %v449, %v1980
    %v1997 = vadd.f32 %v450, %v1981
    %v1998 = vadd.f32 %v451, %v1982
    %v1999 = vadd.f32 %v452, %v1983
    %v2000 = vadd.f32 %v453, %v1984
    %v2001 = vxor.u32 %v1993, 2147483648
    %v2002 = vxor.u32 %v1997, 2147483648
    %v2003 = vmul.f32 %v2001, 1.442695
    %v2004 = vpow.pop %v2003
    %v2005 = vmul.f32 %v2002, 1.442695
    %v2006 = vpow.pop %v2005
    %v2007 = vadd.f32 %v2004, 1.0
    %v2008 = vadd.f32 %v2006, 1.0
    %v2009 = vrcp.pop %v2007
    %v2010 = vmul.f32 %v2007, %v2009
    %v2011 = vsub.f32 1.0, %v2010
    %v2012 = vmul.f32 %v2009, %v2011
    %v2013 = vadd.f32 %v2009, %v2012
    %vm2014 = vweird.f32 %v2007
    %vm2015 = vweird.f32 %v2009
    %vm2016 = vmor %vm2014, %vm2015
    %v2017 = vsel %vm2016, %v2009, %v2013
    %v2018 = vand.u32 2147483647, %v2007
    %vm2019 = vcmp.eq.f32.partialorder %v2018, 8.507059e+37
    %v2020 = vand.u32 %v2007, 2147483648
    %v2021 = vor.u32 1.1754944e-38, %v2020
    %v2022 = vsel %vm2019, %v2021, %v2017
    %v2023 = vmul.f32 1.0, %v2022
    %v2024 = vrcp.pop %v2008
    %v2025 = vmul.f32 %v2008, %v2024
    %v2026 = vsub.f32 1.0, %v2025
    %v2027 = vmul.f32 %v2024, %v2026
    %v2028 = vadd.f32 %v2024, %v2027
    %vm2029 = vweird.f32 %v2008
    %vm2030 = vweird.f32 %v2024
    %vm2031 = vmor %vm2029, %vm2030
    %v2032 = vsel %vm2031, %v2024, %v2028
    %v2033 = vand.u32 2147483647, %v2008
    %vm2034 = vcmp.eq.f32.partialorder %v2033, 8.507059e+37
    %v2035 = vand.u32 %v2008, 2147483648
    %v2036 = vor.u32 1.1754944e-38, %v2035
    %v2037 = vsel %vm2034, %v2036, %v2032
    %v2038 = vmul.f32 1.0, %v2037
    %v2039 = vxor.u32 %v1994, 2147483648
    %v2040 = vxor.u32 %v1998, 2147483648
    %v2041 = vmul.f32 %v2039, 1.442695
    %v2042 = vpow.pop %v2041
    %v2043 = vmul.f32 %v2040, 1.442695
    %v2044 = vpow.pop %v2043
    %v2045 = vadd.f32 %v2042, 1.0
    %v2046 = vadd.f32 %v2044, 1.0
    %v2047 = vrcp.pop %v2045
    %v2048 = vmul.f32 %v2045, %v2047
    %v2049 = vsub.f32 1.0, %v2048
    %v2050 = vmul.f32 %v2047, %v2049
    %v2051 = vadd.f32 %v2047, %v2050
    %vm2052 = vweird.f32 %v2045
    %vm2053 = vweird.f32 %v2047
    %vm2054 = vmor %vm2052, %vm2053
    %v2055 = vsel %vm2054, %v2047, %v2051
    %v2056 = vand.u32 2147483647, %v2045
    %vm2057 = vcmp.eq.f32.partialorder %v2056, 8.507059e+37
    %v2058 = vand.u32 %v2045, 2147483648
    %v2059 = vor.u32 1.1754944e-38, %v2058
    %v2060 = vsel %vm2057, %v2059, %v2055
    %v2061 = vmul.f32 1.0, %v2060
    %v2062 = vrcp.pop %v2046
    %v2063 = vmul.f32 %v2046, %v2062
    %v2064 = vsub.f32 1.0, %v2063
    %v2065 = vmul.f32 %v2062, %v2064
    %v2066 = vadd.f32 %v2062, %v2065
    %vm2067 = vweird.f32 %v2046
    %vm2068 = vweird.f32 %v2062
    %vm2069 = vmor %vm2067, %vm2068
    %v2070 = vsel %vm2069, %v2062, %v2066
    %v2071 = vand.u32 2147483647, %v2046
    %vm2072 = vcmp.eq.f32.partialorder %v2071, 8.507059e+37
    %v2073 = vand.u32 %v2046, 2147483648
    %v2074 = vor.u32 1.1754944e-38, %v2073
    %v2075 = vsel %vm2072, %v2074, %v2070
    %v2076 = vmul.f32 1.0, %v2075
    %v2077 = vtanh.pop %v1995
    %v2078 = vtanh.pop %v1999
    %v2079 = vxor.u32 %v1996, 2147483648
    %v2080 = vxor.u32 %v2000, 2147483648
    %v2081 = vmul.f32 %v2079, 1.442695
    %v2082 = vpow.pop %v2081
    %v2083 = vmul.f32 %v2080, 1.442695
    %v2084 = vpow.pop %v2083
    %v2085 = vadd.f32 %v2082, 1.0
    %v2086 = vadd.f32 %v2084, 1.0
    %v2087 = vrcp.pop %v2085
    %v2088 = vmul.f32 %v2085, %v2087
    %v2089 = vsub.f32 1.0, %v2088
    %v2090 = vmul.f32 %v2087, %v2089
    %v2091 = vadd.f32 %v2087, %v2090
    %vm2092 = vweird.f32 %v2085
    %vm2093 = vweird.f32 %v2087
    %vm2094 = vmor %vm2092, %vm2093
    %v2095 = vsel %vm2094, %v2087, %v2091
    %v2096 = vand.u32 2147483647, %v2085
    %vm2097 = vcmp.eq.f32.partialorder %v2096, 8.507059e+37
    %v2098 = vand.u32 %v2085, 2147483648
    %v2099 = vor.u32 1.1754944e-38, %v2098
    %v2100 = vsel %vm2097, %v2099, %v2095
    %v2101 = vmul.f32 1.0, %v2100
    %v2102 = vrcp.pop %v2086
    %v2103 = vmul.f32 %v2086, %v2102
    %v2104 = vsub.f32 1.0, %v2103
    %v2105 = vmul.f32 %v2102, %v2104
    %v2106 = vadd.f32 %v2102, %v2105
    %vm2107 = vweird.f32 %v2086
    %vm2108 = vweird.f32 %v2102
    %vm2109 = vmor %vm2107, %vm2108
    %v2110 = vsel %vm2109, %v2102, %v2106
    %v2111 = vand.u32 2147483647, %v2086
    %vm2112 = vcmp.eq.f32.partialorder %v2111, 8.507059e+37
    %v2113 = vand.u32 %v2086, 2147483648
    %v2114 = vor.u32 1.1754944e-38, %v2113
    %v2115 = vsel %vm2112, %v2114, %v2110
    %v2116 = vmul.f32 1.0, %v2115
    %v2119 = vrot.slane %v1897, 7
    %v2120 = vrot.slane %v1898, 7
    %v2123 = vmul.f32 %v2061, %v2119
    %v2124 = vmul.f32 %v2076, %v2120
    %v2125 = vmul.f32 %v2023, %v2077
    %v2126 = vmul.f32 %v2038, %v2078
    %v2127 = vadd.f32 %v2123, %v2125
    %v2128 = vadd.f32 %v2124, %v2126
    %v2129 = vtanh.pop %v2127
    %v2130 = vtanh.pop %v2128
    %v2131 = vmul.f32 %v2101, %v2129
    %v2132 = vmul.f32 %v2116, %v2130
    %vm2133 = vcmp.eq.s32.totalorder %v471, 6
    %v2134 = vperm.slane %v2131, 6
    %v2135 = vperm.slane %v2132, 6
    %v2136 = vsel %vm2133, %v2134, %v1906
    %v2137 = vsel %vm2133, %v2135, %v1907
    %v2138 = vpack.c.bf16 %v2131, %v2131
    %v2139 = vpack.c.bf16 %v2132, %v2132
    %v2142 = vunpack.c.l.b16 %v2138
    %v2143 = vunpack.c.l.b16 %v2139
    %v2144 = vrot.slane %v2142, 6
    %v2145 = vrot.slane %v2143, 5
    %v2146 = vsel %vm770, %v2145, %v2144
    %v2147 = vpack.c.b16 %v2146, %v2146
    %v2149 = vsel %vm552, %v2147, 0
    %2151 = vmatpush.bf16.msra.mxu0 0
    %2152 = vmatpush.bf16.msra.mxu0 0
    %2153 = vmatpush.bf16.msra.mxu0 0
    %2154 = vmatpush.bf16.msra.mxu0 0
    %2155 = vmatpush.bf16.msra.mxu0 %v532
    %2156 = vmatpush.bf16.msra.mxu0 %v528
    %2157 = vmatpush.bf16.msra.mxu0 %v524
    %2158 = vmatpush.bf16.msra.mxu0 %v520
    %2159 = vmatmul.bf16.gmra.mxu0 %v2149
    %v2160 = vpop.f32.mrf.mxu0
    %v2161 = vadd.f32 0.0, %v2160
    %v2162 = vpop.f32.mrf.mxu0
    %2163 = vdwg.mxu0
    %2164 = vmatpush.bf16.msra.mxu0 0
    %2165 = vmatpush.bf16.msra.mxu0 0
    %2166 = vmatpush.bf16.msra.mxu0 0
    %2167 = vmatpush.bf16.msra.mxu0 0
    %2168 = vmatpush.bf16.msra.mxu0 %v533
    %2169 = vmatpush.bf16.msra.mxu0 %v529
    %2170 = vmatpush.bf16.msra.mxu0 %v525
    %2171 = vmatpush.bf16.msra.mxu0 %v521
    %2172 = vmatmul.bf16.gmra.mxu0 %v2149
    %v2173 = vpop.f32.mrf.mxu0
    %v2174 = vadd.f32 0.0, %v2173
    %v2175 = vpop.f32.mrf.mxu0
    %2176 = vdwg.mxu0
    %2177 = vmatpush.bf16.msra.mxu0 0
    %2178 = vmatpush.bf16.msra.mxu0 0
    %2179 = vmatpush.bf16.msra.mxu0 0
    %2180 = vmatpush.bf16.msra.mxu0 0
    %2181 = vmatpush.bf16.msra.mxu0 %v534
    %2182 = vmatpush.bf16.msra.mxu0 %v530
    %2183 = vmatpush.bf16.msra.mxu0 %v526
    %2184 = vmatpush.bf16.msra.mxu0 %v522
    %2185 = vmatmul.bf16.gmra.mxu0 %v2149
    %v2186 = vpop.f32.mrf.mxu0
    %v2187 = vadd.f32 0.0, %v2186
    %v2188 = vpop.f32.mrf.mxu0
    %2189 = vdwg.mxu0
    %2190 = vmatpush.bf16.msra.mxu0 0
    %2191 = vmatpush.bf16.msra.mxu0 0
    %2192 = vmatpush.bf16.msra.mxu0 0
    %2193 = vmatpush.bf16.msra.mxu0 0
    %2194 = vmatpush.bf16.msra.mxu0 %v535
    %2195 = vmatpush.bf16.msra.mxu0 %v531
    %2196 = vmatpush.bf16.msra.mxu0 %v527
    %2197 = vmatpush.bf16.msra.mxu0 %v523
    %2198 = vmatmul.bf16.gmra.mxu0 %v2149
    %v2199 = vpop.f32.mrf.mxu0
    %v2200 = vadd.f32 0.0, %v2199
    %v2201 = vpop.f32.mrf.mxu0
    %2202 = vdwg.mxu0
    %v2207 = vrot.slane %v2161, 1
    %v2208 = vrot.slane %v2174, 1
    %v2209 = vrot.slane %v2187, 1
    %v2210 = vrot.slane %v2200, 1
    %v2211 = vrot.slane %v2161, 2
    %v2212 = vrot.slane %v2174, 2
    %v2213 = vrot.slane %v2187, 2
    %v2214 = vrot.slane %v2200, 2
    %v2223 = vadd.f32 %v446, %v2207
    %v2224 = vadd.f32 %v447, %v2208
    %v2225 = vadd.f32 %v448, %v2209
    %v2226 = vadd.f32 %v449, %v2210
    %v2227 = vadd.f32 %v450, %v2211
    %v2228 = vadd.f32 %v451, %v2212
    %v2229 = vadd.f32 %v452, %v2213
    %v2230 = vadd.f32 %v453, %v2214
    %v2231 = vxor.u32 %v2223, 2147483648
    %v2232 = vxor.u32 %v2227, 2147483648
    %v2233 = vmul.f32 %v2231, 1.442695
    %v2234 = vpow.pop %v2233
    %v2235 = vmul.f32 %v2232, 1.442695
    %v2236 = vpow.pop %v2235
    %v2237 = vadd.f32 %v2234, 1.0
    %v2238 = vadd.f32 %v2236, 1.0
    %v2239 = vrcp.pop %v2237
    %v2240 = vmul.f32 %v2237, %v2239
    %v2241 = vsub.f32 1.0, %v2240
    %v2242 = vmul.f32 %v2239, %v2241
    %v2243 = vadd.f32 %v2239, %v2242
    %vm2244 = vweird.f32 %v2237
    %vm2245 = vweird.f32 %v2239
    %vm2246 = vmor %vm2244, %vm2245
    %v2247 = vsel %vm2246, %v2239, %v2243
    %v2248 = vand.u32 2147483647, %v2237
    %vm2249 = vcmp.eq.f32.partialorder %v2248, 8.507059e+37
    %v2250 = vand.u32 %v2237, 2147483648
    %v2251 = vor.u32 1.1754944e-38, %v2250
    %v2252 = vsel %vm2249, %v2251, %v2247
    %v2253 = vmul.f32 1.0, %v2252
    %v2254 = vrcp.pop %v2238
    %v2255 = vmul.f32 %v2238, %v2254
    %v2256 = vsub.f32 1.0, %v2255
    %v2257 = vmul.f32 %v2254, %v2256
    %v2258 = vadd.f32 %v2254, %v2257
    %vm2259 = vweird.f32 %v2238
    %vm2260 = vweird.f32 %v2254
    %vm2261 = vmor %vm2259, %vm2260
    %v2262 = vsel %vm2261, %v2254, %v2258
    %v2263 = vand.u32 2147483647, %v2238
    %vm2264 = vcmp.eq.f32.partialorder %v2263, 8.507059e+37
    %v2265 = vand.u32 %v2238, 2147483648
    %v2266 = vor.u32 1.1754944e-38, %v2265
    %v2267 = vsel %vm2264, %v2266, %v2262
    %v2268 = vmul.f32 1.0, %v2267
    %v2269 = vxor.u32 %v2224, 2147483648
    %v2270 = vxor.u32 %v2228, 2147483648
    %v2271 = vmul.f32 %v2269, 1.442695
    %v2272 = vpow.pop %v2271
    %v2273 = vmul.f32 %v2270, 1.442695
    %v2274 = vpow.pop %v2273
    %v2275 = vadd.f32 %v2272, 1.0
    %v2276 = vadd.f32 %v2274, 1.0
    %v2277 = vrcp.pop %v2275
    %v2278 = vmul.f32 %v2275, %v2277
    %v2279 = vsub.f32 1.0, %v2278
    %v2280 = vmul.f32 %v2277, %v2279
    %v2281 = vadd.f32 %v2277, %v2280
    %vm2282 = vweird.f32 %v2275
    %vm2283 = vweird.f32 %v2277
    %vm2284 = vmor %vm2282, %vm2283
    %v2285 = vsel %vm2284, %v2277, %v2281
    %v2286 = vand.u32 2147483647, %v2275
    %vm2287 = vcmp.eq.f32.partialorder %v2286, 8.507059e+37
    %v2288 = vand.u32 %v2275, 2147483648
    %v2289 = vor.u32 1.1754944e-38, %v2288
    %v2290 = vsel %vm2287, %v2289, %v2285
    %v2291 = vmul.f32 1.0, %v2290
    %v2292 = vrcp.pop %v2276
    %v2293 = vmul.f32 %v2276, %v2292
    %v2294 = vsub.f32 1.0, %v2293
    %v2295 = vmul.f32 %v2292, %v2294
    %v2296 = vadd.f32 %v2292, %v2295
    %vm2297 = vweird.f32 %v2276
    %vm2298 = vweird.f32 %v2292
    %vm2299 = vmor %vm2297, %vm2298
    %v2300 = vsel %vm2299, %v2292, %v2296
    %v2301 = vand.u32 2147483647, %v2276
    %vm2302 = vcmp.eq.f32.partialorder %v2301, 8.507059e+37
    %v2303 = vand.u32 %v2276, 2147483648
    %v2304 = vor.u32 1.1754944e-38, %v2303
    %v2305 = vsel %vm2302, %v2304, %v2300
    %v2306 = vmul.f32 1.0, %v2305
    %v2307 = vtanh.pop %v2225
    %v2308 = vtanh.pop %v2229
    %v2309 = vxor.u32 %v2226, 2147483648
    %v2310 = vxor.u32 %v2230, 2147483648
    %v2311 = vmul.f32 %v2309, 1.442695
    %v2312 = vpow.pop %v2311
    %v2313 = vmul.f32 %v2310, 1.442695
    %v2314 = vpow.pop %v2313
    %v2315 = vadd.f32 %v2312, 1.0
    %v2316 = vadd.f32 %v2314, 1.0
    %v2317 = vrcp.pop %v2315
    %v2318 = vmul.f32 %v2315, %v2317
    %v2319 = vsub.f32 1.0, %v2318
    %v2320 = vmul.f32 %v2317, %v2319
    %v2321 = vadd.f32 %v2317, %v2320
    %vm2322 = vweird.f32 %v2315
    %vm2323 = vweird.f32 %v2317
    %vm2324 = vmor %vm2322, %vm2323
    %v2325 = vsel %vm2324, %v2317, %v2321
    %v2326 = vand.u32 2147483647, %v2315
    %vm2327 = vcmp.eq.f32.partialorder %v2326, 8.507059e+37
    %v2328 = vand.u32 %v2315, 2147483648
    %v2329 = vor.u32 1.1754944e-38, %v2328
    %v2330 = vsel %vm2327, %v2329, %v2325
    %v2331 = vmul.f32 1.0, %v2330
    %v2332 = vrcp.pop %v2316
    %v2333 = vmul.f32 %v2316, %v2332
    %v2334 = vsub.f32 1.0, %v2333
    %v2335 = vmul.f32 %v2332, %v2334
    %v2336 = vadd.f32 %v2332, %v2335
    %vm2337 = vweird.f32 %v2316
    %vm2338 = vweird.f32 %v2332
    %vm2339 = vmor %vm2337, %vm2338
    %v2340 = vsel %vm2339, %v2332, %v2336
    %v2341 = vand.u32 2147483647, %v2316
    %vm2342 = vcmp.eq.f32.partialorder %v2341, 8.507059e+37
    %v2343 = vand.u32 %v2316, 2147483648
    %v2344 = vor.u32 1.1754944e-38, %v2343
    %v2345 = vsel %vm2342, %v2344, %v2340
    %v2346 = vmul.f32 1.0, %v2345
    %v2349 = vrot.slane %v2127, 7
    %v2350 = vrot.slane %v2128, 7
    %v2353 = vmul.f32 %v2291, %v2349
    %v2354 = vmul.f32 %v2306, %v2350
    %v2355 = vmul.f32 %v2253, %v2307
    %v2356 = vmul.f32 %v2268, %v2308
    %v2357 = vadd.f32 %v2353, %v2355
    %v2358 = vadd.f32 %v2354, %v2356
    %v2359 = vtanh.pop %v2357
    %v2360 = vtanh.pop %v2358
    %v2361 = vmul.f32 %v2331, %v2359
    %v2362 = vmul.f32 %v2346, %v2360
    %vm2363 = vcmp.eq.s32.totalorder %v471, 7
    %v2364 = vperm.slane %v2361, 7
    %v2365 = vperm.slane %v2362, 7
    %v2366 = vsel %vm2363, %v2364, %v2136
    %v2367 = vsel %vm2363, %v2365, %v2137
    %v2368 = vpack.c.bf16 %v2367, %v2366
    %v2369 = vld [vmem:[#allocation7] sm:$0xff]
    %v2370 = vld [vmem:[#allocation7 + $0x8] sm:$0xff]
    %v2371 = vld [vmem:[#allocation7 + $0x10] sm:$0xff]
    %v2372 = vld [vmem:[#allocation7 + $0x18] sm:$0xff]
    %v2373 = vld [vmem:[#allocation7 + $0x20] sm:$0xff]
    %v2374 = vld [vmem:[#allocation7 + $0x28] sm:$0xff]
    %v2375 = vld [vmem:[#allocation7 + $0x30] sm:$0xff]
    %v2376 = vld [vmem:[#allocation7 + $0x38] sm:$0xff]
    %v2377 = vld [vmem:[#allocation7 + $0x40] sm:$0xff]
    %v2378 = vld [vmem:[#allocation7 + $0x48] sm:$0xff]
    %v2379 = vld [vmem:[#allocation7 + $0x50] sm:$0xff]
    %v2380 = vld [vmem:[#allocation7 + $0x58] sm:$0xff]
    %v2381 = vld [vmem:[#allocation7 + $0x60] sm:$0xff]
    %v2382 = vld [vmem:[#allocation7 + $0x68] sm:$0xff]
    %v2383 = vld [vmem:[#allocation7 + $0x70] sm:$0xff]
    %v2384 = vld [vmem:[#allocation7 + $0x78] sm:$0xff]
    %v2385 = vld [vmem:[#allocation10] sm:$0xf]
    %v2387 = vperm.slane %v2385, 0
    %v2388 = vperm.slane %v2385, 1
    %v2389 = vperm.slane %v2385, 2
    %v2390 = vperm.slane %v2385, 3
    %v2411 = vunpack.c.l.b16 %v2369
    %v2412 = vunpack.c.h.b16 %v2369
    %v2413 = vunpack.c.l.b16 %v2370
    %v2414 = vunpack.c.h.b16 %v2370
    %v2415 = vunpack.c.l.b16 %v2371
    %v2416 = vunpack.c.h.b16 %v2371
    %v2417 = vunpack.c.l.b16 %v2372
    %v2418 = vunpack.c.h.b16 %v2372
    %v2419 = vunpack.c.l.b16 %v2373
    %v2420 = vunpack.c.h.b16 %v2373
    %v2421 = vunpack.c.l.b16 %v2374
    %v2422 = vunpack.c.h.b16 %v2374
    %v2423 = vunpack.c.l.b16 %v2375
    %v2424 = vunpack.c.h.b16 %v2375
    %v2425 = vunpack.c.l.b16 %v2376
    %v2426 = vunpack.c.h.b16 %v2376
    %v2427 = vunpack.c.l.b16 %v2377
    %v2428 = vunpack.c.h.b16 %v2377
    %v2429 = vunpack.c.l.b16 %v2378
    %v2430 = vunpack.c.h.b16 %v2378
    %v2431 = vunpack.c.l.b16 %v2379
    %v2432 = vunpack.c.h.b16 %v2379
    %v2433 = vunpack.c.l.b16 %v2380
    %v2434 = vunpack.c.h.b16 %v2380
    %v2435 = vunpack.c.l.b16 %v2381
    %v2436 = vunpack.c.h.b16 %v2381
    %v2437 = vunpack.c.l.b16 %v2382
    %v2438 = vunpack.c.h.b16 %v2382
    %v2439 = vunpack.c.l.b16 %v2383
    %v2440 = vunpack.c.h.b16 %v2383
    %v2441 = vunpack.c.l.b16 %v2384
    %v2442 = vunpack.c.h.b16 %v2384
    %v2443 = vpack.c.b16 %v2415, %v2411
    %v2444 = vpack.c.b16 %v2416, %v2412
    %v2445 = vpack.c.b16 %v2417, %v2413
    %v2446 = vpack.c.b16 %v2418, %v2414
    %v2447 = vpack.c.b16 %v2423, %v2419
    %v2448 = vpack.c.b16 %v2424, %v2420
    %v2449 = vpack.c.b16 %v2425, %v2421
    %v2450 = vpack.c.b16 %v2426, %v2422
    %v2451 = vpack.c.b16 %v2431, %v2427
    %v2452 = vpack.c.b16 %v2432, %v2428
    %v2453 = vpack.c.b16 %v2433, %v2429
    %v2454 = vpack.c.b16 %v2434, %v2430
    %v2455 = vpack.c.b16 %v2439, %v2435
    %v2456 = vpack.c.b16 %v2440, %v2436
    %v2457 = vpack.c.b16 %v2441, %v2437
    %v2458 = vpack.c.b16 %v2442, %v2438
    %v2476 = vsel %vm552, %v2368, 0
    %2478 = vmatpush.bf16.msra.mxu0 0
    %2479 = vmatpush.bf16.msra.mxu0 0
    %2480 = vmatpush.bf16.msra.mxu0 0
    %2481 = vmatpush.bf16.msra.mxu0 0
    %2482 = vmatpush.bf16.msra.mxu0 %v2455
    %2483 = vmatpush.bf16.msra.mxu0 %v2451
    %2484 = vmatpush.bf16.msra.mxu0 %v2447
    %2485 = vmatpush.bf16.msra.mxu0 %v2443
    %2486 = vmatmul.bf16.gmra.mxu0 %v2476
    %v2487 = vpop.f32.mrf.mxu0
    %v2488 = vadd.f32 %v2387, %v2487
    %v2489 = vpop.f32.mrf.mxu0
    %v2490 = vadd.f32 %v2387, %v2489
    %2491 = vdwg.mxu0
    %2492 = vmatpush.bf16.msra.mxu0 0
    %2493 = vmatpush.bf16.msra.mxu0 0
    %2494 = vmatpush.bf16.msra.mxu0 0
    %2495 = vmatpush.bf16.msra.mxu0 0
    %2496 = vmatpush.bf16.msra.mxu0 %v2456
    %2497 = vmatpush.bf16.msra.mxu0 %v2452
    %2498 = vmatpush.bf16.msra.mxu0 %v2448
    %2499 = vmatpush.bf16.msra.mxu0 %v2444
    %2500 = vmatmul.bf16.gmra.mxu0 %v2476
    %v2501 = vpop.f32.mrf.mxu0
    %v2502 = vadd.f32 %v2388, %v2501
    %v2503 = vpop.f32.mrf.mxu0
    %v2504 = vadd.f32 %v2388, %v2503
    %2505 = vdwg.mxu0
    %2506 = vmatpush.bf16.msra.mxu0 0
    %2507 = vmatpush.bf16.msra.mxu0 0
    %2508 = vmatpush.bf16.msra.mxu0 0
    %2509 = vmatpush.bf16.msra.mxu0 0
    %2510 = vmatpush.bf16.msra.mxu0 %v2457
    %2511 = vmatpush.bf16.msra.mxu0 %v2453
    %2512 = vmatpush.bf16.msra.mxu0 %v2449
    %2513 = vmatpush.bf16.msra.mxu0 %v2445
    %2514 = vmatmul.bf16.gmra.mxu0 %v2476
    %v2515 = vpop.f32.mrf.mxu0
    %v2516 = vadd.f32 %v2389, %v2515
    %v2517 = vpop.f32.mrf.mxu0
    %v2518 = vadd.f32 %v2389, %v2517
    %2519 = vdwg.mxu0
    %2520 = vmatpush.bf16.msra.mxu0 0
    %2521 = vmatpush.bf16.msra.mxu0 0
    %2522 = vmatpush.bf16.msra.mxu0 0
    %2523 = vmatpush.bf16.msra.mxu0 0
    %2524 = vmatpush.bf16.msra.mxu0 %v2458
    %2525 = vmatpush.bf16.msra.mxu0 %v2454
    %2526 = vmatpush.bf16.msra.mxu0 %v2450
    %2527 = vmatpush.bf16.msra.mxu0 %v2446
    %2528 = vmatmul.bf16.gmra.mxu0 %v2476
    %v2529 = vpop.f32.mrf.mxu0
    %v2530 = vadd.f32 %v2390, %v2529
    %v2531 = vpop.f32.mrf.mxu0
    %v2532 = vadd.f32 %v2390, %v2531
    %2533 = vdwg.mxu0
    %v2534 = vld [vmem:[#allocation9] sm:$0xff]
    %v2535 = vld [vmem:[#allocation9 + $0x8] sm:$0xff]
    %v2536 = vld [vmem:[#allocation9 + $0x10] sm:$0xff]
    %v2537 = vld [vmem:[#allocation9 + $0x18] sm:$0xff]
    %v2538 = vld [vmem:[#allocation9 + $0x20] sm:$0xff]
    %v2539 = vld [vmem:[#allocation9 + $0x28] sm:$0xff]
    %v2540 = vld [vmem:[#allocation9 + $0x30] sm:$0xff]
    %v2541 = vld [vmem:[#allocation9 + $0x38] sm:$0xff]
    %v2542 = vld [vmem:[#allocation9 + $0x40] sm:$0xff]
    %v2543 = vld [vmem:[#allocation9 + $0x48] sm:$0xff]
    %v2544 = vld [vmem:[#allocation9 + $0x50] sm:$0xff]
    %v2545 = vld [vmem:[#allocation9 + $0x58] sm:$0xff]
    %v2546 = vld [vmem:[#allocation9 + $0x60] sm:$0xff]
    %v2547 = vld [vmem:[#allocation9 + $0x68] sm:$0xff]
    %v2548 = vld [vmem:[#allocation9 + $0x70] sm:$0xff]
    %v2549 = vld [vmem:[#allocation9 + $0x78] sm:$0xff]
    %v2566 = vunpack.c.l.b16 %v2534
    %v2567 = vunpack.c.h.b16 %v2534
    %v2568 = vunpack.c.l.b16 %v2535
    %v2569 = vunpack.c.h.b16 %v2535
    %v2570 = vunpack.c.l.b16 %v2536
    %v2571 = vunpack.c.h.b16 %v2536
    %v2572 = vunpack.c.l.b16 %v2537
    %v2573 = vunpack.c.h.b16 %v2537
    %v2574 = vunpack.c.l.b16 %v2538
    %v2575 = vunpack.c.h.b16 %v2538
    %v2576 = vunpack.c.l.b16 %v2539
    %v2577 = vunpack.c.h.b16 %v2539
    %v2578 = vunpack.c.l.b16 %v2540
    %v2579 = vunpack.c.h.b16 %v2540
    %v2580 = vunpack.c.l.b16 %v2541
    %v2581 = vunpack.c.h.b16 %v2541
    %v2582 = vunpack.c.l.b16 %v2542
    %v2583 = vunpack.c.h.b16 %v2542
    %v2584 = vunpack.c.l.b16 %v2543
    %v2585 = vunpack.c.h.b16 %v2543
    %v2586 = vunpack.c.l.b16 %v2544
    %v2587 = vunpack.c.h.b16 %v2544
    %v2588 = vunpack.c.l.b16 %v2545
    %v2589 = vunpack.c.h.b16 %v2545
    %v2590 = vunpack.c.l.b16 %v2546
    %v2591 = vunpack.c.h.b16 %v2546
    %v2592 = vunpack.c.l.b16 %v2547
    %v2593 = vunpack.c.h.b16 %v2547
    %v2594 = vunpack.c.l.b16 %v2548
    %v2595 = vunpack.c.h.b16 %v2548
    %v2596 = vunpack.c.l.b16 %v2549
    %v2597 = vunpack.c.h.b16 %v2549
    %v2598 = vpack.c.b16 %v2570, %v2566
    %v2599 = vpack.c.b16 %v2571, %v2567
    %v2600 = vpack.c.b16 %v2572, %v2568
    %v2601 = vpack.c.b16 %v2573, %v2569
    %v2602 = vpack.c.b16 %v2578, %v2574
    %v2603 = vpack.c.b16 %v2579, %v2575
    %v2604 = vpack.c.b16 %v2580, %v2576
    %v2605 = vpack.c.b16 %v2581, %v2577
    %v2606 = vpack.c.b16 %v2586, %v2582
    %v2607 = vpack.c.b16 %v2587, %v2583
    %v2608 = vpack.c.b16 %v2588, %v2584
    %v2609 = vpack.c.b16 %v2589, %v2585
    %v2610 = vpack.c.b16 %v2594, %v2590
    %v2611 = vpack.c.b16 %v2595, %v2591
    %v2612 = vpack.c.b16 %v2596, %v2592
    %v2613 = vpack.c.b16 %v2597, %v2593
    %2630 = vmatpush.bf16.msra.mxu0 0
    %2631 = vmatpush.bf16.msra.mxu0 0
    %2632 = vmatpush.bf16.msra.mxu0 0
    %2633 = vmatpush.bf16.msra.mxu0 0
    %2634 = vmatpush.bf16.msra.mxu0 %v2610
    %2635 = vmatpush.bf16.msra.mxu0 %v2606
    %2636 = vmatpush.bf16.msra.mxu0 %v2602
    %2637 = vmatpush.bf16.msra.mxu0 %v2598
    %2638 = vmatmul.bf16.gmra.mxu0 %v554
    %v2639 = vpop.f32.mrf.mxu0
    %v2640 = vadd.f32 0.0, %v2639
    %v2641 = vpop.f32.mrf.mxu0
    %2642 = vdwg.mxu0
    %2643 = vmatpush.bf16.msra.mxu0 0
    %2644 = vmatpush.bf16.msra.mxu0 0
    %2645 = vmatpush.bf16.msra.mxu0 0
    %2646 = vmatpush.bf16.msra.mxu0 0
    %2647 = vmatpush.bf16.msra.mxu0 %v2611
    %2648 = vmatpush.bf16.msra.mxu0 %v2607
    %2649 = vmatpush.bf16.msra.mxu0 %v2603
    %2650 = vmatpush.bf16.msra.mxu0 %v2599
    %2651 = vmatmul.bf16.gmra.mxu0 %v554
    %v2652 = vpop.f32.mrf.mxu0
    %v2653 = vadd.f32 0.0, %v2652
    %v2654 = vpop.f32.mrf.mxu0
    %2655 = vdwg.mxu0
    %2656 = vmatpush.bf16.msra.mxu0 0
    %2657 = vmatpush.bf16.msra.mxu0 0
    %2658 = vmatpush.bf16.msra.mxu0 0
    %2659 = vmatpush.bf16.msra.mxu0 0
    %2660 = vmatpush.bf16.msra.mxu0 %v2612
    %2661 = vmatpush.bf16.msra.mxu0 %v2608
    %2662 = vmatpush.bf16.msra.mxu0 %v2604
    %2663 = vmatpush.bf16.msra.mxu0 %v2600
    %2664 = vmatmul.bf16.gmra.mxu0 %v554
    %v2665 = vpop.f32.mrf.mxu0
    %v2666 = vadd.f32 0.0, %v2665
    %v2667 = vpop.f32.mrf.mxu0
    %2668 = vdwg.mxu0
    %2669 = vmatpush.bf16.msra.mxu0 0
    %2670 = vmatpush.bf16.msra.mxu0 0
    %2671 = vmatpush.bf16.msra.mxu0 0
    %2672 = vmatpush.bf16.msra.mxu0 0
    %2673 = vmatpush.bf16.msra.mxu0 %v2613
    %2674 = vmatpush.bf16.msra.mxu0 %v2609
    %2675 = vmatpush.bf16.msra.mxu0 %v2605
    %2676 = vmatpush.bf16.msra.mxu0 %v2601
    %2677 = vmatmul.bf16.gmra.mxu0 %v554
    %v2678 = vpop.f32.mrf.mxu0
    %v2679 = vadd.f32 0.0, %v2678
    %v2680 = vpop.f32.mrf.mxu0
    %2681 = vdwg.mxu0
    %v2686 = vrot.slane %v2640, 1
    %v2687 = vrot.slane %v2653, 1
    %v2688 = vrot.slane %v2666, 1
    %v2689 = vrot.slane %v2679, 1
    %v2698 = vadd.f32 %v2488, %v2640
    %v2699 = vadd.f32 %v2502, %v2653
    %v2700 = vadd.f32 %v2516, %v2666
    %v2701 = vadd.f32 %v2530, %v2679
    %v2702 = vadd.f32 %v2490, %v2686
    %v2703 = vadd.f32 %v2504, %v2687
    %v2704 = vadd.f32 %v2518, %v2688
    %v2705 = vadd.f32 %v2532, %v2689
    %v2706 = vxor.u32 %v2698, 2147483648
    %v2707 = vxor.u32 %v2702, 2147483648
    %v2708 = vmul.f32 %v2706, 1.442695
    %v2709 = vpow.pop %v2708
    %v2710 = vmul.f32 %v2707, 1.442695
    %v2711 = vpow.pop %v2710
    %v2712 = vadd.f32 %v2709, 1.0
    %v2713 = vadd.f32 %v2711, 1.0
    %v2714 = vrcp.pop %v2712
    %v2715 = vmul.f32 %v2712, %v2714
    %v2716 = vsub.f32 1.0, %v2715
    %v2717 = vmul.f32 %v2714, %v2716
    %v2718 = vadd.f32 %v2714, %v2717
    %vm2719 = vweird.f32 %v2712
    %vm2720 = vweird.f32 %v2714
    %vm2721 = vmor %vm2719, %vm2720
    %v2722 = vsel %vm2721, %v2714, %v2718
    %v2723 = vand.u32 2147483647, %v2712
    %vm2724 = vcmp.eq.f32.partialorder %v2723, 8.507059e+37
    %v2725 = vand.u32 %v2712, 2147483648
    %v2726 = vor.u32 1.1754944e-38, %v2725
    %v2727 = vsel %vm2724, %v2726, %v2722
    %v2728 = vmul.f32 1.0, %v2727
    %v2729 = vrcp.pop %v2713
    %v2730 = vmul.f32 %v2713, %v2729
    %v2731 = vsub.f32 1.0, %v2730
    %v2732 = vmul.f32 %v2729, %v2731
    %v2733 = vadd.f32 %v2729, %v2732
    %vm2734 = vweird.f32 %v2713
    %vm2735 = vweird.f32 %v2729
    %vm2736 = vmor %vm2734, %vm2735
    %v2737 = vsel %vm2736, %v2729, %v2733
    %v2738 = vand.u32 2147483647, %v2713
    %vm2739 = vcmp.eq.f32.partialorder %v2738, 8.507059e+37
    %v2740 = vand.u32 %v2713, 2147483648
    %v2741 = vor.u32 1.1754944e-38, %v2740
    %v2742 = vsel %vm2739, %v2741, %v2737
    %v2743 = vmul.f32 1.0, %v2742
    %v2744 = vxor.u32 %v2699, 2147483648
    %v2745 = vxor.u32 %v2703, 2147483648
    %v2746 = vmul.f32 %v2744, 1.442695
    %v2747 = vpow.pop %v2746
    %v2748 = vmul.f32 %v2745, 1.442695
    %v2749 = vpow.pop %v2748
    %v2750 = vadd.f32 %v2747, 1.0
    %v2751 = vadd.f32 %v2749, 1.0
    %v2752 = vrcp.pop %v2750
    %v2753 = vmul.f32 %v2750, %v2752
    %v2754 = vsub.f32 1.0, %v2753
    %v2755 = vmul.f32 %v2752, %v2754
    %v2756 = vadd.f32 %v2752, %v2755
    %vm2757 = vweird.f32 %v2750
    %vm2758 = vweird.f32 %v2752
    %vm2759 = vmor %vm2757, %vm2758
    %v2760 = vsel %vm2759, %v2752, %v2756
    %v2761 = vand.u32 2147483647, %v2750
    %vm2762 = vcmp.eq.f32.partialorder %v2761, 8.507059e+37
    %v2763 = vand.u32 %v2750, 2147483648
    %v2764 = vor.u32 1.1754944e-38, %v2763
    %v2765 = vsel %vm2762, %v2764, %v2760
    %v2766 = vmul.f32 1.0, %v2765
    %v2767 = vrcp.pop %v2751
    %v2768 = vmul.f32 %v2751, %v2767
    %v2769 = vsub.f32 1.0, %v2768
    %v2770 = vmul.f32 %v2767, %v2769
    %v2771 = vadd.f32 %v2767, %v2770
    %vm2772 = vweird.f32 %v2751
    %vm2773 = vweird.f32 %v2767
    %vm2774 = vmor %vm2772, %vm2773
    %v2775 = vsel %vm2774, %v2767, %v2771
    %v2776 = vand.u32 2147483647, %v2751
    %vm2777 = vcmp.eq.f32.partialorder %v2776, 8.507059e+37
    %v2778 = vand.u32 %v2751, 2147483648
    %v2779 = vor.u32 1.1754944e-38, %v2778
    %v2780 = vsel %vm2777, %v2779, %v2775
    %v2781 = vmul.f32 1.0, %v2780
    %v2782 = vtanh.pop %v2700
    %v2783 = vtanh.pop %v2704
    %v2784 = vxor.u32 %v2701, 2147483648
    %v2785 = vxor.u32 %v2705, 2147483648
    %v2786 = vmul.f32 %v2784, 1.442695
    %v2787 = vpow.pop %v2786
    %v2788 = vmul.f32 %v2785, 1.442695
    %v2789 = vpow.pop %v2788
    %v2790 = vadd.f32 %v2787, 1.0
    %v2791 = vadd.f32 %v2789, 1.0
    %v2792 = vrcp.pop %v2790
    %v2793 = vmul.f32 %v2790, %v2792
    %v2794 = vsub.f32 1.0, %v2793
    %v2795 = vmul.f32 %v2792, %v2794
    %v2796 = vadd.f32 %v2792, %v2795
    %vm2797 = vweird.f32 %v2790
    %vm2798 = vweird.f32 %v2792
    %vm2799 = vmor %vm2797, %vm2798
    %v2800 = vsel %vm2799, %v2792, %v2796
    %v2801 = vand.u32 2147483647, %v2790
    %vm2802 = vcmp.eq.f32.partialorder %v2801, 8.507059e+37
    %v2803 = vand.u32 %v2790, 2147483648
    %v2804 = vor.u32 1.1754944e-38, %v2803
    %v2805 = vsel %vm2802, %v2804, %v2800
    %v2806 = vmul.f32 1.0, %v2805
    %v2807 = vrcp.pop %v2791
    %v2808 = vmul.f32 %v2791, %v2807
    %v2809 = vsub.f32 1.0, %v2808
    %v2810 = vmul.f32 %v2807, %v2809
    %v2811 = vadd.f32 %v2807, %v2810
    %vm2812 = vweird.f32 %v2791
    %vm2813 = vweird.f32 %v2807
    %vm2814 = vmor %vm2812, %vm2813
    %v2815 = vsel %vm2814, %v2807, %v2811
    %v2816 = vand.u32 2147483647, %v2791
    %vm2817 = vcmp.eq.f32.partialorder %v2816, 8.507059e+37
    %v2818 = vand.u32 %v2791, 2147483648
    %v2819 = vor.u32 1.1754944e-38, %v2818
    %v2820 = vsel %vm2817, %v2819, %v2815
    %v2821 = vmul.f32 1.0, %v2820
    %v2822 = vmul.f32 %v2766, 0.0
    %v2823 = vmul.f32 %v2781, 0.0
    %v2824 = vmul.f32 %v2728, %v2782
    %v2825 = vmul.f32 %v2743, %v2783
    %v2826 = vadd.f32 %v2822, %v2824
    %v2827 = vadd.f32 %v2823, %v2825
    %v2828 = vtanh.pop %v2826
    %v2829 = vtanh.pop %v2827
    %v2830 = vmul.f32 %v2806, %v2828
    %v2831 = vmul.f32 %v2821, %v2829
    %v2832 = vperm.slane %v2830, 0
    %v2833 = vperm.slane %v2831, 0
    %v2834 = vsel %vm758, %v2832, 0.0
    %v2835 = vsel %vm758, %v2833, 0.0
    %v2836 = vpack.c.bf16 %v2830, %v2830
    %v2837 = vpack.c.bf16 %v2831, %v2831
    %v2840 = vunpack.c.l.b16 %v2836
    %v2841 = vunpack.c.l.b16 %v2837
    %v2842 = vrot.slane %v2841, 7
    %v2843 = vsel %vm770, %v2842, %v2840
    %v2844 = vpack.c.b16 %v2843, %v2843
    %v2846 = vsel %vm552, %v2844, 0
    %2848 = vmatpush.bf16.msra.mxu0 0
    %2849 = vmatpush.bf16.msra.mxu0 0
    %2850 = vmatpush.bf16.msra.mxu0 0
    %2851 = vmatpush.bf16.msra.mxu0 0
    %2852 = vmatpush.bf16.msra.mxu0 %v2610
    %2853 = vmatpush.bf16.msra.mxu0 %v2606
    %2854 = vmatpush.bf16.msra.mxu0 %v2602
    %2855 = vmatpush.bf16.msra.mxu0 %v2598
    %2856 = vmatmul.bf16.gmra.mxu0 %v2846
    %v2857 = vpop.f32.mrf.mxu0
    %v2858 = vadd.f32 0.0, %v2857
    %v2859 = vpop.f32.mrf.mxu0
    %2860 = vdwg.mxu0
    %2861 = vmatpush.bf16.msra.mxu0 0
    %2862 = vmatpush.bf16.msra.mxu0 0
    %2863 = vmatpush.bf16.msra.mxu0 0
    %2864 = vmatpush.bf16.msra.mxu0 0
    %2865 = vmatpush.bf16.msra.mxu0 %v2611
    %2866 = vmatpush.bf16.msra.mxu0 %v2607
    %2867 = vmatpush.bf16.msra.mxu0 %v2603
    %2868 = vmatpush.bf16.msra.mxu0 %v2599
    %2869 = vmatmul.bf16.gmra.mxu0 %v2846
    %v2870 = vpop.f32.mrf.mxu0
    %v2871 = vadd.f32 0.0, %v2870
    %v2872 = vpop.f32.mrf.mxu0
    %2873 = vdwg.mxu0
    %2874 = vmatpush.bf16.msra.mxu0 0
    %2875 = vmatpush.bf16.msra.mxu0 0
    %2876 = vmatpush.bf16.msra.mxu0 0
    %2877 = vmatpush.bf16.msra.mxu0 0
    %2878 = vmatpush.bf16.msra.mxu0 %v2612
    %2879 = vmatpush.bf16.msra.mxu0 %v2608
    %2880 = vmatpush.bf16.msra.mxu0 %v2604
    %2881 = vmatpush.bf16.msra.mxu0 %v2600
    %2882 = vmatmul.bf16.gmra.mxu0 %v2846
    %v2883 = vpop.f32.mrf.mxu0
    %v2884 = vadd.f32 0.0, %v2883
    %v2885 = vpop.f32.mrf.mxu0
    %2886 = vdwg.mxu0
    %2887 = vmatpush.bf16.msra.mxu0 0
    %2888 = vmatpush.bf16.msra.mxu0 0
    %2889 = vmatpush.bf16.msra.mxu0 0
    %2890 = vmatpush.bf16.msra.mxu0 0
    %2891 = vmatpush.bf16.msra.mxu0 %v2613
    %2892 = vmatpush.bf16.msra.mxu0 %v2609
    %2893 = vmatpush.bf16.msra.mxu0 %v2605
    %2894 = vmatpush.bf16.msra.mxu0 %v2601
    %2895 = vmatmul.bf16.gmra.mxu0 %v2846
    %v2896 = vpop.f32.mrf.mxu0
    %v2897 = vadd.f32 0.0, %v2896
    %v2898 = vpop.f32.mrf.mxu0
    %2899 = vdwg.mxu0
    %v2904 = vrot.slane %v2858, 7
    %v2905 = vrot.slane %v2871, 7
    %v2906 = vrot.slane %v2884, 7
    %v2907 = vrot.slane %v2897, 7
    %v2916 = vadd.f32 %v2488, %v2904
    %v2917 = vadd.f32 %v2502, %v2905
    %v2918 = vadd.f32 %v2516, %v2906
    %v2919 = vadd.f32 %v2530, %v2907
    %v2920 = vadd.f32 %v2490, %v2858
    %v2921 = vadd.f32 %v2504, %v2871
    %v2922 = vadd.f32 %v2518, %v2884
    %v2923 = vadd.f32 %v2532, %v2897
    %v2924 = vxor.u32 %v2916, 2147483648
    %v2925 = vxor.u32 %v2920, 2147483648
    %v2926 = vmul.f32 %v2924, 1.442695
    %v2927 = vpow.pop %v2926
    %v2928 = vmul.f32 %v2925, 1.442695
    %v2929 = vpow.pop %v2928
    %v2930 = vadd.f32 %v2927, 1.0
    %v2931 = vadd.f32 %v2929, 1.0
    %v2932 = vrcp.pop %v2930
    %v2933 = vmul.f32 %v2930, %v2932
    %v2934 = vsub.f32 1.0, %v2933
    %v2935 = vmul.f32 %v2932, %v2934
    %v2936 = vadd.f32 %v2932, %v2935
    %vm2937 = vweird.f32 %v2930
    %vm2938 = vweird.f32 %v2932
    %vm2939 = vmor %vm2937, %vm2938
    %v2940 = vsel %vm2939, %v2932, %v2936
    %v2941 = vand.u32 2147483647, %v2930
    %vm2942 = vcmp.eq.f32.partialorder %v2941, 8.507059e+37
    %v2943 = vand.u32 %v2930, 2147483648
    %v2944 = vor.u32 1.1754944e-38, %v2943
    %v2945 = vsel %vm2942, %v2944, %v2940
    %v2946 = vmul.f32 1.0, %v2945
    %v2947 = vrcp.pop %v2931
    %v2948 = vmul.f32 %v2931, %v2947
    %v2949 = vsub.f32 1.0, %v2948
    %v2950 = vmul.f32 %v2947, %v2949
    %v2951 = vadd.f32 %v2947, %v2950
    %vm2952 = vweird.f32 %v2931
    %vm2953 = vweird.f32 %v2947
    %vm2954 = vmor %vm2952, %vm2953
    %v2955 = vsel %vm2954, %v2947, %v2951
    %v2956 = vand.u32 2147483647, %v2931
    %vm2957 = vcmp.eq.f32.partialorder %v2956, 8.507059e+37
    %v2958 = vand.u32 %v2931, 2147483648
    %v2959 = vor.u32 1.1754944e-38, %v2958
    %v2960 = vsel %vm2957, %v2959, %v2955
    %v2961 = vmul.f32 1.0, %v2960
    %v2962 = vxor.u32 %v2917, 2147483648
    %v2963 = vxor.u32 %v2921, 2147483648
    %v2964 = vmul.f32 %v2962, 1.442695
    %v2965 = vpow.pop %v2964
    %v2966 = vmul.f32 %v2963, 1.442695
    %v2967 = vpow.pop %v2966
    %v2968 = vadd.f32 %v2965, 1.0
    %v2969 = vadd.f32 %v2967, 1.0
    %v2970 = vrcp.pop %v2968
    %v2971 = vmul.f32 %v2968, %v2970
    %v2972 = vsub.f32 1.0, %v2971
    %v2973 = vmul.f32 %v2970, %v2972
    %v2974 = vadd.f32 %v2970, %v2973
    %vm2975 = vweird.f32 %v2968
    %vm2976 = vweird.f32 %v2970
    %vm2977 = vmor %vm2975, %vm2976
    %v2978 = vsel %vm2977, %v2970, %v2974
    %v2979 = vand.u32 2147483647, %v2968
    %vm2980 = vcmp.eq.f32.partialorder %v2979, 8.507059e+37
    %v2981 = vand.u32 %v2968, 2147483648
    %v2982 = vor.u32 1.1754944e-38, %v2981
    %v2983 = vsel %vm2980, %v2982, %v2978
    %v2984 = vmul.f32 1.0, %v2983
    %v2985 = vrcp.pop %v2969
    %v2986 = vmul.f32 %v2969, %v2985
    %v2987 = vsub.f32 1.0, %v2986
    %v2988 = vmul.f32 %v2985, %v2987
    %v2989 = vadd.f32 %v2985, %v2988
    %vm2990 = vweird.f32 %v2969
    %vm2991 = vweird.f32 %v2985
    %vm2992 = vmor %vm2990, %vm2991
    %v2993 = vsel %vm2992, %v2985, %v2989
    %v2994 = vand.u32 2147483647, %v2969
    %vm2995 = vcmp.eq.f32.partialorder %v2994, 8.507059e+37
    %v2996 = vand.u32 %v2969, 2147483648
    %v2997 = vor.u32 1.1754944e-38, %v2996
    %v2998 = vsel %vm2995, %v2997, %v2993
    %v2999 = vmul.f32 1.0, %v2998
    %v3000 = vtanh.pop %v2918
    %v3001 = vtanh.pop %v2922
    %v3002 = vxor.u32 %v2919, 2147483648
    %v3003 = vxor.u32 %v2923, 2147483648
    %v3004 = vmul.f32 %v3002, 1.442695
    %v3005 = vpow.pop %v3004
    %v3006 = vmul.f32 %v3003, 1.442695
    %v3007 = vpow.pop %v3006
    %v3008 = vadd.f32 %v3005, 1.0
    %v3009 = vadd.f32 %v3007, 1.0
    %v3010 = vrcp.pop %v3008
    %v3011 = vmul.f32 %v3008, %v3010
    %v3012 = vsub.f32 1.0, %v3011
    %v3013 = vmul.f32 %v3010, %v3012
    %v3014 = vadd.f32 %v3010, %v3013
    %vm3015 = vweird.f32 %v3008
    %vm3016 = vweird.f32 %v3010
    %vm3017 = vmor %vm3015, %vm3016
    %v3018 = vsel %vm3017, %v3010, %v3014
    %v3019 = vand.u32 2147483647, %v3008
    %vm3020 = vcmp.eq.f32.partialorder %v3019, 8.507059e+37
    %v3021 = vand.u32 %v3008, 2147483648
    %v3022 = vor.u32 1.1754944e-38, %v3021
    %v3023 = vsel %vm3020, %v3022, %v3018
    %v3024 = vmul.f32 1.0, %v3023
    %v3025 = vrcp.pop %v3009
    %v3026 = vmul.f32 %v3009, %v3025
    %v3027 = vsub.f32 1.0, %v3026
    %v3028 = vmul.f32 %v3025, %v3027
    %v3029 = vadd.f32 %v3025, %v3028
    %vm3030 = vweird.f32 %v3009
    %vm3031 = vweird.f32 %v3025
    %vm3032 = vmor %vm3030, %vm3031
    %v3033 = vsel %vm3032, %v3025, %v3029
    %v3034 = vand.u32 2147483647, %v3009
    %vm3035 = vcmp.eq.f32.partialorder %v3034, 8.507059e+37
    %v3036 = vand.u32 %v3009, 2147483648
    %v3037 = vor.u32 1.1754944e-38, %v3036
    %v3038 = vsel %vm3035, %v3037, %v3033
    %v3039 = vmul.f32 1.0, %v3038
    %v3042 = vrot.slane %v2826, 7
    %v3043 = vrot.slane %v2827, 7
    %v3046 = vmul.f32 %v2984, %v3042
    %v3047 = vmul.f32 %v2999, %v3043
    %v3048 = vmul.f32 %v2946, %v3000
    %v3049 = vmul.f32 %v2961, %v3001
    %v3050 = vadd.f32 %v3046, %v3048
    %v3051 = vadd.f32 %v3047, %v3049
    %v3052 = vtanh.pop %v3050
    %v3053 = vtanh.pop %v3051
    %v3054 = vmul.f32 %v3024, %v3052
    %v3055 = vmul.f32 %v3039, %v3053
    %v3056 = vperm.slane %v3054, 1
    %v3057 = vperm.slane %v3055, 1
    %v3058 = vsel %vm984, %v3056, %v2834
    %v3059 = vsel %vm984, %v3057, %v2835
    %v3060 = vpack.c.bf16 %v3054, %v3054
    %v3061 = vpack.c.bf16 %v3055, %v3055
    %v3064 = vunpack.c.l.b16 %v3060
    %v3065 = vunpack.c.l.b16 %v3061
    %v3066 = vrot.slane %v3064, 1
    %v3067 = vsel %vm770, %v3065, %v3066
    %v3068 = vpack.c.b16 %v3067, %v3067
    %v3070 = vsel %vm552, %v3068, 0
    %3072 = vmatpush.bf16.msra.mxu0 0
    %3073 = vmatpush.bf16.msra.mxu0 0
    %3074 = vmatpush.bf16.msra.mxu0 0
    %3075 = vmatpush.bf16.msra.mxu0 0
    %3076 = vmatpush.bf16.msra.mxu0 %v2610
    %3077 = vmatpush.bf16.msra.mxu0 %v2606
    %3078 = vmatpush.bf16.msra.mxu0 %v2602
    %3079 = vmatpush.bf16.msra.mxu0 %v2598
    %3080 = vmatmul.bf16.gmra.mxu0 %v3070
    %v3081 = vpop.f32.mrf.mxu0
    %v3082 = vadd.f32 0.0, %v3081
    %v3083 = vpop.f32.mrf.mxu0
    %3084 = vdwg.mxu0
    %3085 = vmatpush.bf16.msra.mxu0 0
    %3086 = vmatpush.bf16.msra.mxu0 0
    %3087 = vmatpush.bf16.msra.mxu0 0
    %3088 = vmatpush.bf16.msra.mxu0 0
    %3089 = vmatpush.bf16.msra.mxu0 %v2611
    %3090 = vmatpush.bf16.msra.mxu0 %v2607
    %3091 = vmatpush.bf16.msra.mxu0 %v2603
    %3092 = vmatpush.bf16.msra.mxu0 %v2599
    %3093 = vmatmul.bf16.gmra.mxu0 %v3070
    %v3094 = vpop.f32.mrf.mxu0
    %v3095 = vadd.f32 0.0, %v3094
    %v3096 = vpop.f32.mrf.mxu0
    %3097 = vdwg.mxu0
    %3098 = vmatpush.bf16.msra.mxu0 0
    %3099 = vmatpush.bf16.msra.mxu0 0
    %3100 = vmatpush.bf16.msra.mxu0 0
    %3101 = vmatpush.bf16.msra.mxu0 0
    %3102 = vmatpush.bf16.msra.mxu0 %v2612
    %3103 = vmatpush.bf16.msra.mxu0 %v2608
    %3104 = vmatpush.bf16.msra.mxu0 %v2604
    %3105 = vmatpush.bf16.msra.mxu0 %v2600
    %3106 = vmatmul.bf16.gmra.mxu0 %v3070
    %v3107 = vpop.f32.mrf.mxu0
    %v3108 = vadd.f32 0.0, %v3107
    %v3109 = vpop.f32.mrf.mxu0
    %3110 = vdwg.mxu0
    %3111 = vmatpush.bf16.msra.mxu0 0
    %3112 = vmatpush.bf16.msra.mxu0 0
    %3113 = vmatpush.bf16.msra.mxu0 0
    %3114 = vmatpush.bf16.msra.mxu0 0
    %3115 = vmatpush.bf16.msra.mxu0 %v2613
    %3116 = vmatpush.bf16.msra.mxu0 %v2609
    %3117 = vmatpush.bf16.msra.mxu0 %v2605
    %3118 = vmatpush.bf16.msra.mxu0 %v2601
    %3119 = vmatmul.bf16.gmra.mxu0 %v3070
    %v3120 = vpop.f32.mrf.mxu0
    %v3121 = vadd.f32 0.0, %v3120
    %v3122 = vpop.f32.mrf.mxu0
    %3123 = vdwg.mxu0
    %v3128 = vrot.slane %v3082, 6
    %v3129 = vrot.slane %v3095, 6
    %v3130 = vrot.slane %v3108, 6
    %v3131 = vrot.slane %v3121, 6
    %v3132 = vrot.slane %v3082, 7
    %v3133 = vrot.slane %v3095, 7
    %v3134 = vrot.slane %v3108, 7
    %v3135 = vrot.slane %v3121, 7
    %v3144 = vadd.f32 %v2488, %v3128
    %v3145 = vadd.f32 %v2502, %v3129
    %v3146 = vadd.f32 %v2516, %v3130
    %v3147 = vadd.f32 %v2530, %v3131
    %v3148 = vadd.f32 %v2490, %v3132
    %v3149 = vadd.f32 %v2504, %v3133
    %v3150 = vadd.f32 %v2518, %v3134
    %v3151 = vadd.f32 %v2532, %v3135
    %v3152 = vxor.u32 %v3144, 2147483648
    %v3153 = vxor.u32 %v3148, 2147483648
    %v3154 = vmul.f32 %v3152, 1.442695
    %v3155 = vpow.pop %v3154
    %v3156 = vmul.f32 %v3153, 1.442695
    %v3157 = vpow.pop %v3156
    %v3158 = vadd.f32 %v3155, 1.0
    %v3159 = vadd.f32 %v3157, 1.0
    %v3160 = vrcp.pop %v3158
    %v3161 = vmul.f32 %v3158, %v3160
    %v3162 = vsub.f32 1.0, %v3161
    %v3163 = vmul.f32 %v3160, %v3162
    %v3164 = vadd.f32 %v3160, %v3163
    %vm3165 = vweird.f32 %v3158
    %vm3166 = vweird.f32 %v3160
    %vm3167 = vmor %vm3165, %vm3166
    %v3168 = vsel %vm3167, %v3160, %v3164
    %v3169 = vand.u32 2147483647, %v3158
    %vm3170 = vcmp.eq.f32.partialorder %v3169, 8.507059e+37
    %v3171 = vand.u32 %v3158, 2147483648
    %v3172 = vor.u32 1.1754944e-38, %v3171
    %v3173 = vsel %vm3170, %v3172, %v3168
    %v3174 = vmul.f32 1.0, %v3173
    %v3175 = vrcp.pop %v3159
    %v3176 = vmul.f32 %v3159, %v3175
    %v3177 = vsub.f32 1.0, %v3176
    %v3178 = vmul.f32 %v3175, %v3177
    %v3179 = vadd.f32 %v3175, %v3178
    %vm3180 = vweird.f32 %v3159
    %vm3181 = vweird.f32 %v3175
    %vm3182 = vmor %vm3180, %vm3181
    %v3183 = vsel %vm3182, %v3175, %v3179
    %v3184 = vand.u32 2147483647, %v3159
    %vm3185 = vcmp.eq.f32.partialorder %v3184, 8.507059e+37
    %v3186 = vand.u32 %v3159, 2147483648
    %v3187 = vor.u32 1.1754944e-38, %v3186
    %v3188 = vsel %vm3185, %v3187, %v3183
    %v3189 = vmul.f32 1.0, %v3188
    %v3190 = vxor.u32 %v3145, 2147483648
    %v3191 = vxor.u32 %v3149, 2147483648
    %v3192 = vmul.f32 %v3190, 1.442695
    %v3193 = vpow.pop %v3192
    %v3194 = vmul.f32 %v3191, 1.442695
    %v3195 = vpow.pop %v3194
    %v3196 = vadd.f32 %v3193, 1.0
    %v3197 = vadd.f32 %v3195, 1.0
    %v3198 = vrcp.pop %v3196
    %v3199 = vmul.f32 %v3196, %v3198
    %v3200 = vsub.f32 1.0, %v3199
    %v3201 = vmul.f32 %v3198, %v3200
    %v3202 = vadd.f32 %v3198, %v3201
    %vm3203 = vweird.f32 %v3196
    %vm3204 = vweird.f32 %v3198
    %vm3205 = vmor %vm3203, %vm3204
    %v3206 = vsel %vm3205, %v3198, %v3202
    %v3207 = vand.u32 2147483647, %v3196
    %vm3208 = vcmp.eq.f32.partialorder %v3207, 8.507059e+37
    %v3209 = vand.u32 %v3196, 2147483648
    %v3210 = vor.u32 1.1754944e-38, %v3209
    %v3211 = vsel %vm3208, %v3210, %v3206
    %v3212 = vmul.f32 1.0, %v3211
    %v3213 = vrcp.pop %v3197
    %v3214 = vmul.f32 %v3197, %v3213
    %v3215 = vsub.f32 1.0, %v3214
    %v3216 = vmul.f32 %v3213, %v3215
    %v3217 = vadd.f32 %v3213, %v3216
    %vm3218 = vweird.f32 %v3197
    %vm3219 = vweird.f32 %v3213
    %vm3220 = vmor %vm3218, %vm3219
    %v3221 = vsel %vm3220, %v3213, %v3217
    %v3222 = vand.u32 2147483647, %v3197
    %vm3223 = vcmp.eq.f32.partialorder %v3222, 8.507059e+37
    %v3224 = vand.u32 %v3197, 2147483648
    %v3225 = vor.u32 1.1754944e-38, %v3224
    %v3226 = vsel %vm3223, %v3225, %v3221
    %v3227 = vmul.f32 1.0, %v3226
    %v3228 = vtanh.pop %v3146
    %v3229 = vtanh.pop %v3150
    %v3230 = vxor.u32 %v3147, 2147483648
    %v3231 = vxor.u32 %v3151, 2147483648
    %v3232 = vmul.f32 %v3230, 1.442695
    %v3233 = vpow.pop %v3232
    %v3234 = vmul.f32 %v3231, 1.442695
    %v3235 = vpow.pop %v3234
    %v3236 = vadd.f32 %v3233, 1.0
    %v3237 = vadd.f32 %v3235, 1.0
    %v3238 = vrcp.pop %v3236
    %v3239 = vmul.f32 %v3236, %v3238
    %v3240 = vsub.f32 1.0, %v3239
    %v3241 = vmul.f32 %v3238, %v3240
    %v3242 = vadd.f32 %v3238, %v3241
    %vm3243 = vweird.f32 %v3236
    %vm3244 = vweird.f32 %v3238
    %vm3245 = vmor %vm3243, %vm3244
    %v3246 = vsel %vm3245, %v3238, %v3242
    %v3247 = vand.u32 2147483647, %v3236
    %vm3248 = vcmp.eq.f32.partialorder %v3247, 8.507059e+37
    %v3249 = vand.u32 %v3236, 2147483648
    %v3250 = vor.u32 1.1754944e-38, %v3249
    %v3251 = vsel %vm3248, %v3250, %v3246
    %v3252 = vmul.f32 1.0, %v3251
    %v3253 = vrcp.pop %v3237
    %v3254 = vmul.f32 %v3237, %v3253
    %v3255 = vsub.f32 1.0, %v3254
    %v3256 = vmul.f32 %v3253, %v3255
    %v3257 = vadd.f32 %v3253, %v3256
    %vm3258 = vweird.f32 %v3237
    %vm3259 = vweird.f32 %v3253
    %vm3260 = vmor %vm3258, %vm3259
    %v3261 = vsel %vm3260, %v3253, %v3257
    %v3262 = vand.u32 2147483647, %v3237
    %vm3263 = vcmp.eq.f32.partialorder %v3262, 8.507059e+37
    %v3264 = vand.u32 %v3237, 2147483648
    %v3265 = vor.u32 1.1754944e-38, %v3264
    %v3266 = vsel %vm3263, %v3265, %v3261
    %v3267 = vmul.f32 1.0, %v3266
    %v3270 = vrot.slane %v3050, 7
    %v3271 = vrot.slane %v3051, 7
    %v3274 = vmul.f32 %v3212, %v3270
    %v3275 = vmul.f32 %v3227, %v3271
    %v3276 = vmul.f32 %v3174, %v3228
    %v3277 = vmul.f32 %v3189, %v3229
    %v3278 = vadd.f32 %v3274, %v3276
    %v3279 = vadd.f32 %v3275, %v3277
    %v3280 = vtanh.pop %v3278
    %v3281 = vtanh.pop %v3279
    %v3282 = vmul.f32 %v3252, %v3280
    %v3283 = vmul.f32 %v3267, %v3281
    %v3284 = vperm.slane %v3282, 2
    %v3285 = vperm.slane %v3283, 2
    %v3286 = vsel %vm1213, %v3284, %v3058
    %v3287 = vsel %vm1213, %v3285, %v3059
    %v3288 = vpack.c.bf16 %v3282, %v3282
    %v3289 = vpack.c.bf16 %v3283, %v3283
    %v3292 = vunpack.c.l.b16 %v3288
    %v3293 = vunpack.c.l.b16 %v3289
    %v3294 = vrot.slane %v3292, 2
    %v3295 = vrot.slane %v3293, 1
    %v3296 = vsel %vm770, %v3295, %v3294
    %v3297 = vpack.c.b16 %v3296, %v3296
    %v3299 = vsel %vm552, %v3297, 0
    %3301 = vmatpush.bf16.msra.mxu0 0
    %3302 = vmatpush.bf16.msra.mxu0 0
    %3303 = vmatpush.bf16.msra.mxu0 0
    %3304 = vmatpush.bf16.msra.mxu0 0
    %3305 = vmatpush.bf16.msra.mxu0 %v2610
    %3306 = vmatpush.bf16.msra.mxu0 %v2606
    %3307 = vmatpush.bf16.msra.mxu0 %v2602
    %3308 = vmatpush.bf16.msra.mxu0 %v2598
    %3309 = vmatmul.bf16.gmra.mxu0 %v3299
    %v3310 = vpop.f32.mrf.mxu0
    %v3311 = vadd.f32 0.0, %v3310
    %v3312 = vpop.f32.mrf.mxu0
    %3313 = vdwg.mxu0
    %3314 = vmatpush.bf16.msra.mxu0 0
    %3315 = vmatpush.bf16.msra.mxu0 0
    %3316 = vmatpush.bf16.msra.mxu0 0
    %3317 = vmatpush.bf16.msra.mxu0 0
    %3318 = vmatpush.bf16.msra.mxu0 %v2611
    %3319 = vmatpush.bf16.msra.mxu0 %v2607
    %3320 = vmatpush.bf16.msra.mxu0 %v2603
    %3321 = vmatpush.bf16.msra.mxu0 %v2599
    %3322 = vmatmul.bf16.gmra.mxu0 %v3299
    %v3323 = vpop.f32.mrf.mxu0
    %v3324 = vadd.f32 0.0, %v3323
    %v3325 = vpop.f32.mrf.mxu0
    %3326 = vdwg.mxu0
    %3327 = vmatpush.bf16.msra.mxu0 0
    %3328 = vmatpush.bf16.msra.mxu0 0
    %3329 = vmatpush.bf16.msra.mxu0 0
    %3330 = vmatpush.bf16.msra.mxu0 0
    %3331 = vmatpush.bf16.msra.mxu0 %v2612
    %3332 = vmatpush.bf16.msra.mxu0 %v2608
    %3333 = vmatpush.bf16.msra.mxu0 %v2604
    %3334 = vmatpush.bf16.msra.mxu0 %v2600
    %3335 = vmatmul.bf16.gmra.mxu0 %v3299
    %v3336 = vpop.f32.mrf.mxu0
    %v3337 = vadd.f32 0.0, %v3336
    %v3338 = vpop.f32.mrf.mxu0
    %3339 = vdwg.mxu0
    %3340 = vmatpush.bf16.msra.mxu0 0
    %3341 = vmatpush.bf16.msra.mxu0 0
    %3342 = vmatpush.bf16.msra.mxu0 0
    %3343 = vmatpush.bf16.msra.mxu0 0
    %3344 = vmatpush.bf16.msra.mxu0 %v2613
    %3345 = vmatpush.bf16.msra.mxu0 %v2609
    %3346 = vmatpush.bf16.msra.mxu0 %v2605
    %3347 = vmatpush.bf16.msra.mxu0 %v2601
    %3348 = vmatmul.bf16.gmra.mxu0 %v3299
    %v3349 = vpop.f32.mrf.mxu0
    %v3350 = vadd.f32 0.0, %v3349
    %v3351 = vpop.f32.mrf.mxu0
    %3352 = vdwg.mxu0
    %v3357 = vrot.slane %v3311, 5
    %v3358 = vrot.slane %v3324, 5
    %v3359 = vrot.slane %v3337, 5
    %v3360 = vrot.slane %v3350, 5
    %v3361 = vrot.slane %v3311, 6
    %v3362 = vrot.slane %v3324, 6
    %v3363 = vrot.slane %v3337, 6
    %v3364 = vrot.slane %v3350, 6
    %v3373 = vadd.f32 %v2488, %v3357
    %v3374 = vadd.f32 %v2502, %v3358
    %v3375 = vadd.f32 %v2516, %v3359
    %v3376 = vadd.f32 %v2530, %v3360
    %v3377 = vadd.f32 %v2490, %v3361
    %v3378 = vadd.f32 %v2504, %v3362
    %v3379 = vadd.f32 %v2518, %v3363
    %v3380 = vadd.f32 %v2532, %v3364
    %v3381 = vxor.u32 %v3373, 2147483648
    %v3382 = vxor.u32 %v3377, 2147483648
    %v3383 = vmul.f32 %v3381, 1.442695
    %v3384 = vpow.pop %v3383
    %v3385 = vmul.f32 %v3382, 1.442695
    %v3386 = vpow.pop %v3385
    %v3387 = vadd.f32 %v3384, 1.0
    %v3388 = vadd.f32 %v3386, 1.0
    %v3389 = vrcp.pop %v3387
    %v3390 = vmul.f32 %v3387, %v3389
    %v3391 = vsub.f32 1.0, %v3390
    %v3392 = vmul.f32 %v3389, %v3391
    %v3393 = vadd.f32 %v3389, %v3392
    %vm3394 = vweird.f32 %v3387
    %vm3395 = vweird.f32 %v3389
    %vm3396 = vmor %vm3394, %vm3395
    %v3397 = vsel %vm3396, %v3389, %v3393
    %v3398 = vand.u32 2147483647, %v3387
    %vm3399 = vcmp.eq.f32.partialorder %v3398, 8.507059e+37
    %v3400 = vand.u32 %v3387, 2147483648
    %v3401 = vor.u32 1.1754944e-38, %v3400
    %v3402 = vsel %vm3399, %v3401, %v3397
    %v3403 = vmul.f32 1.0, %v3402
    %v3404 = vrcp.pop %v3388
    %v3405 = vmul.f32 %v3388, %v3404
    %v3406 = vsub.f32 1.0, %v3405
    %v3407 = vmul.f32 %v3404, %v3406
    %v3408 = vadd.f32 %v3404, %v3407
    %vm3409 = vweird.f32 %v3388
    %vm3410 = vweird.f32 %v3404
    %vm3411 = vmor %vm3409, %vm3410
    %v3412 = vsel %vm3411, %v3404, %v3408
    %v3413 = vand.u32 2147483647, %v3388
    %vm3414 = vcmp.eq.f32.partialorder %v3413, 8.507059e+37
    %v3415 = vand.u32 %v3388, 2147483648
    %v3416 = vor.u32 1.1754944e-38, %v3415
    %v3417 = vsel %vm3414, %v3416, %v3412
    %v3418 = vmul.f32 1.0, %v3417
    %v3419 = vxor.u32 %v3374, 2147483648
    %v3420 = vxor.u32 %v3378, 2147483648
    %v3421 = vmul.f32 %v3419, 1.442695
    %v3422 = vpow.pop %v3421
    %v3423 = vmul.f32 %v3420, 1.442695
    %v3424 = vpow.pop %v3423
    %v3425 = vadd.f32 %v3422, 1.0
    %v3426 = vadd.f32 %v3424, 1.0
    %v3427 = vrcp.pop %v3425
    %v3428 = vmul.f32 %v3425, %v3427
    %v3429 = vsub.f32 1.0, %v3428
    %v3430 = vmul.f32 %v3427, %v3429
    %v3431 = vadd.f32 %v3427, %v3430
    %vm3432 = vweird.f32 %v3425
    %vm3433 = vweird.f32 %v3427
    %vm3434 = vmor %vm3432, %vm3433
    %v3435 = vsel %vm3434, %v3427, %v3431
    %v3436 = vand.u32 2147483647, %v3425
    %vm3437 = vcmp.eq.f32.partialorder %v3436, 8.507059e+37
    %v3438 = vand.u32 %v3425, 2147483648
    %v3439 = vor.u32 1.1754944e-38, %v3438
    %v3440 = vsel %vm3437, %v3439, %v3435
    %v3441 = vmul.f32 1.0, %v3440
    %v3442 = vrcp.pop %v3426
    %v3443 = vmul.f32 %v3426, %v3442
    %v3444 = vsub.f32 1.0, %v3443
    %v3445 = vmul.f32 %v3442, %v3444
    %v3446 = vadd.f32 %v3442, %v3445
    %vm3447 = vweird.f32 %v3426
    %vm3448 = vweird.f32 %v3442
    %vm3449 = vmor %vm3447, %vm3448
    %v3450 = vsel %vm3449, %v3442, %v3446
    %v3451 = vand.u32 2147483647, %v3426
    %vm3452 = vcmp.eq.f32.partialorder %v3451, 8.507059e+37
    %v3453 = vand.u32 %v3426, 2147483648
    %v3454 = vor.u32 1.1754944e-38, %v3453
    %v3455 = vsel %vm3452, %v3454, %v3450
    %v3456 = vmul.f32 1.0, %v3455
    %v3457 = vtanh.pop %v3375
    %v3458 = vtanh.pop %v3379
    %v3459 = vxor.u32 %v3376, 2147483648
    %v3460 = vxor.u32 %v3380, 2147483648
    %v3461 = vmul.f32 %v3459, 1.442695
    %v3462 = vpow.pop %v3461
    %v3463 = vmul.f32 %v3460, 1.442695
    %v3464 = vpow.pop %v3463
    %v3465 = vadd.f32 %v3462, 1.0
    %v3466 = vadd.f32 %v3464, 1.0
    %v3467 = vrcp.pop %v3465
    %v3468 = vmul.f32 %v3465, %v3467
    %v3469 = vsub.f32 1.0, %v3468
    %v3470 = vmul.f32 %v3467, %v3469
    %v3471 = vadd.f32 %v3467, %v3470
    %vm3472 = vweird.f32 %v3465
    %vm3473 = vweird.f32 %v3467
    %vm3474 = vmor %vm3472, %vm3473
    %v3475 = vsel %vm3474, %v3467, %v3471
    %v3476 = vand.u32 2147483647, %v3465
    %vm3477 = vcmp.eq.f32.partialorder %v3476, 8.507059e+37
    %v3478 = vand.u32 %v3465, 2147483648
    %v3479 = vor.u32 1.1754944e-38, %v3478
    %v3480 = vsel %vm3477, %v3479, %v3475
    %v3481 = vmul.f32 1.0, %v3480
    %v3482 = vrcp.pop %v3466
    %v3483 = vmul.f32 %v3466, %v3482
    %v3484 = vsub.f32 1.0, %v3483
    %v3485 = vmul.f32 %v3482, %v3484
    %v3486 = vadd.f32 %v3482, %v3485
    %vm3487 = vweird.f32 %v3466
    %vm3488 = vweird.f32 %v3482
    %vm3489 = vmor %vm3487, %vm3488
    %v3490 = vsel %vm3489, %v3482, %v3486
    %v3491 = vand.u32 2147483647, %v3466
    %vm3492 = vcmp.eq.f32.partialorder %v3491, 8.507059e+37
    %v3493 = vand.u32 %v3466, 2147483648
    %v3494 = vor.u32 1.1754944e-38, %v3493
    %v3495 = vsel %vm3492, %v3494, %v3490
    %v3496 = vmul.f32 1.0, %v3495
    %v3499 = vrot.slane %v3278, 7
    %v3500 = vrot.slane %v3279, 7
    %v3503 = vmul.f32 %v3441, %v3499
    %v3504 = vmul.f32 %v3456, %v3500
    %v3505 = vmul.f32 %v3403, %v3457
    %v3506 = vmul.f32 %v3418, %v3458
    %v3507 = vadd.f32 %v3503, %v3505
    %v3508 = vadd.f32 %v3504, %v3506
    %v3509 = vtanh.pop %v3507
    %v3510 = vtanh.pop %v3508
    %v3511 = vmul.f32 %v3481, %v3509
    %v3512 = vmul.f32 %v3496, %v3510
    %v3513 = vperm.slane %v3511, 3
    %v3514 = vperm.slane %v3512, 3
    %v3515 = vsel %vm1443, %v3513, %v3286
    %v3516 = vsel %vm1443, %v3514, %v3287
    %v3517 = vpack.c.bf16 %v3511, %v3511
    %v3518 = vpack.c.bf16 %v3512, %v3512
    %v3521 = vunpack.c.l.b16 %v3517
    %v3522 = vunpack.c.l.b16 %v3518
    %v3523 = vrot.slane %v3521, 3
    %v3524 = vrot.slane %v3522, 2
    %v3525 = vsel %vm770, %v3524, %v3523
    %v3526 = vpack.c.b16 %v3525, %v3525
    %v3528 = vsel %vm552, %v3526, 0
    %3530 = vmatpush.bf16.msra.mxu0 0
    %3531 = vmatpush.bf16.msra.mxu0 0
    %3532 = vmatpush.bf16.msra.mxu0 0
    %3533 = vmatpush.bf16.msra.mxu0 0
    %3534 = vmatpush.bf16.msra.mxu0 %v2610
    %3535 = vmatpush.bf16.msra.mxu0 %v2606
    %3536 = vmatpush.bf16.msra.mxu0 %v2602
    %3537 = vmatpush.bf16.msra.mxu0 %v2598
    %3538 = vmatmul.bf16.gmra.mxu0 %v3528
    %v3539 = vpop.f32.mrf.mxu0
    %v3540 = vadd.f32 0.0, %v3539
    %v3541 = vpop.f32.mrf.mxu0
    %3542 = vdwg.mxu0
    %3543 = vmatpush.bf16.msra.mxu0 0
    %3544 = vmatpush.bf16.msra.mxu0 0
    %3545 = vmatpush.bf16.msra.mxu0 0
    %3546 = vmatpush.bf16.msra.mxu0 0
    %3547 = vmatpush.bf16.msra.mxu0 %v2611
    %3548 = vmatpush.bf16.msra.mxu0 %v2607
    %3549 = vmatpush.bf16.msra.mxu0 %v2603
    %3550 = vmatpush.bf16.msra.mxu0 %v2599
    %3551 = vmatmul.bf16.gmra.mxu0 %v3528
    %v3552 = vpop.f32.mrf.mxu0
    %v3553 = vadd.f32 0.0, %v3552
    %v3554 = vpop.f32.mrf.mxu0
    %3555 = vdwg.mxu0
    %3556 = vmatpush.bf16.msra.mxu0 0
    %3557 = vmatpush.bf16.msra.mxu0 0
    %3558 = vmatpush.bf16.msra.mxu0 0
    %3559 = vmatpush.bf16.msra.mxu0 0
    %3560 = vmatpush.bf16.msra.mxu0 %v2612
    %3561 = vmatpush.bf16.msra.mxu0 %v2608
    %3562 = vmatpush.bf16.msra.mxu0 %v2604
    %3563 = vmatpush.bf16.msra.mxu0 %v2600
    %3564 = vmatmul.bf16.gmra.mxu0 %v3528
    %v3565 = vpop.f32.mrf.mxu0
    %v3566 = vadd.f32 0.0, %v3565
    %v3567 = vpop.f32.mrf.mxu0
    %3568 = vdwg.mxu0
    %3569 = vmatpush.bf16.msra.mxu0 0
    %3570 = vmatpush.bf16.msra.mxu0 0
    %3571 = vmatpush.bf16.msra.mxu0 0
    %3572 = vmatpush.bf16.msra.mxu0 0
    %3573 = vmatpush.bf16.msra.mxu0 %v2613
    %3574 = vmatpush.bf16.msra.mxu0 %v2609
    %3575 = vmatpush.bf16.msra.mxu0 %v2605
    %3576 = vmatpush.bf16.msra.mxu0 %v2601
    %3577 = vmatmul.bf16.gmra.mxu0 %v3528
    %v3578 = vpop.f32.mrf.mxu0
    %v3579 = vadd.f32 0.0, %v3578
    %v3580 = vpop.f32.mrf.mxu0
    %3581 = vdwg.mxu0
    %v3586 = vrot.slane %v3540, 4
    %v3587 = vrot.slane %v3553, 4
    %v3588 = vrot.slane %v3566, 4
    %v3589 = vrot.slane %v3579, 4
    %v3590 = vrot.slane %v3540, 5
    %v3591 = vrot.slane %v3553, 5
    %v3592 = vrot.slane %v3566, 5
    %v3593 = vrot.slane %v3579, 5
    %v3602 = vadd.f32 %v2488, %v3586
    %v3603 = vadd.f32 %v2502, %v3587
    %v3604 = vadd.f32 %v2516, %v3588
    %v3605 = vadd.f32 %v2530, %v3589
    %v3606 = vadd.f32 %v2490, %v3590
    %v3607 = vadd.f32 %v2504, %v3591
    %v3608 = vadd.f32 %v2518, %v3592
    %v3609 = vadd.f32 %v2532, %v3593
    %v3610 = vxor.u32 %v3602, 2147483648
    %v3611 = vxor.u32 %v3606, 2147483648
    %v3612 = vmul.f32 %v3610, 1.442695
    %v3613 = vpow.pop %v3612
    %v3614 = vmul.f32 %v3611, 1.442695
    %v3615 = vpow.pop %v3614
    %v3616 = vadd.f32 %v3613, 1.0
    %v3617 = vadd.f32 %v3615, 1.0
    %v3618 = vrcp.pop %v3616
    %v3619 = vmul.f32 %v3616, %v3618
    %v3620 = vsub.f32 1.0, %v3619
    %v3621 = vmul.f32 %v3618, %v3620
    %v3622 = vadd.f32 %v3618, %v3621
    %vm3623 = vweird.f32 %v3616
    %vm3624 = vweird.f32 %v3618
    %vm3625 = vmor %vm3623, %vm3624
    %v3626 = vsel %vm3625, %v3618, %v3622
    %v3627 = vand.u32 2147483647, %v3616
    %vm3628 = vcmp.eq.f32.partialorder %v3627, 8.507059e+37
    %v3629 = vand.u32 %v3616, 2147483648
    %v3630 = vor.u32 1.1754944e-38, %v3629
    %v3631 = vsel %vm3628, %v3630, %v3626
    %v3632 = vmul.f32 1.0, %v3631
    %v3633 = vrcp.pop %v3617
    %v3634 = vmul.f32 %v3617, %v3633
    %v3635 = vsub.f32 1.0, %v3634
    %v3636 = vmul.f32 %v3633, %v3635
    %v3637 = vadd.f32 %v3633, %v3636
    %vm3638 = vweird.f32 %v3617
    %vm3639 = vweird.f32 %v3633
    %vm3640 = vmor %vm3638, %vm3639
    %v3641 = vsel %vm3640, %v3633, %v3637
    %v3642 = vand.u32 2147483647, %v3617
    %vm3643 = vcmp.eq.f32.partialorder %v3642, 8.507059e+37
    %v3644 = vand.u32 %v3617, 2147483648
    %v3645 = vor.u32 1.1754944e-38, %v3644
    %v3646 = vsel %vm3643, %v3645, %v3641
    %v3647 = vmul.f32 1.0, %v3646
    %v3648 = vxor.u32 %v3603, 2147483648
    %v3649 = vxor.u32 %v3607, 2147483648
    %v3650 = vmul.f32 %v3648, 1.442695
    %v3651 = vpow.pop %v3650
    %v3652 = vmul.f32 %v3649, 1.442695
    %v3653 = vpow.pop %v3652
    %v3654 = vadd.f32 %v3651, 1.0
    %v3655 = vadd.f32 %v3653, 1.0
    %v3656 = vrcp.pop %v3654
    %v3657 = vmul.f32 %v3654, %v3656
    %v3658 = vsub.f32 1.0, %v3657
    %v3659 = vmul.f32 %v3656, %v3658
    %v3660 = vadd.f32 %v3656, %v3659
    %vm3661 = vweird.f32 %v3654
    %vm3662 = vweird.f32 %v3656
    %vm3663 = vmor %vm3661, %vm3662
    %v3664 = vsel %vm3663, %v3656, %v3660
    %v3665 = vand.u32 2147483647, %v3654
    %vm3666 = vcmp.eq.f32.partialorder %v3665, 8.507059e+37
    %v3667 = vand.u32 %v3654, 2147483648
    %v3668 = vor.u32 1.1754944e-38, %v3667
    %v3669 = vsel %vm3666, %v3668, %v3664
    %v3670 = vmul.f32 1.0, %v3669
    %v3671 = vrcp.pop %v3655
    %v3672 = vmul.f32 %v3655, %v3671
    %v3673 = vsub.f32 1.0, %v3672
    %v3674 = vmul.f32 %v3671, %v3673
    %v3675 = vadd.f32 %v3671, %v3674
    %vm3676 = vweird.f32 %v3655
    %vm3677 = vweird.f32 %v3671
    %vm3678 = vmor %vm3676, %vm3677
    %v3679 = vsel %vm3678, %v3671, %v3675
    %v3680 = vand.u32 2147483647, %v3655
    %vm3681 = vcmp.eq.f32.partialorder %v3680, 8.507059e+37
    %v3682 = vand.u32 %v3655, 2147483648
    %v3683 = vor.u32 1.1754944e-38, %v3682
    %v3684 = vsel %vm3681, %v3683, %v3679
    %v3685 = vmul.f32 1.0, %v3684
    %v3686 = vtanh.pop %v3604
    %v3687 = vtanh.pop %v3608
    %v3688 = vxor.u32 %v3605, 2147483648
    %v3689 = vxor.u32 %v3609, 2147483648
    %v3690 = vmul.f32 %v3688, 1.442695
    %v3691 = vpow.pop %v3690
    %v3692 = vmul.f32 %v3689, 1.442695
    %v3693 = vpow.pop %v3692
    %v3694 = vadd.f32 %v3691, 1.0
    %v3695 = vadd.f32 %v3693, 1.0
    %v3696 = vrcp.pop %v3694
    %v3697 = vmul.f32 %v3694, %v3696
    %v3698 = vsub.f32 1.0, %v3697
    %v3699 = vmul.f32 %v3696, %v3698
    %v3700 = vadd.f32 %v3696, %v3699
    %vm3701 = vweird.f32 %v3694
    %vm3702 = vweird.f32 %v3696
    %vm3703 = vmor %vm3701, %vm3702
    %v3704 = vsel %vm3703, %v3696, %v3700
    %v3705 = vand.u32 2147483647, %v3694
    %vm3706 = vcmp.eq.f32.partialorder %v3705, 8.507059e+37
    %v3707 = vand.u32 %v3694, 2147483648
    %v3708 = vor.u32 1.1754944e-38, %v3707
    %v3709 = vsel %vm3706, %v3708, %v3704
    %v3710 = vmul.f32 1.0, %v3709
    %v3711 = vrcp.pop %v3695
    %v3712 = vmul.f32 %v3695, %v3711
    %v3713 = vsub.f32 1.0, %v3712
    %v3714 = vmul.f32 %v3711, %v3713
    %v3715 = vadd.f32 %v3711, %v3714
    %vm3716 = vweird.f32 %v3695
    %vm3717 = vweird.f32 %v3711
    %vm3718 = vmor %vm3716, %vm3717
    %v3719 = vsel %vm3718, %v3711, %v3715
    %v3720 = vand.u32 2147483647, %v3695
    %vm3721 = vcmp.eq.f32.partialorder %v3720, 8.507059e+37
    %v3722 = vand.u32 %v3695, 2147483648
    %v3723 = vor.u32 1.1754944e-38, %v3722
    %v3724 = vsel %vm3721, %v3723, %v3719
    %v3725 = vmul.f32 1.0, %v3724
    %v3728 = vrot.slane %v3507, 7
    %v3729 = vrot.slane %v3508, 7
    %v3732 = vmul.f32 %v3670, %v3728
    %v3733 = vmul.f32 %v3685, %v3729
    %v3734 = vmul.f32 %v3632, %v3686
    %v3735 = vmul.f32 %v3647, %v3687
    %v3736 = vadd.f32 %v3732, %v3734
    %v3737 = vadd.f32 %v3733, %v3735
    %v3738 = vtanh.pop %v3736
    %v3739 = vtanh.pop %v3737
    %v3740 = vmul.f32 %v3710, %v3738
    %v3741 = vmul.f32 %v3725, %v3739
    %v3742 = vperm.slane %v3740, 4
    %v3743 = vperm.slane %v3741, 4
    %v3744 = vsel %vm1673, %v3742, %v3515
    %v3745 = vsel %vm1673, %v3743, %v3516
    %v3746 = vpack.c.bf16 %v3740, %v3740
    %v3747 = vpack.c.bf16 %v3741, %v3741
    %v3750 = vunpack.c.l.b16 %v3746
    %v3751 = vunpack.c.l.b16 %v3747
    %v3752 = vrot.slane %v3750, 4
    %v3753 = vrot.slane %v3751, 3
    %v3754 = vsel %vm770, %v3753, %v3752
    %v3755 = vpack.c.b16 %v3754, %v3754
    %v3757 = vsel %vm552, %v3755, 0
    %3759 = vmatpush.bf16.msra.mxu0 0
    %3760 = vmatpush.bf16.msra.mxu0 0
    %3761 = vmatpush.bf16.msra.mxu0 0
    %3762 = vmatpush.bf16.msra.mxu0 0
    %3763 = vmatpush.bf16.msra.mxu0 %v2610
    %3764 = vmatpush.bf16.msra.mxu0 %v2606
    %3765 = vmatpush.bf16.msra.mxu0 %v2602
    %3766 = vmatpush.bf16.msra.mxu0 %v2598
    %3767 = vmatmul.bf16.gmra.mxu0 %v3757
    %v3768 = vpop.f32.mrf.mxu0
    %v3769 = vadd.f32 0.0, %v3768
    %v3770 = vpop.f32.mrf.mxu0
    %3771 = vdwg.mxu0
    %3772 = vmatpush.bf16.msra.mxu0 0
    %3773 = vmatpush.bf16.msra.mxu0 0
    %3774 = vmatpush.bf16.msra.mxu0 0
    %3775 = vmatpush.bf16.msra.mxu0 0
    %3776 = vmatpush.bf16.msra.mxu0 %v2611
    %3777 = vmatpush.bf16.msra.mxu0 %v2607
    %3778 = vmatpush.bf16.msra.mxu0 %v2603
    %3779 = vmatpush.bf16.msra.mxu0 %v2599
    %3780 = vmatmul.bf16.gmra.mxu0 %v3757
    %v3781 = vpop.f32.mrf.mxu0
    %v3782 = vadd.f32 0.0, %v3781
    %v3783 = vpop.f32.mrf.mxu0
    %3784 = vdwg.mxu0
    %3785 = vmatpush.bf16.msra.mxu0 0
    %3786 = vmatpush.bf16.msra.mxu0 0
    %3787 = vmatpush.bf16.msra.mxu0 0
    %3788 = vmatpush.bf16.msra.mxu0 0
    %3789 = vmatpush.bf16.msra.mxu0 %v2612
    %3790 = vmatpush.bf16.msra.mxu0 %v2608
    %3791 = vmatpush.bf16.msra.mxu0 %v2604
    %3792 = vmatpush.bf16.msra.mxu0 %v2600
    %3793 = vmatmul.bf16.gmra.mxu0 %v3757
    %v3794 = vpop.f32.mrf.mxu0
    %v3795 = vadd.f32 0.0, %v3794
    %v3796 = vpop.f32.mrf.mxu0
    %3797 = vdwg.mxu0
    %3798 = vmatpush.bf16.msra.mxu0 0
    %3799 = vmatpush.bf16.msra.mxu0 0
    %3800 = vmatpush.bf16.msra.mxu0 0
    %3801 = vmatpush.bf16.msra.mxu0 0
    %3802 = vmatpush.bf16.msra.mxu0 %v2613
    %3803 = vmatpush.bf16.msra.mxu0 %v2609
    %3804 = vmatpush.bf16.msra.mxu0 %v2605
    %3805 = vmatpush.bf16.msra.mxu0 %v2601
    %3806 = vmatmul.bf16.gmra.mxu0 %v3757
    %v3807 = vpop.f32.mrf.mxu0
    %v3808 = vadd.f32 0.0, %v3807
    %v3809 = vpop.f32.mrf.mxu0
    %3810 = vdwg.mxu0
    %v3815 = vrot.slane %v3769, 3
    %v3816 = vrot.slane %v3782, 3
    %v3817 = vrot.slane %v3795, 3
    %v3818 = vrot.slane %v3808, 3
    %v3819 = vrot.slane %v3769, 4
    %v3820 = vrot.slane %v3782, 4
    %v3821 = vrot.slane %v3795, 4
    %v3822 = vrot.slane %v3808, 4
    %v3831 = vadd.f32 %v2488, %v3815
    %v3832 = vadd.f32 %v2502, %v3816
    %v3833 = vadd.f32 %v2516, %v3817
    %v3834 = vadd.f32 %v2530, %v3818
    %v3835 = vadd.f32 %v2490, %v3819
    %v3836 = vadd.f32 %v2504, %v3820
    %v3837 = vadd.f32 %v2518, %v3821
    %v3838 = vadd.f32 %v2532, %v3822
    %v3839 = vxor.u32 %v3831, 2147483648
    %v3840 = vxor.u32 %v3835, 2147483648
    %v3841 = vmul.f32 %v3839, 1.442695
    %v3842 = vpow.pop %v3841
    %v3843 = vmul.f32 %v3840, 1.442695
    %v3844 = vpow.pop %v3843
    %v3845 = vadd.f32 %v3842, 1.0
    %v3846 = vadd.f32 %v3844, 1.0
    %v3847 = vrcp.pop %v3845
    %v3848 = vmul.f32 %v3845, %v3847
    %v3849 = vsub.f32 1.0, %v3848
    %v3850 = vmul.f32 %v3847, %v3849
    %v3851 = vadd.f32 %v3847, %v3850
    %vm3852 = vweird.f32 %v3845
    %vm3853 = vweird.f32 %v3847
    %vm3854 = vmor %vm3852, %vm3853
    %v3855 = vsel %vm3854, %v3847, %v3851
    %v3856 = vand.u32 2147483647, %v3845
    %vm3857 = vcmp.eq.f32.partialorder %v3856, 8.507059e+37
    %v3858 = vand.u32 %v3845, 2147483648
    %v3859 = vor.u32 1.1754944e-38, %v3858
    %v3860 = vsel %vm3857, %v3859, %v3855
    %v3861 = vmul.f32 1.0, %v3860
    %v3862 = vrcp.pop %v3846
    %v3863 = vmul.f32 %v3846, %v3862
    %v3864 = vsub.f32 1.0, %v3863
    %v3865 = vmul.f32 %v3862, %v3864
    %v3866 = vadd.f32 %v3862, %v3865
    %vm3867 = vweird.f32 %v3846
    %vm3868 = vweird.f32 %v3862
    %vm3869 = vmor %vm3867, %vm3868
    %v3870 = vsel %vm3869, %v3862, %v3866
    %v3871 = vand.u32 2147483647, %v3846
    %vm3872 = vcmp.eq.f32.partialorder %v3871, 8.507059e+37
    %v3873 = vand.u32 %v3846, 2147483648
    %v3874 = vor.u32 1.1754944e-38, %v3873
    %v3875 = vsel %vm3872, %v3874, %v3870
    %v3876 = vmul.f32 1.0, %v3875
    %v3877 = vxor.u32 %v3832, 2147483648
    %v3878 = vxor.u32 %v3836, 2147483648
    %v3879 = vmul.f32 %v3877, 1.442695
    %v3880 = vpow.pop %v3879
    %v3881 = vmul.f32 %v3878, 1.442695
    %v3882 = vpow.pop %v3881
    %v3883 = vadd.f32 %v3880, 1.0
    %v3884 = vadd.f32 %v3882, 1.0
    %v3885 = vrcp.pop %v3883
    %v3886 = vmul.f32 %v3883, %v3885
    %v3887 = vsub.f32 1.0, %v3886
    %v3888 = vmul.f32 %v3885, %v3887
    %v3889 = vadd.f32 %v3885, %v3888
    %vm3890 = vweird.f32 %v3883
    %vm3891 = vweird.f32 %v3885
    %vm3892 = vmor %vm3890, %vm3891
    %v3893 = vsel %vm3892, %v3885, %v3889
    %v3894 = vand.u32 2147483647, %v3883
    %vm3895 = vcmp.eq.f32.partialorder %v3894, 8.507059e+37
    %v3896 = vand.u32 %v3883, 2147483648
    %v3897 = vor.u32 1.1754944e-38, %v3896
    %v3898 = vsel %vm3895, %v3897, %v3893
    %v3899 = vmul.f32 1.0, %v3898
    %v3900 = vrcp.pop %v3884
    %v3901 = vmul.f32 %v3884, %v3900
    %v3902 = vsub.f32 1.0, %v3901
    %v3903 = vmul.f32 %v3900, %v3902
    %v3904 = vadd.f32 %v3900, %v3903
    %vm3905 = vweird.f32 %v3884
    %vm3906 = vweird.f32 %v3900
    %vm3907 = vmor %vm3905, %vm3906
    %v3908 = vsel %vm3907, %v3900, %v3904
    %v3909 = vand.u32 2147483647, %v3884
    %vm3910 = vcmp.eq.f32.partialorder %v3909, 8.507059e+37
    %v3911 = vand.u32 %v3884, 2147483648
    %v3912 = vor.u32 1.1754944e-38, %v3911
    %v3913 = vsel %vm3910, %v3912, %v3908
    %v3914 = vmul.f32 1.0, %v3913
    %v3915 = vtanh.pop %v3833
    %v3916 = vtanh.pop %v3837
    %v3917 = vxor.u32 %v3834, 2147483648
    %v3918 = vxor.u32 %v3838, 2147483648
    %v3919 = vmul.f32 %v3917, 1.442695
    %v3920 = vpow.pop %v3919
    %v3921 = vmul.f32 %v3918, 1.442695
    %v3922 = vpow.pop %v3921
    %v3923 = vadd.f32 %v3920, 1.0
    %v3924 = vadd.f32 %v3922, 1.0
    %v3925 = vrcp.pop %v3923
    %v3926 = vmul.f32 %v3923, %v3925
    %v3927 = vsub.f32 1.0, %v3926
    %v3928 = vmul.f32 %v3925, %v3927
    %v3929 = vadd.f32 %v3925, %v3928
    %vm3930 = vweird.f32 %v3923
    %vm3931 = vweird.f32 %v3925
    %vm3932 = vmor %vm3930, %vm3931
    %v3933 = vsel %vm3932, %v3925, %v3929
    %v3934 = vand.u32 2147483647, %v3923
    %vm3935 = vcmp.eq.f32.partialorder %v3934, 8.507059e+37
    %v3936 = vand.u32 %v3923, 2147483648
    %v3937 = vor.u32 1.1754944e-38, %v3936
    %v3938 = vsel %vm3935, %v3937, %v3933
    %v3939 = vmul.f32 1.0, %v3938
    %v3940 = vrcp.pop %v3924
    %v3941 = vmul.f32 %v3924, %v3940
    %v3942 = vsub.f32 1.0, %v3941
    %v3943 = vmul.f32 %v3940, %v3942
    %v3944 = vadd.f32 %v3940, %v3943
    %vm3945 = vweird.f32 %v3924
    %vm3946 = vweird.f32 %v3940
    %vm3947 = vmor %vm3945, %vm3946
    %v3948 = vsel %vm3947, %v3940, %v3944
    %v3949 = vand.u32 2147483647, %v3924
    %vm3950 = vcmp.eq.f32.partialorder %v3949, 8.507059e+37
    %v3951 = vand.u32 %v3924, 2147483648
    %v3952 = vor.u32 1.1754944e-38, %v3951
    %v3953 = vsel %vm3950, %v3952, %v3948
    %v3954 = vmul.f32 1.0, %v3953
    %v3957 = vrot.slane %v3736, 7
    %v3958 = vrot.slane %v3737, 7
    %v3961 = vmul.f32 %v3899, %v3957
    %v3962 = vmul.f32 %v3914, %v3958
    %v3963 = vmul.f32 %v3861, %v3915
    %v3964 = vmul.f32 %v3876, %v3916
    %v3965 = vadd.f32 %v3961, %v3963
    %v3966 = vadd.f32 %v3962, %v3964
    %v3967 = vtanh.pop %v3965
    %v3968 = vtanh.pop %v3966
    %v3969 = vmul.f32 %v3939, %v3967
    %v3970 = vmul.f32 %v3954, %v3968
    %v3971 = vperm.slane %v3969, 5
    %v3972 = vperm.slane %v3970, 5
    %v3973 = vsel %vm1903, %v3971, %v3744
    %v3974 = vsel %vm1903, %v3972, %v3745
    %v3975 = vpack.c.bf16 %v3969, %v3969
    %v3976 = vpack.c.bf16 %v3970, %v3970
    %v3979 = vunpack.c.l.b16 %v3975
    %v3980 = vunpack.c.l.b16 %v3976
    %v3981 = vrot.slane %v3979, 5
    %v3982 = vrot.slane %v3980, 4
    %v3983 = vsel %vm770, %v3982, %v3981
    %v3984 = vpack.c.b16 %v3983, %v3983
    %v3986 = vsel %vm552, %v3984, 0
    %3988 = vmatpush.bf16.msra.mxu0 0
    %3989 = vmatpush.bf16.msra.mxu0 0
    %3990 = vmatpush.bf16.msra.mxu0 0
    %3991 = vmatpush.bf16.msra.mxu0 0
    %3992 = vmatpush.bf16.msra.mxu0 %v2610
    %3993 = vmatpush.bf16.msra.mxu0 %v2606
    %3994 = vmatpush.bf16.msra.mxu0 %v2602
    %3995 = vmatpush.bf16.msra.mxu0 %v2598
    %3996 = vmatmul.bf16.gmra.mxu0 %v3986
    %v3997 = vpop.f32.mrf.mxu0
    %v3998 = vadd.f32 0.0, %v3997
    %v3999 = vpop.f32.mrf.mxu0
    %4000 = vdwg.mxu0
    %4001 = vmatpush.bf16.msra.mxu0 0
    %4002 = vmatpush.bf16.msra.mxu0 0
    %4003 = vmatpush.bf16.msra.mxu0 0
    %4004 = vmatpush.bf16.msra.mxu0 0
    %4005 = vmatpush.bf16.msra.mxu0 %v2611
    %4006 = vmatpush.bf16.msra.mxu0 %v2607
    %4007 = vmatpush.bf16.msra.mxu0 %v2603
    %4008 = vmatpush.bf16.msra.mxu0 %v2599
    %4009 = vmatmul.bf16.gmra.mxu0 %v3986
    %v4010 = vpop.f32.mrf.mxu0
    %v4011 = vadd.f32 0.0, %v4010
    %v4012 = vpop.f32.mrf.mxu0
    %4013 = vdwg.mxu0
    %4014 = vmatpush.bf16.msra.mxu0 0
    %4015 = vmatpush.bf16.msra.mxu0 0
    %4016 = vmatpush.bf16.msra.mxu0 0
    %4017 = vmatpush.bf16.msra.mxu0 0
    %4018 = vmatpush.bf16.msra.mxu0 %v2612
    %4019 = vmatpush.bf16.msra.mxu0 %v2608
    %4020 = vmatpush.bf16.msra.mxu0 %v2604
    %4021 = vmatpush.bf16.msra.mxu0 %v2600
    %4022 = vmatmul.bf16.gmra.mxu0 %v3986
    %v4023 = vpop.f32.mrf.mxu0
    %v4024 = vadd.f32 0.0, %v4023
    %v4025 = vpop.f32.mrf.mxu0
    %4026 = vdwg.mxu0
    %4027 = vmatpush.bf16.msra.mxu0 0
    %4028 = vmatpush.bf16.msra.mxu0 0
    %4029 = vmatpush.bf16.msra.mxu0 0
    %4030 = vmatpush.bf16.msra.mxu0 0
    %4031 = vmatpush.bf16.msra.mxu0 %v2613
    %4032 = vmatpush.bf16.msra.mxu0 %v2609
    %4033 = vmatpush.bf16.msra.mxu0 %v2605
    %4034 = vmatpush.bf16.msra.mxu0 %v2601
    %4035 = vmatmul.bf16.gmra.mxu0 %v3986
    %v4036 = vpop.f32.mrf.mxu0
    %v4037 = vadd.f32 0.0, %v4036
    %v4038 = vpop.f32.mrf.mxu0
    %4039 = vdwg.mxu0
    %v4044 = vrot.slane %v3998, 2
    %v4045 = vrot.slane %v4011, 2
    %v4046 = vrot.slane %v4024, 2
    %v4047 = vrot.slane %v4037, 2
    %v4048 = vrot.slane %v3998, 3
    %v4049 = vrot.slane %v4011, 3
    %v4050 = vrot.slane %v4024, 3
    %v4051 = vrot.slane %v4037, 3
    %v4060 = vadd.f32 %v2488, %v4044
    %v4061 = vadd.f32 %v2502, %v4045
    %v4062 = vadd.f32 %v2516, %v4046
    %v4063 = vadd.f32 %v2530, %v4047
    %v4064 = vadd.f32 %v2490, %v4048
    %v4065 = vadd.f32 %v2504, %v4049
    %v4066 = vadd.f32 %v2518, %v4050
    %v4067 = vadd.f32 %v2532, %v4051
    %v4068 = vxor.u32 %v4060, 2147483648
    %v4069 = vxor.u32 %v4064, 2147483648
    %v4070 = vmul.f32 %v4068, 1.442695
    %v4071 = vpow.pop %v4070
    %v4072 = vmul.f32 %v4069, 1.442695
    %v4073 = vpow.pop %v4072
    %v4074 = vadd.f32 %v4071, 1.0
    %v4075 = vadd.f32 %v4073, 1.0
    %v4076 = vrcp.pop %v4074
    %v4077 = vmul.f32 %v4074, %v4076
    %v4078 = vsub.f32 1.0, %v4077
    %v4079 = vmul.f32 %v4076, %v4078
    %v4080 = vadd.f32 %v4076, %v4079
    %vm4081 = vweird.f32 %v4074
    %vm4082 = vweird.f32 %v4076
    %vm4083 = vmor %vm4081, %vm4082
    %v4084 = vsel %vm4083, %v4076, %v4080
    %v4085 = vand.u32 2147483647, %v4074
    %vm4086 = vcmp.eq.f32.partialorder %v4085, 8.507059e+37
    %v4087 = vand.u32 %v4074, 2147483648
    %v4088 = vor.u32 1.1754944e-38, %v4087
    %v4089 = vsel %vm4086, %v4088, %v4084
    %v4090 = vmul.f32 1.0, %v4089
    %v4091 = vrcp.pop %v4075
    %v4092 = vmul.f32 %v4075, %v4091
    %v4093 = vsub.f32 1.0, %v4092
    %v4094 = vmul.f32 %v4091, %v4093
    %v4095 = vadd.f32 %v4091, %v4094
    %vm4096 = vweird.f32 %v4075
    %vm4097 = vweird.f32 %v4091
    %vm4098 = vmor %vm4096, %vm4097
    %v4099 = vsel %vm4098, %v4091, %v4095
    %v4100 = vand.u32 2147483647, %v4075
    %vm4101 = vcmp.eq.f32.partialorder %v4100, 8.507059e+37
    %v4102 = vand.u32 %v4075, 2147483648
    %v4103 = vor.u32 1.1754944e-38, %v4102
    %v4104 = vsel %vm4101, %v4103, %v4099
    %v4105 = vmul.f32 1.0, %v4104
    %v4106 = vxor.u32 %v4061, 2147483648
    %v4107 = vxor.u32 %v4065, 2147483648
    %v4108 = vmul.f32 %v4106, 1.442695
    %v4109 = vpow.pop %v4108
    %v4110 = vmul.f32 %v4107, 1.442695
    %v4111 = vpow.pop %v4110
    %v4112 = vadd.f32 %v4109, 1.0
    %v4113 = vadd.f32 %v4111, 1.0
    %v4114 = vrcp.pop %v4112
    %v4115 = vmul.f32 %v4112, %v4114
    %v4116 = vsub.f32 1.0, %v4115
    %v4117 = vmul.f32 %v4114, %v4116
    %v4118 = vadd.f32 %v4114, %v4117
    %vm4119 = vweird.f32 %v4112
    %vm4120 = vweird.f32 %v4114
    %vm4121 = vmor %vm4119, %vm4120
    %v4122 = vsel %vm4121, %v4114, %v4118
    %v4123 = vand.u32 2147483647, %v4112
    %vm4124 = vcmp.eq.f32.partialorder %v4123, 8.507059e+37
    %v4125 = vand.u32 %v4112, 2147483648
    %v4126 = vor.u32 1.1754944e-38, %v4125
    %v4127 = vsel %vm4124, %v4126, %v4122
    %v4128 = vmul.f32 1.0, %v4127
    %v4129 = vrcp.pop %v4113
    %v4130 = vmul.f32 %v4113, %v4129
    %v4131 = vsub.f32 1.0, %v4130
    %v4132 = vmul.f32 %v4129, %v4131
    %v4133 = vadd.f32 %v4129, %v4132
    %vm4134 = vweird.f32 %v4113
    %vm4135 = vweird.f32 %v4129
    %vm4136 = vmor %vm4134, %vm4135
    %v4137 = vsel %vm4136, %v4129, %v4133
    %v4138 = vand.u32 2147483647, %v4113
    %vm4139 = vcmp.eq.f32.partialorder %v4138, 8.507059e+37
    %v4140 = vand.u32 %v4113, 2147483648
    %v4141 = vor.u32 1.1754944e-38, %v4140
    %v4142 = vsel %vm4139, %v4141, %v4137
    %v4143 = vmul.f32 1.0, %v4142
    %v4144 = vtanh.pop %v4062
    %v4145 = vtanh.pop %v4066
    %v4146 = vxor.u32 %v4063, 2147483648
    %v4147 = vxor.u32 %v4067, 2147483648
    %v4148 = vmul.f32 %v4146, 1.442695
    %v4149 = vpow.pop %v4148
    %v4150 = vmul.f32 %v4147, 1.442695
    %v4151 = vpow.pop %v4150
    %v4152 = vadd.f32 %v4149, 1.0
    %v4153 = vadd.f32 %v4151, 1.0
    %v4154 = vrcp.pop %v4152
    %v4155 = vmul.f32 %v4152, %v4154
    %v4156 = vsub.f32 1.0, %v4155
    %v4157 = vmul.f32 %v4154, %v4156
    %v4158 = vadd.f32 %v4154, %v4157
    %vm4159 = vweird.f32 %v4152
    %vm4160 = vweird.f32 %v4154
    %vm4161 = vmor %vm4159, %vm4160
    %v4162 = vsel %vm4161, %v4154, %v4158
    %v4163 = vand.u32 2147483647, %v4152
    %vm4164 = vcmp.eq.f32.partialorder %v4163, 8.507059e+37
    %v4165 = vand.u32 %v4152, 2147483648
    %v4166 = vor.u32 1.1754944e-38, %v4165
    %v4167 = vsel %vm4164, %v4166, %v4162
    %v4168 = vmul.f32 1.0, %v4167
    %v4169 = vrcp.pop %v4153
    %v4170 = vmul.f32 %v4153, %v4169
    %v4171 = vsub.f32 1.0, %v4170
    %v4172 = vmul.f32 %v4169, %v4171
    %v4173 = vadd.f32 %v4169, %v4172
    %vm4174 = vweird.f32 %v4153
    %vm4175 = vweird.f32 %v4169
    %vm4176 = vmor %vm4174, %vm4175
    %v4177 = vsel %vm4176, %v4169, %v4173
    %v4178 = vand.u32 2147483647, %v4153
    %vm4179 = vcmp.eq.f32.partialorder %v4178, 8.507059e+37
    %v4180 = vand.u32 %v4153, 2147483648
    %v4181 = vor.u32 1.1754944e-38, %v4180
    %v4182 = vsel %vm4179, %v4181, %v4177
    %v4183 = vmul.f32 1.0, %v4182
    %v4186 = vrot.slane %v3965, 7
    %v4187 = vrot.slane %v3966, 7
    %v4190 = vmul.f32 %v4128, %v4186
    %v4191 = vmul.f32 %v4143, %v4187
    %v4192 = vmul.f32 %v4090, %v4144
    %v4193 = vmul.f32 %v4105, %v4145
    %v4194 = vadd.f32 %v4190, %v4192
    %v4195 = vadd.f32 %v4191, %v4193
    %v4196 = vtanh.pop %v4194
    %v4197 = vtanh.pop %v4195
    %v4198 = vmul.f32 %v4168, %v4196
    %v4199 = vmul.f32 %v4183, %v4197
    %v4200 = vperm.slane %v4198, 6
    %v4201 = vperm.slane %v4199, 6
    %v4202 = vsel %vm2133, %v4200, %v3973
    %v4203 = vsel %vm2133, %v4201, %v3974
    %v4204 = vpack.c.bf16 %v4198, %v4198
    %v4205 = vpack.c.bf16 %v4199, %v4199
    %v4208 = vunpack.c.l.b16 %v4204
    %v4209 = vunpack.c.l.b16 %v4205
    %v4210 = vrot.slane %v4208, 6
    %v4211 = vrot.slane %v4209, 5
    %v4212 = vsel %vm770, %v4211, %v4210
    %v4213 = vpack.c.b16 %v4212, %v4212
    %v4215 = vsel %vm552, %v4213, 0
    %4217 = vmatpush.bf16.msra.mxu0 0
    %4218 = vmatpush.bf16.msra.mxu0 0
    %4219 = vmatpush.bf16.msra.mxu0 0
    %4220 = vmatpush.bf16.msra.mxu0 0
    %4221 = vmatpush.bf16.msra.mxu0 %v2610
    %4222 = vmatpush.bf16.msra.mxu0 %v2606
    %4223 = vmatpush.bf16.msra.mxu0 %v2602
    %4224 = vmatpush.bf16.msra.mxu0 %v2598
    %4225 = vmatmul.bf16.gmra.mxu0 %v4215
    %v4226 = vpop.f32.mrf.mxu0
    %v4227 = vadd.f32 0.0, %v4226
    %v4228 = vpop.f32.mrf.mxu0
    %4229 = vdwg.mxu0
    %4230 = vmatpush.bf16.msra.mxu0 0
    %4231 = vmatpush.bf16.msra.mxu0 0
    %4232 = vmatpush.bf16.msra.mxu0 0
    %4233 = vmatpush.bf16.msra.mxu0 0
    %4234 = vmatpush.bf16.msra.mxu0 %v2611
    %4235 = vmatpush.bf16.msra.mxu0 %v2607
    %4236 = vmatpush.bf16.msra.mxu0 %v2603
    %4237 = vmatpush.bf16.msra.mxu0 %v2599
    %4238 = vmatmul.bf16.gmra.mxu0 %v4215
    %v4239 = vpop.f32.mrf.mxu0
    %v4240 = vadd.f32 0.0, %v4239
    %v4241 = vpop.f32.mrf.mxu0
    %4242 = vdwg.mxu0
    %4243 = vmatpush.bf16.msra.mxu0 0
    %4244 = vmatpush.bf16.msra.mxu0 0
    %4245 = vmatpush.bf16.msra.mxu0 0
    %4246 = vmatpush.bf16.msra.mxu0 0
    %4247 = vmatpush.bf16.msra.mxu0 %v2612
    %4248 = vmatpush.bf16.msra.mxu0 %v2608
    %4249 = vmatpush.bf16.msra.mxu0 %v2604
    %4250 = vmatpush.bf16.msra.mxu0 %v2600
    %4251 = vmatmul.bf16.gmra.mxu0 %v4215
    %v4252 = vpop.f32.mrf.mxu0
    %v4253 = vadd.f32 0.0, %v4252
    %v4254 = vpop.f32.mrf.mxu0
    %4255 = vdwg.mxu0
    %4256 = vmatpush.bf16.msra.mxu0 0
    %4257 = vmatpush.bf16.msra.mxu0 0
    %4258 = vmatpush.bf16.msra.mxu0 0
    %4259 = vmatpush.bf16.msra.mxu0 0
    %4260 = vmatpush.bf16.msra.mxu0 %v2613
    %4261 = vmatpush.bf16.msra.mxu0 %v2609
    %4262 = vmatpush.bf16.msra.mxu0 %v2605
    %4263 = vmatpush.bf16.msra.mxu0 %v2601
    %4264 = vmatmul.bf16.gmra.mxu0 %v4215
    %v4265 = vpop.f32.mrf.mxu0
    %v4266 = vadd.f32 0.0, %v4265
    %v4267 = vpop.f32.mrf.mxu0
    %4268 = vdwg.mxu0
    %v4273 = vrot.slane %v4227, 1
    %v4274 = vrot.slane %v4240, 1
    %v4275 = vrot.slane %v4253, 1
    %v4276 = vrot.slane %v4266, 1
    %v4277 = vrot.slane %v4227, 2
    %v4278 = vrot.slane %v4240, 2
    %v4279 = vrot.slane %v4253, 2
    %v4280 = vrot.slane %v4266, 2
    %v4289 = vadd.f32 %v2488, %v4273
    %v4290 = vadd.f32 %v2502, %v4274
    %v4291 = vadd.f32 %v2516, %v4275
    %v4292 = vadd.f32 %v2530, %v4276
    %v4293 = vadd.f32 %v2490, %v4277
    %v4294 = vadd.f32 %v2504, %v4278
    %v4295 = vadd.f32 %v2518, %v4279
    %v4296 = vadd.f32 %v2532, %v4280
    %v4297 = vxor.u32 %v4289, 2147483648
    %v4298 = vxor.u32 %v4293, 2147483648
    %v4299 = vmul.f32 %v4297, 1.442695
    %v4300 = vpow.pop %v4299
    %v4301 = vmul.f32 %v4298, 1.442695
    %v4302 = vpow.pop %v4301
    %v4303 = vadd.f32 %v4300, 1.0
    %v4304 = vadd.f32 %v4302, 1.0
    %v4305 = vrcp.pop %v4303
    %v4306 = vmul.f32 %v4303, %v4305
    %v4307 = vsub.f32 1.0, %v4306
    %v4308 = vmul.f32 %v4305, %v4307
    %v4309 = vadd.f32 %v4305, %v4308
    %vm4310 = vweird.f32 %v4303
    %vm4311 = vweird.f32 %v4305
    %vm4312 = vmor %vm4310, %vm4311
    %v4313 = vsel %vm4312, %v4305, %v4309
    %v4314 = vand.u32 2147483647, %v4303
    %vm4315 = vcmp.eq.f32.partialorder %v4314, 8.507059e+37
    %v4316 = vand.u32 %v4303, 2147483648
    %v4317 = vor.u32 1.1754944e-38, %v4316
    %v4318 = vsel %vm4315, %v4317, %v4313
    %v4319 = vmul.f32 1.0, %v4318
    %v4320 = vrcp.pop %v4304
    %v4321 = vmul.f32 %v4304, %v4320
    %v4322 = vsub.f32 1.0, %v4321
    %v4323 = vmul.f32 %v4320, %v4322
    %v4324 = vadd.f32 %v4320, %v4323
    %vm4325 = vweird.f32 %v4304
    %vm4326 = vweird.f32 %v4320
    %vm4327 = vmor %vm4325, %vm4326
    %v4328 = vsel %vm4327, %v4320, %v4324
    %v4329 = vand.u32 2147483647, %v4304
    %vm4330 = vcmp.eq.f32.partialorder %v4329, 8.507059e+37
    %v4331 = vand.u32 %v4304, 2147483648
    %v4332 = vor.u32 1.1754944e-38, %v4331
    %v4333 = vsel %vm4330, %v4332, %v4328
    %v4334 = vmul.f32 1.0, %v4333
    %v4335 = vxor.u32 %v4290, 2147483648
    %v4336 = vxor.u32 %v4294, 2147483648
    %v4337 = vmul.f32 %v4335, 1.442695
    %v4338 = vpow.pop %v4337
    %v4339 = vmul.f32 %v4336, 1.442695
    %v4340 = vpow.pop %v4339
    %v4341 = vadd.f32 %v4338, 1.0
    %v4342 = vadd.f32 %v4340, 1.0
    %v4343 = vrcp.pop %v4341
    %v4344 = vmul.f32 %v4341, %v4343
    %v4345 = vsub.f32 1.0, %v4344
    %v4346 = vmul.f32 %v4343, %v4345
    %v4347 = vadd.f32 %v4343, %v4346
    %vm4348 = vweird.f32 %v4341
    %vm4349 = vweird.f32 %v4343
    %vm4350 = vmor %vm4348, %vm4349
    %v4351 = vsel %vm4350, %v4343, %v4347
    %v4352 = vand.u32 2147483647, %v4341
    %vm4353 = vcmp.eq.f32.partialorder %v4352, 8.507059e+37
    %v4354 = vand.u32 %v4341, 2147483648
    %v4355 = vor.u32 1.1754944e-38, %v4354
    %v4356 = vsel %vm4353, %v4355, %v4351
    %v4357 = vmul.f32 1.0, %v4356
    %v4358 = vrcp.pop %v4342
    %v4359 = vmul.f32 %v4342, %v4358
    %v4360 = vsub.f32 1.0, %v4359
    %v4361 = vmul.f32 %v4358, %v4360
    %v4362 = vadd.f32 %v4358, %v4361
    %vm4363 = vweird.f32 %v4342
    %vm4364 = vweird.f32 %v4358
    %vm4365 = vmor %vm4363, %vm4364
    %v4366 = vsel %vm4365, %v4358, %v4362
    %v4367 = vand.u32 2147483647, %v4342
    %vm4368 = vcmp.eq.f32.partialorder %v4367, 8.507059e+37
    %v4369 = vand.u32 %v4342, 2147483648
    %v4370 = vor.u32 1.1754944e-38, %v4369
    %v4371 = vsel %vm4368, %v4370, %v4366
    %v4372 = vmul.f32 1.0, %v4371
    %v4373 = vtanh.pop %v4291
    %v4374 = vtanh.pop %v4295
    %v4375 = vxor.u32 %v4292, 2147483648
    %v4376 = vxor.u32 %v4296, 2147483648
    %v4377 = vmul.f32 %v4375, 1.442695
    %v4378 = vpow.pop %v4377
    %v4379 = vmul.f32 %v4376, 1.442695
    %v4380 = vpow.pop %v4379
    %v4381 = vadd.f32 %v4378, 1.0
    %v4382 = vadd.f32 %v4380, 1.0
    %v4383 = vrcp.pop %v4381
    %v4384 = vmul.f32 %v4381, %v4383
    %v4385 = vsub.f32 1.0, %v4384
    %v4386 = vmul.f32 %v4383, %v4385
    %v4387 = vadd.f32 %v4383, %v4386
    %vm4388 = vweird.f32 %v4381
    %vm4389 = vweird.f32 %v4383
    %vm4390 = vmor %vm4388, %vm4389
    %v4391 = vsel %vm4390, %v4383, %v4387
    %v4392 = vand.u32 2147483647, %v4381
    %vm4393 = vcmp.eq.f32.partialorder %v4392, 8.507059e+37
    %v4394 = vand.u32 %v4381, 2147483648
    %v4395 = vor.u32 1.1754944e-38, %v4394
    %v4396 = vsel %vm4393, %v4395, %v4391
    %v4397 = vmul.f32 1.0, %v4396
    %v4398 = vrcp.pop %v4382
    %v4399 = vmul.f32 %v4382, %v4398
    %v4400 = vsub.f32 1.0, %v4399
    %v4401 = vmul.f32 %v4398, %v4400
    %v4402 = vadd.f32 %v4398, %v4401
    %vm4403 = vweird.f32 %v4382
    %vm4404 = vweird.f32 %v4398
    %vm4405 = vmor %vm4403, %vm4404
    %v4406 = vsel %vm4405, %v4398, %v4402
    %v4407 = vand.u32 2147483647, %v4382
    %vm4408 = vcmp.eq.f32.partialorder %v4407, 8.507059e+37
    %v4409 = vand.u32 %v4382, 2147483648
    %v4410 = vor.u32 1.1754944e-38, %v4409
    %v4411 = vsel %vm4408, %v4410, %v4406
    %v4412 = vmul.f32 1.0, %v4411
    %v4415 = vrot.slane %v4194, 7
    %v4416 = vrot.slane %v4195, 7
    %v4419 = vmul.f32 %v4357, %v4415
    %v4420 = vmul.f32 %v4372, %v4416
    %v4421 = vmul.f32 %v4319, %v4373
    %v4422 = vmul.f32 %v4334, %v4374
    %v4423 = vadd.f32 %v4419, %v4421
    %v4424 = vadd.f32 %v4420, %v4422
    %v4425 = vtanh.pop %v4423
    %v4426 = vtanh.pop %v4424
    %v4427 = vmul.f32 %v4397, %v4425
    %v4428 = vmul.f32 %v4412, %v4426
    %v4429 = vperm.slane %v4427, 7
    %v4430 = vperm.slane %v4428, 7
    %v4431 = vsel %vm2363, %v4429, %v4202
    %v4432 = vsel %vm2363, %v4430, %v4203
    %v4433 = vpack.c.bf16 %v4432, %v4431
    %v4434 = vld [vmem:[#allocation12] sm:$0xff]
    %v4435 = vld [vmem:[#allocation12 + $0x8] sm:$0xff]
    %v4436 = vld [vmem:[#allocation12 + $0x10] sm:$0xff]
    %v4437 = vld [vmem:[#allocation12 + $0x18] sm:$0xff]
    %v4438 = vld [vmem:[#allocation12 + $0x20] sm:$0xff]
    %v4439 = vld [vmem:[#allocation12 + $0x28] sm:$0xff]
    %v4440 = vld [vmem:[#allocation12 + $0x30] sm:$0xff]
    %v4441 = vld [vmem:[#allocation12 + $0x38] sm:$0xff]
    %v4442 = vld [vmem:[#allocation12 + $0x40] sm:$0xff]
    %v4443 = vld [vmem:[#allocation12 + $0x48] sm:$0xff]
    %v4444 = vld [vmem:[#allocation12 + $0x50] sm:$0xff]
    %v4445 = vld [vmem:[#allocation12 + $0x58] sm:$0xff]
    %v4446 = vld [vmem:[#allocation12 + $0x60] sm:$0xff]
    %v4447 = vld [vmem:[#allocation12 + $0x68] sm:$0xff]
    %v4448 = vld [vmem:[#allocation12 + $0x70] sm:$0xff]
    %v4449 = vld [vmem:[#allocation12 + $0x78] sm:$0xff]
    %v4450 = vld [vmem:[#allocation15] sm:$0xf]
    %v4452 = vperm.slane %v4450, 0
    %v4453 = vperm.slane %v4450, 1
    %v4454 = vperm.slane %v4450, 2
    %v4455 = vperm.slane %v4450, 3
    %v4476 = vunpack.c.l.b16 %v4434
    %v4477 = vunpack.c.h.b16 %v4434
    %v4478 = vunpack.c.l.b16 %v4435
    %v4479 = vunpack.c.h.b16 %v4435
    %v4480 = vunpack.c.l.b16 %v4436
    %v4481 = vunpack.c.h.b16 %v4436
    %v4482 = vunpack.c.l.b16 %v4437
    %v4483 = vunpack.c.h.b16 %v4437
    %v4484 = vunpack.c.l.b16 %v4438
    %v4485 = vunpack.c.h.b16 %v4438
    %v4486 = vunpack.c.l.b16 %v4439
    %v4487 = vunpack.c.h.b16 %v4439
    %v4488 = vunpack.c.l.b16 %v4440
    %v4489 = vunpack.c.h.b16 %v4440
    %v4490 = vunpack.c.l.b16 %v4441
    %v4491 = vunpack.c.h.b16 %v4441
    %v4492 = vunpack.c.l.b16 %v4442
    %v4493 = vunpack.c.h.b16 %v4442
    %v4494 = vunpack.c.l.b16 %v4443
    %v4495 = vunpack.c.h.b16 %v4443
    %v4496 = vunpack.c.l.b16 %v4444
    %v4497 = vunpack.c.h.b16 %v4444
    %v4498 = vunpack.c.l.b16 %v4445
    %v4499 = vunpack.c.h.b16 %v4445
    %v4500 = vunpack.c.l.b16 %v4446
    %v4501 = vunpack.c.h.b16 %v4446
    %v4502 = vunpack.c.l.b16 %v4447
    %v4503 = vunpack.c.h.b16 %v4447
    %v4504 = vunpack.c.l.b16 %v4448
    %v4505 = vunpack.c.h.b16 %v4448
    %v4506 = vunpack.c.l.b16 %v4449
    %v4507 = vunpack.c.h.b16 %v4449
    %v4508 = vpack.c.b16 %v4480, %v4476
    %v4509 = vpack.c.b16 %v4481, %v4477
    %v4510 = vpack.c.b16 %v4482, %v4478
    %v4511 = vpack.c.b16 %v4483, %v4479
    %v4512 = vpack.c.b16 %v4488, %v4484
    %v4513 = vpack.c.b16 %v4489, %v4485
    %v4514 = vpack.c.b16 %v4490, %v4486
    %v4515 = vpack.c.b16 %v4491, %v4487
    %v4516 = vpack.c.b16 %v4496, %v4492
    %v4517 = vpack.c.b16 %v4497, %v4493
    %v4518 = vpack.c.b16 %v4498, %v4494
    %v4519 = vpack.c.b16 %v4499, %v4495
    %v4520 = vpack.c.b16 %v4504, %v4500
    %v4521 = vpack.c.b16 %v4505, %v4501
    %v4522 = vpack.c.b16 %v4506, %v4502
    %v4523 = vpack.c.b16 %v4507, %v4503
    %v4541 = vsel %vm552, %v4433, 0
    %4543 = vmatpush.bf16.msra.mxu0 0
    %4544 = vmatpush.bf16.msra.mxu0 0
    %4545 = vmatpush.bf16.msra.mxu0 0
    %4546 = vmatpush.bf16.msra.mxu0 0
    %4547 = vmatpush.bf16.msra.mxu0 %v4520
    %4548 = vmatpush.bf16.msra.mxu0 %v4516
    %4549 = vmatpush.bf16.msra.mxu0 %v4512
    %4550 = vmatpush.bf16.msra.mxu0 %v4508
    %4551 = vmatmul.bf16.gmra.mxu0 %v4541
    %v4552 = vpop.f32.mrf.mxu0
    %v4553 = vadd.f32 %v4452, %v4552
    %v4554 = vpop.f32.mrf.mxu0
    %v4555 = vadd.f32 %v4452, %v4554
    %4556 = vdwg.mxu0
    %4557 = vmatpush.bf16.msra.mxu0 0
    %4558 = vmatpush.bf16.msra.mxu0 0
    %4559 = vmatpush.bf16.msra.mxu0 0
    %4560 = vmatpush.bf16.msra.mxu0 0
    %4561 = vmatpush.bf16.msra.mxu0 %v4521
    %4562 = vmatpush.bf16.msra.mxu0 %v4517
    %4563 = vmatpush.bf16.msra.mxu0 %v4513
    %4564 = vmatpush.bf16.msra.mxu0 %v4509
    %4565 = vmatmul.bf16.gmra.mxu0 %v4541
    %v4566 = vpop.f32.mrf.mxu0
    %v4567 = vadd.f32 %v4453, %v4566
    %v4568 = vpop.f32.mrf.mxu0
    %v4569 = vadd.f32 %v4453, %v4568
    %4570 = vdwg.mxu0
    %4571 = vmatpush.bf16.msra.mxu0 0
    %4572 = vmatpush.bf16.msra.mxu0 0
    %4573 = vmatpush.bf16.msra.mxu0 0
    %4574 = vmatpush.bf16.msra.mxu0 0
    %4575 = vmatpush.bf16.msra.mxu0 %v4522
    %4576 = vmatpush.bf16.msra.mxu0 %v4518
    %4577 = vmatpush.bf16.msra.mxu0 %v4514
    %4578 = vmatpush.bf16.msra.mxu0 %v4510
    %4579 = vmatmul.bf16.gmra.mxu0 %v4541
    %v4580 = vpop.f32.mrf.mxu0
    %v4581 = vadd.f32 %v4454, %v4580
    %v4582 = vpop.f32.mrf.mxu0
    %v4583 = vadd.f32 %v4454, %v4582
    %4584 = vdwg.mxu0
    %4585 = vmatpush.bf16.msra.mxu0 0
    %4586 = vmatpush.bf16.msra.mxu0 0
    %4587 = vmatpush.bf16.msra.mxu0 0
    %4588 = vmatpush.bf16.msra.mxu0 0
    %4589 = vmatpush.bf16.msra.mxu0 %v4523
    %4590 = vmatpush.bf16.msra.mxu0 %v4519
    %4591 = vmatpush.bf16.msra.mxu0 %v4515
    %4592 = vmatpush.bf16.msra.mxu0 %v4511
    %4593 = vmatmul.bf16.gmra.mxu0 %v4541
    %v4594 = vpop.f32.mrf.mxu0
    %v4595 = vadd.f32 %v4455, %v4594
    %v4596 = vpop.f32.mrf.mxu0
    %v4597 = vadd.f32 %v4455, %v4596
    %4598 = vdwg.mxu0
    %v4599 = vld [vmem:[#allocation13] sm:$0xff]
    %v4600 = vld [vmem:[#allocation13 + $0x8] sm:$0xff]
    %v4601 = vld [vmem:[#allocation13 + $0x10] sm:$0xff]
    %v4602 = vld [vmem:[#allocation13 + $0x18] sm:$0xff]
    %v4603 = vld [vmem:[#allocation13 + $0x20] sm:$0xff]
    %v4604 = vld [vmem:[#allocation13 + $0x28] sm:$0xff]
    %v4605 = vld [vmem:[#allocation13 + $0x30] sm:$0xff]
    %v4606 = vld [vmem:[#allocation13 + $0x38] sm:$0xff]
    %v4607 = vld [vmem:[#allocation13 + $0x40] sm:$0xff]
    %v4608 = vld [vmem:[#allocation13 + $0x48] sm:$0xff]
    %v4609 = vld [vmem:[#allocation13 + $0x50] sm:$0xff]
    %v4610 = vld [vmem:[#allocation13 + $0x58] sm:$0xff]
    %v4611 = vld [vmem:[#allocation13 + $0x60] sm:$0xff]
    %v4612 = vld [vmem:[#allocation13 + $0x68] sm:$0xff]
    %v4613 = vld [vmem:[#allocation13 + $0x70] sm:$0xff]
    %v4614 = vld [vmem:[#allocation13 + $0x78] sm:$0xff]
    %v4631 = vunpack.c.l.b16 %v4599
    %v4632 = vunpack.c.h.b16 %v4599
    %v4633 = vunpack.c.l.b16 %v4600
    %v4634 = vunpack.c.h.b16 %v4600
    %v4635 = vunpack.c.l.b16 %v4601
    %v4636 = vunpack.c.h.b16 %v4601
    %v4637 = vunpack.c.l.b16 %v4602
    %v4638 = vunpack.c.h.b16 %v4602
    %v4639 = vunpack.c.l.b16 %v4603
    %v4640 = vunpack.c.h.b16 %v4603
    %v4641 = vunpack.c.l.b16 %v4604
    %v4642 = vunpack.c.h.b16 %v4604
    %v4643 = vunpack.c.l.b16 %v4605
    %v4644 = vunpack.c.h.b16 %v4605
    %v4645 = vunpack.c.l.b16 %v4606
    %v4646 = vunpack.c.h.b16 %v4606
    %v4647 = vunpack.c.l.b16 %v4607
    %v4648 = vunpack.c.h.b16 %v4607
    %v4649 = vunpack.c.l.b16 %v4608
    %v4650 = vunpack.c.h.b16 %v4608
    %v4651 = vunpack.c.l.b16 %v4609
    %v4652 = vunpack.c.h.b16 %v4609
    %v4653 = vunpack.c.l.b16 %v4610
    %v4654 = vunpack.c.h.b16 %v4610
    %v4655 = vunpack.c.l.b16 %v4611
    %v4656 = vunpack.c.h.b16 %v4611
    %v4657 = vunpack.c.l.b16 %v4612
    %v4658 = vunpack.c.h.b16 %v4612
    %v4659 = vunpack.c.l.b16 %v4613
    %v4660 = vunpack.c.h.b16 %v4613
    %v4661 = vunpack.c.l.b16 %v4614
    %v4662 = vunpack.c.h.b16 %v4614
    %v4663 = vpack.c.b16 %v4635, %v4631
    %v4664 = vpack.c.b16 %v4636, %v4632
    %v4665 = vpack.c.b16 %v4637, %v4633
    %v4666 = vpack.c.b16 %v4638, %v4634
    %v4667 = vpack.c.b16 %v4643, %v4639
    %v4668 = vpack.c.b16 %v4644, %v4640
    %v4669 = vpack.c.b16 %v4645, %v4641
    %v4670 = vpack.c.b16 %v4646, %v4642
    %v4671 = vpack.c.b16 %v4651, %v4647
    %v4672 = vpack.c.b16 %v4652, %v4648
    %v4673 = vpack.c.b16 %v4653, %v4649
    %v4674 = vpack.c.b16 %v4654, %v4650
    %v4675 = vpack.c.b16 %v4659, %v4655
    %v4676 = vpack.c.b16 %v4660, %v4656
    %v4677 = vpack.c.b16 %v4661, %v4657
    %v4678 = vpack.c.b16 %v4662, %v4658
    %4695 = vmatpush.bf16.msra.mxu0 0
    %4696 = vmatpush.bf16.msra.mxu0 0
    %4697 = vmatpush.bf16.msra.mxu0 0
    %4698 = vmatpush.bf16.msra.mxu0 0
    %4699 = vmatpush.bf16.msra.mxu0 %v4675
    %4700 = vmatpush.bf16.msra.mxu0 %v4671
    %4701 = vmatpush.bf16.msra.mxu0 %v4667
    %4702 = vmatpush.bf16.msra.mxu0 %v4663
    %4703 = vmatmul.bf16.gmra.mxu0 %v554
    %v4704 = vpop.f32.mrf.mxu0
    %v4705 = vadd.f32 0.0, %v4704
    %v4706 = vpop.f32.mrf.mxu0
    %4707 = vdwg.mxu0
    %4708 = vmatpush.bf16.msra.mxu0 0
    %4709 = vmatpush.bf16.msra.mxu0 0
    %4710 = vmatpush.bf16.msra.mxu0 0
    %4711 = vmatpush.bf16.msra.mxu0 0
    %4712 = vmatpush.bf16.msra.mxu0 %v4676
    %4713 = vmatpush.bf16.msra.mxu0 %v4672
    %4714 = vmatpush.bf16.msra.mxu0 %v4668
    %4715 = vmatpush.bf16.msra.mxu0 %v4664
    %4716 = vmatmul.bf16.gmra.mxu0 %v554
    %v4717 = vpop.f32.mrf.mxu0
    %v4718 = vadd.f32 0.0, %v4717
    %v4719 = vpop.f32.mrf.mxu0
    %4720 = vdwg.mxu0
    %4721 = vmatpush.bf16.msra.mxu0 0
    %4722 = vmatpush.bf16.msra.mxu0 0
    %4723 = vmatpush.bf16.msra.mxu0 0
    %4724 = vmatpush.bf16.msra.mxu0 0
    %4725 = vmatpush.bf16.msra.mxu0 %v4677
    %4726 = vmatpush.bf16.msra.mxu0 %v4673
    %4727 = vmatpush.bf16.msra.mxu0 %v4669
    %4728 = vmatpush.bf16.msra.mxu0 %v4665
    %4729 = vmatmul.bf16.gmra.mxu0 %v554
    %v4730 = vpop.f32.mrf.mxu0
    %v4731 = vadd.f32 0.0, %v4730
    %v4732 = vpop.f32.mrf.mxu0
    %4733 = vdwg.mxu0
    %4734 = vmatpush.bf16.msra.mxu0 0
    %4735 = vmatpush.bf16.msra.mxu0 0
    %4736 = vmatpush.bf16.msra.mxu0 0
    %4737 = vmatpush.bf16.msra.mxu0 0
    %4738 = vmatpush.bf16.msra.mxu0 %v4678
    %4739 = vmatpush.bf16.msra.mxu0 %v4674
    %4740 = vmatpush.bf16.msra.mxu0 %v4670
    %4741 = vmatpush.bf16.msra.mxu0 %v4666
    %4742 = vmatmul.bf16.gmra.mxu0 %v554
    %v4743 = vpop.f32.mrf.mxu0
    %v4744 = vadd.f32 0.0, %v4743
    %v4745 = vpop.f32.mrf.mxu0
    %4746 = vdwg.mxu0
    %v4751 = vrot.slane %v4705, 1
    %v4752 = vrot.slane %v4718, 1
    %v4753 = vrot.slane %v4731, 1
    %v4754 = vrot.slane %v4744, 1
    %v4763 = vadd.f32 %v4553, %v4705
    %v4764 = vadd.f32 %v4567, %v4718
    %v4765 = vadd.f32 %v4581, %v4731
    %v4766 = vadd.f32 %v4595, %v4744
    %v4767 = vadd.f32 %v4555, %v4751
    %v4768 = vadd.f32 %v4569, %v4752
    %v4769 = vadd.f32 %v4583, %v4753
    %v4770 = vadd.f32 %v4597, %v4754
    %v4771 = vxor.u32 %v4763, 2147483648
    %v4772 = vxor.u32 %v4767, 2147483648
    %v4773 = vmul.f32 %v4771, 1.442695
    %v4774 = vpow.pop %v4773
    %v4775 = vmul.f32 %v4772, 1.442695
    %v4776 = vpow.pop %v4775
    %v4777 = vadd.f32 %v4774, 1.0
    %v4778 = vadd.f32 %v4776, 1.0
    %v4779 = vrcp.pop %v4777
    %v4780 = vmul.f32 %v4777, %v4779
    %v4781 = vsub.f32 1.0, %v4780
    %v4782 = vmul.f32 %v4779, %v4781
    %v4783 = vadd.f32 %v4779, %v4782
    %vm4784 = vweird.f32 %v4777
    %vm4785 = vweird.f32 %v4779
    %vm4786 = vmor %vm4784, %vm4785
    %v4787 = vsel %vm4786, %v4779, %v4783
    %v4788 = vand.u32 2147483647, %v4777
    %vm4789 = vcmp.eq.f32.partialorder %v4788, 8.507059e+37
    %v4790 = vand.u32 %v4777, 2147483648
    %v4791 = vor.u32 1.1754944e-38, %v4790
    %v4792 = vsel %vm4789, %v4791, %v4787
    %v4793 = vmul.f32 1.0, %v4792
    %v4794 = vrcp.pop %v4778
    %v4795 = vmul.f32 %v4778, %v4794
    %v4796 = vsub.f32 1.0, %v4795
    %v4797 = vmul.f32 %v4794, %v4796
    %v4798 = vadd.f32 %v4794, %v4797
    %vm4799 = vweird.f32 %v4778
    %vm4800 = vweird.f32 %v4794
    %vm4801 = vmor %vm4799, %vm4800
    %v4802 = vsel %vm4801, %v4794, %v4798
    %v4803 = vand.u32 2147483647, %v4778
    %vm4804 = vcmp.eq.f32.partialorder %v4803, 8.507059e+37
    %v4805 = vand.u32 %v4778, 2147483648
    %v4806 = vor.u32 1.1754944e-38, %v4805
    %v4807 = vsel %vm4804, %v4806, %v4802
    %v4808 = vmul.f32 1.0, %v4807
    %v4809 = vxor.u32 %v4764, 2147483648
    %v4810 = vxor.u32 %v4768, 2147483648
    %v4811 = vmul.f32 %v4809, 1.442695
    %v4812 = vpow.pop %v4811
    %v4813 = vmul.f32 %v4810, 1.442695
    %v4814 = vpow.pop %v4813
    %v4815 = vadd.f32 %v4812, 1.0
    %v4816 = vadd.f32 %v4814, 1.0
    %v4817 = vrcp.pop %v4815
    %v4818 = vmul.f32 %v4815, %v4817
    %v4819 = vsub.f32 1.0, %v4818
    %v4820 = vmul.f32 %v4817, %v4819
    %v4821 = vadd.f32 %v4817, %v4820
    %vm4822 = vweird.f32 %v4815
    %vm4823 = vweird.f32 %v4817
    %vm4824 = vmor %vm4822, %vm4823
    %v4825 = vsel %vm4824, %v4817, %v4821
    %v4826 = vand.u32 2147483647, %v4815
    %vm4827 = vcmp.eq.f32.partialorder %v4826, 8.507059e+37
    %v4828 = vand.u32 %v4815, 2147483648
    %v4829 = vor.u32 1.1754944e-38, %v4828
    %v4830 = vsel %vm4827, %v4829, %v4825
    %v4831 = vmul.f32 1.0, %v4830
    %v4832 = vrcp.pop %v4816
    %v4833 = vmul.f32 %v4816, %v4832
    %v4834 = vsub.f32 1.0, %v4833
    %v4835 = vmul.f32 %v4832, %v4834
    %v4836 = vadd.f32 %v4832, %v4835
    %vm4837 = vweird.f32 %v4816
    %vm4838 = vweird.f32 %v4832
    %vm4839 = vmor %vm4837, %vm4838
    %v4840 = vsel %vm4839, %v4832, %v4836
    %v4841 = vand.u32 2147483647, %v4816
    %vm4842 = vcmp.eq.f32.partialorder %v4841, 8.507059e+37
    %v4843 = vand.u32 %v4816, 2147483648
    %v4844 = vor.u32 1.1754944e-38, %v4843
    %v4845 = vsel %vm4842, %v4844, %v4840
    %v4846 = vmul.f32 1.0, %v4845
    %v4847 = vtanh.pop %v4765
    %v4848 = vtanh.pop %v4769
    %v4849 = vxor.u32 %v4766, 2147483648
    %v4850 = vxor.u32 %v4770, 2147483648
    %v4851 = vmul.f32 %v4849, 1.442695
    %v4852 = vpow.pop %v4851
    %v4853 = vmul.f32 %v4850, 1.442695
    %v4854 = vpow.pop %v4853
    %v4855 = vadd.f32 %v4852, 1.0
    %v4856 = vadd.f32 %v4854, 1.0
    %v4857 = vrcp.pop %v4855
    %v4858 = vmul.f32 %v4855, %v4857
    %v4859 = vsub.f32 1.0, %v4858
    %v4860 = vmul.f32 %v4857, %v4859
    %v4861 = vadd.f32 %v4857, %v4860
    %vm4862 = vweird.f32 %v4855
    %vm4863 = vweird.f32 %v4857
    %vm4864 = vmor %vm4862, %vm4863
    %v4865 = vsel %vm4864, %v4857, %v4861
    %v4866 = vand.u32 2147483647, %v4855
    %vm4867 = vcmp.eq.f32.partialorder %v4866, 8.507059e+37
    %v4868 = vand.u32 %v4855, 2147483648
    %v4869 = vor.u32 1.1754944e-38, %v4868
    %v4870 = vsel %vm4867, %v4869, %v4865
    %v4871 = vmul.f32 1.0, %v4870
    %v4872 = vrcp.pop %v4856
    %v4873 = vmul.f32 %v4856, %v4872
    %v4874 = vsub.f32 1.0, %v4873
    %v4875 = vmul.f32 %v4872, %v4874
    %v4876 = vadd.f32 %v4872, %v4875
    %vm4877 = vweird.f32 %v4856
    %vm4878 = vweird.f32 %v4872
    %vm4879 = vmor %vm4877, %vm4878
    %v4880 = vsel %vm4879, %v4872, %v4876
    %v4881 = vand.u32 2147483647, %v4856
    %vm4882 = vcmp.eq.f32.partialorder %v4881, 8.507059e+37
    %v4883 = vand.u32 %v4856, 2147483648
    %v4884 = vor.u32 1.1754944e-38, %v4883
    %v4885 = vsel %vm4882, %v4884, %v4880
    %v4886 = vmul.f32 1.0, %v4885
    %v4887 = vmul.f32 %v4831, 0.0
    %v4888 = vmul.f32 %v4846, 0.0
    %v4889 = vmul.f32 %v4793, %v4847
    %v4890 = vmul.f32 %v4808, %v4848
    %v4891 = vadd.f32 %v4887, %v4889
    %v4892 = vadd.f32 %v4888, %v4890
    %v4893 = vtanh.pop %v4891
    %v4894 = vtanh.pop %v4892
    %v4895 = vmul.f32 %v4871, %v4893
    %v4896 = vmul.f32 %v4886, %v4894
    %v4897 = vperm.slane %v4895, 0
    %v4898 = vperm.slane %v4896, 0
    %v4899 = vsel %vm758, %v4897, 0.0
    %v4900 = vsel %vm758, %v4898, 0.0
    %v4901 = vpack.c.bf16 %v4895, %v4895
    %v4902 = vpack.c.bf16 %v4896, %v4896
    %v4905 = vunpack.c.l.b16 %v4901
    %v4906 = vunpack.c.l.b16 %v4902
    %v4907 = vrot.slane %v4906, 7
    %v4908 = vsel %vm770, %v4907, %v4905
    %v4909 = vpack.c.b16 %v4908, %v4908
    %v4911 = vsel %vm552, %v4909, 0
    %4913 = vmatpush.bf16.msra.mxu0 0
    %4914 = vmatpush.bf16.msra.mxu0 0
    %4915 = vmatpush.bf16.msra.mxu0 0
    %4916 = vmatpush.bf16.msra.mxu0 0
    %4917 = vmatpush.bf16.msra.mxu0 %v4675
    %4918 = vmatpush.bf16.msra.mxu0 %v4671
    %4919 = vmatpush.bf16.msra.mxu0 %v4667
    %4920 = vmatpush.bf16.msra.mxu0 %v4663
    %4921 = vmatmul.bf16.gmra.mxu0 %v4911
    %v4922 = vpop.f32.mrf.mxu0
    %v4923 = vadd.f32 0.0, %v4922
    %v4924 = vpop.f32.mrf.mxu0
    %4925 = vdwg.mxu0
    %4926 = vmatpush.bf16.msra.mxu0 0
    %4927 = vmatpush.bf16.msra.mxu0 0
    %4928 = vmatpush.bf16.msra.mxu0 0
    %4929 = vmatpush.bf16.msra.mxu0 0
    %4930 = vmatpush.bf16.msra.mxu0 %v4676
    %4931 = vmatpush.bf16.msra.mxu0 %v4672
    %4932 = vmatpush.bf16.msra.mxu0 %v4668
    %4933 = vmatpush.bf16.msra.mxu0 %v4664
    %4934 = vmatmul.bf16.gmra.mxu0 %v4911
    %v4935 = vpop.f32.mrf.mxu0
    %v4936 = vadd.f32 0.0, %v4935
    %v4937 = vpop.f32.mrf.mxu0
    %4938 = vdwg.mxu0
    %4939 = vmatpush.bf16.msra.mxu0 0
    %4940 = vmatpush.bf16.msra.mxu0 0
    %4941 = vmatpush.bf16.msra.mxu0 0
    %4942 = vmatpush.bf16.msra.mxu0 0
    %4943 = vmatpush.bf16.msra.mxu0 %v4677
    %4944 = vmatpush.bf16.msra.mxu0 %v4673
    %4945 = vmatpush.bf16.msra.mxu0 %v4669
    %4946 = vmatpush.bf16.msra.mxu0 %v4665
    %4947 = vmatmul.bf16.gmra.mxu0 %v4911
    %v4948 = vpop.f32.mrf.mxu0
    %v4949 = vadd.f32 0.0, %v4948
    %v4950 = vpop.f32.mrf.mxu0
    %4951 = vdwg.mxu0
    %4952 = vmatpush.bf16.msra.mxu0 0
    %4953 = vmatpush.bf16.msra.mxu0 0
    %4954 = vmatpush.bf16.msra.mxu0 0
    %4955 = vmatpush.bf16.msra.mxu0 0
    %4956 = vmatpush.bf16.msra.mxu0 %v4678
    %4957 = vmatpush.bf16.msra.mxu0 %v4674
    %4958 = vmatpush.bf16.msra.mxu0 %v4670
    %4959 = vmatpush.bf16.msra.mxu0 %v4666
    %4960 = vmatmul.bf16.gmra.mxu0 %v4911
    %v4961 = vpop.f32.mrf.mxu0
    %v4962 = vadd.f32 0.0, %v4961
    %v4963 = vpop.f32.mrf.mxu0
    %4964 = vdwg.mxu0
    %v4969 = vrot.slane %v4923, 7
    %v4970 = vrot.slane %v4936, 7
    %v4971 = vrot.slane %v4949, 7
    %v4972 = vrot.slane %v4962, 7
    %v4981 = vadd.f32 %v4553, %v4969
    %v4982 = vadd.f32 %v4567, %v4970
    %v4983 = vadd.f32 %v4581, %v4971
    %v4984 = vadd.f32 %v4595, %v4972
    %v4985 = vadd.f32 %v4555, %v4923
    %v4986 = vadd.f32 %v4569, %v4936
    %v4987 = vadd.f32 %v4583, %v4949
    %v4988 = vadd.f32 %v4597, %v4962
    %v4989 = vxor.u32 %v4981, 2147483648
    %v4990 = vxor.u32 %v4985, 2147483648
    %v4991 = vmul.f32 %v4989, 1.442695
    %v4992 = vpow.pop %v4991
    %v4993 = vmul.f32 %v4990, 1.442695
    %v4994 = vpow.pop %v4993
    %v4995 = vadd.f32 %v4992, 1.0
    %v4996 = vadd.f32 %v4994, 1.0
    %v4997 = vrcp.pop %v4995
    %v4998 = vmul.f32 %v4995, %v4997
    %v4999 = vsub.f32 1.0, %v4998
    %v5000 = vmul.f32 %v4997, %v4999
    %v5001 = vadd.f32 %v4997, %v5000
    %vm5002 = vweird.f32 %v4995
    %vm5003 = vweird.f32 %v4997
    %vm5004 = vmor %vm5002, %vm5003
    %v5005 = vsel %vm5004, %v4997, %v5001
    %v5006 = vand.u32 2147483647, %v4995
    %vm5007 = vcmp.eq.f32.partialorder %v5006, 8.507059e+37
    %v5008 = vand.u32 %v4995, 2147483648
    %v5009 = vor.u32 1.1754944e-38, %v5008
    %v5010 = vsel %vm5007, %v5009, %v5005
    %v5011 = vmul.f32 1.0, %v5010
    %v5012 = vrcp.pop %v4996
    %v5013 = vmul.f32 %v4996, %v5012
    %v5014 = vsub.f32 1.0, %v5013
    %v5015 = vmul.f32 %v5012, %v5014
    %v5016 = vadd.f32 %v5012, %v5015
    %vm5017 = vweird.f32 %v4996
    %vm5018 = vweird.f32 %v5012
    %vm5019 = vmor %vm5017, %vm5018
    %v5020 = vsel %vm5019, %v5012, %v5016
    %v5021 = vand.u32 2147483647, %v4996
    %vm5022 = vcmp.eq.f32.partialorder %v5021, 8.507059e+37
    %v5023 = vand.u32 %v4996, 2147483648
    %v5024 = vor.u32 1.1754944e-38, %v5023
    %v5025 = vsel %vm5022, %v5024, %v5020
    %v5026 = vmul.f32 1.0, %v5025
    %v5027 = vxor.u32 %v4982, 2147483648
    %v5028 = vxor.u32 %v4986, 2147483648
    %v5029 = vmul.f32 %v5027, 1.442695
    %v5030 = vpow.pop %v5029
    %v5031 = vmul.f32 %v5028, 1.442695
    %v5032 = vpow.pop %v5031
    %v5033 = vadd.f32 %v5030, 1.0
    %v5034 = vadd.f32 %v5032, 1.0
    %v5035 = vrcp.pop %v5033
    %v5036 = vmul.f32 %v5033, %v5035
    %v5037 = vsub.f32 1.0, %v5036
    %v5038 = vmul.f32 %v5035, %v5037
    %v5039 = vadd.f32 %v5035, %v5038
    %vm5040 = vweird.f32 %v5033
    %vm5041 = vweird.f32 %v5035
    %vm5042 = vmor %vm5040, %vm5041
    %v5043 = vsel %vm5042, %v5035, %v5039
    %v5044 = vand.u32 2147483647, %v5033
    %vm5045 = vcmp.eq.f32.partialorder %v5044, 8.507059e+37
    %v5046 = vand.u32 %v5033, 2147483648
    %v5047 = vor.u32 1.1754944e-38, %v5046
    %v5048 = vsel %vm5045, %v5047, %v5043
    %v5049 = vmul.f32 1.0, %v5048
    %v5050 = vrcp.pop %v5034
    %v5051 = vmul.f32 %v5034, %v5050
    %v5052 = vsub.f32 1.0, %v5051
    %v5053 = vmul.f32 %v5050, %v5052
    %v5054 = vadd.f32 %v5050, %v5053
    %vm5055 = vweird.f32 %v5034
    %vm5056 = vweird.f32 %v5050
    %vm5057 = vmor %vm5055, %vm5056
    %v5058 = vsel %vm5057, %v5050, %v5054
    %v5059 = vand.u32 2147483647, %v5034
    %vm5060 = vcmp.eq.f32.partialorder %v5059, 8.507059e+37
    %v5061 = vand.u32 %v5034, 2147483648
    %v5062 = vor.u32 1.1754944e-38, %v5061
    %v5063 = vsel %vm5060, %v5062, %v5058
    %v5064 = vmul.f32 1.0, %v5063
    %v5065 = vtanh.pop %v4983
    %v5066 = vtanh.pop %v4987
    %v5067 = vxor.u32 %v4984, 2147483648
    %v5068 = vxor.u32 %v4988, 2147483648
    %v5069 = vmul.f32 %v5067, 1.442695
    %v5070 = vpow.pop %v5069
    %v5071 = vmul.f32 %v5068, 1.442695
    %v5072 = vpow.pop %v5071
    %v5073 = vadd.f32 %v5070, 1.0
    %v5074 = vadd.f32 %v5072, 1.0
    %v5075 = vrcp.pop %v5073
    %v5076 = vmul.f32 %v5073, %v5075
    %v5077 = vsub.f32 1.0, %v5076
    %v5078 = vmul.f32 %v5075, %v5077
    %v5079 = vadd.f32 %v5075, %v5078
    %vm5080 = vweird.f32 %v5073
    %vm5081 = vweird.f32 %v5075
    %vm5082 = vmor %vm5080, %vm5081
    %v5083 = vsel %vm5082, %v5075, %v5079
    %v5084 = vand.u32 2147483647, %v5073
    %vm5085 = vcmp.eq.f32.partialorder %v5084, 8.507059e+37
    %v5086 = vand.u32 %v5073, 2147483648
    %v5087 = vor.u32 1.1754944e-38, %v5086
    %v5088 = vsel %vm5085, %v5087, %v5083
    %v5089 = vmul.f32 1.0, %v5088
    %v5090 = vrcp.pop %v5074
    %v5091 = vmul.f32 %v5074, %v5090
    %v5092 = vsub.f32 1.0, %v5091
    %v5093 = vmul.f32 %v5090, %v5092
    %v5094 = vadd.f32 %v5090, %v5093
    %vm5095 = vweird.f32 %v5074
    %vm5096 = vweird.f32 %v5090
    %vm5097 = vmor %vm5095, %vm5096
    %v5098 = vsel %vm5097, %v5090, %v5094
    %v5099 = vand.u32 2147483647, %v5074
    %vm5100 = vcmp.eq.f32.partialorder %v5099, 8.507059e+37
    %v5101 = vand.u32 %v5074, 2147483648
    %v5102 = vor.u32 1.1754944e-38, %v5101
    %v5103 = vsel %vm5100, %v5102, %v5098
    %v5104 = vmul.f32 1.0, %v5103
    %v5107 = vrot.slane %v4891, 7
    %v5108 = vrot.slane %v4892, 7
    %v5111 = vmul.f32 %v5049, %v5107
    %v5112 = vmul.f32 %v5064, %v5108
    %v5113 = vmul.f32 %v5011, %v5065
    %v5114 = vmul.f32 %v5026, %v5066
    %v5115 = vadd.f32 %v5111, %v5113
    %v5116 = vadd.f32 %v5112, %v5114
    %v5117 = vtanh.pop %v5115
    %v5118 = vtanh.pop %v5116
    %v5119 = vmul.f32 %v5089, %v5117
    %v5120 = vmul.f32 %v5104, %v5118
    %v5121 = vperm.slane %v5119, 1
    %v5122 = vperm.slane %v5120, 1
    %v5123 = vsel %vm984, %v5121, %v4899
    %v5124 = vsel %vm984, %v5122, %v4900
    %v5125 = vpack.c.bf16 %v5119, %v5119
    %v5126 = vpack.c.bf16 %v5120, %v5120
    %v5129 = vunpack.c.l.b16 %v5125
    %v5130 = vunpack.c.l.b16 %v5126
    %v5131 = vrot.slane %v5129, 1
    %v5132 = vsel %vm770, %v5130, %v5131
    %v5133 = vpack.c.b16 %v5132, %v5132
    %v5135 = vsel %vm552, %v5133, 0
    %5137 = vmatpush.bf16.msra.mxu0 0
    %5138 = vmatpush.bf16.msra.mxu0 0
    %5139 = vmatpush.bf16.msra.mxu0 0
    %5140 = vmatpush.bf16.msra.mxu0 0
    %5141 = vmatpush.bf16.msra.mxu0 %v4675
    %5142 = vmatpush.bf16.msra.mxu0 %v4671
    %5143 = vmatpush.bf16.msra.mxu0 %v4667
    %5144 = vmatpush.bf16.msra.mxu0 %v4663
    %5145 = vmatmul.bf16.gmra.mxu0 %v5135
    %v5146 = vpop.f32.mrf.mxu0
    %v5147 = vadd.f32 0.0, %v5146
    %v5148 = vpop.f32.mrf.mxu0
    %5149 = vdwg.mxu0
    %5150 = vmatpush.bf16.msra.mxu0 0
    %5151 = vmatpush.bf16.msra.mxu0 0
    %5152 = vmatpush.bf16.msra.mxu0 0
    %5153 = vmatpush.bf16.msra.mxu0 0
    %5154 = vmatpush.bf16.msra.mxu0 %v4676
    %5155 = vmatpush.bf16.msra.mxu0 %v4672
    %5156 = vmatpush.bf16.msra.mxu0 %v4668
    %5157 = vmatpush.bf16.msra.mxu0 %v4664
    %5158 = vmatmul.bf16.gmra.mxu0 %v5135
    %v5159 = vpop.f32.mrf.mxu0
    %v5160 = vadd.f32 0.0, %v5159
    %v5161 = vpop.f32.mrf.mxu0
    %5162 = vdwg.mxu0
    %5163 = vmatpush.bf16.msra.mxu0 0
    %5164 = vmatpush.bf16.msra.mxu0 0
    %5165 = vmatpush.bf16.msra.mxu0 0
    %5166 = vmatpush.bf16.msra.mxu0 0
    %5167 = vmatpush.bf16.msra.mxu0 %v4677
    %5168 = vmatpush.bf16.msra.mxu0 %v4673
    %5169 = vmatpush.bf16.msra.mxu0 %v4669
    %5170 = vmatpush.bf16.msra.mxu0 %v4665
    %5171 = vmatmul.bf16.gmra.mxu0 %v5135
    %v5172 = vpop.f32.mrf.mxu0
    %v5173 = vadd.f32 0.0, %v5172
    %v5174 = vpop.f32.mrf.mxu0
    %5175 = vdwg.mxu0
    %5176 = vmatpush.bf16.msra.mxu0 0
    %5177 = vmatpush.bf16.msra.mxu0 0
    %5178 = vmatpush.bf16.msra.mxu0 0
    %5179 = vmatpush.bf16.msra.mxu0 0
    %5180 = vmatpush.bf16.msra.mxu0 %v4678
    %5181 = vmatpush.bf16.msra.mxu0 %v4674
    %5182 = vmatpush.bf16.msra.mxu0 %v4670
    %5183 = vmatpush.bf16.msra.mxu0 %v4666
    %5184 = vmatmul.bf16.gmra.mxu0 %v5135
    %v5185 = vpop.f32.mrf.mxu0
    %v5186 = vadd.f32 0.0, %v5185
    %v5187 = vpop.f32.mrf.mxu0
    %5188 = vdwg.mxu0
    %v5193 = vrot.slane %v5147, 6
    %v5194 = vrot.slane %v5160, 6
    %v5195 = vrot.slane %v5173, 6
    %v5196 = vrot.slane %v5186, 6
    %v5197 = vrot.slane %v5147, 7
    %v5198 = vrot.slane %v5160, 7
    %v5199 = vrot.slane %v5173, 7
    %v5200 = vrot.slane %v5186, 7
    %v5209 = vadd.f32 %v4553, %v5193
    %v5210 = vadd.f32 %v4567, %v5194
    %v5211 = vadd.f32 %v4581, %v5195
    %v5212 = vadd.f32 %v4595, %v5196
    %v5213 = vadd.f32 %v4555, %v5197
    %v5214 = vadd.f32 %v4569, %v5198
    %v5215 = vadd.f32 %v4583, %v5199
    %v5216 = vadd.f32 %v4597, %v5200
    %v5217 = vxor.u32 %v5209, 2147483648
    %v5218 = vxor.u32 %v5213, 2147483648
    %v5219 = vmul.f32 %v5217, 1.442695
    %v5220 = vpow.pop %v5219
    %v5221 = vmul.f32 %v5218, 1.442695
    %v5222 = vpow.pop %v5221
    %v5223 = vadd.f32 %v5220, 1.0
    %v5224 = vadd.f32 %v5222, 1.0
    %v5225 = vrcp.pop %v5223
    %v5226 = vmul.f32 %v5223, %v5225
    %v5227 = vsub.f32 1.0, %v5226
    %v5228 = vmul.f32 %v5225, %v5227
    %v5229 = vadd.f32 %v5225, %v5228
    %vm5230 = vweird.f32 %v5223
    %vm5231 = vweird.f32 %v5225
    %vm5232 = vmor %vm5230, %vm5231
    %v5233 = vsel %vm5232, %v5225, %v5229
    %v5234 = vand.u32 2147483647, %v5223
    %vm5235 = vcmp.eq.f32.partialorder %v5234, 8.507059e+37
    %v5236 = vand.u32 %v5223, 2147483648
    %v5237 = vor.u32 1.1754944e-38, %v5236
    %v5238 = vsel %vm5235, %v5237, %v5233
    %v5239 = vmul.f32 1.0, %v5238
    %v5240 = vrcp.pop %v5224
    %v5241 = vmul.f32 %v5224, %v5240
    %v5242 = vsub.f32 1.0, %v5241
    %v5243 = vmul.f32 %v5240, %v5242
    %v5244 = vadd.f32 %v5240, %v5243
    %vm5245 = vweird.f32 %v5224
    %vm5246 = vweird.f32 %v5240
    %vm5247 = vmor %vm5245, %vm5246
    %v5248 = vsel %vm5247, %v5240, %v5244
    %v5249 = vand.u32 2147483647, %v5224
    %vm5250 = vcmp.eq.f32.partialorder %v5249, 8.507059e+37
    %v5251 = vand.u32 %v5224, 2147483648
    %v5252 = vor.u32 1.1754944e-38, %v5251
    %v5253 = vsel %vm5250, %v5252, %v5248
    %v5254 = vmul.f32 1.0, %v5253
    %v5255 = vxor.u32 %v5210, 2147483648
    %v5256 = vxor.u32 %v5214, 2147483648
    %v5257 = vmul.f32 %v5255, 1.442695
    %v5258 = vpow.pop %v5257
    %v5259 = vmul.f32 %v5256, 1.442695
    %v5260 = vpow.pop %v5259
    %v5261 = vadd.f32 %v5258, 1.0
    %v5262 = vadd.f32 %v5260, 1.0
    %v5263 = vrcp.pop %v5261
    %v5264 = vmul.f32 %v5261, %v5263
    %v5265 = vsub.f32 1.0, %v5264
    %v5266 = vmul.f32 %v5263, %v5265
    %v5267 = vadd.f32 %v5263, %v5266
    %vm5268 = vweird.f32 %v5261
    %vm5269 = vweird.f32 %v5263
    %vm5270 = vmor %vm5268, %vm5269
    %v5271 = vsel %vm5270, %v5263, %v5267
    %v5272 = vand.u32 2147483647, %v5261
    %vm5273 = vcmp.eq.f32.partialorder %v5272, 8.507059e+37
    %v5274 = vand.u32 %v5261, 2147483648
    %v5275 = vor.u32 1.1754944e-38, %v5274
    %v5276 = vsel %vm5273, %v5275, %v5271
    %v5277 = vmul.f32 1.0, %v5276
    %v5278 = vrcp.pop %v5262
    %v5279 = vmul.f32 %v5262, %v5278
    %v5280 = vsub.f32 1.0, %v5279
    %v5281 = vmul.f32 %v5278, %v5280
    %v5282 = vadd.f32 %v5278, %v5281
    %vm5283 = vweird.f32 %v5262
    %vm5284 = vweird.f32 %v5278
    %vm5285 = vmor %vm5283, %vm5284
    %v5286 = vsel %vm5285, %v5278, %v5282
    %v5287 = vand.u32 2147483647, %v5262
    %vm5288 = vcmp.eq.f32.partialorder %v5287, 8.507059e+37
    %v5289 = vand.u32 %v5262, 2147483648
    %v5290 = vor.u32 1.1754944e-38, %v5289
    %v5291 = vsel %vm5288, %v5290, %v5286
    %v5292 = vmul.f32 1.0, %v5291
    %v5293 = vtanh.pop %v5211
    %v5294 = vtanh.pop %v5215
    %v5295 = vxor.u32 %v5212, 2147483648
    %v5296 = vxor.u32 %v5216, 2147483648
    %v5297 = vmul.f32 %v5295, 1.442695
    %v5298 = vpow.pop %v5297
    %v5299 = vmul.f32 %v5296, 1.442695
    %v5300 = vpow.pop %v5299
    %v5301 = vadd.f32 %v5298, 1.0
    %v5302 = vadd.f32 %v5300, 1.0
    %v5303 = vrcp.pop %v5301
    %v5304 = vmul.f32 %v5301, %v5303
    %v5305 = vsub.f32 1.0, %v5304
    %v5306 = vmul.f32 %v5303, %v5305
    %v5307 = vadd.f32 %v5303, %v5306
    %vm5308 = vweird.f32 %v5301
    %vm5309 = vweird.f32 %v5303
    %vm5310 = vmor %vm5308, %vm5309
    %v5311 = vsel %vm5310, %v5303, %v5307
    %v5312 = vand.u32 2147483647, %v5301
    %vm5313 = vcmp.eq.f32.partialorder %v5312, 8.507059e+37
    %v5314 = vand.u32 %v5301, 2147483648
    %v5315 = vor.u32 1.1754944e-38, %v5314
    %v5316 = vsel %vm5313, %v5315, %v5311
    %v5317 = vmul.f32 1.0, %v5316
    %v5318 = vrcp.pop %v5302
    %v5319 = vmul.f32 %v5302, %v5318
    %v5320 = vsub.f32 1.0, %v5319
    %v5321 = vmul.f32 %v5318, %v5320
    %v5322 = vadd.f32 %v5318, %v5321
    %vm5323 = vweird.f32 %v5302
    %vm5324 = vweird.f32 %v5318
    %vm5325 = vmor %vm5323, %vm5324
    %v5326 = vsel %vm5325, %v5318, %v5322
    %v5327 = vand.u32 2147483647, %v5302
    %vm5328 = vcmp.eq.f32.partialorder %v5327, 8.507059e+37
    %v5329 = vand.u32 %v5302, 2147483648
    %v5330 = vor.u32 1.1754944e-38, %v5329
    %v5331 = vsel %vm5328, %v5330, %v5326
    %v5332 = vmul.f32 1.0, %v5331
    %v5335 = vrot.slane %v5115, 7
    %v5336 = vrot.slane %v5116, 7
    %v5339 = vmul.f32 %v5277, %v5335
    %v5340 = vmul.f32 %v5292, %v5336
    %v5341 = vmul.f32 %v5239, %v5293
    %v5342 = vmul.f32 %v5254, %v5294
    %v5343 = vadd.f32 %v5339, %v5341
    %v5344 = vadd.f32 %v5340, %v5342
    %v5345 = vtanh.pop %v5343
    %v5346 = vtanh.pop %v5344
    %v5347 = vmul.f32 %v5317, %v5345
    %v5348 = vmul.f32 %v5332, %v5346
    %v5349 = vperm.slane %v5347, 2
    %v5350 = vperm.slane %v5348, 2
    %v5351 = vsel %vm1213, %v5349, %v5123
    %v5352 = vsel %vm1213, %v5350, %v5124
    %v5353 = vpack.c.bf16 %v5347, %v5347
    %v5354 = vpack.c.bf16 %v5348, %v5348
    %v5357 = vunpack.c.l.b16 %v5353
    %v5358 = vunpack.c.l.b16 %v5354
    %v5359 = vrot.slane %v5357, 2
    %v5360 = vrot.slane %v5358, 1
    %v5361 = vsel %vm770, %v5360, %v5359
    %v5362 = vpack.c.b16 %v5361, %v5361
    %v5364 = vsel %vm552, %v5362, 0
    %5366 = vmatpush.bf16.msra.mxu0 0
    %5367 = vmatpush.bf16.msra.mxu0 0
    %5368 = vmatpush.bf16.msra.mxu0 0
    %5369 = vmatpush.bf16.msra.mxu0 0
    %5370 = vmatpush.bf16.msra.mxu0 %v4675
    %5371 = vmatpush.bf16.msra.mxu0 %v4671
    %5372 = vmatpush.bf16.msra.mxu0 %v4667
    %5373 = vmatpush.bf16.msra.mxu0 %v4663
    %5374 = vmatmul.bf16.gmra.mxu0 %v5364
    %v5375 = vpop.f32.mrf.mxu0
    %v5376 = vadd.f32 0.0, %v5375
    %v5377 = vpop.f32.mrf.mxu0
    %5378 = vdwg.mxu0
    %5379 = vmatpush.bf16.msra.mxu0 0
    %5380 = vmatpush.bf16.msra.mxu0 0
    %5381 = vmatpush.bf16.msra.mxu0 0
    %5382 = vmatpush.bf16.msra.mxu0 0
    %5383 = vmatpush.bf16.msra.mxu0 %v4676
    %5384 = vmatpush.bf16.msra.mxu0 %v4672
    %5385 = vmatpush.bf16.msra.mxu0 %v4668
    %5386 = vmatpush.bf16.msra.mxu0 %v4664
    %5387 = vmatmul.bf16.gmra.mxu0 %v5364
    %v5388 = vpop.f32.mrf.mxu0
    %v5389 = vadd.f32 0.0, %v5388
    %v5390 = vpop.f32.mrf.mxu0
    %5391 = vdwg.mxu0
    %5392 = vmatpush.bf16.msra.mxu0 0
    %5393 = vmatpush.bf16.msra.mxu0 0
    %5394 = vmatpush.bf16.msra.mxu0 0
    %5395 = vmatpush.bf16.msra.mxu0 0
    %5396 = vmatpush.bf16.msra.mxu0 %v4677
    %5397 = vmatpush.bf16.msra.mxu0 %v4673
    %5398 = vmatpush.bf16.msra.mxu0 %v4669
    %5399 = vmatpush.bf16.msra.mxu0 %v4665
    %5400 = vmatmul.bf16.gmra.mxu0 %v5364
    %v5401 = vpop.f32.mrf.mxu0
    %v5402 = vadd.f32 0.0, %v5401
    %v5403 = vpop.f32.mrf.mxu0
    %5404 = vdwg.mxu0
    %5405 = vmatpush.bf16.msra.mxu0 0
    %5406 = vmatpush.bf16.msra.mxu0 0
    %5407 = vmatpush.bf16.msra.mxu0 0
    %5408 = vmatpush.bf16.msra.mxu0 0
    %5409 = vmatpush.bf16.msra.mxu0 %v4678
    %5410 = vmatpush.bf16.msra.mxu0 %v4674
    %5411 = vmatpush.bf16.msra.mxu0 %v4670
    %5412 = vmatpush.bf16.msra.mxu0 %v4666
    %5413 = vmatmul.bf16.gmra.mxu0 %v5364
    %v5414 = vpop.f32.mrf.mxu0
    %v5415 = vadd.f32 0.0, %v5414
    %v5416 = vpop.f32.mrf.mxu0
    %5417 = vdwg.mxu0
    %v5422 = vrot.slane %v5376, 5
    %v5423 = vrot.slane %v5389, 5
    %v5424 = vrot.slane %v5402, 5
    %v5425 = vrot.slane %v5415, 5
    %v5426 = vrot.slane %v5376, 6
    %v5427 = vrot.slane %v5389, 6
    %v5428 = vrot.slane %v5402, 6
    %v5429 = vrot.slane %v5415, 6
    %v5438 = vadd.f32 %v4553, %v5422
    %v5439 = vadd.f32 %v4567, %v5423
    %v5440 = vadd.f32 %v4581, %v5424
    %v5441 = vadd.f32 %v4595, %v5425
    %v5442 = vadd.f32 %v4555, %v5426
    %v5443 = vadd.f32 %v4569, %v5427
    %v5444 = vadd.f32 %v4583, %v5428
    %v5445 = vadd.f32 %v4597, %v5429
    %v5446 = vxor.u32 %v5438, 2147483648
    %v5447 = vxor.u32 %v5442, 2147483648
    %v5448 = vmul.f32 %v5446, 1.442695
    %v5449 = vpow.pop %v5448
    %v5450 = vmul.f32 %v5447, 1.442695
    %v5451 = vpow.pop %v5450
    %v5452 = vadd.f32 %v5449, 1.0
    %v5453 = vadd.f32 %v5451, 1.0
    %v5454 = vrcp.pop %v5452
    %v5455 = vmul.f32 %v5452, %v5454
    %v5456 = vsub.f32 1.0, %v5455
    %v5457 = vmul.f32 %v5454, %v5456
    %v5458 = vadd.f32 %v5454, %v5457
    %vm5459 = vweird.f32 %v5452
    %vm5460 = vweird.f32 %v5454
    %vm5461 = vmor %vm5459, %vm5460
    %v5462 = vsel %vm5461, %v5454, %v5458
    %v5463 = vand.u32 2147483647, %v5452
    %vm5464 = vcmp.eq.f32.partialorder %v5463, 8.507059e+37
    %v5465 = vand.u32 %v5452, 2147483648
    %v5466 = vor.u32 1.1754944e-38, %v5465
    %v5467 = vsel %vm5464, %v5466, %v5462
    %v5468 = vmul.f32 1.0, %v5467
    %v5469 = vrcp.pop %v5453
    %v5470 = vmul.f32 %v5453, %v5469
    %v5471 = vsub.f32 1.0, %v5470
    %v5472 = vmul.f32 %v5469, %v5471
    %v5473 = vadd.f32 %v5469, %v5472
    %vm5474 = vweird.f32 %v5453
    %vm5475 = vweird.f32 %v5469
    %vm5476 = vmor %vm5474, %vm5475
    %v5477 = vsel %vm5476, %v5469, %v5473
    %v5478 = vand.u32 2147483647, %v5453
    %vm5479 = vcmp.eq.f32.partialorder %v5478, 8.507059e+37
    %v5480 = vand.u32 %v5453, 2147483648
    %v5481 = vor.u32 1.1754944e-38, %v5480
    %v5482 = vsel %vm5479, %v5481, %v5477
    %v5483 = vmul.f32 1.0, %v5482
    %v5484 = vxor.u32 %v5439, 2147483648
    %v5485 = vxor.u32 %v5443, 2147483648
    %v5486 = vmul.f32 %v5484, 1.442695
    %v5487 = vpow.pop %v5486
    %v5488 = vmul.f32 %v5485, 1.442695
    %v5489 = vpow.pop %v5488
    %v5490 = vadd.f32 %v5487, 1.0
    %v5491 = vadd.f32 %v5489, 1.0
    %v5492 = vrcp.pop %v5490
    %v5493 = vmul.f32 %v5490, %v5492
    %v5494 = vsub.f32 1.0, %v5493
    %v5495 = vmul.f32 %v5492, %v5494
    %v5496 = vadd.f32 %v5492, %v5495
    %vm5497 = vweird.f32 %v5490
    %vm5498 = vweird.f32 %v5492
    %vm5499 = vmor %vm5497, %vm5498
    %v5500 = vsel %vm5499, %v5492, %v5496
    %v5501 = vand.u32 2147483647, %v5490
    %vm5502 = vcmp.eq.f32.partialorder %v5501, 8.507059e+37
    %v5503 = vand.u32 %v5490, 2147483648
    %v5504 = vor.u32 1.1754944e-38, %v5503
    %v5505 = vsel %vm5502, %v5504, %v5500
    %v5506 = vmul.f32 1.0, %v5505
    %v5507 = vrcp.pop %v5491
    %v5508 = vmul.f32 %v5491, %v5507
    %v5509 = vsub.f32 1.0, %v5508
    %v5510 = vmul.f32 %v5507, %v5509
    %v5511 = vadd.f32 %v5507, %v5510
    %vm5512 = vweird.f32 %v5491
    %vm5513 = vweird.f32 %v5507
    %vm5514 = vmor %vm5512, %vm5513
    %v5515 = vsel %vm5514, %v5507, %v5511
    %v5516 = vand.u32 2147483647, %v5491
    %vm5517 = vcmp.eq.f32.partialorder %v5516, 8.507059e+37
    %v5518 = vand.u32 %v5491, 2147483648
    %v5519 = vor.u32 1.1754944e-38, %v5518
    %v5520 = vsel %vm5517, %v5519, %v5515
    %v5521 = vmul.f32 1.0, %v5520
    %v5522 = vtanh.pop %v5440
    %v5523 = vtanh.pop %v5444
    %v5524 = vxor.u32 %v5441, 2147483648
    %v5525 = vxor.u32 %v5445, 2147483648
    %v5526 = vmul.f32 %v5524, 1.442695
    %v5527 = vpow.pop %v5526
    %v5528 = vmul.f32 %v5525, 1.442695
    %v5529 = vpow.pop %v5528
    %v5530 = vadd.f32 %v5527, 1.0
    %v5531 = vadd.f32 %v5529, 1.0
    %v5532 = vrcp.pop %v5530
    %v5533 = vmul.f32 %v5530, %v5532
    %v5534 = vsub.f32 1.0, %v5533
    %v5535 = vmul.f32 %v5532, %v5534
    %v5536 = vadd.f32 %v5532, %v5535
    %vm5537 = vweird.f32 %v5530
    %vm5538 = vweird.f32 %v5532
    %vm5539 = vmor %vm5537, %vm5538
    %v5540 = vsel %vm5539, %v5532, %v5536
    %v5541 = vand.u32 2147483647, %v5530
    %vm5542 = vcmp.eq.f32.partialorder %v5541, 8.507059e+37
    %v5543 = vand.u32 %v5530, 2147483648
    %v5544 = vor.u32 1.1754944e-38, %v5543
    %v5545 = vsel %vm5542, %v5544, %v5540
    %v5546 = vmul.f32 1.0, %v5545
    %v5547 = vrcp.pop %v5531
    %v5548 = vmul.f32 %v5531, %v5547
    %v5549 = vsub.f32 1.0, %v5548
    %v5550 = vmul.f32 %v5547, %v5549
    %v5551 = vadd.f32 %v5547, %v5550
    %vm5552 = vweird.f32 %v5531
    %vm5553 = vweird.f32 %v5547
    %vm5554 = vmor %vm5552, %vm5553
    %v5555 = vsel %vm5554, %v5547, %v5551
    %v5556 = vand.u32 2147483647, %v5531
    %vm5557 = vcmp.eq.f32.partialorder %v5556, 8.507059e+37
    %v5558 = vand.u32 %v5531, 2147483648
    %v5559 = vor.u32 1.1754944e-38, %v5558
    %v5560 = vsel %vm5557, %v5559, %v5555
    %v5561 = vmul.f32 1.0, %v5560
    %v5564 = vrot.slane %v5343, 7
    %v5565 = vrot.slane %v5344, 7
    %v5568 = vmul.f32 %v5506, %v5564
    %v5569 = vmul.f32 %v5521, %v5565
    %v5570 = vmul.f32 %v5468, %v5522
    %v5571 = vmul.f32 %v5483, %v5523
    %v5572 = vadd.f32 %v5568, %v5570
    %v5573 = vadd.f32 %v5569, %v5571
    %v5574 = vtanh.pop %v5572
    %v5575 = vtanh.pop %v5573
    %v5576 = vmul.f32 %v5546, %v5574
    %v5577 = vmul.f32 %v5561, %v5575
    %v5578 = vperm.slane %v5576, 3
    %v5579 = vperm.slane %v5577, 3
    %v5580 = vsel %vm1443, %v5578, %v5351
    %v5581 = vsel %vm1443, %v5579, %v5352
    %v5582 = vpack.c.bf16 %v5576, %v5576
    %v5583 = vpack.c.bf16 %v5577, %v5577
    %v5586 = vunpack.c.l.b16 %v5582
    %v5587 = vunpack.c.l.b16 %v5583
    %v5588 = vrot.slane %v5586, 3
    %v5589 = vrot.slane %v5587, 2
    %v5590 = vsel %vm770, %v5589, %v5588
    %v5591 = vpack.c.b16 %v5590, %v5590
    %v5593 = vsel %vm552, %v5591, 0
    %5595 = vmatpush.bf16.msra.mxu0 0
    %5596 = vmatpush.bf16.msra.mxu0 0
    %5597 = vmatpush.bf16.msra.mxu0 0
    %5598 = vmatpush.bf16.msra.mxu0 0
    %5599 = vmatpush.bf16.msra.mxu0 %v4675
    %5600 = vmatpush.bf16.msra.mxu0 %v4671
    %5601 = vmatpush.bf16.msra.mxu0 %v4667
    %5602 = vmatpush.bf16.msra.mxu0 %v4663
    %5603 = vmatmul.bf16.gmra.mxu0 %v5593
    %v5604 = vpop.f32.mrf.mxu0
    %v5605 = vadd.f32 0.0, %v5604
    %v5606 = vpop.f32.mrf.mxu0
    %5607 = vdwg.mxu0
    %5608 = vmatpush.bf16.msra.mxu0 0
    %5609 = vmatpush.bf16.msra.mxu0 0
    %5610 = vmatpush.bf16.msra.mxu0 0
    %5611 = vmatpush.bf16.msra.mxu0 0
    %5612 = vmatpush.bf16.msra.mxu0 %v4676
    %5613 = vmatpush.bf16.msra.mxu0 %v4672
    %5614 = vmatpush.bf16.msra.mxu0 %v4668
    %5615 = vmatpush.bf16.msra.mxu0 %v4664
    %5616 = vmatmul.bf16.gmra.mxu0 %v5593
    %v5617 = vpop.f32.mrf.mxu0
    %v5618 = vadd.f32 0.0, %v5617
    %v5619 = vpop.f32.mrf.mxu0
    %5620 = vdwg.mxu0
    %5621 = vmatpush.bf16.msra.mxu0 0
    %5622 = vmatpush.bf16.msra.mxu0 0
    %5623 = vmatpush.bf16.msra.mxu0 0
    %5624 = vmatpush.bf16.msra.mxu0 0
    %5625 = vmatpush.bf16.msra.mxu0 %v4677
    %5626 = vmatpush.bf16.msra.mxu0 %v4673
    %5627 = vmatpush.bf16.msra.mxu0 %v4669
    %5628 = vmatpush.bf16.msra.mxu0 %v4665
    %5629 = vmatmul.bf16.gmra.mxu0 %v5593
    %v5630 = vpop.f32.mrf.mxu0
    %v5631 = vadd.f32 0.0, %v5630
    %v5632 = vpop.f32.mrf.mxu0
    %5633 = vdwg.mxu0
    %5634 = vmatpush.bf16.msra.mxu0 0
    %5635 = vmatpush.bf16.msra.mxu0 0
    %5636 = vmatpush.bf16.msra.mxu0 0
    %5637 = vmatpush.bf16.msra.mxu0 0
    %5638 = vmatpush.bf16.msra.mxu0 %v4678
    %5639 = vmatpush.bf16.msra.mxu0 %v4674
    %5640 = vmatpush.bf16.msra.mxu0 %v4670
    %5641 = vmatpush.bf16.msra.mxu0 %v4666
    %5642 = vmatmul.bf16.gmra.mxu0 %v5593
    %v5643 = vpop.f32.mrf.mxu0
    %v5644 = vadd.f32 0.0, %v5643
    %v5645 = vpop.f32.mrf.mxu0
    %5646 = vdwg.mxu0
    %v5651 = vrot.slane %v5605, 4
    %v5652 = vrot.slane %v5618, 4
    %v5653 = vrot.slane %v5631, 4
    %v5654 = vrot.slane %v5644, 4
    %v5655 = vrot.slane %v5605, 5
    %v5656 = vrot.slane %v5618, 5
    %v5657 = vrot.slane %v5631, 5
    %v5658 = vrot.slane %v5644, 5
    %v5667 = vadd.f32 %v4553, %v5651
    %v5668 = vadd.f32 %v4567, %v5652
    %v5669 = vadd.f32 %v4581, %v5653
    %v5670 = vadd.f32 %v4595, %v5654
    %v5671 = vadd.f32 %v4555, %v5655
    %v5672 = vadd.f32 %v4569, %v5656
    %v5673 = vadd.f32 %v4583, %v5657
    %v5674 = vadd.f32 %v4597, %v5658
    %v5675 = vxor.u32 %v5667, 2147483648
    %v5676 = vxor.u32 %v5671, 2147483648
    %v5677 = vmul.f32 %v5675, 1.442695
    %v5678 = vpow.pop %v5677
    %v5679 = vmul.f32 %v5676, 1.442695
    %v5680 = vpow.pop %v5679
    %v5681 = vadd.f32 %v5678, 1.0
    %v5682 = vadd.f32 %v5680, 1.0
    %v5683 = vrcp.pop %v5681
    %v5684 = vmul.f32 %v5681, %v5683
    %v5685 = vsub.f32 1.0, %v5684
    %v5686 = vmul.f32 %v5683, %v5685
    %v5687 = vadd.f32 %v5683, %v5686
    %vm5688 = vweird.f32 %v5681
    %vm5689 = vweird.f32 %v5683
    %vm5690 = vmor %vm5688, %vm5689
    %v5691 = vsel %vm5690, %v5683, %v5687
    %v5692 = vand.u32 2147483647, %v5681
    %vm5693 = vcmp.eq.f32.partialorder %v5692, 8.507059e+37
    %v5694 = vand.u32 %v5681, 2147483648
    %v5695 = vor.u32 1.1754944e-38, %v5694
    %v5696 = vsel %vm5693, %v5695, %v5691
    %v5697 = vmul.f32 1.0, %v5696
    %v5698 = vrcp.pop %v5682
    %v5699 = vmul.f32 %v5682, %v5698
    %v5700 = vsub.f32 1.0, %v5699
    %v5701 = vmul.f32 %v5698, %v5700
    %v5702 = vadd.f32 %v5698, %v5701
    %vm5703 = vweird.f32 %v5682
    %vm5704 = vweird.f32 %v5698
    %vm5705 = vmor %vm5703, %vm5704
    %v5706 = vsel %vm5705, %v5698, %v5702
    %v5707 = vand.u32 2147483647, %v5682
    %vm5708 = vcmp.eq.f32.partialorder %v5707, 8.507059e+37
    %v5709 = vand.u32 %v5682, 2147483648
    %v5710 = vor.u32 1.1754944e-38, %v5709
    %v5711 = vsel %vm5708, %v5710, %v5706
    %v5712 = vmul.f32 1.0, %v5711
    %v5713 = vxor.u32 %v5668, 2147483648
    %v5714 = vxor.u32 %v5672, 2147483648
    %v5715 = vmul.f32 %v5713, 1.442695
    %v5716 = vpow.pop %v5715
    %v5717 = vmul.f32 %v5714, 1.442695
    %v5718 = vpow.pop %v5717
    %v5719 = vadd.f32 %v5716, 1.0
    %v5720 = vadd.f32 %v5718, 1.0
    %v5721 = vrcp.pop %v5719
    %v5722 = vmul.f32 %v5719, %v5721
    %v5723 = vsub.f32 1.0, %v5722
    %v5724 = vmul.f32 %v5721, %v5723
    %v5725 = vadd.f32 %v5721, %v5724
    %vm5726 = vweird.f32 %v5719
    %vm5727 = vweird.f32 %v5721
    %vm5728 = vmor %vm5726, %vm5727
    %v5729 = vsel %vm5728, %v5721, %v5725
    %v5730 = vand.u32 2147483647, %v5719
    %vm5731 = vcmp.eq.f32.partialorder %v5730, 8.507059e+37
    %v5732 = vand.u32 %v5719, 2147483648
    %v5733 = vor.u32 1.1754944e-38, %v5732
    %v5734 = vsel %vm5731, %v5733, %v5729
    %v5735 = vmul.f32 1.0, %v5734
    %v5736 = vrcp.pop %v5720
    %v5737 = vmul.f32 %v5720, %v5736
    %v5738 = vsub.f32 1.0, %v5737
    %v5739 = vmul.f32 %v5736, %v5738
    %v5740 = vadd.f32 %v5736, %v5739
    %vm5741 = vweird.f32 %v5720
    %vm5742 = vweird.f32 %v5736
    %vm5743 = vmor %vm5741, %vm5742
    %v5744 = vsel %vm5743, %v5736, %v5740
    %v5745 = vand.u32 2147483647, %v5720
    %vm5746 = vcmp.eq.f32.partialorder %v5745, 8.507059e+37
    %v5747 = vand.u32 %v5720, 2147483648
    %v5748 = vor.u32 1.1754944e-38, %v5747
    %v5749 = vsel %vm5746, %v5748, %v5744
    %v5750 = vmul.f32 1.0, %v5749
    %v5751 = vtanh.pop %v5669
    %v5752 = vtanh.pop %v5673
    %v5753 = vxor.u32 %v5670, 2147483648
    %v5754 = vxor.u32 %v5674, 2147483648
    %v5755 = vmul.f32 %v5753, 1.442695
    %v5756 = vpow.pop %v5755
    %v5757 = vmul.f32 %v5754, 1.442695
    %v5758 = vpow.pop %v5757
    %v5759 = vadd.f32 %v5756, 1.0
    %v5760 = vadd.f32 %v5758, 1.0
    %v5761 = vrcp.pop %v5759
    %v5762 = vmul.f32 %v5759, %v5761
    %v5763 = vsub.f32 1.0, %v5762
    %v5764 = vmul.f32 %v5761, %v5763
    %v5765 = vadd.f32 %v5761, %v5764
    %vm5766 = vweird.f32 %v5759
    %vm5767 = vweird.f32 %v5761
    %vm5768 = vmor %vm5766, %vm5767
    %v5769 = vsel %vm5768, %v5761, %v5765
    %v5770 = vand.u32 2147483647, %v5759
    %vm5771 = vcmp.eq.f32.partialorder %v5770, 8.507059e+37
    %v5772 = vand.u32 %v5759, 2147483648
    %v5773 = vor.u32 1.1754944e-38, %v5772
    %v5774 = vsel %vm5771, %v5773, %v5769
    %v5775 = vmul.f32 1.0, %v5774
    %v5776 = vrcp.pop %v5760
    %v5777 = vmul.f32 %v5760, %v5776
    %v5778 = vsub.f32 1.0, %v5777
    %v5779 = vmul.f32 %v5776, %v5778
    %v5780 = vadd.f32 %v5776, %v5779
    %vm5781 = vweird.f32 %v5760
    %vm5782 = vweird.f32 %v5776
    %vm5783 = vmor %vm5781, %vm5782
    %v5784 = vsel %vm5783, %v5776, %v5780
    %v5785 = vand.u32 2147483647, %v5760
    %vm5786 = vcmp.eq.f32.partialorder %v5785, 8.507059e+37
    %v5787 = vand.u32 %v5760, 2147483648
    %v5788 = vor.u32 1.1754944e-38, %v5787
    %v5789 = vsel %vm5786, %v5788, %v5784
    %v5790 = vmul.f32 1.0, %v5789
    %v5793 = vrot.slane %v5572, 7
    %v5794 = vrot.slane %v5573, 7
    %v5797 = vmul.f32 %v5735, %v5793
    %v5798 = vmul.f32 %v5750, %v5794
    %v5799 = vmul.f32 %v5697, %v5751
    %v5800 = vmul.f32 %v5712, %v5752
    %v5801 = vadd.f32 %v5797, %v5799
    %v5802 = vadd.f32 %v5798, %v5800
    %v5803 = vtanh.pop %v5801
    %v5804 = vtanh.pop %v5802
    %v5805 = vmul.f32 %v5775, %v5803
    %v5806 = vmul.f32 %v5790, %v5804
    %v5807 = vperm.slane %v5805, 4
    %v5808 = vperm.slane %v5806, 4
    %v5809 = vsel %vm1673, %v5807, %v5580
    %v5810 = vsel %vm1673, %v5808, %v5581
    %v5811 = vpack.c.bf16 %v5805, %v5805
    %v5812 = vpack.c.bf16 %v5806, %v5806
    %v5815 = vunpack.c.l.b16 %v5811
    %v5816 = vunpack.c.l.b16 %v5812
    %v5817 = vrot.slane %v5815, 4
    %v5818 = vrot.slane %v5816, 3
    %v5819 = vsel %vm770, %v5818, %v5817
    %v5820 = vpack.c.b16 %v5819, %v5819
    %v5822 = vsel %vm552, %v5820, 0
    %5824 = vmatpush.bf16.msra.mxu0 0
    %5825 = vmatpush.bf16.msra.mxu0 0
    %5826 = vmatpush.bf16.msra.mxu0 0
    %5827 = vmatpush.bf16.msra.mxu0 0
    %5828 = vmatpush.bf16.msra.mxu0 %v4675
    %5829 = vmatpush.bf16.msra.mxu0 %v4671
    %5830 = vmatpush.bf16.msra.mxu0 %v4667
    %5831 = vmatpush.bf16.msra.mxu0 %v4663
    %5832 = vmatmul.bf16.gmra.mxu0 %v5822
    %v5833 = vpop.f32.mrf.mxu0
    %v5834 = vadd.f32 0.0, %v5833
    %v5835 = vpop.f32.mrf.mxu0
    %5836 = vdwg.mxu0
    %5837 = vmatpush.bf16.msra.mxu0 0
    %5838 = vmatpush.bf16.msra.mxu0 0
    %5839 = vmatpush.bf16.msra.mxu0 0
    %5840 = vmatpush.bf16.msra.mxu0 0
    %5841 = vmatpush.bf16.msra.mxu0 %v4676
    %5842 = vmatpush.bf16.msra.mxu0 %v4672
    %5843 = vmatpush.bf16.msra.mxu0 %v4668
    %5844 = vmatpush.bf16.msra.mxu0 %v4664
    %5845 = vmatmul.bf16.gmra.mxu0 %v5822
    %v5846 = vpop.f32.mrf.mxu0
    %v5847 = vadd.f32 0.0, %v5846
    %v5848 = vpop.f32.mrf.mxu0
    %5849 = vdwg.mxu0
    %5850 = vmatpush.bf16.msra.mxu0 0
    %5851 = vmatpush.bf16.msra.mxu0 0
    %5852 = vmatpush.bf16.msra.mxu0 0
    %5853 = vmatpush.bf16.msra.mxu0 0
    %5854 = vmatpush.bf16.msra.mxu0 %v4677
    %5855 = vmatpush.bf16.msra.mxu0 %v4673
    %5856 = vmatpush.bf16.msra.mxu0 %v4669
    %5857 = vmatpush.bf16.msra.mxu0 %v4665
    %5858 = vmatmul.bf16.gmra.mxu0 %v5822
    %v5859 = vpop.f32.mrf.mxu0
    %v5860 = vadd.f32 0.0, %v5859
    %v5861 = vpop.f32.mrf.mxu0
    %5862 = vdwg.mxu0
    %5863 = vmatpush.bf16.msra.mxu0 0
    %5864 = vmatpush.bf16.msra.mxu0 0
    %5865 = vmatpush.bf16.msra.mxu0 0
    %5866 = vmatpush.bf16.msra.mxu0 0
    %5867 = vmatpush.bf16.msra.mxu0 %v4678
    %5868 = vmatpush.bf16.msra.mxu0 %v4674
    %5869 = vmatpush.bf16.msra.mxu0 %v4670
    %5870 = vmatpush.bf16.msra.mxu0 %v4666
    %5871 = vmatmul.bf16.gmra.mxu0 %v5822
    %v5872 = vpop.f32.mrf.mxu0
    %v5873 = vadd.f32 0.0, %v5872
    %v5874 = vpop.f32.mrf.mxu0
    %5875 = vdwg.mxu0
    %v5880 = vrot.slane %v5834, 3
    %v5881 = vrot.slane %v5847, 3
    %v5882 = vrot.slane %v5860, 3
    %v5883 = vrot.slane %v5873, 3
    %v5884 = vrot.slane %v5834, 4
    %v5885 = vrot.slane %v5847, 4
    %v5886 = vrot.slane %v5860, 4
    %v5887 = vrot.slane %v5873, 4
    %v5896 = vadd.f32 %v4553, %v5880
    %v5897 = vadd.f32 %v4567, %v5881
    %v5898 = vadd.f32 %v4581, %v5882
    %v5899 = vadd.f32 %v4595, %v5883
    %v5900 = vadd.f32 %v4555, %v5884
    %v5901 = vadd.f32 %v4569, %v5885
    %v5902 = vadd.f32 %v4583, %v5886
    %v5903 = vadd.f32 %v4597, %v5887
    %v5904 = vxor.u32 %v5896, 2147483648
    %v5905 = vxor.u32 %v5900, 2147483648
    %v5906 = vmul.f32 %v5904, 1.442695
    %v5907 = vpow.pop %v5906
    %v5908 = vmul.f32 %v5905, 1.442695
    %v5909 = vpow.pop %v5908
    %v5910 = vadd.f32 %v5907, 1.0
    %v5911 = vadd.f32 %v5909, 1.0
    %v5912 = vrcp.pop %v5910
    %v5913 = vmul.f32 %v5910, %v5912
    %v5914 = vsub.f32 1.0, %v5913
    %v5915 = vmul.f32 %v5912, %v5914
    %v5916 = vadd.f32 %v5912, %v5915
    %vm5917 = vweird.f32 %v5910
    %vm5918 = vweird.f32 %v5912
    %vm5919 = vmor %vm5917, %vm5918
    %v5920 = vsel %vm5919, %v5912, %v5916
    %v5921 = vand.u32 2147483647, %v5910
    %vm5922 = vcmp.eq.f32.partialorder %v5921, 8.507059e+37
    %v5923 = vand.u32 %v5910, 2147483648
    %v5924 = vor.u32 1.1754944e-38, %v5923
    %v5925 = vsel %vm5922, %v5924, %v5920
    %v5926 = vmul.f32 1.0, %v5925
    %v5927 = vrcp.pop %v5911
    %v5928 = vmul.f32 %v5911, %v5927
    %v5929 = vsub.f32 1.0, %v5928
    %v5930 = vmul.f32 %v5927, %v5929
    %v5931 = vadd.f32 %v5927, %v5930
    %vm5932 = vweird.f32 %v5911
    %vm5933 = vweird.f32 %v5927
    %vm5934 = vmor %vm5932, %vm5933
    %v5935 = vsel %vm5934, %v5927, %v5931
    %v5936 = vand.u32 2147483647, %v5911
    %vm5937 = vcmp.eq.f32.partialorder %v5936, 8.507059e+37
    %v5938 = vand.u32 %v5911, 2147483648
    %v5939 = vor.u32 1.1754944e-38, %v5938
    %v5940 = vsel %vm5937, %v5939, %v5935
    %v5941 = vmul.f32 1.0, %v5940
    %v5942 = vxor.u32 %v5897, 2147483648
    %v5943 = vxor.u32 %v5901, 2147483648
    %v5944 = vmul.f32 %v5942, 1.442695
    %v5945 = vpow.pop %v5944
    %v5946 = vmul.f32 %v5943, 1.442695
    %v5947 = vpow.pop %v5946
    %v5948 = vadd.f32 %v5945, 1.0
    %v5949 = vadd.f32 %v5947, 1.0
    %v5950 = vrcp.pop %v5948
    %v5951 = vmul.f32 %v5948, %v5950
    %v5952 = vsub.f32 1.0, %v5951
    %v5953 = vmul.f32 %v5950, %v5952
    %v5954 = vadd.f32 %v5950, %v5953
    %vm5955 = vweird.f32 %v5948
    %vm5956 = vweird.f32 %v5950
    %vm5957 = vmor %vm5955, %vm5956
    %v5958 = vsel %vm5957, %v5950, %v5954
    %v5959 = vand.u32 2147483647, %v5948
    %vm5960 = vcmp.eq.f32.partialorder %v5959, 8.507059e+37
    %v5961 = vand.u32 %v5948, 2147483648
    %v5962 = vor.u32 1.1754944e-38, %v5961
    %v5963 = vsel %vm5960, %v5962, %v5958
    %v5964 = vmul.f32 1.0, %v5963
    %v5965 = vrcp.pop %v5949
    %v5966 = vmul.f32 %v5949, %v5965
    %v5967 = vsub.f32 1.0, %v5966
    %v5968 = vmul.f32 %v5965, %v5967
    %v5969 = vadd.f32 %v5965, %v5968
    %vm5970 = vweird.f32 %v5949
    %vm5971 = vweird.f32 %v5965
    %vm5972 = vmor %vm5970, %vm5971
    %v5973 = vsel %vm5972, %v5965, %v5969
    %v5974 = vand.u32 2147483647, %v5949
    %vm5975 = vcmp.eq.f32.partialorder %v5974, 8.507059e+37
    %v5976 = vand.u32 %v5949, 2147483648
    %v5977 = vor.u32 1.1754944e-38, %v5976
    %v5978 = vsel %vm5975, %v5977, %v5973
    %v5979 = vmul.f32 1.0, %v5978
    %v5980 = vtanh.pop %v5898
    %v5981 = vtanh.pop %v5902
    %v5982 = vxor.u32 %v5899, 2147483648
    %v5983 = vxor.u32 %v5903, 2147483648
    %v5984 = vmul.f32 %v5982, 1.442695
    %v5985 = vpow.pop %v5984
    %v5986 = vmul.f32 %v5983, 1.442695
    %v5987 = vpow.pop %v5986
    %v5988 = vadd.f32 %v5985, 1.0
    %v5989 = vadd.f32 %v5987, 1.0
    %v5990 = vrcp.pop %v5988
    %v5991 = vmul.f32 %v5988, %v5990
    %v5992 = vsub.f32 1.0, %v5991
    %v5993 = vmul.f32 %v5990, %v5992
    %v5994 = vadd.f32 %v5990, %v5993
    %vm5995 = vweird.f32 %v5988
    %vm5996 = vweird.f32 %v5990
    %vm5997 = vmor %vm5995, %vm5996
    %v5998 = vsel %vm5997, %v5990, %v5994
    %v5999 = vand.u32 2147483647, %v5988
    %vm6000 = vcmp.eq.f32.partialorder %v5999, 8.507059e+37
    %v6001 = vand.u32 %v5988, 2147483648
    %v6002 = vor.u32 1.1754944e-38, %v6001
    %v6003 = vsel %vm6000, %v6002, %v5998
    %v6004 = vmul.f32 1.0, %v6003
    %v6005 = vrcp.pop %v5989
    %v6006 = vmul.f32 %v5989, %v6005
    %v6007 = vsub.f32 1.0, %v6006
    %v6008 = vmul.f32 %v6005, %v6007
    %v6009 = vadd.f32 %v6005, %v6008
    %vm6010 = vweird.f32 %v5989
    %vm6011 = vweird.f32 %v6005
    %vm6012 = vmor %vm6010, %vm6011
    %v6013 = vsel %vm6012, %v6005, %v6009
    %v6014 = vand.u32 2147483647, %v5989
    %vm6015 = vcmp.eq.f32.partialorder %v6014, 8.507059e+37
    %v6016 = vand.u32 %v5989, 2147483648
    %v6017 = vor.u32 1.1754944e-38, %v6016
    %v6018 = vsel %vm6015, %v6017, %v6013
    %v6019 = vmul.f32 1.0, %v6018
    %v6022 = vrot.slane %v5801, 7
    %v6023 = vrot.slane %v5802, 7
    %v6026 = vmul.f32 %v5964, %v6022
    %v6027 = vmul.f32 %v5979, %v6023
    %v6028 = vmul.f32 %v5926, %v5980
    %v6029 = vmul.f32 %v5941, %v5981
    %v6030 = vadd.f32 %v6026, %v6028
    %v6031 = vadd.f32 %v6027, %v6029
    %v6032 = vtanh.pop %v6030
    %v6033 = vtanh.pop %v6031
    %v6034 = vmul.f32 %v6004, %v6032
    %v6035 = vmul.f32 %v6019, %v6033
    %v6036 = vperm.slane %v6034, 5
    %v6037 = vperm.slane %v6035, 5
    %v6038 = vsel %vm1903, %v6036, %v5809
    %v6039 = vsel %vm1903, %v6037, %v5810
    %v6040 = vpack.c.bf16 %v6034, %v6034
    %v6041 = vpack.c.bf16 %v6035, %v6035
    %v6044 = vunpack.c.l.b16 %v6040
    %v6045 = vunpack.c.l.b16 %v6041
    %v6046 = vrot.slane %v6044, 5
    %v6047 = vrot.slane %v6045, 4
    %v6048 = vsel %vm770, %v6047, %v6046
    %v6049 = vpack.c.b16 %v6048, %v6048
    %v6051 = vsel %vm552, %v6049, 0
    %6053 = vmatpush.bf16.msra.mxu0 0
    %6054 = vmatpush.bf16.msra.mxu0 0
    %6055 = vmatpush.bf16.msra.mxu0 0
    %6056 = vmatpush.bf16.msra.mxu0 0
    %6057 = vmatpush.bf16.msra.mxu0 %v4675
    %6058 = vmatpush.bf16.msra.mxu0 %v4671
    %6059 = vmatpush.bf16.msra.mxu0 %v4667
    %6060 = vmatpush.bf16.msra.mxu0 %v4663
    %6061 = vmatmul.bf16.gmra.mxu0 %v6051
    %v6062 = vpop.f32.mrf.mxu0
    %v6063 = vadd.f32 0.0, %v6062
    %v6064 = vpop.f32.mrf.mxu0
    %6065 = vdwg.mxu0
    %6066 = vmatpush.bf16.msra.mxu0 0
    %6067 = vmatpush.bf16.msra.mxu0 0
    %6068 = vmatpush.bf16.msra.mxu0 0
    %6069 = vmatpush.bf16.msra.mxu0 0
    %6070 = vmatpush.bf16.msra.mxu0 %v4676
    %6071 = vmatpush.bf16.msra.mxu0 %v4672
    %6072 = vmatpush.bf16.msra.mxu0 %v4668
    %6073 = vmatpush.bf16.msra.mxu0 %v4664
    %6074 = vmatmul.bf16.gmra.mxu0 %v6051
    %v6075 = vpop.f32.mrf.mxu0
    %v6076 = vadd.f32 0.0, %v6075
    %v6077 = vpop.f32.mrf.mxu0
    %6078 = vdwg.mxu0
    %6079 = vmatpush.bf16.msra.mxu0 0
    %6080 = vmatpush.bf16.msra.mxu0 0
    %6081 = vmatpush.bf16.msra.mxu0 0
    %6082 = vmatpush.bf16.msra.mxu0 0
    %6083 = vmatpush.bf16.msra.mxu0 %v4677
    %6084 = vmatpush.bf16.msra.mxu0 %v4673
    %6085 = vmatpush.bf16.msra.mxu0 %v4669
    %6086 = vmatpush.bf16.msra.mxu0 %v4665
    %6087 = vmatmul.bf16.gmra.mxu0 %v6051
    %v6088 = vpop.f32.mrf.mxu0
    %v6089 = vadd.f32 0.0, %v6088
    %v6090 = vpop.f32.mrf.mxu0
    %6091 = vdwg.mxu0
    %6092 = vmatpush.bf16.msra.mxu0 0
    %6093 = vmatpush.bf16.msra.mxu0 0
    %6094 = vmatpush.bf16.msra.mxu0 0
    %6095 = vmatpush.bf16.msra.mxu0 0
    %6096 = vmatpush.bf16.msra.mxu0 %v4678
    %6097 = vmatpush.bf16.msra.mxu0 %v4674
    %6098 = vmatpush.bf16.msra.mxu0 %v4670
    %6099 = vmatpush.bf16.msra.mxu0 %v4666
    %6100 = vmatmul.bf16.gmra.mxu0 %v6051
    %v6101 = vpop.f32.mrf.mxu0
    %v6102 = vadd.f32 0.0, %v6101
    %v6103 = vpop.f32.mrf.mxu0
    %6104 = vdwg.mxu0
    %v6109 = vrot.slane %v6063, 2
    %v6110 = vrot.slane %v6076, 2
    %v6111 = vrot.slane %v6089, 2
    %v6112 = vrot.slane %v6102, 2
    %v6113 = vrot.slane %v6063, 3
    %v6114 = vrot.slane %v6076, 3
    %v6115 = vrot.slane %v6089, 3
    %v6116 = vrot.slane %v6102, 3
    %v6125 = vadd.f32 %v4553, %v6109
    %v6126 = vadd.f32 %v4567, %v6110
    %v6127 = vadd.f32 %v4581, %v6111
    %v6128 = vadd.f32 %v4595, %v6112
    %v6129 = vadd.f32 %v4555, %v6113
    %v6130 = vadd.f32 %v4569, %v6114
    %v6131 = vadd.f32 %v4583, %v6115
    %v6132 = vadd.f32 %v4597, %v6116
    %v6133 = vxor.u32 %v6125, 2147483648
    %v6134 = vxor.u32 %v6129, 2147483648
    %v6135 = vmul.f32 %v6133, 1.442695
    %v6136 = vpow.pop %v6135
    %v6137 = vmul.f32 %v6134, 1.442695
    %v6138 = vpow.pop %v6137
    %v6139 = vadd.f32 %v6136, 1.0
    %v6140 = vadd.f32 %v6138, 1.0
    %v6141 = vrcp.pop %v6139
    %v6142 = vmul.f32 %v6139, %v6141
    %v6143 = vsub.f32 1.0, %v6142
    %v6144 = vmul.f32 %v6141, %v6143
    %v6145 = vadd.f32 %v6141, %v6144
    %vm6146 = vweird.f32 %v6139
    %vm6147 = vweird.f32 %v6141
    %vm6148 = vmor %vm6146, %vm6147
    %v6149 = vsel %vm6148, %v6141, %v6145
    %v6150 = vand.u32 2147483647, %v6139
    %vm6151 = vcmp.eq.f32.partialorder %v6150, 8.507059e+37
    %v6152 = vand.u32 %v6139, 2147483648
    %v6153 = vor.u32 1.1754944e-38, %v6152
    %v6154 = vsel %vm6151, %v6153, %v6149
    %v6155 = vmul.f32 1.0, %v6154
    %v6156 = vrcp.pop %v6140
    %v6157 = vmul.f32 %v6140, %v6156
    %v6158 = vsub.f32 1.0, %v6157
    %v6159 = vmul.f32 %v6156, %v6158
    %v6160 = vadd.f32 %v6156, %v6159
    %vm6161 = vweird.f32 %v6140
    %vm6162 = vweird.f32 %v6156
    %vm6163 = vmor %vm6161, %vm6162
    %v6164 = vsel %vm6163, %v6156, %v6160
    %v6165 = vand.u32 2147483647, %v6140
    %vm6166 = vcmp.eq.f32.partialorder %v6165, 8.507059e+37
    %v6167 = vand.u32 %v6140, 2147483648
    %v6168 = vor.u32 1.1754944e-38, %v6167
    %v6169 = vsel %vm6166, %v6168, %v6164
    %v6170 = vmul.f32 1.0, %v6169
    %v6171 = vxor.u32 %v6126, 2147483648
    %v6172 = vxor.u32 %v6130, 2147483648
    %v6173 = vmul.f32 %v6171, 1.442695
    %v6174 = vpow.pop %v6173
    %v6175 = vmul.f32 %v6172, 1.442695
    %v6176 = vpow.pop %v6175
    %v6177 = vadd.f32 %v6174, 1.0
    %v6178 = vadd.f32 %v6176, 1.0
    %v6179 = vrcp.pop %v6177
    %v6180 = vmul.f32 %v6177, %v6179
    %v6181 = vsub.f32 1.0, %v6180
    %v6182 = vmul.f32 %v6179, %v6181
    %v6183 = vadd.f32 %v6179, %v6182
    %vm6184 = vweird.f32 %v6177
    %vm6185 = vweird.f32 %v6179
    %vm6186 = vmor %vm6184, %vm6185
    %v6187 = vsel %vm6186, %v6179, %v6183
    %v6188 = vand.u32 2147483647, %v6177
    %vm6189 = vcmp.eq.f32.partialorder %v6188, 8.507059e+37
    %v6190 = vand.u32 %v6177, 2147483648
    %v6191 = vor.u32 1.1754944e-38, %v6190
    %v6192 = vsel %vm6189, %v6191, %v6187
    %v6193 = vmul.f32 1.0, %v6192
    %v6194 = vrcp.pop %v6178
    %v6195 = vmul.f32 %v6178, %v6194
    %v6196 = vsub.f32 1.0, %v6195
    %v6197 = vmul.f32 %v6194, %v6196
    %v6198 = vadd.f32 %v6194, %v6197
    %vm6199 = vweird.f32 %v6178
    %vm6200 = vweird.f32 %v6194
    %vm6201 = vmor %vm6199, %vm6200
    %v6202 = vsel %vm6201, %v6194, %v6198
    %v6203 = vand.u32 2147483647, %v6178
    %vm6204 = vcmp.eq.f32.partialorder %v6203, 8.507059e+37
    %v6205 = vand.u32 %v6178, 2147483648
    %v6206 = vor.u32 1.1754944e-38, %v6205
    %v6207 = vsel %vm6204, %v6206, %v6202
    %v6208 = vmul.f32 1.0, %v6207
    %v6209 = vtanh.pop %v6127
    %v6210 = vtanh.pop %v6131
    %v6211 = vxor.u32 %v6128, 2147483648
    %v6212 = vxor.u32 %v6132, 2147483648
    %v6213 = vmul.f32 %v6211, 1.442695
    %v6214 = vpow.pop %v6213
    %v6215 = vmul.f32 %v6212, 1.442695
    %v6216 = vpow.pop %v6215
    %v6217 = vadd.f32 %v6214, 1.0
    %v6218 = vadd.f32 %v6216, 1.0
    %v6219 = vrcp.pop %v6217
    %v6220 = vmul.f32 %v6217, %v6219
    %v6221 = vsub.f32 1.0, %v6220
    %v6222 = vmul.f32 %v6219, %v6221
    %v6223 = vadd.f32 %v6219, %v6222
    %vm6224 = vweird.f32 %v6217
    %vm6225 = vweird.f32 %v6219
    %vm6226 = vmor %vm6224, %vm6225
    %v6227 = vsel %vm6226, %v6219, %v6223
    %v6228 = vand.u32 2147483647, %v6217
    %vm6229 = vcmp.eq.f32.partialorder %v6228, 8.507059e+37
    %v6230 = vand.u32 %v6217, 2147483648
    %v6231 = vor.u32 1.1754944e-38, %v6230
    %v6232 = vsel %vm6229, %v6231, %v6227
    %v6233 = vmul.f32 1.0, %v6232
    %v6234 = vrcp.pop %v6218
    %v6235 = vmul.f32 %v6218, %v6234
    %v6236 = vsub.f32 1.0, %v6235
    %v6237 = vmul.f32 %v6234, %v6236
    %v6238 = vadd.f32 %v6234, %v6237
    %vm6239 = vweird.f32 %v6218
    %vm6240 = vweird.f32 %v6234
    %vm6241 = vmor %vm6239, %vm6240
    %v6242 = vsel %vm6241, %v6234, %v6238
    %v6243 = vand.u32 2147483647, %v6218
    %vm6244 = vcmp.eq.f32.partialorder %v6243, 8.507059e+37
    %v6245 = vand.u32 %v6218, 2147483648
    %v6246 = vor.u32 1.1754944e-38, %v6245
    %v6247 = vsel %vm6244, %v6246, %v6242
    %v6248 = vmul.f32 1.0, %v6247
    %v6251 = vrot.slane %v6030, 7
    %v6252 = vrot.slane %v6031, 7
    %v6255 = vmul.f32 %v6193, %v6251
    %v6256 = vmul.f32 %v6208, %v6252
    %v6257 = vmul.f32 %v6155, %v6209
    %v6258 = vmul.f32 %v6170, %v6210
    %v6259 = vadd.f32 %v6255, %v6257
    %v6260 = vadd.f32 %v6256, %v6258
    %v6261 = vtanh.pop %v6259
    %v6262 = vtanh.pop %v6260
    %v6263 = vmul.f32 %v6233, %v6261
    %v6264 = vmul.f32 %v6248, %v6262
    %v6265 = vperm.slane %v6263, 6
    %v6266 = vperm.slane %v6264, 6
    %v6267 = vsel %vm2133, %v6265, %v6038
    %v6268 = vsel %vm2133, %v6266, %v6039
    %v6269 = vpack.c.bf16 %v6263, %v6263
    %v6270 = vpack.c.bf16 %v6264, %v6264
    %v6273 = vunpack.c.l.b16 %v6269
    %v6274 = vunpack.c.l.b16 %v6270
    %v6275 = vrot.slane %v6273, 6
    %v6276 = vrot.slane %v6274, 5
    %v6277 = vsel %vm770, %v6276, %v6275
    %v6278 = vpack.c.b16 %v6277, %v6277
    %v6280 = vsel %vm552, %v6278, 0
    %6282 = vmatpush.bf16.msra.mxu0 0
    %6283 = vmatpush.bf16.msra.mxu0 0
    %6284 = vmatpush.bf16.msra.mxu0 0
    %6285 = vmatpush.bf16.msra.mxu0 0
    %6286 = vmatpush.bf16.msra.mxu0 %v4675
    %6287 = vmatpush.bf16.msra.mxu0 %v4671
    %6288 = vmatpush.bf16.msra.mxu0 %v4667
    %6289 = vmatpush.bf16.msra.mxu0 %v4663
    %6290 = vmatmul.bf16.gmra.mxu0 %v6280
    %v6291 = vpop.f32.mrf.mxu0
    %v6292 = vadd.f32 0.0, %v6291
    %v6293 = vpop.f32.mrf.mxu0
    %6294 = vdwg.mxu0
    %6295 = vmatpush.bf16.msra.mxu0 0
    %6296 = vmatpush.bf16.msra.mxu0 0
    %6297 = vmatpush.bf16.msra.mxu0 0
    %6298 = vmatpush.bf16.msra.mxu0 0
    %6299 = vmatpush.bf16.msra.mxu0 %v4676
    %6300 = vmatpush.bf16.msra.mxu0 %v4672
    %6301 = vmatpush.bf16.msra.mxu0 %v4668
    %6302 = vmatpush.bf16.msra.mxu0 %v4664
    %6303 = vmatmul.bf16.gmra.mxu0 %v6280
    %v6304 = vpop.f32.mrf.mxu0
    %v6305 = vadd.f32 0.0, %v6304
    %v6306 = vpop.f32.mrf.mxu0
    %6307 = vdwg.mxu0
    %6308 = vmatpush.bf16.msra.mxu0 0
    %6309 = vmatpush.bf16.msra.mxu0 0
    %6310 = vmatpush.bf16.msra.mxu0 0
    %6311 = vmatpush.bf16.msra.mxu0 0
    %6312 = vmatpush.bf16.msra.mxu0 %v4677
    %6313 = vmatpush.bf16.msra.mxu0 %v4673
    %6314 = vmatpush.bf16.msra.mxu0 %v4669
    %6315 = vmatpush.bf16.msra.mxu0 %v4665
    %6316 = vmatmul.bf16.gmra.mxu0 %v6280
    %v6317 = vpop.f32.mrf.mxu0
    %v6318 = vadd.f32 0.0, %v6317
    %v6319 = vpop.f32.mrf.mxu0
    %6320 = vdwg.mxu0
    %6321 = vmatpush.bf16.msra.mxu0 0
    %6322 = vmatpush.bf16.msra.mxu0 0
    %6323 = vmatpush.bf16.msra.mxu0 0
    %6324 = vmatpush.bf16.msra.mxu0 0
    %6325 = vmatpush.bf16.msra.mxu0 %v4678
    %6326 = vmatpush.bf16.msra.mxu0 %v4674
    %6327 = vmatpush.bf16.msra.mxu0 %v4670
    %6328 = vmatpush.bf16.msra.mxu0 %v4666
    %6329 = vmatmul.bf16.gmra.mxu0 %v6280
    %v6330 = vpop.f32.mrf.mxu0
    %v6331 = vadd.f32 0.0, %v6330
    %v6332 = vpop.f32.mrf.mxu0
    %6333 = vdwg.mxu0
    %v6338 = vrot.slane %v6292, 1
    %v6339 = vrot.slane %v6305, 1
    %v6340 = vrot.slane %v6318, 1
    %v6341 = vrot.slane %v6331, 1
    %v6342 = vrot.slane %v6292, 2
    %v6343 = vrot.slane %v6305, 2
    %v6344 = vrot.slane %v6318, 2
    %v6345 = vrot.slane %v6331, 2
    %v6354 = vadd.f32 %v4553, %v6338
    %v6355 = vadd.f32 %v4567, %v6339
    %v6356 = vadd.f32 %v4581, %v6340
    %v6357 = vadd.f32 %v4595, %v6341
    %v6358 = vadd.f32 %v4555, %v6342
    %v6359 = vadd.f32 %v4569, %v6343
    %v6360 = vadd.f32 %v4583, %v6344
    %v6361 = vadd.f32 %v4597, %v6345
    %v6362 = vxor.u32 %v6354, 2147483648
    %v6363 = vxor.u32 %v6358, 2147483648
    %v6364 = vmul.f32 %v6362, 1.442695
    %v6365 = vpow.pop %v6364
    %v6366 = vmul.f32 %v6363, 1.442695
    %v6367 = vpow.pop %v6366
    %v6368 = vadd.f32 %v6365, 1.0
    %v6369 = vadd.f32 %v6367, 1.0
    %v6370 = vrcp.pop %v6368
    %v6371 = vmul.f32 %v6368, %v6370
    %v6372 = vsub.f32 1.0, %v6371
    %v6373 = vmul.f32 %v6370, %v6372
    %v6374 = vadd.f32 %v6370, %v6373
    %vm6375 = vweird.f32 %v6368
    %vm6376 = vweird.f32 %v6370
    %vm6377 = vmor %vm6375, %vm6376
    %v6378 = vsel %vm6377, %v6370, %v6374
    %v6379 = vand.u32 2147483647, %v6368
    %vm6380 = vcmp.eq.f32.partialorder %v6379, 8.507059e+37
    %v6381 = vand.u32 %v6368, 2147483648
    %v6382 = vor.u32 1.1754944e-38, %v6381
    %v6383 = vsel %vm6380, %v6382, %v6378
    %v6384 = vmul.f32 1.0, %v6383
    %v6385 = vrcp.pop %v6369
    %v6386 = vmul.f32 %v6369, %v6385
    %v6387 = vsub.f32 1.0, %v6386
    %v6388 = vmul.f32 %v6385, %v6387
    %v6389 = vadd.f32 %v6385, %v6388
    %vm6390 = vweird.f32 %v6369
    %vm6391 = vweird.f32 %v6385
    %vm6392 = vmor %vm6390, %vm6391
    %v6393 = vsel %vm6392, %v6385, %v6389
    %v6394 = vand.u32 2147483647, %v6369
    %vm6395 = vcmp.eq.f32.partialorder %v6394, 8.507059e+37
    %v6396 = vand.u32 %v6369, 2147483648
    %v6397 = vor.u32 1.1754944e-38, %v6396
    %v6398 = vsel %vm6395, %v6397, %v6393
    %v6399 = vmul.f32 1.0, %v6398
    %v6400 = vxor.u32 %v6355, 2147483648
    %v6401 = vxor.u32 %v6359, 2147483648
    %v6402 = vmul.f32 %v6400, 1.442695
    %v6403 = vpow.pop %v6402
    %v6404 = vmul.f32 %v6401, 1.442695
    %v6405 = vpow.pop %v6404
    %v6406 = vadd.f32 %v6403, 1.0
    %v6407 = vadd.f32 %v6405, 1.0
    %v6408 = vrcp.pop %v6406
    %v6409 = vmul.f32 %v6406, %v6408
    %v6410 = vsub.f32 1.0, %v6409
    %v6411 = vmul.f32 %v6408, %v6410
    %v6412 = vadd.f32 %v6408, %v6411
    %vm6413 = vweird.f32 %v6406
    %vm6414 = vweird.f32 %v6408
    %vm6415 = vmor %vm6413, %vm6414
    %v6416 = vsel %vm6415, %v6408, %v6412
    %v6417 = vand.u32 2147483647, %v6406
    %vm6418 = vcmp.eq.f32.partialorder %v6417, 8.507059e+37
    %v6419 = vand.u32 %v6406, 2147483648
    %v6420 = vor.u32 1.1754944e-38, %v6419
    %v6421 = vsel %vm6418, %v6420, %v6416
    %v6422 = vmul.f32 1.0, %v6421
    %v6423 = vrcp.pop %v6407
    %v6424 = vmul.f32 %v6407, %v6423
    %v6425 = vsub.f32 1.0, %v6424
    %v6426 = vmul.f32 %v6423, %v6425
    %v6427 = vadd.f32 %v6423, %v6426
    %vm6428 = vweird.f32 %v6407
    %vm6429 = vweird.f32 %v6423
    %vm6430 = vmor %vm6428, %vm6429
    %v6431 = vsel %vm6430, %v6423, %v6427
    %v6432 = vand.u32 2147483647, %v6407
    %vm6433 = vcmp.eq.f32.partialorder %v6432, 8.507059e+37
    %v6434 = vand.u32 %v6407, 2147483648
    %v6435 = vor.u32 1.1754944e-38, %v6434
    %v6436 = vsel %vm6433, %v6435, %v6431
    %v6437 = vmul.f32 1.0, %v6436
    %v6438 = vtanh.pop %v6356
    %v6439 = vtanh.pop %v6360
    %v6440 = vxor.u32 %v6357, 2147483648
    %v6441 = vxor.u32 %v6361, 2147483648
    %v6442 = vmul.f32 %v6440, 1.442695
    %v6443 = vpow.pop %v6442
    %v6444 = vmul.f32 %v6441, 1.442695
    %v6445 = vpow.pop %v6444
    %v6446 = vadd.f32 %v6443, 1.0
    %v6447 = vadd.f32 %v6445, 1.0
    %v6448 = vrcp.pop %v6446
    %v6449 = vmul.f32 %v6446, %v6448
    %v6450 = vsub.f32 1.0, %v6449
    %v6451 = vmul.f32 %v6448, %v6450
    %v6452 = vadd.f32 %v6448, %v6451
    %vm6453 = vweird.f32 %v6446
    %vm6454 = vweird.f32 %v6448
    %vm6455 = vmor %vm6453, %vm6454
    %v6456 = vsel %vm6455, %v6448, %v6452
    %v6457 = vand.u32 2147483647, %v6446
    %vm6458 = vcmp.eq.f32.partialorder %v6457, 8.507059e+37
    %v6459 = vand.u32 %v6446, 2147483648
    %v6460 = vor.u32 1.1754944e-38, %v6459
    %v6461 = vsel %vm6458, %v6460, %v6456
    %v6462 = vmul.f32 1.0, %v6461
    %v6463 = vrcp.pop %v6447
    %v6464 = vmul.f32 %v6447, %v6463
    %v6465 = vsub.f32 1.0, %v6464
    %v6466 = vmul.f32 %v6463, %v6465
    %v6467 = vadd.f32 %v6463, %v6466
    %vm6468 = vweird.f32 %v6447
    %vm6469 = vweird.f32 %v6463
    %vm6470 = vmor %vm6468, %vm6469
    %v6471 = vsel %vm6470, %v6463, %v6467
    %v6472 = vand.u32 2147483647, %v6447
    %vm6473 = vcmp.eq.f32.partialorder %v6472, 8.507059e+37
    %v6474 = vand.u32 %v6447, 2147483648
    %v6475 = vor.u32 1.1754944e-38, %v6474
    %v6476 = vsel %vm6473, %v6475, %v6471
    %v6477 = vmul.f32 1.0, %v6476
    %v6480 = vrot.slane %v6259, 7
    %v6481 = vrot.slane %v6260, 7
    %v6484 = vmul.f32 %v6422, %v6480
    %v6485 = vmul.f32 %v6437, %v6481
    %v6486 = vmul.f32 %v6384, %v6438
    %v6487 = vmul.f32 %v6399, %v6439
    %v6488 = vadd.f32 %v6484, %v6486
    %v6489 = vadd.f32 %v6485, %v6487
    %v6490 = vtanh.pop %v6488
    %v6491 = vtanh.pop %v6489
    %v6492 = vmul.f32 %v6462, %v6490
    %v6493 = vmul.f32 %v6477, %v6491
    %v6494 = vperm.slane %v6492, 7
    %v6495 = vperm.slane %v6493, 7
    %v6496 = vsel %vm2363, %v6494, %v6267
    %v6497 = vsel %vm2363, %v6495, %v6268
    %v6498 = vpack.c.bf16 %v6497, %v6496
    %v6499 = vld [vmem:[#allocation16] sm:$0xff]
    %v6500 = vld [vmem:[#allocation16 + $0x8] sm:$0xff]
    %v6501 = vld [vmem:[#allocation16 + $0x10] sm:$0xff]
    %v6502 = vld [vmem:[#allocation16 + $0x18] sm:$0xff]
    %v6503 = vld [vmem:[#allocation16 + $0x20] sm:$0xff]
    %v6504 = vld [vmem:[#allocation16 + $0x28] sm:$0xff]
    %v6505 = vld [vmem:[#allocation16 + $0x30] sm:$0xff]
    %v6506 = vld [vmem:[#allocation16 + $0x38] sm:$0xff]
    %v6507 = vld [vmem:[#allocation16 + $0x40] sm:$0xff]
    %v6508 = vld [vmem:[#allocation16 + $0x48] sm:$0xff]
    %v6509 = vld [vmem:[#allocation16 + $0x50] sm:$0xff]
    %v6510 = vld [vmem:[#allocation16 + $0x58] sm:$0xff]
    %v6511 = vld [vmem:[#allocation16 + $0x60] sm:$0xff]
    %v6512 = vld [vmem:[#allocation16 + $0x68] sm:$0xff]
    %v6513 = vld [vmem:[#allocation16 + $0x70] sm:$0xff]
    %v6514 = vld [vmem:[#allocation16 + $0x78] sm:$0xff]
    %v6515 = vld [vmem:[#allocation19] sm:$0xf]
    %v6517 = vperm.slane %v6515, 0
    %v6518 = vperm.slane %v6515, 1
    %v6519 = vperm.slane %v6515, 2
    %v6520 = vperm.slane %v6515, 3
    %v6541 = vunpack.c.l.b16 %v6499
    %v6542 = vunpack.c.h.b16 %v6499
    %v6543 = vunpack.c.l.b16 %v6500
    %v6544 = vunpack.c.h.b16 %v6500
    %v6545 = vunpack.c.l.b16 %v6501
    %v6546 = vunpack.c.h.b16 %v6501
    %v6547 = vunpack.c.l.b16 %v6502
    %v6548 = vunpack.c.h.b16 %v6502
    %v6549 = vunpack.c.l.b16 %v6503
    %v6550 = vunpack.c.h.b16 %v6503
    %v6551 = vunpack.c.l.b16 %v6504
    %v6552 = vunpack.c.h.b16 %v6504
    %v6553 = vunpack.c.l.b16 %v6505
    %v6554 = vunpack.c.h.b16 %v6505
    %v6555 = vunpack.c.l.b16 %v6506
    %v6556 = vunpack.c.h.b16 %v6506
    %v6557 = vunpack.c.l.b16 %v6507
    %v6558 = vunpack.c.h.b16 %v6507
    %v6559 = vunpack.c.l.b16 %v6508
    %v6560 = vunpack.c.h.b16 %v6508
    %v6561 = vunpack.c.l.b16 %v6509
    %v6562 = vunpack.c.h.b16 %v6509
    %v6563 = vunpack.c.l.b16 %v6510
    %v6564 = vunpack.c.h.b16 %v6510
    %v6565 = vunpack.c.l.b16 %v6511
    %v6566 = vunpack.c.h.b16 %v6511
    %v6567 = vunpack.c.l.b16 %v6512
    %v6568 = vunpack.c.h.b16 %v6512
    %v6569 = vunpack.c.l.b16 %v6513
    %v6570 = vunpack.c.h.b16 %v6513
    %v6571 = vunpack.c.l.b16 %v6514
    %v6572 = vunpack.c.h.b16 %v6514
    %v6573 = vpack.c.b16 %v6545, %v6541
    %v6574 = vpack.c.b16 %v6546, %v6542
    %v6575 = vpack.c.b16 %v6547, %v6543
    %v6576 = vpack.c.b16 %v6548, %v6544
    %v6577 = vpack.c.b16 %v6553, %v6549
    %v6578 = vpack.c.b16 %v6554, %v6550
    %v6579 = vpack.c.b16 %v6555, %v6551
    %v6580 = vpack.c.b16 %v6556, %v6552
    %v6581 = vpack.c.b16 %v6561, %v6557
    %v6582 = vpack.c.b16 %v6562, %v6558
    %v6583 = vpack.c.b16 %v6563, %v6559
    %v6584 = vpack.c.b16 %v6564, %v6560
    %v6585 = vpack.c.b16 %v6569, %v6565
    %v6586 = vpack.c.b16 %v6570, %v6566
    %v6587 = vpack.c.b16 %v6571, %v6567
    %v6588 = vpack.c.b16 %v6572, %v6568
    %v6606 = vsel %vm552, %v6498, 0
    %6608 = vmatpush.bf16.msra.mxu0 0
    %6609 = vmatpush.bf16.msra.mxu0 0
    %6610 = vmatpush.bf16.msra.mxu0 0
    %6611 = vmatpush.bf16.msra.mxu0 0
    %6612 = vmatpush.bf16.msra.mxu0 %v6585
    %6613 = vmatpush.bf16.msra.mxu0 %v6581
    %6614 = vmatpush.bf16.msra.mxu0 %v6577
    %6615 = vmatpush.bf16.msra.mxu0 %v6573
    %6616 = vmatmul.bf16.gmra.mxu0 %v6606
    %v6617 = vpop.f32.mrf.mxu0
    %v6618 = vadd.f32 %v6517, %v6617
    %v6619 = vpop.f32.mrf.mxu0
    %v6620 = vadd.f32 %v6517, %v6619
    %6621 = vdwg.mxu0
    %6622 = vmatpush.bf16.msra.mxu0 0
    %6623 = vmatpush.bf16.msra.mxu0 0
    %6624 = vmatpush.bf16.msra.mxu0 0
    %6625 = vmatpush.bf16.msra.mxu0 0
    %6626 = vmatpush.bf16.msra.mxu0 %v6586
    %6627 = vmatpush.bf16.msra.mxu0 %v6582
    %6628 = vmatpush.bf16.msra.mxu0 %v6578
    %6629 = vmatpush.bf16.msra.mxu0 %v6574
    %6630 = vmatmul.bf16.gmra.mxu0 %v6606
    %v6631 = vpop.f32.mrf.mxu0
    %v6632 = vadd.f32 %v6518, %v6631
    %v6633 = vpop.f32.mrf.mxu0
    %v6634 = vadd.f32 %v6518, %v6633
    %6635 = vdwg.mxu0
    %6636 = vmatpush.bf16.msra.mxu0 0
    %6637 = vmatpush.bf16.msra.mxu0 0
    %6638 = vmatpush.bf16.msra.mxu0 0
    %6639 = vmatpush.bf16.msra.mxu0 0
    %6640 = vmatpush.bf16.msra.mxu0 %v6587
    %6641 = vmatpush.bf16.msra.mxu0 %v6583
    %6642 = vmatpush.bf16.msra.mxu0 %v6579
    %6643 = vmatpush.bf16.msra.mxu0 %v6575
    %6644 = vmatmul.bf16.gmra.mxu0 %v6606
    %v6645 = vpop.f32.mrf.mxu0
    %v6646 = vadd.f32 %v6519, %v6645
    %v6647 = vpop.f32.mrf.mxu0
    %v6648 = vadd.f32 %v6519, %v6647
    %6649 = vdwg.mxu0
    %6650 = vmatpush.bf16.msra.mxu0 0
    %6651 = vmatpush.bf16.msra.mxu0 0
    %6652 = vmatpush.bf16.msra.mxu0 0
    %6653 = vmatpush.bf16.msra.mxu0 0
    %6654 = vmatpush.bf16.msra.mxu0 %v6588
    %6655 = vmatpush.bf16.msra.mxu0 %v6584
    %6656 = vmatpush.bf16.msra.mxu0 %v6580
    %6657 = vmatpush.bf16.msra.mxu0 %v6576
    %6658 = vmatmul.bf16.gmra.mxu0 %v6606
    %v6659 = vpop.f32.mrf.mxu0
    %v6660 = vadd.f32 %v6520, %v6659
    %v6661 = vpop.f32.mrf.mxu0
    %v6662 = vadd.f32 %v6520, %v6661
    %6663 = vdwg.mxu0
    %v6664 = vld [vmem:[#allocation18] sm:$0xff]
    %v6665 = vld [vmem:[#allocation18 + $0x8] sm:$0xff]
    %v6666 = vld [vmem:[#allocation18 + $0x10] sm:$0xff]
    %v6667 = vld [vmem:[#allocation18 + $0x18] sm:$0xff]
    %v6668 = vld [vmem:[#allocation18 + $0x20] sm:$0xff]
    %v6669 = vld [vmem:[#allocation18 + $0x28] sm:$0xff]
    %v6670 = vld [vmem:[#allocation18 + $0x30] sm:$0xff]
    %v6671 = vld [vmem:[#allocation18 + $0x38] sm:$0xff]
    %v6672 = vld [vmem:[#allocation18 + $0x40] sm:$0xff]
    %v6673 = vld [vmem:[#allocation18 + $0x48] sm:$0xff]
    %v6674 = vld [vmem:[#allocation18 + $0x50] sm:$0xff]
    %v6675 = vld [vmem:[#allocation18 + $0x58] sm:$0xff]
    %v6676 = vld [vmem:[#allocation18 + $0x60] sm:$0xff]
    %v6677 = vld [vmem:[#allocation18 + $0x68] sm:$0xff]
    %v6678 = vld [vmem:[#allocation18 + $0x70] sm:$0xff]
    %v6679 = vld [vmem:[#allocation18 + $0x78] sm:$0xff]
    %v6696 = vunpack.c.l.b16 %v6664
    %v6697 = vunpack.c.h.b16 %v6664
    %v6698 = vunpack.c.l.b16 %v6665
    %v6699 = vunpack.c.h.b16 %v6665
    %v6700 = vunpack.c.l.b16 %v6666
    %v6701 = vunpack.c.h.b16 %v6666
    %v6702 = vunpack.c.l.b16 %v6667
    %v6703 = vunpack.c.h.b16 %v6667
    %v6704 = vunpack.c.l.b16 %v6668
    %v6705 = vunpack.c.h.b16 %v6668
    %v6706 = vunpack.c.l.b16 %v6669
    %v6707 = vunpack.c.h.b16 %v6669
    %v6708 = vunpack.c.l.b16 %v6670
    %v6709 = vunpack.c.h.b16 %v6670
    %v6710 = vunpack.c.l.b16 %v6671
    %v6711 = vunpack.c.h.b16 %v6671
    %v6712 = vunpack.c.l.b16 %v6672
    %v6713 = vunpack.c.h.b16 %v6672
    %v6714 = vunpack.c.l.b16 %v6673
    %v6715 = vunpack.c.h.b16 %v6673
    %v6716 = vunpack.c.l.b16 %v6674
    %v6717 = vunpack.c.h.b16 %v6674
    %v6718 = vunpack.c.l.b16 %v6675
    %v6719 = vunpack.c.h.b16 %v6675
    %v6720 = vunpack.c.l.b16 %v6676
    %v6721 = vunpack.c.h.b16 %v6676
    %v6722 = vunpack.c.l.b16 %v6677
    %v6723 = vunpack.c.h.b16 %v6677
    %v6724 = vunpack.c.l.b16 %v6678
    %v6725 = vunpack.c.h.b16 %v6678
    %v6726 = vunpack.c.l.b16 %v6679
    %v6727 = vunpack.c.h.b16 %v6679
    %v6728 = vpack.c.b16 %v6700, %v6696
    %v6729 = vpack.c.b16 %v6701, %v6697
    %v6730 = vpack.c.b16 %v6702, %v6698
    %v6731 = vpack.c.b16 %v6703, %v6699
    %v6732 = vpack.c.b16 %v6708, %v6704
    %v6733 = vpack.c.b16 %v6709, %v6705
    %v6734 = vpack.c.b16 %v6710, %v6706
    %v6735 = vpack.c.b16 %v6711, %v6707
    %v6736 = vpack.c.b16 %v6716, %v6712
    %v6737 = vpack.c.b16 %v6717, %v6713
    %v6738 = vpack.c.b16 %v6718, %v6714
    %v6739 = vpack.c.b16 %v6719, %v6715
    %v6740 = vpack.c.b16 %v6724, %v6720
    %v6741 = vpack.c.b16 %v6725, %v6721
    %v6742 = vpack.c.b16 %v6726, %v6722
    %v6743 = vpack.c.b16 %v6727, %v6723
    %6760 = vmatpush.bf16.msra.mxu0 0
    %6761 = vmatpush.bf16.msra.mxu0 0
    %6762 = vmatpush.bf16.msra.mxu0 0
    %6763 = vmatpush.bf16.msra.mxu0 0
    %6764 = vmatpush.bf16.msra.mxu0 %v6740
    %6765 = vmatpush.bf16.msra.mxu0 %v6736
    %6766 = vmatpush.bf16.msra.mxu0 %v6732
    %6767 = vmatpush.bf16.msra.mxu0 %v6728
    %6768 = vmatmul.bf16.gmra.mxu0 %v554
    %v6769 = vpop.f32.mrf.mxu0
    %v6770 = vadd.f32 0.0, %v6769
    %v6771 = vpop.f32.mrf.mxu0
    %6772 = vdwg.mxu0
    %6773 = vmatpush.bf16.msra.mxu0 0
    %6774 = vmatpush.bf16.msra.mxu0 0
    %6775 = vmatpush.bf16.msra.mxu0 0
    %6776 = vmatpush.bf16.msra.mxu0 0
    %6777 = vmatpush.bf16.msra.mxu0 %v6741
    %6778 = vmatpush.bf16.msra.mxu0 %v6737
    %6779 = vmatpush.bf16.msra.mxu0 %v6733
    %6780 = vmatpush.bf16.msra.mxu0 %v6729
    %6781 = vmatmul.bf16.gmra.mxu0 %v554
    %v6782 = vpop.f32.mrf.mxu0
    %v6783 = vadd.f32 0.0, %v6782
    %v6784 = vpop.f32.mrf.mxu0
    %6785 = vdwg.mxu0
    %6786 = vmatpush.bf16.msra.mxu0 0
    %6787 = vmatpush.bf16.msra.mxu0 0
    %6788 = vmatpush.bf16.msra.mxu0 0
    %6789 = vmatpush.bf16.msra.mxu0 0
    %6790 = vmatpush.bf16.msra.mxu0 %v6742
    %6791 = vmatpush.bf16.msra.mxu0 %v6738
    %6792 = vmatpush.bf16.msra.mxu0 %v6734
    %6793 = vmatpush.bf16.msra.mxu0 %v6730
    %6794 = vmatmul.bf16.gmra.mxu0 %v554
    %v6795 = vpop.f32.mrf.mxu0
    %v6796 = vadd.f32 0.0, %v6795
    %v6797 = vpop.f32.mrf.mxu0
    %6798 = vdwg.mxu0
    %6799 = vmatpush.bf16.msra.mxu0 0
    %6800 = vmatpush.bf16.msra.mxu0 0
    %6801 = vmatpush.bf16.msra.mxu0 0
    %6802 = vmatpush.bf16.msra.mxu0 0
    %6803 = vmatpush.bf16.msra.mxu0 %v6743
    %6804 = vmatpush.bf16.msra.mxu0 %v6739
    %6805 = vmatpush.bf16.msra.mxu0 %v6735
    %6806 = vmatpush.bf16.msra.mxu0 %v6731
    %6807 = vmatmul.bf16.gmra.mxu0 %v554
    %v6808 = vpop.f32.mrf.mxu0
    %v6809 = vadd.f32 0.0, %v6808
    %v6810 = vpop.f32.mrf.mxu0
    %6811 = vdwg.mxu0
    %v6816 = vrot.slane %v6770, 1
    %v6817 = vrot.slane %v6783, 1
    %v6818 = vrot.slane %v6796, 1
    %v6819 = vrot.slane %v6809, 1
    %v6828 = vadd.f32 %v6618, %v6770
    %v6829 = vadd.f32 %v6632, %v6783
    %v6830 = vadd.f32 %v6646, %v6796
    %v6831 = vadd.f32 %v6660, %v6809
    %v6832 = vadd.f32 %v6620, %v6816
    %v6833 = vadd.f32 %v6634, %v6817
    %v6834 = vadd.f32 %v6648, %v6818
    %v6835 = vadd.f32 %v6662, %v6819
    %v6836 = vxor.u32 %v6828, 2147483648
    %v6837 = vxor.u32 %v6832, 2147483648
    %v6838 = vmul.f32 %v6836, 1.442695
    %v6839 = vpow.pop %v6838
    %v6840 = vmul.f32 %v6837, 1.442695
    %v6841 = vpow.pop %v6840
    %v6842 = vadd.f32 %v6839, 1.0
    %v6843 = vadd.f32 %v6841, 1.0
    %v6844 = vrcp.pop %v6842
    %v6845 = vmul.f32 %v6842, %v6844
    %v6846 = vsub.f32 1.0, %v6845
    %v6847 = vmul.f32 %v6844, %v6846
    %v6848 = vadd.f32 %v6844, %v6847
    %vm6849 = vweird.f32 %v6842
    %vm6850 = vweird.f32 %v6844
    %vm6851 = vmor %vm6849, %vm6850
    %v6852 = vsel %vm6851, %v6844, %v6848
    %v6853 = vand.u32 2147483647, %v6842
    %vm6854 = vcmp.eq.f32.partialorder %v6853, 8.507059e+37
    %v6855 = vand.u32 %v6842, 2147483648
    %v6856 = vor.u32 1.1754944e-38, %v6855
    %v6857 = vsel %vm6854, %v6856, %v6852
    %v6858 = vmul.f32 1.0, %v6857
    %v6859 = vrcp.pop %v6843
    %v6860 = vmul.f32 %v6843, %v6859
    %v6861 = vsub.f32 1.0, %v6860
    %v6862 = vmul.f32 %v6859, %v6861
    %v6863 = vadd.f32 %v6859, %v6862
    %vm6864 = vweird.f32 %v6843
    %vm6865 = vweird.f32 %v6859
    %vm6866 = vmor %vm6864, %vm6865
    %v6867 = vsel %vm6866, %v6859, %v6863
    %v6868 = vand.u32 2147483647, %v6843
    %vm6869 = vcmp.eq.f32.partialorder %v6868, 8.507059e+37
    %v6870 = vand.u32 %v6843, 2147483648
    %v6871 = vor.u32 1.1754944e-38, %v6870
    %v6872 = vsel %vm6869, %v6871, %v6867
    %v6873 = vmul.f32 1.0, %v6872
    %v6874 = vxor.u32 %v6829, 2147483648
    %v6875 = vxor.u32 %v6833, 2147483648
    %v6876 = vmul.f32 %v6874, 1.442695
    %v6877 = vpow.pop %v6876
    %v6878 = vmul.f32 %v6875, 1.442695
    %v6879 = vpow.pop %v6878
    %v6880 = vadd.f32 %v6877, 1.0
    %v6881 = vadd.f32 %v6879, 1.0
    %v6882 = vrcp.pop %v6880
    %v6883 = vmul.f32 %v6880, %v6882
    %v6884 = vsub.f32 1.0, %v6883
    %v6885 = vmul.f32 %v6882, %v6884
    %v6886 = vadd.f32 %v6882, %v6885
    %vm6887 = vweird.f32 %v6880
    %vm6888 = vweird.f32 %v6882
    %vm6889 = vmor %vm6887, %vm6888
    %v6890 = vsel %vm6889, %v6882, %v6886
    %v6891 = vand.u32 2147483647, %v6880
    %vm6892 = vcmp.eq.f32.partialorder %v6891, 8.507059e+37
    %v6893 = vand.u32 %v6880, 2147483648
    %v6894 = vor.u32 1.1754944e-38, %v6893
    %v6895 = vsel %vm6892, %v6894, %v6890
    %v6896 = vmul.f32 1.0, %v6895
    %v6897 = vrcp.pop %v6881
    %v6898 = vmul.f32 %v6881, %v6897
    %v6899 = vsub.f32 1.0, %v6898
    %v6900 = vmul.f32 %v6897, %v6899
    %v6901 = vadd.f32 %v6897, %v6900
    %vm6902 = vweird.f32 %v6881
    %vm6903 = vweird.f32 %v6897
    %vm6904 = vmor %vm6902, %vm6903
    %v6905 = vsel %vm6904, %v6897, %v6901
    %v6906 = vand.u32 2147483647, %v6881
    %vm6907 = vcmp.eq.f32.partialorder %v6906, 8.507059e+37
    %v6908 = vand.u32 %v6881, 2147483648
    %v6909 = vor.u32 1.1754944e-38, %v6908
    %v6910 = vsel %vm6907, %v6909, %v6905
    %v6911 = vmul.f32 1.0, %v6910
    %v6912 = vtanh.pop %v6830
    %v6913 = vtanh.pop %v6834
    %v6914 = vxor.u32 %v6831, 2147483648
    %v6915 = vxor.u32 %v6835, 2147483648
    %v6916 = vmul.f32 %v6914, 1.442695
    %v6917 = vpow.pop %v6916
    %v6918 = vmul.f32 %v6915, 1.442695
    %v6919 = vpow.pop %v6918
    %v6920 = vadd.f32 %v6917, 1.0
    %v6921 = vadd.f32 %v6919, 1.0
    %v6922 = vrcp.pop %v6920
    %v6923 = vmul.f32 %v6920, %v6922
    %v6924 = vsub.f32 1.0, %v6923
    %v6925 = vmul.f32 %v6922, %v6924
    %v6926 = vadd.f32 %v6922, %v6925
    %vm6927 = vweird.f32 %v6920
    %vm6928 = vweird.f32 %v6922
    %vm6929 = vmor %vm6927, %vm6928
    %v6930 = vsel %vm6929, %v6922, %v6926
    %v6931 = vand.u32 2147483647, %v6920
    %vm6932 = vcmp.eq.f32.partialorder %v6931, 8.507059e+37
    %v6933 = vand.u32 %v6920, 2147483648
    %v6934 = vor.u32 1.1754944e-38, %v6933
    %v6935 = vsel %vm6932, %v6934, %v6930
    %v6936 = vmul.f32 1.0, %v6935
    %v6937 = vrcp.pop %v6921
    %v6938 = vmul.f32 %v6921, %v6937
    %v6939 = vsub.f32 1.0, %v6938
    %v6940 = vmul.f32 %v6937, %v6939
    %v6941 = vadd.f32 %v6937, %v6940
    %vm6942 = vweird.f32 %v6921
    %vm6943 = vweird.f32 %v6937
    %vm6944 = vmor %vm6942, %vm6943
    %v6945 = vsel %vm6944, %v6937, %v6941
    %v6946 = vand.u32 2147483647, %v6921
    %vm6947 = vcmp.eq.f32.partialorder %v6946, 8.507059e+37
    %v6948 = vand.u32 %v6921, 2147483648
    %v6949 = vor.u32 1.1754944e-38, %v6948
    %v6950 = vsel %vm6947, %v6949, %v6945
    %v6951 = vmul.f32 1.0, %v6950
    %v6952 = vmul.f32 %v6896, 0.0
    %v6953 = vmul.f32 %v6911, 0.0
    %v6954 = vmul.f32 %v6858, %v6912
    %v6955 = vmul.f32 %v6873, %v6913
    %v6956 = vadd.f32 %v6952, %v6954
    %v6957 = vadd.f32 %v6953, %v6955
    %v6958 = vtanh.pop %v6956
    %v6959 = vtanh.pop %v6957
    %v6960 = vmul.f32 %v6936, %v6958
    %v6961 = vmul.f32 %v6951, %v6959
    %v6962 = vperm.slane %v6960, 0
    %v6963 = vperm.slane %v6961, 0
    %v6964 = vsel %vm758, %v6962, 0.0
    %v6965 = vsel %vm758, %v6963, 0.0
    %v6966 = vpack.c.bf16 %v6960, %v6960
    %v6967 = vpack.c.bf16 %v6961, %v6961
    %v6970 = vunpack.c.l.b16 %v6966
    %v6971 = vunpack.c.l.b16 %v6967
    %v6972 = vrot.slane %v6971, 7
    %v6973 = vsel %vm770, %v6972, %v6970
    %v6974 = vpack.c.b16 %v6973, %v6973
    %v6976 = vsel %vm552, %v6974, 0
    %6978 = vmatpush.bf16.msra.mxu0 0
    %6979 = vmatpush.bf16.msra.mxu0 0
    %6980 = vmatpush.bf16.msra.mxu0 0
    %6981 = vmatpush.bf16.msra.mxu0 0
    %6982 = vmatpush.bf16.msra.mxu0 %v6740
    %6983 = vmatpush.bf16.msra.mxu0 %v6736
    %6984 = vmatpush.bf16.msra.mxu0 %v6732
    %6985 = vmatpush.bf16.msra.mxu0 %v6728
    %6986 = vmatmul.bf16.gmra.mxu0 %v6976
    %v6987 = vpop.f32.mrf.mxu0
    %v6988 = vadd.f32 0.0, %v6987
    %v6989 = vpop.f32.mrf.mxu0
    %6990 = vdwg.mxu0
    %6991 = vmatpush.bf16.msra.mxu0 0
    %6992 = vmatpush.bf16.msra.mxu0 0
    %6993 = vmatpush.bf16.msra.mxu0 0
    %6994 = vmatpush.bf16.msra.mxu0 0
    %6995 = vmatpush.bf16.msra.mxu0 %v6741
    %6996 = vmatpush.bf16.msra.mxu0 %v6737
    %6997 = vmatpush.bf16.msra.mxu0 %v6733
    %6998 = vmatpush.bf16.msra.mxu0 %v6729
    %6999 = vmatmul.bf16.gmra.mxu0 %v6976
    %v7000 = vpop.f32.mrf.mxu0
    %v7001 = vadd.f32 0.0, %v7000
    %v7002 = vpop.f32.mrf.mxu0
    %7003 = vdwg.mxu0
    %7004 = vmatpush.bf16.msra.mxu0 0
    %7005 = vmatpush.bf16.msra.mxu0 0
    %7006 = vmatpush.bf16.msra.mxu0 0
    %7007 = vmatpush.bf16.msra.mxu0 0
    %7008 = vmatpush.bf16.msra.mxu0 %v6742
    %7009 = vmatpush.bf16.msra.mxu0 %v6738
    %7010 = vmatpush.bf16.msra.mxu0 %v6734
    %7011 = vmatpush.bf16.msra.mxu0 %v6730
    %7012 = vmatmul.bf16.gmra.mxu0 %v6976
    %v7013 = vpop.f32.mrf.mxu0
    %v7014 = vadd.f32 0.0, %v7013
    %v7015 = vpop.f32.mrf.mxu0
    %7016 = vdwg.mxu0
    %7017 = vmatpush.bf16.msra.mxu0 0
    %7018 = vmatpush.bf16.msra.mxu0 0
    %7019 = vmatpush.bf16.msra.mxu0 0
    %7020 = vmatpush.bf16.msra.mxu0 0
    %7021 = vmatpush.bf16.msra.mxu0 %v6743
    %7022 = vmatpush.bf16.msra.mxu0 %v6739
    %7023 = vmatpush.bf16.msra.mxu0 %v6735
    %7024 = vmatpush.bf16.msra.mxu0 %v6731
    %7025 = vmatmul.bf16.gmra.mxu0 %v6976
    %v7026 = vpop.f32.mrf.mxu0
    %v7027 = vadd.f32 0.0, %v7026
    %v7028 = vpop.f32.mrf.mxu0
    %7029 = vdwg.mxu0
    %v7034 = vrot.slane %v6988, 7
    %v7035 = vrot.slane %v7001, 7
    %v7036 = vrot.slane %v7014, 7
    %v7037 = vrot.slane %v7027, 7
    %v7046 = vadd.f32 %v6618, %v7034
    %v7047 = vadd.f32 %v6632, %v7035
    %v7048 = vadd.f32 %v6646, %v7036
    %v7049 = vadd.f32 %v6660, %v7037
    %v7050 = vadd.f32 %v6620, %v6988
    %v7051 = vadd.f32 %v6634, %v7001
    %v7052 = vadd.f32 %v6648, %v7014
    %v7053 = vadd.f32 %v6662, %v7027
    %v7054 = vxor.u32 %v7046, 2147483648
    %v7055 = vxor.u32 %v7050, 2147483648
    %v7056 = vmul.f32 %v7054, 1.442695
    %v7057 = vpow.pop %v7056
    %v7058 = vmul.f32 %v7055, 1.442695
    %v7059 = vpow.pop %v7058
    %v7060 = vadd.f32 %v7057, 1.0
    %v7061 = vadd.f32 %v7059, 1.0
    %v7062 = vrcp.pop %v7060
    %v7063 = vmul.f32 %v7060, %v7062
    %v7064 = vsub.f32 1.0, %v7063
    %v7065 = vmul.f32 %v7062, %v7064
    %v7066 = vadd.f32 %v7062, %v7065
    %vm7067 = vweird.f32 %v7060
    %vm7068 = vweird.f32 %v7062
    %vm7069 = vmor %vm7067, %vm7068
    %v7070 = vsel %vm7069, %v7062, %v7066
    %v7071 = vand.u32 2147483647, %v7060
    %vm7072 = vcmp.eq.f32.partialorder %v7071, 8.507059e+37
    %v7073 = vand.u32 %v7060, 2147483648
    %v7074 = vor.u32 1.1754944e-38, %v7073
    %v7075 = vsel %vm7072, %v7074, %v7070
    %v7076 = vmul.f32 1.0, %v7075
    %v7077 = vrcp.pop %v7061
    %v7078 = vmul.f32 %v7061, %v7077
    %v7079 = vsub.f32 1.0, %v7078
    %v7080 = vmul.f32 %v7077, %v7079
    %v7081 = vadd.f32 %v7077, %v7080
    %vm7082 = vweird.f32 %v7061
    %vm7083 = vweird.f32 %v7077
    %vm7084 = vmor %vm7082, %vm7083
    %v7085 = vsel %vm7084, %v7077, %v7081
    %v7086 = vand.u32 2147483647, %v7061
    %vm7087 = vcmp.eq.f32.partialorder %v7086, 8.507059e+37
    %v7088 = vand.u32 %v7061, 2147483648
    %v7089 = vor.u32 1.1754944e-38, %v7088
    %v7090 = vsel %vm7087, %v7089, %v7085
    %v7091 = vmul.f32 1.0, %v7090
    %v7092 = vxor.u32 %v7047, 2147483648
    %v7093 = vxor.u32 %v7051, 2147483648
    %v7094 = vmul.f32 %v7092, 1.442695
    %v7095 = vpow.pop %v7094
    %v7096 = vmul.f32 %v7093, 1.442695
    %v7097 = vpow.pop %v7096
    %v7098 = vadd.f32 %v7095, 1.0
    %v7099 = vadd.f32 %v7097, 1.0
    %v7100 = vrcp.pop %v7098
    %v7101 = vmul.f32 %v7098, %v7100
    %v7102 = vsub.f32 1.0, %v7101
    %v7103 = vmul.f32 %v7100, %v7102
    %v7104 = vadd.f32 %v7100, %v7103
    %vm7105 = vweird.f32 %v7098
    %vm7106 = vweird.f32 %v7100
    %vm7107 = vmor %vm7105, %vm7106
    %v7108 = vsel %vm7107, %v7100, %v7104
    %v7109 = vand.u32 2147483647, %v7098
    %vm7110 = vcmp.eq.f32.partialorder %v7109, 8.507059e+37
    %v7111 = vand.u32 %v7098, 2147483648
    %v7112 = vor.u32 1.1754944e-38, %v7111
    %v7113 = vsel %vm7110, %v7112, %v7108
    %v7114 = vmul.f32 1.0, %v7113
    %v7115 = vrcp.pop %v7099
    %v7116 = vmul.f32 %v7099, %v7115
    %v7117 = vsub.f32 1.0, %v7116
    %v7118 = vmul.f32 %v7115, %v7117
    %v7119 = vadd.f32 %v7115, %v7118
    %vm7120 = vweird.f32 %v7099
    %vm7121 = vweird.f32 %v7115
    %vm7122 = vmor %vm7120, %vm7121
    %v7123 = vsel %vm7122, %v7115, %v7119
    %v7124 = vand.u32 2147483647, %v7099
    %vm7125 = vcmp.eq.f32.partialorder %v7124, 8.507059e+37
    %v7126 = vand.u32 %v7099, 2147483648
    %v7127 = vor.u32 1.1754944e-38, %v7126
    %v7128 = vsel %vm7125, %v7127, %v7123
    %v7129 = vmul.f32 1.0, %v7128
    %v7130 = vtanh.pop %v7048
    %v7131 = vtanh.pop %v7052
    %v7132 = vxor.u32 %v7049, 2147483648
    %v7133 = vxor.u32 %v7053, 2147483648
    %v7134 = vmul.f32 %v7132, 1.442695
    %v7135 = vpow.pop %v7134
    %v7136 = vmul.f32 %v7133, 1.442695
    %v7137 = vpow.pop %v7136
    %v7138 = vadd.f32 %v7135, 1.0
    %v7139 = vadd.f32 %v7137, 1.0
    %v7140 = vrcp.pop %v7138
    %v7141 = vmul.f32 %v7138, %v7140
    %v7142 = vsub.f32 1.0, %v7141
    %v7143 = vmul.f32 %v7140, %v7142
    %v7144 = vadd.f32 %v7140, %v7143
    %vm7145 = vweird.f32 %v7138
    %vm7146 = vweird.f32 %v7140
    %vm7147 = vmor %vm7145, %vm7146
    %v7148 = vsel %vm7147, %v7140, %v7144
    %v7149 = vand.u32 2147483647, %v7138
    %vm7150 = vcmp.eq.f32.partialorder %v7149, 8.507059e+37
    %v7151 = vand.u32 %v7138, 2147483648
    %v7152 = vor.u32 1.1754944e-38, %v7151
    %v7153 = vsel %vm7150, %v7152, %v7148
    %v7154 = vmul.f32 1.0, %v7153
    %v7155 = vrcp.pop %v7139
    %v7156 = vmul.f32 %v7139, %v7155
    %v7157 = vsub.f32 1.0, %v7156
    %v7158 = vmul.f32 %v7155, %v7157
    %v7159 = vadd.f32 %v7155, %v7158
    %vm7160 = vweird.f32 %v7139
    %vm7161 = vweird.f32 %v7155
    %vm7162 = vmor %vm7160, %vm7161
    %v7163 = vsel %vm7162, %v7155, %v7159
    %v7164 = vand.u32 2147483647, %v7139
    %vm7165 = vcmp.eq.f32.partialorder %v7164, 8.507059e+37
    %v7166 = vand.u32 %v7139, 2147483648
    %v7167 = vor.u32 1.1754944e-38, %v7166
    %v7168 = vsel %vm7165, %v7167, %v7163
    %v7169 = vmul.f32 1.0, %v7168
    %v7172 = vrot.slane %v6956, 7
    %v7173 = vrot.slane %v6957, 7
    %v7176 = vmul.f32 %v7114, %v7172
    %v7177 = vmul.f32 %v7129, %v7173
    %v7178 = vmul.f32 %v7076, %v7130
    %v7179 = vmul.f32 %v7091, %v7131
    %v7180 = vadd.f32 %v7176, %v7178
    %v7181 = vadd.f32 %v7177, %v7179
    %v7182 = vtanh.pop %v7180
    %v7183 = vtanh.pop %v7181
    %v7184 = vmul.f32 %v7154, %v7182
    %v7185 = vmul.f32 %v7169, %v7183
    %v7186 = vperm.slane %v7184, 1
    %v7187 = vperm.slane %v7185, 1
    %v7188 = vsel %vm984, %v7186, %v6964
    %v7189 = vsel %vm984, %v7187, %v6965
    %v7190 = vpack.c.bf16 %v7184, %v7184
    %v7191 = vpack.c.bf16 %v7185, %v7185
    %v7194 = vunpack.c.l.b16 %v7190
    %v7195 = vunpack.c.l.b16 %v7191
    %v7196 = vrot.slane %v7194, 1
    %v7197 = vsel %vm770, %v7195, %v7196
    %v7198 = vpack.c.b16 %v7197, %v7197
    %v7200 = vsel %vm552, %v7198, 0
    %7202 = vmatpush.bf16.msra.mxu0 0
    %7203 = vmatpush.bf16.msra.mxu0 0
    %7204 = vmatpush.bf16.msra.mxu0 0
    %7205 = vmatpush.bf16.msra.mxu0 0
    %7206 = vmatpush.bf16.msra.mxu0 %v6740
    %7207 = vmatpush.bf16.msra.mxu0 %v6736
    %7208 = vmatpush.bf16.msra.mxu0 %v6732
    %7209 = vmatpush.bf16.msra.mxu0 %v6728
    %7210 = vmatmul.bf16.gmra.mxu0 %v7200
    %v7211 = vpop.f32.mrf.mxu0
    %v7212 = vadd.f32 0.0, %v7211
    %v7213 = vpop.f32.mrf.mxu0
    %7214 = vdwg.mxu0
    %7215 = vmatpush.bf16.msra.mxu0 0
    %7216 = vmatpush.bf16.msra.mxu0 0
    %7217 = vmatpush.bf16.msra.mxu0 0
    %7218 = vmatpush.bf16.msra.mxu0 0
    %7219 = vmatpush.bf16.msra.mxu0 %v6741
    %7220 = vmatpush.bf16.msra.mxu0 %v6737
    %7221 = vmatpush.bf16.msra.mxu0 %v6733
    %7222 = vmatpush.bf16.msra.mxu0 %v6729
    %7223 = vmatmul.bf16.gmra.mxu0 %v7200
    %v7224 = vpop.f32.mrf.mxu0
    %v7225 = vadd.f32 0.0, %v7224
    %v7226 = vpop.f32.mrf.mxu0
    %7227 = vdwg.mxu0
    %7228 = vmatpush.bf16.msra.mxu0 0
    %7229 = vmatpush.bf16.msra.mxu0 0
    %7230 = vmatpush.bf16.msra.mxu0 0
    %7231 = vmatpush.bf16.msra.mxu0 0
    %7232 = vmatpush.bf16.msra.mxu0 %v6742
    %7233 = vmatpush.bf16.msra.mxu0 %v6738
    %7234 = vmatpush.bf16.msra.mxu0 %v6734
    %7235 = vmatpush.bf16.msra.mxu0 %v6730
    %7236 = vmatmul.bf16.gmra.mxu0 %v7200
    %v7237 = vpop.f32.mrf.mxu0
    %v7238 = vadd.f32 0.0, %v7237
    %v7239 = vpop.f32.mrf.mxu0
    %7240 = vdwg.mxu0
    %7241 = vmatpush.bf16.msra.mxu0 0
    %7242 = vmatpush.bf16.msra.mxu0 0
    %7243 = vmatpush.bf16.msra.mxu0 0
    %7244 = vmatpush.bf16.msra.mxu0 0
    %7245 = vmatpush.bf16.msra.mxu0 %v6743
    %7246 = vmatpush.bf16.msra.mxu0 %v6739
    %7247 = vmatpush.bf16.msra.mxu0 %v6735
    %7248 = vmatpush.bf16.msra.mxu0 %v6731
    %7249 = vmatmul.bf16.gmra.mxu0 %v7200
    %v7250 = vpop.f32.mrf.mxu0
    %v7251 = vadd.f32 0.0, %v7250
    %v7252 = vpop.f32.mrf.mxu0
    %7253 = vdwg.mxu0
    %v7258 = vrot.slane %v7212, 6
    %v7259 = vrot.slane %v7225, 6
    %v7260 = vrot.slane %v7238, 6
    %v7261 = vrot.slane %v7251, 6
    %v7262 = vrot.slane %v7212, 7
    %v7263 = vrot.slane %v7225, 7
    %v7264 = vrot.slane %v7238, 7
    %v7265 = vrot.slane %v7251, 7
    %v7274 = vadd.f32 %v6618, %v7258
    %v7275 = vadd.f32 %v6632, %v7259
    %v7276 = vadd.f32 %v6646, %v7260
    %v7277 = vadd.f32 %v6660, %v7261
    %v7278 = vadd.f32 %v6620, %v7262
    %v7279 = vadd.f32 %v6634, %v7263
    %v7280 = vadd.f32 %v6648, %v7264
    %v7281 = vadd.f32 %v6662, %v7265
    %v7282 = vxor.u32 %v7274, 2147483648
    %v7283 = vxor.u32 %v7278, 2147483648
    %v7284 = vmul.f32 %v7282, 1.442695
    %v7285 = vpow.pop %v7284
    %v7286 = vmul.f32 %v7283, 1.442695
    %v7287 = vpow.pop %v7286
    %v7288 = vadd.f32 %v7285, 1.0
    %v7289 = vadd.f32 %v7287, 1.0
    %v7290 = vrcp.pop %v7288
    %v7291 = vmul.f32 %v7288, %v7290
    %v7292 = vsub.f32 1.0, %v7291
    %v7293 = vmul.f32 %v7290, %v7292
    %v7294 = vadd.f32 %v7290, %v7293
    %vm7295 = vweird.f32 %v7288
    %vm7296 = vweird.f32 %v7290
    %vm7297 = vmor %vm7295, %vm7296
    %v7298 = vsel %vm7297, %v7290, %v7294
    %v7299 = vand.u32 2147483647, %v7288
    %vm7300 = vcmp.eq.f32.partialorder %v7299, 8.507059e+37
    %v7301 = vand.u32 %v7288, 2147483648
    %v7302 = vor.u32 1.1754944e-38, %v7301
    %v7303 = vsel %vm7300, %v7302, %v7298
    %v7304 = vmul.f32 1.0, %v7303
    %v7305 = vrcp.pop %v7289
    %v7306 = vmul.f32 %v7289, %v7305
    %v7307 = vsub.f32 1.0, %v7306
    %v7308 = vmul.f32 %v7305, %v7307
    %v7309 = vadd.f32 %v7305, %v7308
    %vm7310 = vweird.f32 %v7289
    %vm7311 = vweird.f32 %v7305
    %vm7312 = vmor %vm7310, %vm7311
    %v7313 = vsel %vm7312, %v7305, %v7309
    %v7314 = vand.u32 2147483647, %v7289
    %vm7315 = vcmp.eq.f32.partialorder %v7314, 8.507059e+37
    %v7316 = vand.u32 %v7289, 2147483648
    %v7317 = vor.u32 1.1754944e-38, %v7316
    %v7318 = vsel %vm7315, %v7317, %v7313
    %v7319 = vmul.f32 1.0, %v7318
    %v7320 = vxor.u32 %v7275, 2147483648
    %v7321 = vxor.u32 %v7279, 2147483648
    %v7322 = vmul.f32 %v7320, 1.442695
    %v7323 = vpow.pop %v7322
    %v7324 = vmul.f32 %v7321, 1.442695
    %v7325 = vpow.pop %v7324
    %v7326 = vadd.f32 %v7323, 1.0
    %v7327 = vadd.f32 %v7325, 1.0
    %v7328 = vrcp.pop %v7326
    %v7329 = vmul.f32 %v7326, %v7328
    %v7330 = vsub.f32 1.0, %v7329
    %v7331 = vmul.f32 %v7328, %v7330
    %v7332 = vadd.f32 %v7328, %v7331
    %vm7333 = vweird.f32 %v7326
    %vm7334 = vweird.f32 %v7328
    %vm7335 = vmor %vm7333, %vm7334
    %v7336 = vsel %vm7335, %v7328, %v7332
    %v7337 = vand.u32 2147483647, %v7326
    %vm7338 = vcmp.eq.f32.partialorder %v7337, 8.507059e+37
    %v7339 = vand.u32 %v7326, 2147483648
    %v7340 = vor.u32 1.1754944e-38, %v7339
    %v7341 = vsel %vm7338, %v7340, %v7336
    %v7342 = vmul.f32 1.0, %v7341
    %v7343 = vrcp.pop %v7327
    %v7344 = vmul.f32 %v7327, %v7343
    %v7345 = vsub.f32 1.0, %v7344
    %v7346 = vmul.f32 %v7343, %v7345
    %v7347 = vadd.f32 %v7343, %v7346
    %vm7348 = vweird.f32 %v7327
    %vm7349 = vweird.f32 %v7343
    %vm7350 = vmor %vm7348, %vm7349
    %v7351 = vsel %vm7350, %v7343, %v7347
    %v7352 = vand.u32 2147483647, %v7327
    %vm7353 = vcmp.eq.f32.partialorder %v7352, 8.507059e+37
    %v7354 = vand.u32 %v7327, 2147483648
    %v7355 = vor.u32 1.1754944e-38, %v7354
    %v7356 = vsel %vm7353, %v7355, %v7351
    %v7357 = vmul.f32 1.0, %v7356
    %v7358 = vtanh.pop %v7276
    %v7359 = vtanh.pop %v7280
    %v7360 = vxor.u32 %v7277, 2147483648
    %v7361 = vxor.u32 %v7281, 2147483648
    %v7362 = vmul.f32 %v7360, 1.442695
    %v7363 = vpow.pop %v7362
    %v7364 = vmul.f32 %v7361, 1.442695
    %v7365 = vpow.pop %v7364
    %v7366 = vadd.f32 %v7363, 1.0
    %v7367 = vadd.f32 %v7365, 1.0
    %v7368 = vrcp.pop %v7366
    %v7369 = vmul.f32 %v7366, %v7368
    %v7370 = vsub.f32 1.0, %v7369
    %v7371 = vmul.f32 %v7368, %v7370
    %v7372 = vadd.f32 %v7368, %v7371
    %vm7373 = vweird.f32 %v7366
    %vm7374 = vweird.f32 %v7368
    %vm7375 = vmor %vm7373, %vm7374
    %v7376 = vsel %vm7375, %v7368, %v7372
    %v7377 = vand.u32 2147483647, %v7366
    %vm7378 = vcmp.eq.f32.partialorder %v7377, 8.507059e+37
    %v7379 = vand.u32 %v7366, 2147483648
    %v7380 = vor.u32 1.1754944e-38, %v7379
    %v7381 = vsel %vm7378, %v7380, %v7376
    %v7382 = vmul.f32 1.0, %v7381
    %v7383 = vrcp.pop %v7367
    %v7384 = vmul.f32 %v7367, %v7383
    %v7385 = vsub.f32 1.0, %v7384
    %v7386 = vmul.f32 %v7383, %v7385
    %v7387 = vadd.f32 %v7383, %v7386
    %vm7388 = vweird.f32 %v7367
    %vm7389 = vweird.f32 %v7383
    %vm7390 = vmor %vm7388, %vm7389
    %v7391 = vsel %vm7390, %v7383, %v7387
    %v7392 = vand.u32 2147483647, %v7367
    %vm7393 = vcmp.eq.f32.partialorder %v7392, 8.507059e+37
    %v7394 = vand.u32 %v7367, 2147483648
    %v7395 = vor.u32 1.1754944e-38, %v7394
    %v7396 = vsel %vm7393, %v7395, %v7391
    %v7397 = vmul.f32 1.0, %v7396
    %v7400 = vrot.slane %v7180, 7
    %v7401 = vrot.slane %v7181, 7
    %v7404 = vmul.f32 %v7342, %v7400
    %v7405 = vmul.f32 %v7357, %v7401
    %v7406 = vmul.f32 %v7304, %v7358
    %v7407 = vmul.f32 %v7319, %v7359
    %v7408 = vadd.f32 %v7404, %v7406
    %v7409 = vadd.f32 %v7405, %v7407
    %v7410 = vtanh.pop %v7408
    %v7411 = vtanh.pop %v7409
    %v7412 = vmul.f32 %v7382, %v7410
    %v7413 = vmul.f32 %v7397, %v7411
    %v7414 = vperm.slane %v7412, 2
    %v7415 = vperm.slane %v7413, 2
    %v7416 = vsel %vm1213, %v7414, %v7188
    %v7417 = vsel %vm1213, %v7415, %v7189
    %v7418 = vpack.c.bf16 %v7412, %v7412
    %v7419 = vpack.c.bf16 %v7413, %v7413
    %v7422 = vunpack.c.l.b16 %v7418
    %v7423 = vunpack.c.l.b16 %v7419
    %v7424 = vrot.slane %v7422, 2
    %v7425 = vrot.slane %v7423, 1
    %v7426 = vsel %vm770, %v7425, %v7424
    %v7427 = vpack.c.b16 %v7426, %v7426
    %v7429 = vsel %vm552, %v7427, 0
    %7431 = vmatpush.bf16.msra.mxu0 0
    %7432 = vmatpush.bf16.msra.mxu0 0
    %7433 = vmatpush.bf16.msra.mxu0 0
    %7434 = vmatpush.bf16.msra.mxu0 0
    %7435 = vmatpush.bf16.msra.mxu0 %v6740
    %7436 = vmatpush.bf16.msra.mxu0 %v6736
    %7437 = vmatpush.bf16.msra.mxu0 %v6732
    %7438 = vmatpush.bf16.msra.mxu0 %v6728
    %7439 = vmatmul.bf16.gmra.mxu0 %v7429
    %v7440 = vpop.f32.mrf.mxu0
    %v7441 = vadd.f32 0.0, %v7440
    %v7442 = vpop.f32.mrf.mxu0
    %7443 = vdwg.mxu0
    %7444 = vmatpush.bf16.msra.mxu0 0
    %7445 = vmatpush.bf16.msra.mxu0 0
    %7446 = vmatpush.bf16.msra.mxu0 0
    %7447 = vmatpush.bf16.msra.mxu0 0
    %7448 = vmatpush.bf16.msra.mxu0 %v6741
    %7449 = vmatpush.bf16.msra.mxu0 %v6737
    %7450 = vmatpush.bf16.msra.mxu0 %v6733
    %7451 = vmatpush.bf16.msra.mxu0 %v6729
    %7452 = vmatmul.bf16.gmra.mxu0 %v7429
    %v7453 = vpop.f32.mrf.mxu0
    %v7454 = vadd.f32 0.0, %v7453
    %v7455 = vpop.f32.mrf.mxu0
    %7456 = vdwg.mxu0
    %7457 = vmatpush.bf16.msra.mxu0 0
    %7458 = vmatpush.bf16.msra.mxu0 0
    %7459 = vmatpush.bf16.msra.mxu0 0
    %7460 = vmatpush.bf16.msra.mxu0 0
    %7461 = vmatpush.bf16.msra.mxu0 %v6742
    %7462 = vmatpush.bf16.msra.mxu0 %v6738
    %7463 = vmatpush.bf16.msra.mxu0 %v6734
    %7464 = vmatpush.bf16.msra.mxu0 %v6730
    %7465 = vmatmul.bf16.gmra.mxu0 %v7429
    %v7466 = vpop.f32.mrf.mxu0
    %v7467 = vadd.f32 0.0, %v7466
    %v7468 = vpop.f32.mrf.mxu0
    %7469 = vdwg.mxu0
    %7470 = vmatpush.bf16.msra.mxu0 0
    %7471 = vmatpush.bf16.msra.mxu0 0
    %7472 = vmatpush.bf16.msra.mxu0 0
    %7473 = vmatpush.bf16.msra.mxu0 0
    %7474 = vmatpush.bf16.msra.mxu0 %v6743
    %7475 = vmatpush.bf16.msra.mxu0 %v6739
    %7476 = vmatpush.bf16.msra.mxu0 %v6735
    %7477 = vmatpush.bf16.msra.mxu0 %v6731
    %7478 = vmatmul.bf16.gmra.mxu0 %v7429
    %v7479 = vpop.f32.mrf.mxu0
    %v7480 = vadd.f32 0.0, %v7479
    %v7481 = vpop.f32.mrf.mxu0
    %7482 = vdwg.mxu0
    %v7487 = vrot.slane %v7441, 5
    %v7488 = vrot.slane %v7454, 5
    %v7489 = vrot.slane %v7467, 5
    %v7490 = vrot.slane %v7480, 5
    %v7491 = vrot.slane %v7441, 6
    %v7492 = vrot.slane %v7454, 6
    %v7493 = vrot.slane %v7467, 6
    %v7494 = vrot.slane %v7480, 6
    %v7503 = vadd.f32 %v6618, %v7487
    %v7504 = vadd.f32 %v6632, %v7488
    %v7505 = vadd.f32 %v6646, %v7489
    %v7506 = vadd.f32 %v6660, %v7490
    %v7507 = vadd.f32 %v6620, %v7491
    %v7508 = vadd.f32 %v6634, %v7492
    %v7509 = vadd.f32 %v6648, %v7493
    %v7510 = vadd.f32 %v6662, %v7494
    %v7511 = vxor.u32 %v7503, 2147483648
    %v7512 = vxor.u32 %v7507, 2147483648
    %v7513 = vmul.f32 %v7511, 1.442695
    %v7514 = vpow.pop %v7513
    %v7515 = vmul.f32 %v7512, 1.442695
    %v7516 = vpow.pop %v7515
    %v7517 = vadd.f32 %v7514, 1.0
    %v7518 = vadd.f32 %v7516, 1.0
    %v7519 = vrcp.pop %v7517
    %v7520 = vmul.f32 %v7517, %v7519
    %v7521 = vsub.f32 1.0, %v7520
    %v7522 = vmul.f32 %v7519, %v7521
    %v7523 = vadd.f32 %v7519, %v7522
    %vm7524 = vweird.f32 %v7517
    %vm7525 = vweird.f32 %v7519
    %vm7526 = vmor %vm7524, %vm7525
    %v7527 = vsel %vm7526, %v7519, %v7523
    %v7528 = vand.u32 2147483647, %v7517
    %vm7529 = vcmp.eq.f32.partialorder %v7528, 8.507059e+37
    %v7530 = vand.u32 %v7517, 2147483648
    %v7531 = vor.u32 1.1754944e-38, %v7530
    %v7532 = vsel %vm7529, %v7531, %v7527
    %v7533 = vmul.f32 1.0, %v7532
    %v7534 = vrcp.pop %v7518
    %v7535 = vmul.f32 %v7518, %v7534
    %v7536 = vsub.f32 1.0, %v7535
    %v7537 = vmul.f32 %v7534, %v7536
    %v7538 = vadd.f32 %v7534, %v7537
    %vm7539 = vweird.f32 %v7518
    %vm7540 = vweird.f32 %v7534
    %vm7541 = vmor %vm7539, %vm7540
    %v7542 = vsel %vm7541, %v7534, %v7538
    %v7543 = vand.u32 2147483647, %v7518
    %vm7544 = vcmp.eq.f32.partialorder %v7543, 8.507059e+37
    %v7545 = vand.u32 %v7518, 2147483648
    %v7546 = vor.u32 1.1754944e-38, %v7545
    %v7547 = vsel %vm7544, %v7546, %v7542
    %v7548 = vmul.f32 1.0, %v7547
    %v7549 = vxor.u32 %v7504, 2147483648
    %v7550 = vxor.u32 %v7508, 2147483648
    %v7551 = vmul.f32 %v7549, 1.442695
    %v7552 = vpow.pop %v7551
    %v7553 = vmul.f32 %v7550, 1.442695
    %v7554 = vpow.pop %v7553
    %v7555 = vadd.f32 %v7552, 1.0
    %v7556 = vadd.f32 %v7554, 1.0
    %v7557 = vrcp.pop %v7555
    %v7558 = vmul.f32 %v7555, %v7557
    %v7559 = vsub.f32 1.0, %v7558
    %v7560 = vmul.f32 %v7557, %v7559
    %v7561 = vadd.f32 %v7557, %v7560
    %vm7562 = vweird.f32 %v7555
    %vm7563 = vweird.f32 %v7557
    %vm7564 = vmor %vm7562, %vm7563
    %v7565 = vsel %vm7564, %v7557, %v7561
    %v7566 = vand.u32 2147483647, %v7555
    %vm7567 = vcmp.eq.f32.partialorder %v7566, 8.507059e+37
    %v7568 = vand.u32 %v7555, 2147483648
    %v7569 = vor.u32 1.1754944e-38, %v7568
    %v7570 = vsel %vm7567, %v7569, %v7565
    %v7571 = vmul.f32 1.0, %v7570
    %v7572 = vrcp.pop %v7556
    %v7573 = vmul.f32 %v7556, %v7572
    %v7574 = vsub.f32 1.0, %v7573
    %v7575 = vmul.f32 %v7572, %v7574
    %v7576 = vadd.f32 %v7572, %v7575
    %vm7577 = vweird.f32 %v7556
    %vm7578 = vweird.f32 %v7572
    %vm7579 = vmor %vm7577, %vm7578
    %v7580 = vsel %vm7579, %v7572, %v7576
    %v7581 = vand.u32 2147483647, %v7556
    %vm7582 = vcmp.eq.f32.partialorder %v7581, 8.507059e+37
    %v7583 = vand.u32 %v7556, 2147483648
    %v7584 = vor.u32 1.1754944e-38, %v7583
    %v7585 = vsel %vm7582, %v7584, %v7580
    %v7586 = vmul.f32 1.0, %v7585
    %v7587 = vtanh.pop %v7505
    %v7588 = vtanh.pop %v7509
    %v7589 = vxor.u32 %v7506, 2147483648
    %v7590 = vxor.u32 %v7510, 2147483648
    %v7591 = vmul.f32 %v7589, 1.442695
    %v7592 = vpow.pop %v7591
    %v7593 = vmul.f32 %v7590, 1.442695
    %v7594 = vpow.pop %v7593
    %v7595 = vadd.f32 %v7592, 1.0
    %v7596 = vadd.f32 %v7594, 1.0
    %v7597 = vrcp.pop %v7595
    %v7598 = vmul.f32 %v7595, %v7597
    %v7599 = vsub.f32 1.0, %v7598
    %v7600 = vmul.f32 %v7597, %v7599
    %v7601 = vadd.f32 %v7597, %v7600
    %vm7602 = vweird.f32 %v7595
    %vm7603 = vweird.f32 %v7597
    %vm7604 = vmor %vm7602, %vm7603
    %v7605 = vsel %vm7604, %v7597, %v7601
    %v7606 = vand.u32 2147483647, %v7595
    %vm7607 = vcmp.eq.f32.partialorder %v7606, 8.507059e+37
    %v7608 = vand.u32 %v7595, 2147483648
    %v7609 = vor.u32 1.1754944e-38, %v7608
    %v7610 = vsel %vm7607, %v7609, %v7605
    %v7611 = vmul.f32 1.0, %v7610
    %v7612 = vrcp.pop %v7596
    %v7613 = vmul.f32 %v7596, %v7612
    %v7614 = vsub.f32 1.0, %v7613
    %v7615 = vmul.f32 %v7612, %v7614
    %v7616 = vadd.f32 %v7612, %v7615
    %vm7617 = vweird.f32 %v7596
    %vm7618 = vweird.f32 %v7612
    %vm7619 = vmor %vm7617, %vm7618
    %v7620 = vsel %vm7619, %v7612, %v7616
    %v7621 = vand.u32 2147483647, %v7596
    %vm7622 = vcmp.eq.f32.partialorder %v7621, 8.507059e+37
    %v7623 = vand.u32 %v7596, 2147483648
    %v7624 = vor.u32 1.1754944e-38, %v7623
    %v7625 = vsel %vm7622, %v7624, %v7620
    %v7626 = vmul.f32 1.0, %v7625
    %v7629 = vrot.slane %v7408, 7
    %v7630 = vrot.slane %v7409, 7
    %v7633 = vmul.f32 %v7571, %v7629
    %v7634 = vmul.f32 %v7586, %v7630
    %v7635 = vmul.f32 %v7533, %v7587
    %v7636 = vmul.f32 %v7548, %v7588
    %v7637 = vadd.f32 %v7633, %v7635
    %v7638 = vadd.f32 %v7634, %v7636
    %v7639 = vtanh.pop %v7637
    %v7640 = vtanh.pop %v7638
    %v7641 = vmul.f32 %v7611, %v7639
    %v7642 = vmul.f32 %v7626, %v7640
    %v7643 = vperm.slane %v7641, 3
    %v7644 = vperm.slane %v7642, 3
    %v7645 = vsel %vm1443, %v7643, %v7416
    %v7646 = vsel %vm1443, %v7644, %v7417
    %v7647 = vpack.c.bf16 %v7641, %v7641
    %v7648 = vpack.c.bf16 %v7642, %v7642
    %v7651 = vunpack.c.l.b16 %v7647
    %v7652 = vunpack.c.l.b16 %v7648
    %v7653 = vrot.slane %v7651, 3
    %v7654 = vrot.slane %v7652, 2
    %v7655 = vsel %vm770, %v7654, %v7653
    %v7656 = vpack.c.b16 %v7655, %v7655
    %v7658 = vsel %vm552, %v7656, 0
    %7660 = vmatpush.bf16.msra.mxu0 0
    %7661 = vmatpush.bf16.msra.mxu0 0
    %7662 = vmatpush.bf16.msra.mxu0 0
    %7663 = vmatpush.bf16.msra.mxu0 0
    %7664 = vmatpush.bf16.msra.mxu0 %v6740
    %7665 = vmatpush.bf16.msra.mxu0 %v6736
    %7666 = vmatpush.bf16.msra.mxu0 %v6732
    %7667 = vmatpush.bf16.msra.mxu0 %v6728
    %7668 = vmatmul.bf16.gmra.mxu0 %v7658
    %v7669 = vpop.f32.mrf.mxu0
    %v7670 = vadd.f32 0.0, %v7669
    %v7671 = vpop.f32.mrf.mxu0
    %7672 = vdwg.mxu0
    %7673 = vmatpush.bf16.msra.mxu0 0
    %7674 = vmatpush.bf16.msra.mxu0 0
    %7675 = vmatpush.bf16.msra.mxu0 0
    %7676 = vmatpush.bf16.msra.mxu0 0
    %7677 = vmatpush.bf16.msra.mxu0 %v6741
    %7678 = vmatpush.bf16.msra.mxu0 %v6737
    %7679 = vmatpush.bf16.msra.mxu0 %v6733
    %7680 = vmatpush.bf16.msra.mxu0 %v6729
    %7681 = vmatmul.bf16.gmra.mxu0 %v7658
    %v7682 = vpop.f32.mrf.mxu0
    %v7683 = vadd.f32 0.0, %v7682
    %v7684 = vpop.f32.mrf.mxu0
    %7685 = vdwg.mxu0
    %7686 = vmatpush.bf16.msra.mxu0 0
    %7687 = vmatpush.bf16.msra.mxu0 0
    %7688 = vmatpush.bf16.msra.mxu0 0
    %7689 = vmatpush.bf16.msra.mxu0 0
    %7690 = vmatpush.bf16.msra.mxu0 %v6742
    %7691 = vmatpush.bf16.msra.mxu0 %v6738
    %7692 = vmatpush.bf16.msra.mxu0 %v6734
    %7693 = vmatpush.bf16.msra.mxu0 %v6730
    %7694 = vmatmul.bf16.gmra.mxu0 %v7658
    %v7695 = vpop.f32.mrf.mxu0
    %v7696 = vadd.f32 0.0, %v7695
    %v7697 = vpop.f32.mrf.mxu0
    %7698 = vdwg.mxu0
    %7699 = vmatpush.bf16.msra.mxu0 0
    %7700 = vmatpush.bf16.msra.mxu0 0
    %7701 = vmatpush.bf16.msra.mxu0 0
    %7702 = vmatpush.bf16.msra.mxu0 0
    %7703 = vmatpush.bf16.msra.mxu0 %v6743
    %7704 = vmatpush.bf16.msra.mxu0 %v6739
    %7705 = vmatpush.bf16.msra.mxu0 %v6735
    %7706 = vmatpush.bf16.msra.mxu0 %v6731
    %7707 = vmatmul.bf16.gmra.mxu0 %v7658
    %v7708 = vpop.f32.mrf.mxu0
    %v7709 = vadd.f32 0.0, %v7708
    %v7710 = vpop.f32.mrf.mxu0
    %7711 = vdwg.mxu0
    %v7716 = vrot.slane %v7670, 4
    %v7717 = vrot.slane %v7683, 4
    %v7718 = vrot.slane %v7696, 4
    %v7719 = vrot.slane %v7709, 4
    %v7720 = vrot.slane %v7670, 5
    %v7721 = vrot.slane %v7683, 5
    %v7722 = vrot.slane %v7696, 5
    %v7723 = vrot.slane %v7709, 5
    %v7732 = vadd.f32 %v6618, %v7716
    %v7733 = vadd.f32 %v6632, %v7717
    %v7734 = vadd.f32 %v6646, %v7718
    %v7735 = vadd.f32 %v6660, %v7719
    %v7736 = vadd.f32 %v6620, %v7720
    %v7737 = vadd.f32 %v6634, %v7721
    %v7738 = vadd.f32 %v6648, %v7722
    %v7739 = vadd.f32 %v6662, %v7723
    %v7740 = vxor.u32 %v7732, 2147483648
    %v7741 = vxor.u32 %v7736, 2147483648
    %v7742 = vmul.f32 %v7740, 1.442695
    %v7743 = vpow.pop %v7742
    %v7744 = vmul.f32 %v7741, 1.442695
    %v7745 = vpow.pop %v7744
    %v7746 = vadd.f32 %v7743, 1.0
    %v7747 = vadd.f32 %v7745, 1.0
    %v7748 = vrcp.pop %v7746
    %v7749 = vmul.f32 %v7746, %v7748
    %v7750 = vsub.f32 1.0, %v7749
    %v7751 = vmul.f32 %v7748, %v7750
    %v7752 = vadd.f32 %v7748, %v7751
    %vm7753 = vweird.f32 %v7746
    %vm7754 = vweird.f32 %v7748
    %vm7755 = vmor %vm7753, %vm7754
    %v7756 = vsel %vm7755, %v7748, %v7752
    %v7757 = vand.u32 2147483647, %v7746
    %vm7758 = vcmp.eq.f32.partialorder %v7757, 8.507059e+37
    %v7759 = vand.u32 %v7746, 2147483648
    %v7760 = vor.u32 1.1754944e-38, %v7759
    %v7761 = vsel %vm7758, %v7760, %v7756
    %v7762 = vmul.f32 1.0, %v7761
    %v7763 = vrcp.pop %v7747
    %v7764 = vmul.f32 %v7747, %v7763
    %v7765 = vsub.f32 1.0, %v7764
    %v7766 = vmul.f32 %v7763, %v7765
    %v7767 = vadd.f32 %v7763, %v7766
    %vm7768 = vweird.f32 %v7747
    %vm7769 = vweird.f32 %v7763
    %vm7770 = vmor %vm7768, %vm7769
    %v7771 = vsel %vm7770, %v7763, %v7767
    %v7772 = vand.u32 2147483647, %v7747
    %vm7773 = vcmp.eq.f32.partialorder %v7772, 8.507059e+37
    %v7774 = vand.u32 %v7747, 2147483648
    %v7775 = vor.u32 1.1754944e-38, %v7774
    %v7776 = vsel %vm7773, %v7775, %v7771
    %v7777 = vmul.f32 1.0, %v7776
    %v7778 = vxor.u32 %v7733, 2147483648
    %v7779 = vxor.u32 %v7737, 2147483648
    %v7780 = vmul.f32 %v7778, 1.442695
    %v7781 = vpow.pop %v7780
    %v7782 = vmul.f32 %v7779, 1.442695
    %v7783 = vpow.pop %v7782
    %v7784 = vadd.f32 %v7781, 1.0
    %v7785 = vadd.f32 %v7783, 1.0
    %v7786 = vrcp.pop %v7784
    %v7787 = vmul.f32 %v7784, %v7786
    %v7788 = vsub.f32 1.0, %v7787
    %v7789 = vmul.f32 %v7786, %v7788
    %v7790 = vadd.f32 %v7786, %v7789
    %vm7791 = vweird.f32 %v7784
    %vm7792 = vweird.f32 %v7786
    %vm7793 = vmor %vm7791, %vm7792
    %v7794 = vsel %vm7793, %v7786, %v7790
    %v7795 = vand.u32 2147483647, %v7784
    %vm7796 = vcmp.eq.f32.partialorder %v7795, 8.507059e+37
    %v7797 = vand.u32 %v7784, 2147483648
    %v7798 = vor.u32 1.1754944e-38, %v7797
    %v7799 = vsel %vm7796, %v7798, %v7794
    %v7800 = vmul.f32 1.0, %v7799
    %v7801 = vrcp.pop %v7785
    %v7802 = vmul.f32 %v7785, %v7801
    %v7803 = vsub.f32 1.0, %v7802
    %v7804 = vmul.f32 %v7801, %v7803
    %v7805 = vadd.f32 %v7801, %v7804
    %vm7806 = vweird.f32 %v7785
    %vm7807 = vweird.f32 %v7801
    %vm7808 = vmor %vm7806, %vm7807
    %v7809 = vsel %vm7808, %v7801, %v7805
    %v7810 = vand.u32 2147483647, %v7785
    %vm7811 = vcmp.eq.f32.partialorder %v7810, 8.507059e+37
    %v7812 = vand.u32 %v7785, 2147483648
    %v7813 = vor.u32 1.1754944e-38, %v7812
    %v7814 = vsel %vm7811, %v7813, %v7809
    %v7815 = vmul.f32 1.0, %v7814
    %v7816 = vtanh.pop %v7734
    %v7817 = vtanh.pop %v7738
    %v7818 = vxor.u32 %v7735, 2147483648
    %v7819 = vxor.u32 %v7739, 2147483648
    %v7820 = vmul.f32 %v7818, 1.442695
    %v7821 = vpow.pop %v7820
    %v7822 = vmul.f32 %v7819, 1.442695
    %v7823 = vpow.pop %v7822
    %v7824 = vadd.f32 %v7821, 1.0
    %v7825 = vadd.f32 %v7823, 1.0
    %v7826 = vrcp.pop %v7824
    %v7827 = vmul.f32 %v7824, %v7826
    %v7828 = vsub.f32 1.0, %v7827
    %v7829 = vmul.f32 %v7826, %v7828
    %v7830 = vadd.f32 %v7826, %v7829
    %vm7831 = vweird.f32 %v7824
    %vm7832 = vweird.f32 %v7826
    %vm7833 = vmor %vm7831, %vm7832
    %v7834 = vsel %vm7833, %v7826, %v7830
    %v7835 = vand.u32 2147483647, %v7824
    %vm7836 = vcmp.eq.f32.partialorder %v7835, 8.507059e+37
    %v7837 = vand.u32 %v7824, 2147483648
    %v7838 = vor.u32 1.1754944e-38, %v7837
    %v7839 = vsel %vm7836, %v7838, %v7834
    %v7840 = vmul.f32 1.0, %v7839
    %v7841 = vrcp.pop %v7825
    %v7842 = vmul.f32 %v7825, %v7841
    %v7843 = vsub.f32 1.0, %v7842
    %v7844 = vmul.f32 %v7841, %v7843
    %v7845 = vadd.f32 %v7841, %v7844
    %vm7846 = vweird.f32 %v7825
    %vm7847 = vweird.f32 %v7841
    %vm7848 = vmor %vm7846, %vm7847
    %v7849 = vsel %vm7848, %v7841, %v7845
    %v7850 = vand.u32 2147483647, %v7825
    %vm7851 = vcmp.eq.f32.partialorder %v7850, 8.507059e+37
    %v7852 = vand.u32 %v7825, 2147483648
    %v7853 = vor.u32 1.1754944e-38, %v7852
    %v7854 = vsel %vm7851, %v7853, %v7849
    %v7855 = vmul.f32 1.0, %v7854
    %v7858 = vrot.slane %v7637, 7
    %v7859 = vrot.slane %v7638, 7
    %v7862 = vmul.f32 %v7800, %v7858
    %v7863 = vmul.f32 %v7815, %v7859
    %v7864 = vmul.f32 %v7762, %v7816
    %v7865 = vmul.f32 %v7777, %v7817
    %v7866 = vadd.f32 %v7862, %v7864
    %v7867 = vadd.f32 %v7863, %v7865
    %v7868 = vtanh.pop %v7866
    %v7869 = vtanh.pop %v7867
    %v7870 = vmul.f32 %v7840, %v7868
    %v7871 = vmul.f32 %v7855, %v7869
    %v7872 = vperm.slane %v7870, 4
    %v7873 = vperm.slane %v7871, 4
    %v7874 = vsel %vm1673, %v7872, %v7645
    %v7875 = vsel %vm1673, %v7873, %v7646
    %v7876 = vpack.c.bf16 %v7870, %v7870
    %v7877 = vpack.c.bf16 %v7871, %v7871
    %v7880 = vunpack.c.l.b16 %v7876
    %v7881 = vunpack.c.l.b16 %v7877
    %v7882 = vrot.slane %v7880, 4
    %v7883 = vrot.slane %v7881, 3
    %v7884 = vsel %vm770, %v7883, %v7882
    %v7885 = vpack.c.b16 %v7884, %v7884
    %v7887 = vsel %vm552, %v7885, 0
    %7889 = vmatpush.bf16.msra.mxu0 0
    %7890 = vmatpush.bf16.msra.mxu0 0
    %7891 = vmatpush.bf16.msra.mxu0 0
    %7892 = vmatpush.bf16.msra.mxu0 0
    %7893 = vmatpush.bf16.msra.mxu0 %v6740
    %7894 = vmatpush.bf16.msra.mxu0 %v6736
    %7895 = vmatpush.bf16.msra.mxu0 %v6732
    %7896 = vmatpush.bf16.msra.mxu0 %v6728
    %7897 = vmatmul.bf16.gmra.mxu0 %v7887
    %v7898 = vpop.f32.mrf.mxu0
    %v7899 = vadd.f32 0.0, %v7898
    %v7900 = vpop.f32.mrf.mxu0
    %7901 = vdwg.mxu0
    %7902 = vmatpush.bf16.msra.mxu0 0
    %7903 = vmatpush.bf16.msra.mxu0 0
    %7904 = vmatpush.bf16.msra.mxu0 0
    %7905 = vmatpush.bf16.msra.mxu0 0
    %7906 = vmatpush.bf16.msra.mxu0 %v6741
    %7907 = vmatpush.bf16.msra.mxu0 %v6737
    %7908 = vmatpush.bf16.msra.mxu0 %v6733
    %7909 = vmatpush.bf16.msra.mxu0 %v6729
    %7910 = vmatmul.bf16.gmra.mxu0 %v7887
    %v7911 = vpop.f32.mrf.mxu0
    %v7912 = vadd.f32 0.0, %v7911
    %v7913 = vpop.f32.mrf.mxu0
    %7914 = vdwg.mxu0
    %7915 = vmatpush.bf16.msra.mxu0 0
    %7916 = vmatpush.bf16.msra.mxu0 0
    %7917 = vmatpush.bf16.msra.mxu0 0
    %7918 = vmatpush.bf16.msra.mxu0 0
    %7919 = vmatpush.bf16.msra.mxu0 %v6742
    %7920 = vmatpush.bf16.msra.mxu0 %v6738
    %7921 = vmatpush.bf16.msra.mxu0 %v6734
    %7922 = vmatpush.bf16.msra.mxu0 %v6730
    %7923 = vmatmul.bf16.gmra.mxu0 %v7887
    %v7924 = vpop.f32.mrf.mxu0
    %v7925 = vadd.f32 0.0, %v7924
    %v7926 = vpop.f32.mrf.mxu0
    %7927 = vdwg.mxu0
    %7928 = vmatpush.bf16.msra.mxu0 0
    %7929 = vmatpush.bf16.msra.mxu0 0
    %7930 = vmatpush.bf16.msra.mxu0 0
    %7931 = vmatpush.bf16.msra.mxu0 0
    %7932 = vmatpush.bf16.msra.mxu0 %v6743
    %7933 = vmatpush.bf16.msra.mxu0 %v6739
    %7934 = vmatpush.bf16.msra.mxu0 %v6735
    %7935 = vmatpush.bf16.msra.mxu0 %v6731
    %7936 = vmatmul.bf16.gmra.mxu0 %v7887
    %v7937 = vpop.f32.mrf.mxu0
    %v7938 = vadd.f32 0.0, %v7937
    %v7939 = vpop.f32.mrf.mxu0
    %7940 = vdwg.mxu0
    %v7945 = vrot.slane %v7899, 3
    %v7946 = vrot.slane %v7912, 3
    %v7947 = vrot.slane %v7925, 3
    %v7948 = vrot.slane %v7938, 3
    %v7949 = vrot.slane %v7899, 4
    %v7950 = vrot.slane %v7912, 4
    %v7951 = vrot.slane %v7925, 4
    %v7952 = vrot.slane %v7938, 4
    %v7961 = vadd.f32 %v6618, %v7945
    %v7962 = vadd.f32 %v6632, %v7946
    %v7963 = vadd.f32 %v6646, %v7947
    %v7964 = vadd.f32 %v6660, %v7948
    %v7965 = vadd.f32 %v6620, %v7949
    %v7966 = vadd.f32 %v6634, %v7950
    %v7967 = vadd.f32 %v6648, %v7951
    %v7968 = vadd.f32 %v6662, %v7952
    %v7969 = vxor.u32 %v7961, 2147483648
    %v7970 = vxor.u32 %v7965, 2147483648
    %v7971 = vmul.f32 %v7969, 1.442695
    %v7972 = vpow.pop %v7971
    %v7973 = vmul.f32 %v7970, 1.442695
    %v7974 = vpow.pop %v7973
    %v7975 = vadd.f32 %v7972, 1.0
    %v7976 = vadd.f32 %v7974, 1.0
    %v7977 = vrcp.pop %v7975
    %v7978 = vmul.f32 %v7975, %v7977
    %v7979 = vsub.f32 1.0, %v7978
    %v7980 = vmul.f32 %v7977, %v7979
    %v7981 = vadd.f32 %v7977, %v7980
    %vm7982 = vweird.f32 %v7975
    %vm7983 = vweird.f32 %v7977
    %vm7984 = vmor %vm7982, %vm7983
    %v7985 = vsel %vm7984, %v7977, %v7981
    %v7986 = vand.u32 2147483647, %v7975
    %vm7987 = vcmp.eq.f32.partialorder %v7986, 8.507059e+37
    %v7988 = vand.u32 %v7975, 2147483648
    %v7989 = vor.u32 1.1754944e-38, %v7988
    %v7990 = vsel %vm7987, %v7989, %v7985
    %v7991 = vmul.f32 1.0, %v7990
    %v7992 = vrcp.pop %v7976
    %v7993 = vmul.f32 %v7976, %v7992
    %v7994 = vsub.f32 1.0, %v7993
    %v7995 = vmul.f32 %v7992, %v7994
    %v7996 = vadd.f32 %v7992, %v7995
    %vm7997 = vweird.f32 %v7976
    %vm7998 = vweird.f32 %v7992
    %vm7999 = vmor %vm7997, %vm7998
    %v8000 = vsel %vm7999, %v7992, %v7996
    %v8001 = vand.u32 2147483647, %v7976
    %vm8002 = vcmp.eq.f32.partialorder %v8001, 8.507059e+37
    %v8003 = vand.u32 %v7976, 2147483648
    %v8004 = vor.u32 1.1754944e-38, %v8003
    %v8005 = vsel %vm8002, %v8004, %v8000
    %v8006 = vmul.f32 1.0, %v8005
    %v8007 = vxor.u32 %v7962, 2147483648
    %v8008 = vxor.u32 %v7966, 2147483648
    %v8009 = vmul.f32 %v8007, 1.442695
    %v8010 = vpow.pop %v8009
    %v8011 = vmul.f32 %v8008, 1.442695
    %v8012 = vpow.pop %v8011
    %v8013 = vadd.f32 %v8010, 1.0
    %v8014 = vadd.f32 %v8012, 1.0
    %v8015 = vrcp.pop %v8013
    %v8016 = vmul.f32 %v8013, %v8015
    %v8017 = vsub.f32 1.0, %v8016
    %v8018 = vmul.f32 %v8015, %v8017
    %v8019 = vadd.f32 %v8015, %v8018
    %vm8020 = vweird.f32 %v8013
    %vm8021 = vweird.f32 %v8015
    %vm8022 = vmor %vm8020, %vm8021
    %v8023 = vsel %vm8022, %v8015, %v8019
    %v8024 = vand.u32 2147483647, %v8013
    %vm8025 = vcmp.eq.f32.partialorder %v8024, 8.507059e+37
    %v8026 = vand.u32 %v8013, 2147483648
    %v8027 = vor.u32 1.1754944e-38, %v8026
    %v8028 = vsel %vm8025, %v8027, %v8023
    %v8029 = vmul.f32 1.0, %v8028
    %v8030 = vrcp.pop %v8014
    %v8031 = vmul.f32 %v8014, %v8030
    %v8032 = vsub.f32 1.0, %v8031
    %v8033 = vmul.f32 %v8030, %v8032
    %v8034 = vadd.f32 %v8030, %v8033
    %vm8035 = vweird.f32 %v8014
    %vm8036 = vweird.f32 %v8030
    %vm8037 = vmor %vm8035, %vm8036
    %v8038 = vsel %vm8037, %v8030, %v8034
    %v8039 = vand.u32 2147483647, %v8014
    %vm8040 = vcmp.eq.f32.partialorder %v8039, 8.507059e+37
    %v8041 = vand.u32 %v8014, 2147483648
    %v8042 = vor.u32 1.1754944e-38, %v8041
    %v8043 = vsel %vm8040, %v8042, %v8038
    %v8044 = vmul.f32 1.0, %v8043
    %v8045 = vtanh.pop %v7963
    %v8046 = vtanh.pop %v7967
    %v8047 = vxor.u32 %v7964, 2147483648
    %v8048 = vxor.u32 %v7968, 2147483648
    %v8049 = vmul.f32 %v8047, 1.442695
    %v8050 = vpow.pop %v8049
    %v8051 = vmul.f32 %v8048, 1.442695
    %v8052 = vpow.pop %v8051
    %v8053 = vadd.f32 %v8050, 1.0
    %v8054 = vadd.f32 %v8052, 1.0
    %v8055 = vrcp.pop %v8053
    %v8056 = vmul.f32 %v8053, %v8055
    %v8057 = vsub.f32 1.0, %v8056
    %v8058 = vmul.f32 %v8055, %v8057
    %v8059 = vadd.f32 %v8055, %v8058
    %vm8060 = vweird.f32 %v8053
    %vm8061 = vweird.f32 %v8055
    %vm8062 = vmor %vm8060, %vm8061
    %v8063 = vsel %vm8062, %v8055, %v8059
    %v8064 = vand.u32 2147483647, %v8053
    %vm8065 = vcmp.eq.f32.partialorder %v8064, 8.507059e+37
    %v8066 = vand.u32 %v8053, 2147483648
    %v8067 = vor.u32 1.1754944e-38, %v8066
    %v8068 = vsel %vm8065, %v8067, %v8063
    %v8069 = vmul.f32 1.0, %v8068
    %v8070 = vrcp.pop %v8054
    %v8071 = vmul.f32 %v8054, %v8070
    %v8072 = vsub.f32 1.0, %v8071
    %v8073 = vmul.f32 %v8070, %v8072
    %v8074 = vadd.f32 %v8070, %v8073
    %vm8075 = vweird.f32 %v8054
    %vm8076 = vweird.f32 %v8070
    %vm8077 = vmor %vm8075, %vm8076
    %v8078 = vsel %vm8077, %v8070, %v8074
    %v8079 = vand.u32 2147483647, %v8054
    %vm8080 = vcmp.eq.f32.partialorder %v8079, 8.507059e+37
    %v8081 = vand.u32 %v8054, 2147483648
    %v8082 = vor.u32 1.1754944e-38, %v8081
    %v8083 = vsel %vm8080, %v8082, %v8078
    %v8084 = vmul.f32 1.0, %v8083
    %v8087 = vrot.slane %v7866, 7
    %v8088 = vrot.slane %v7867, 7
    %v8091 = vmul.f32 %v8029, %v8087
    %v8092 = vmul.f32 %v8044, %v8088
    %v8093 = vmul.f32 %v7991, %v8045
    %v8094 = vmul.f32 %v8006, %v8046
    %v8095 = vadd.f32 %v8091, %v8093
    %v8096 = vadd.f32 %v8092, %v8094
    %v8097 = vtanh.pop %v8095
    %v8098 = vtanh.pop %v8096
    %v8099 = vmul.f32 %v8069, %v8097
    %v8100 = vmul.f32 %v8084, %v8098
    %v8101 = vperm.slane %v8099, 5
    %v8102 = vperm.slane %v8100, 5
    %v8103 = vsel %vm1903, %v8101, %v7874
    %v8104 = vsel %vm1903, %v8102, %v7875
    %v8105 = vpack.c.bf16 %v8099, %v8099
    %v8106 = vpack.c.bf16 %v8100, %v8100
    %v8109 = vunpack.c.l.b16 %v8105
    %v8110 = vunpack.c.l.b16 %v8106
    %v8111 = vrot.slane %v8109, 5
    %v8112 = vrot.slane %v8110, 4
    %v8113 = vsel %vm770, %v8112, %v8111
    %v8114 = vpack.c.b16 %v8113, %v8113
    %v8116 = vsel %vm552, %v8114, 0
    %8118 = vmatpush.bf16.msra.mxu0 0
    %8119 = vmatpush.bf16.msra.mxu0 0
    %8120 = vmatpush.bf16.msra.mxu0 0
    %8121 = vmatpush.bf16.msra.mxu0 0
    %8122 = vmatpush.bf16.msra.mxu0 %v6740
    %8123 = vmatpush.bf16.msra.mxu0 %v6736
    %8124 = vmatpush.bf16.msra.mxu0 %v6732
    %8125 = vmatpush.bf16.msra.mxu0 %v6728
    %8126 = vmatmul.bf16.gmra.mxu0 %v8116
    %v8127 = vpop.f32.mrf.mxu0
    %v8128 = vadd.f32 0.0, %v8127
    %v8129 = vpop.f32.mrf.mxu0
    %8130 = vdwg.mxu0
    %8131 = vmatpush.bf16.msra.mxu0 0
    %8132 = vmatpush.bf16.msra.mxu0 0
    %8133 = vmatpush.bf16.msra.mxu0 0
    %8134 = vmatpush.bf16.msra.mxu0 0
    %8135 = vmatpush.bf16.msra.mxu0 %v6741
    %8136 = vmatpush.bf16.msra.mxu0 %v6737
    %8137 = vmatpush.bf16.msra.mxu0 %v6733
    %8138 = vmatpush.bf16.msra.mxu0 %v6729
    %8139 = vmatmul.bf16.gmra.mxu0 %v8116
    %v8140 = vpop.f32.mrf.mxu0
    %v8141 = vadd.f32 0.0, %v8140
    %v8142 = vpop.f32.mrf.mxu0
    %8143 = vdwg.mxu0
    %8144 = vmatpush.bf16.msra.mxu0 0
    %8145 = vmatpush.bf16.msra.mxu0 0
    %8146 = vmatpush.bf16.msra.mxu0 0
    %8147 = vmatpush.bf16.msra.mxu0 0
    %8148 = vmatpush.bf16.msra.mxu0 %v6742
    %8149 = vmatpush.bf16.msra.mxu0 %v6738
    %8150 = vmatpush.bf16.msra.mxu0 %v6734
    %8151 = vmatpush.bf16.msra.mxu0 %v6730
    %8152 = vmatmul.bf16.gmra.mxu0 %v8116
    %v8153 = vpop.f32.mrf.mxu0
    %v8154 = vadd.f32 0.0, %v8153
    %v8155 = vpop.f32.mrf.mxu0
    %8156 = vdwg.mxu0
    %8157 = vmatpush.bf16.msra.mxu0 0
    %8158 = vmatpush.bf16.msra.mxu0 0
    %8159 = vmatpush.bf16.msra.mxu0 0
    %8160 = vmatpush.bf16.msra.mxu0 0
    %8161 = vmatpush.bf16.msra.mxu0 %v6743
    %8162 = vmatpush.bf16.msra.mxu0 %v6739
    %8163 = vmatpush.bf16.msra.mxu0 %v6735
    %8164 = vmatpush.bf16.msra.mxu0 %v6731
    %8165 = vmatmul.bf16.gmra.mxu0 %v8116
    %v8166 = vpop.f32.mrf.mxu0
    %v8167 = vadd.f32 0.0, %v8166
    %v8168 = vpop.f32.mrf.mxu0
    %8169 = vdwg.mxu0
    %v8174 = vrot.slane %v8128, 2
    %v8175 = vrot.slane %v8141, 2
    %v8176 = vrot.slane %v8154, 2
    %v8177 = vrot.slane %v8167, 2
    %v8178 = vrot.slane %v8128, 3
    %v8179 = vrot.slane %v8141, 3
    %v8180 = vrot.slane %v8154, 3
    %v8181 = vrot.slane %v8167, 3
    %v8190 = vadd.f32 %v6618, %v8174
    %v8191 = vadd.f32 %v6632, %v8175
    %v8192 = vadd.f32 %v6646, %v8176
    %v8193 = vadd.f32 %v6660, %v8177
    %v8194 = vadd.f32 %v6620, %v8178
    %v8195 = vadd.f32 %v6634, %v8179
    %v8196 = vadd.f32 %v6648, %v8180
    %v8197 = vadd.f32 %v6662, %v8181
    %v8198 = vxor.u32 %v8190, 2147483648
    %v8199 = vxor.u32 %v8194, 2147483648
    %v8200 = vmul.f32 %v8198, 1.442695
    %v8201 = vpow.pop %v8200
    %v8202 = vmul.f32 %v8199, 1.442695
    %v8203 = vpow.pop %v8202
    %v8204 = vadd.f32 %v8201, 1.0
    %v8205 = vadd.f32 %v8203, 1.0
    %v8206 = vrcp.pop %v8204
    %v8207 = vmul.f32 %v8204, %v8206
    %v8208 = vsub.f32 1.0, %v8207
    %v8209 = vmul.f32 %v8206, %v8208
    %v8210 = vadd.f32 %v8206, %v8209
    %vm8211 = vweird.f32 %v8204
    %vm8212 = vweird.f32 %v8206
    %vm8213 = vmor %vm8211, %vm8212
    %v8214 = vsel %vm8213, %v8206, %v8210
    %v8215 = vand.u32 2147483647, %v8204
    %vm8216 = vcmp.eq.f32.partialorder %v8215, 8.507059e+37
    %v8217 = vand.u32 %v8204, 2147483648
    %v8218 = vor.u32 1.1754944e-38, %v8217
    %v8219 = vsel %vm8216, %v8218, %v8214
    %v8220 = vmul.f32 1.0, %v8219
    %v8221 = vrcp.pop %v8205
    %v8222 = vmul.f32 %v8205, %v8221
    %v8223 = vsub.f32 1.0, %v8222
    %v8224 = vmul.f32 %v8221, %v8223
    %v8225 = vadd.f32 %v8221, %v8224
    %vm8226 = vweird.f32 %v8205
    %vm8227 = vweird.f32 %v8221
    %vm8228 = vmor %vm8226, %vm8227
    %v8229 = vsel %vm8228, %v8221, %v8225
    %v8230 = vand.u32 2147483647, %v8205
    %vm8231 = vcmp.eq.f32.partialorder %v8230, 8.507059e+37
    %v8232 = vand.u32 %v8205, 2147483648
    %v8233 = vor.u32 1.1754944e-38, %v8232
    %v8234 = vsel %vm8231, %v8233, %v8229
    %v8235 = vmul.f32 1.0, %v8234
    %v8236 = vxor.u32 %v8191, 2147483648
    %v8237 = vxor.u32 %v8195, 2147483648
    %v8238 = vmul.f32 %v8236, 1.442695
    %v8239 = vpow.pop %v8238
    %v8240 = vmul.f32 %v8237, 1.442695
    %v8241 = vpow.pop %v8240
    %v8242 = vadd.f32 %v8239, 1.0
    %v8243 = vadd.f32 %v8241, 1.0
    %v8244 = vrcp.pop %v8242
    %v8245 = vmul.f32 %v8242, %v8244
    %v8246 = vsub.f32 1.0, %v8245
    %v8247 = vmul.f32 %v8244, %v8246
    %v8248 = vadd.f32 %v8244, %v8247
    %vm8249 = vweird.f32 %v8242
    %vm8250 = vweird.f32 %v8244
    %vm8251 = vmor %vm8249, %vm8250
    %v8252 = vsel %vm8251, %v8244, %v8248
    %v8253 = vand.u32 2147483647, %v8242
    %vm8254 = vcmp.eq.f32.partialorder %v8253, 8.507059e+37
    %v8255 = vand.u32 %v8242, 2147483648
    %v8256 = vor.u32 1.1754944e-38, %v8255
    %v8257 = vsel %vm8254, %v8256, %v8252
    %v8258 = vmul.f32 1.0, %v8257
    %v8259 = vrcp.pop %v8243
    %v8260 = vmul.f32 %v8243, %v8259
    %v8261 = vsub.f32 1.0, %v8260
    %v8262 = vmul.f32 %v8259, %v8261
    %v8263 = vadd.f32 %v8259, %v8262
    %vm8264 = vweird.f32 %v8243
    %vm8265 = vweird.f32 %v8259
    %vm8266 = vmor %vm8264, %vm8265
    %v8267 = vsel %vm8266, %v8259, %v8263
    %v8268 = vand.u32 2147483647, %v8243
    %vm8269 = vcmp.eq.f32.partialorder %v8268, 8.507059e+37
    %v8270 = vand.u32 %v8243, 2147483648
    %v8271 = vor.u32 1.1754944e-38, %v8270
    %v8272 = vsel %vm8269, %v8271, %v8267
    %v8273 = vmul.f32 1.0, %v8272
    %v8274 = vtanh.pop %v8192
    %v8275 = vtanh.pop %v8196
    %v8276 = vxor.u32 %v8193, 2147483648
    %v8277 = vxor.u32 %v8197, 2147483648
    %v8278 = vmul.f32 %v8276, 1.442695
    %v8279 = vpow.pop %v8278
    %v8280 = vmul.f32 %v8277, 1.442695
    %v8281 = vpow.pop %v8280
    %v8282 = vadd.f32 %v8279, 1.0
    %v8283 = vadd.f32 %v8281, 1.0
    %v8284 = vrcp.pop %v8282
    %v8285 = vmul.f32 %v8282, %v8284
    %v8286 = vsub.f32 1.0, %v8285
    %v8287 = vmul.f32 %v8284, %v8286
    %v8288 = vadd.f32 %v8284, %v8287
    %vm8289 = vweird.f32 %v8282
    %vm8290 = vweird.f32 %v8284
    %vm8291 = vmor %vm8289, %vm8290
    %v8292 = vsel %vm8291, %v8284, %v8288
    %v8293 = vand.u32 2147483647, %v8282
    %vm8294 = vcmp.eq.f32.partialorder %v8293, 8.507059e+37
    %v8295 = vand.u32 %v8282, 2147483648
    %v8296 = vor.u32 1.1754944e-38, %v8295
    %v8297 = vsel %vm8294, %v8296, %v8292
    %v8298 = vmul.f32 1.0, %v8297
    %v8299 = vrcp.pop %v8283
    %v8300 = vmul.f32 %v8283, %v8299
    %v8301 = vsub.f32 1.0, %v8300
    %v8302 = vmul.f32 %v8299, %v8301
    %v8303 = vadd.f32 %v8299, %v8302
    %vm8304 = vweird.f32 %v8283
    %vm8305 = vweird.f32 %v8299
    %vm8306 = vmor %vm8304, %vm8305
    %v8307 = vsel %vm8306, %v8299, %v8303
    %v8308 = vand.u32 2147483647, %v8283
    %vm8309 = vcmp.eq.f32.partialorder %v8308, 8.507059e+37
    %v8310 = vand.u32 %v8283, 2147483648
    %v8311 = vor.u32 1.1754944e-38, %v8310
    %v8312 = vsel %vm8309, %v8311, %v8307
    %v8313 = vmul.f32 1.0, %v8312
    %v8316 = vrot.slane %v8095, 7
    %v8317 = vrot.slane %v8096, 7
    %v8320 = vmul.f32 %v8258, %v8316
    %v8321 = vmul.f32 %v8273, %v8317
    %v8322 = vmul.f32 %v8220, %v8274
    %v8323 = vmul.f32 %v8235, %v8275
    %v8324 = vadd.f32 %v8320, %v8322
    %v8325 = vadd.f32 %v8321, %v8323
    %v8326 = vtanh.pop %v8324
    %v8327 = vtanh.pop %v8325
    %v8328 = vmul.f32 %v8298, %v8326
    %v8329 = vmul.f32 %v8313, %v8327
    %v8330 = vperm.slane %v8328, 6
    %v8331 = vperm.slane %v8329, 6
    %v8332 = vsel %vm2133, %v8330, %v8103
    %v8333 = vsel %vm2133, %v8331, %v8104
    %v8334 = vpack.c.bf16 %v8328, %v8328
    %v8335 = vpack.c.bf16 %v8329, %v8329
    %v8338 = vunpack.c.l.b16 %v8334
    %v8339 = vunpack.c.l.b16 %v8335
    %v8340 = vrot.slane %v8338, 6
    %v8341 = vrot.slane %v8339, 5
    %v8342 = vsel %vm770, %v8341, %v8340
    %v8343 = vpack.c.b16 %v8342, %v8342
    %v8345 = vsel %vm552, %v8343, 0
    %8347 = vmatpush.bf16.msra.mxu0 0
    %8348 = vmatpush.bf16.msra.mxu0 0
    %8349 = vmatpush.bf16.msra.mxu0 0
    %8350 = vmatpush.bf16.msra.mxu0 0
    %8351 = vmatpush.bf16.msra.mxu0 %v6740
    %8352 = vmatpush.bf16.msra.mxu0 %v6736
    %8353 = vmatpush.bf16.msra.mxu0 %v6732
    %8354 = vmatpush.bf16.msra.mxu0 %v6728
    %8355 = vmatmul.bf16.gmra.mxu0 %v8345
    %v8356 = vpop.f32.mrf.mxu0
    %v8357 = vadd.f32 0.0, %v8356
    %v8358 = vpop.f32.mrf.mxu0
    %8359 = vdwg.mxu0
    %8360 = vmatpush.bf16.msra.mxu0 0
    %8361 = vmatpush.bf16.msra.mxu0 0
    %8362 = vmatpush.bf16.msra.mxu0 0
    %8363 = vmatpush.bf16.msra.mxu0 0
    %8364 = vmatpush.bf16.msra.mxu0 %v6741
    %8365 = vmatpush.bf16.msra.mxu0 %v6737
    %8366 = vmatpush.bf16.msra.mxu0 %v6733
    %8367 = vmatpush.bf16.msra.mxu0 %v6729
    %8368 = vmatmul.bf16.gmra.mxu0 %v8345
    %v8369 = vpop.f32.mrf.mxu0
    %v8370 = vadd.f32 0.0, %v8369
    %v8371 = vpop.f32.mrf.mxu0
    %8372 = vdwg.mxu0
    %8373 = vmatpush.bf16.msra.mxu0 0
    %8374 = vmatpush.bf16.msra.mxu0 0
    %8375 = vmatpush.bf16.msra.mxu0 0
    %8376 = vmatpush.bf16.msra.mxu0 0
    %8377 = vmatpush.bf16.msra.mxu0 %v6742
    %8378 = vmatpush.bf16.msra.mxu0 %v6738
    %8379 = vmatpush.bf16.msra.mxu0 %v6734
    %8380 = vmatpush.bf16.msra.mxu0 %v6730
    %8381 = vmatmul.bf16.gmra.mxu0 %v8345
    %v8382 = vpop.f32.mrf.mxu0
    %v8383 = vadd.f32 0.0, %v8382
    %v8384 = vpop.f32.mrf.mxu0
    %8385 = vdwg.mxu0
    %8386 = vmatpush.bf16.msra.mxu0 0
    %8387 = vmatpush.bf16.msra.mxu0 0
    %8388 = vmatpush.bf16.msra.mxu0 0
    %8389 = vmatpush.bf16.msra.mxu0 0
    %8390 = vmatpush.bf16.msra.mxu0 %v6743
    %8391 = vmatpush.bf16.msra.mxu0 %v6739
    %8392 = vmatpush.bf16.msra.mxu0 %v6735
    %8393 = vmatpush.bf16.msra.mxu0 %v6731
    %8394 = vmatmul.bf16.gmra.mxu0 %v8345
    %v8395 = vpop.f32.mrf.mxu0
    %v8396 = vadd.f32 0.0, %v8395
    %v8397 = vpop.f32.mrf.mxu0
    %8398 = vdwg.mxu0
    %v8403 = vrot.slane %v8357, 1
    %v8404 = vrot.slane %v8370, 1
    %v8405 = vrot.slane %v8383, 1
    %v8406 = vrot.slane %v8396, 1
    %v8407 = vrot.slane %v8357, 2
    %v8408 = vrot.slane %v8370, 2
    %v8409 = vrot.slane %v8383, 2
    %v8410 = vrot.slane %v8396, 2
    %v8419 = vadd.f32 %v6618, %v8403
    %v8420 = vadd.f32 %v6632, %v8404
    %v8421 = vadd.f32 %v6646, %v8405
    %v8422 = vadd.f32 %v6660, %v8406
    %v8423 = vadd.f32 %v6620, %v8407
    %v8424 = vadd.f32 %v6634, %v8408
    %v8425 = vadd.f32 %v6648, %v8409
    %v8426 = vadd.f32 %v6662, %v8410
    %v8427 = vxor.u32 %v8419, 2147483648
    %v8428 = vxor.u32 %v8423, 2147483648
    %v8429 = vmul.f32 %v8427, 1.442695
    %v8430 = vpow.pop %v8429
    %v8431 = vmul.f32 %v8428, 1.442695
    %v8432 = vpow.pop %v8431
    %v8433 = vadd.f32 %v8430, 1.0
    %v8434 = vadd.f32 %v8432, 1.0
    %v8435 = vrcp.pop %v8433
    %v8436 = vmul.f32 %v8433, %v8435
    %v8437 = vsub.f32 1.0, %v8436
    %v8438 = vmul.f32 %v8435, %v8437
    %v8439 = vadd.f32 %v8435, %v8438
    %vm8440 = vweird.f32 %v8433
    %vm8441 = vweird.f32 %v8435
    %vm8442 = vmor %vm8440, %vm8441
    %v8443 = vsel %vm8442, %v8435, %v8439
    %v8444 = vand.u32 2147483647, %v8433
    %vm8445 = vcmp.eq.f32.partialorder %v8444, 8.507059e+37
    %v8446 = vand.u32 %v8433, 2147483648
    %v8447 = vor.u32 1.1754944e-38, %v8446
    %v8448 = vsel %vm8445, %v8447, %v8443
    %v8449 = vmul.f32 1.0, %v8448
    %v8450 = vrcp.pop %v8434
    %v8451 = vmul.f32 %v8434, %v8450
    %v8452 = vsub.f32 1.0, %v8451
    %v8453 = vmul.f32 %v8450, %v8452
    %v8454 = vadd.f32 %v8450, %v8453
    %vm8455 = vweird.f32 %v8434
    %vm8456 = vweird.f32 %v8450
    %vm8457 = vmor %vm8455, %vm8456
    %v8458 = vsel %vm8457, %v8450, %v8454
    %v8459 = vand.u32 2147483647, %v8434
    %vm8460 = vcmp.eq.f32.partialorder %v8459, 8.507059e+37
    %v8461 = vand.u32 %v8434, 2147483648
    %v8462 = vor.u32 1.1754944e-38, %v8461
    %v8463 = vsel %vm8460, %v8462, %v8458
    %v8464 = vmul.f32 1.0, %v8463
    %v8465 = vxor.u32 %v8420, 2147483648
    %v8466 = vxor.u32 %v8424, 2147483648
    %v8467 = vmul.f32 %v8465, 1.442695
    %v8468 = vpow.pop %v8467
    %v8469 = vmul.f32 %v8466, 1.442695
    %v8470 = vpow.pop %v8469
    %v8471 = vadd.f32 %v8468, 1.0
    %v8472 = vadd.f32 %v8470, 1.0
    %v8473 = vrcp.pop %v8471
    %v8474 = vmul.f32 %v8471, %v8473
    %v8475 = vsub.f32 1.0, %v8474
    %v8476 = vmul.f32 %v8473, %v8475
    %v8477 = vadd.f32 %v8473, %v8476
    %vm8478 = vweird.f32 %v8471
    %vm8479 = vweird.f32 %v8473
    %vm8480 = vmor %vm8478, %vm8479
    %v8481 = vsel %vm8480, %v8473, %v8477
    %v8482 = vand.u32 2147483647, %v8471
    %vm8483 = vcmp.eq.f32.partialorder %v8482, 8.507059e+37
    %v8484 = vand.u32 %v8471, 2147483648
    %v8485 = vor.u32 1.1754944e-38, %v8484
    %v8486 = vsel %vm8483, %v8485, %v8481
    %v8487 = vmul.f32 1.0, %v8486
    %v8488 = vrcp.pop %v8472
    %v8489 = vmul.f32 %v8472, %v8488
    %v8490 = vsub.f32 1.0, %v8489
    %v8491 = vmul.f32 %v8488, %v8490
    %v8492 = vadd.f32 %v8488, %v8491
    %vm8493 = vweird.f32 %v8472
    %vm8494 = vweird.f32 %v8488
    %vm8495 = vmor %vm8493, %vm8494
    %v8496 = vsel %vm8495, %v8488, %v8492
    %v8497 = vand.u32 2147483647, %v8472
    %vm8498 = vcmp.eq.f32.partialorder %v8497, 8.507059e+37
    %v8499 = vand.u32 %v8472, 2147483648
    %v8500 = vor.u32 1.1754944e-38, %v8499
    %v8501 = vsel %vm8498, %v8500, %v8496
    %v8502 = vmul.f32 1.0, %v8501
    %v8503 = vtanh.pop %v8421
    %v8504 = vtanh.pop %v8425
    %v8505 = vxor.u32 %v8422, 2147483648
    %v8506 = vxor.u32 %v8426, 2147483648
    %v8507 = vmul.f32 %v8505, 1.442695
    %v8508 = vpow.pop %v8507
    %v8509 = vmul.f32 %v8506, 1.442695
    %v8510 = vpow.pop %v8509
    %v8511 = vadd.f32 %v8508, 1.0
    %v8512 = vadd.f32 %v8510, 1.0
    %v8513 = vrcp.pop %v8511
    %v8514 = vmul.f32 %v8511, %v8513
    %v8515 = vsub.f32 1.0, %v8514
    %v8516 = vmul.f32 %v8513, %v8515
    %v8517 = vadd.f32 %v8513, %v8516
    %vm8518 = vweird.f32 %v8511
    %vm8519 = vweird.f32 %v8513
    %vm8520 = vmor %vm8518, %vm8519
    %v8521 = vsel %vm8520, %v8513, %v8517
    %v8522 = vand.u32 2147483647, %v8511
    %vm8523 = vcmp.eq.f32.partialorder %v8522, 8.507059e+37
    %v8524 = vand.u32 %v8511, 2147483648
    %v8525 = vor.u32 1.1754944e-38, %v8524
    %v8526 = vsel %vm8523, %v8525, %v8521
    %v8527 = vmul.f32 1.0, %v8526
    %v8528 = vrcp.pop %v8512
    %v8529 = vmul.f32 %v8512, %v8528
    %v8530 = vsub.f32 1.0, %v8529
    %v8531 = vmul.f32 %v8528, %v8530
    %v8532 = vadd.f32 %v8528, %v8531
    %vm8533 = vweird.f32 %v8512
    %vm8534 = vweird.f32 %v8528
    %vm8535 = vmor %vm8533, %vm8534
    %v8536 = vsel %vm8535, %v8528, %v8532
    %v8537 = vand.u32 2147483647, %v8512
    %vm8538 = vcmp.eq.f32.partialorder %v8537, 8.507059e+37
    %v8539 = vand.u32 %v8512, 2147483648
    %v8540 = vor.u32 1.1754944e-38, %v8539
    %v8541 = vsel %vm8538, %v8540, %v8536
    %v8542 = vmul.f32 1.0, %v8541
    %v8545 = vrot.slane %v8324, 7
    %v8546 = vrot.slane %v8325, 7
    %v8549 = vmul.f32 %v8487, %v8545
    %v8550 = vmul.f32 %v8502, %v8546
    %v8551 = vmul.f32 %v8449, %v8503
    %v8552 = vmul.f32 %v8464, %v8504
    %v8553 = vadd.f32 %v8549, %v8551
    %v8554 = vadd.f32 %v8550, %v8552
    %v8555 = vtanh.pop %v8553
    %v8556 = vtanh.pop %v8554
    %v8557 = vmul.f32 %v8527, %v8555
    %v8558 = vmul.f32 %v8542, %v8556
    %v8559 = vperm.slane %v8557, 7
    %v8560 = vperm.slane %v8558, 7
    %v8561 = vsel %vm2363, %v8559, %v8332
    %v8562 = vsel %vm2363, %v8560, %v8333
    %v8563 = vpack.c.bf16 %v8562, %v8561
    %v8564 = vld [vmem:[#allocation21] sm:$0xf]
    %v8565 = vld [vmem:[#allocation21 + $0x4] sm:$0xf]
    %v8566 = vld [vmem:[#allocation21 + $0x8] sm:$0xf]
    %v8567 = vld [vmem:[#allocation21 + $0xc] sm:$0xf]
    %v8568 = vld [vmem:[#allocation21 + $0x10] sm:$0xf]
    %v8569 = vld [vmem:[#allocation21 + $0x14] sm:$0xf]
    %v8570 = vld [vmem:[#allocation21 + $0x18] sm:$0xf]
    %v8571 = vld [vmem:[#allocation21 + $0x1c] sm:$0xf]
    %v8572 = vld [vmem:[#allocation22] sm:$0x1]
    %v8574 = vperm.slane %v8572, 0
    %v8584 = vunpack.c.l.b16 %v8564
    %v8585 = vunpack.c.l.b16 %v8565
    %v8586 = vunpack.c.l.b16 %v8566
    %v8587 = vunpack.c.l.b16 %v8567
    %v8588 = vunpack.c.l.b16 %v8568
    %v8589 = vunpack.c.l.b16 %v8569
    %v8590 = vunpack.c.l.b16 %v8570
    %v8591 = vunpack.c.l.b16 %v8571
    %v8592 = vpack.c.b16 %v8585, %v8584
    %v8593 = vpack.c.b16 %v8587, %v8586
    %v8594 = vpack.c.b16 %v8589, %v8588
    %v8595 = vpack.c.b16 %v8591, %v8590
    %v8601 = vsel %vm552, %v8563, 0
    %8603 = vmatpush.bf16.msra.mxu0 0
    %8604 = vmatpush.bf16.msra.mxu0 0
    %8605 = vmatpush.bf16.msra.mxu0 0
    %8606 = vmatpush.bf16.msra.mxu0 0
    %8607 = vmatpush.bf16.msra.mxu0 %v8595
    %8608 = vmatpush.bf16.msra.mxu0 %v8594
    %8609 = vmatpush.bf16.msra.mxu0 %v8593
    %8610 = vmatpush.bf16.msra.mxu0 %v8592
    %8611 = vmatmul.bf16.gmra.mxu0 %v8601
    %v8612 = vpop.f32.mrf.mxu0
    %v8613 = vadd.f32 %v8574, %v8612
    %v8614 = vpop.f32.mrf.mxu0
    %v8615 = vadd.f32 %v8574, %v8614
    %8616 = vdwg.mxu0
    %v8617 = vmax.f32 %v8613, 0.0
    %v8618 = vmax.f32 %v8615, 0.0
    %v8619 = vpack.c.bf16 %v8618, %v8617
    %v8620 = vld [vmem:[%s17] sm:$0xf]
    %v8621 = vld [vmem:[%s17 + $0x4] sm:$0xf]
    %v8622 = vld [vmem:[%s17 + $0x8] sm:$0xf]
    %v8623 = vld [vmem:[%s17 + $0xc] sm:$0xf]
    %v8624 = vld [vmem:[%s17 + $0x10] sm:$0xf]
    %v8625 = vld [vmem:[%s17 + $0x14] sm:$0xf]
    %v8626 = vld [vmem:[%s17 + $0x18] sm:$0xf]
    %v8627 = vld [vmem:[%s17 + $0x1c] sm:$0xf]
    %v8628 = vld [vmem:[%s17 + $0x20] sm:$0xf]
    %v8629 = vld [vmem:[%s17 + $0x24] sm:$0xf]
    %v8630 = vld [vmem:[%s17 + $0x28] sm:$0xf]
    %v8631 = vld [vmem:[%s17 + $0x2c] sm:$0xf]
    %v8632 = vld [vmem:[%s17 + $0x30] sm:$0xf]
    %v8633 = vld [vmem:[%s17 + $0x34] sm:$0xf]
    %v8634 = vld [vmem:[%s17 + $0x38] sm:$0xf]
    %v8635 = vld [vmem:[%s17 + $0x3c] sm:$0xf]
    %v8636 = vld [vmem:[%s18] sm:$0x1]
    %v8638 = vperm.slane %v8636, 0
    %v8656 = vunpack.c.l.b16 %v8620
    %v8657 = vunpack.c.l.b16 %v8621
    %v8658 = vunpack.c.l.b16 %v8622
    %v8659 = vunpack.c.l.b16 %v8623
    %v8660 = vunpack.c.l.b16 %v8624
    %v8661 = vunpack.c.l.b16 %v8625
    %v8662 = vunpack.c.l.b16 %v8626
    %v8663 = vunpack.c.l.b16 %v8627
    %v8664 = vunpack.c.l.b16 %v8628
    %v8665 = vunpack.c.l.b16 %v8629
    %v8666 = vunpack.c.l.b16 %v8630
    %v8667 = vunpack.c.l.b16 %v8631
    %v8668 = vunpack.c.l.b16 %v8632
    %v8669 = vunpack.c.l.b16 %v8633
    %v8670 = vunpack.c.l.b16 %v8634
    %v8671 = vunpack.c.l.b16 %v8635
    %v8672 = vpack.c.b16 %v8657, %v8656
    %v8673 = vpack.c.b16 %v8659, %v8658
    %v8674 = vpack.c.b16 %v8661, %v8660
    %v8675 = vpack.c.b16 %v8663, %v8662
    %v8676 = vpack.c.b16 %v8665, %v8664
    %v8677 = vpack.c.b16 %v8667, %v8666
    %v8678 = vpack.c.b16 %v8669, %v8668
    %v8679 = vpack.c.b16 %v8671, %v8670
    %8688 = vmatpush.bf16.msra.mxu0 %v8679
    %8689 = vmatpush.bf16.msra.mxu0 %v8678
    %8690 = vmatpush.bf16.msra.mxu0 %v8677
    %8691 = vmatpush.bf16.msra.mxu0 %v8676
    %8692 = vmatpush.bf16.msra.mxu0 %v8675
    %8693 = vmatpush.bf16.msra.mxu0 %v8674
    %8694 = vmatpush.bf16.msra.mxu0 %v8673
    %8695 = vmatpush.bf16.msra.mxu0 %v8672
    %8696 = vmatmul.bf16.gmra.mxu0 %v8619
    %v8697 = vpop.f32.mrf.mxu0
    %v8698 = vadd.f32 %v8638, %v8697
    %v8699 = vpop.f32.mrf.mxu0
    %v8700 = vadd.f32 %v8638, %v8699
    %8701 = vdwg.mxu0
    %8702 = vst [vmem:[%s19] sm:$0x1f] %v8698
    %8703 = vst [vmem:[%s19 + $0x8] sm:$0x1f] %v8700
    // Predicated region
    $region134: #{tpu_custom_call.1} parent=1 // pred_check
      _
    $region135: #{tpu_custom_call.1} parent=1 // pred_check_branch
      %8705 = sbr.rel (0) target = $region137
    $region136: #{tpu_custom_call.1} parent=1 // pred_region
      _
    $region137: #{tpu_custom_call.1} parent=1 // pred_fallthru
      _
    // Predicated region
    $region138: #{tpu_custom_call.1} parent=1 // pred_check
      _
    $region139: #{tpu_custom_call.1} parent=1 // pred_check_branch
      %8707 = sbr.rel (0) target = $region141
    $region140: #{tpu_custom_call.1} parent=1 // pred_region
      _
    $region141: #{tpu_custom_call.1} parent=1 // pred_fallthru
      _
    %8708 = vsyncpa [#allocation3], 1
    %8709 = vsyncpa [#allocation5], 1
    %8710 = vsyncpa [#allocation8], 1
    %8711 = vsyncpa [#allocation11], 1
    %8712 = vsyncpa [#allocation14], 1
    %8713 = vsyncpa [#allocation17], 1
    %8714 = vsyncpa [#allocation20], 1
    %8715 = vsyncpa [#allocation23], 1

</llo_original>
